<compile_context>
chip_gen: v7x
topology: tpu7x:2x2x1
jax: 0.10.0
libtpu: 0.0.40
codegen_flags: <defaults>
</compile_context>

<pallas_src>
import jax
import jax.numpy as jnp
from jax.experimental import pallas as pl
from jax.experimental.pallas import tpu as pltpu


def _round_up(a: int, b: int) -> int:
    return ((a + b - 1) // b) * b


def _tpu_vmem_capacity() -> int:
    try:
        return int(pltpu.get_tpu_info().vmem_capacity_bytes)
    except Exception:
        return 64 << 20  # safe lower bound on every generation


def _vmem_estimate(tm, in_p, th, out_p, x_bytes, out_bytes) -> int:
    # Counts default double-buffering (2x) on every pipelined input/output.
    return (
        2 * tm * in_p * x_bytes        # x tiles (caller dtype)
        + 2 * in_p * th * 2            # bf16 W1 tile
        + 2 * th * 4                   # f32 b1
        + 2 * th * out_p * 2           # bf16 W2 tile
        + 2 * out_p * 4                # f32 b2
        + 2 * tm * out_p * out_bytes   # out tiles
        + tm * out_p * 4               # f32 accumulator scratch
        + tm * th * 4                  # f32 intermediate h
    )


def _pick_row_tile(M: int, tm_target: int):
    """Row tile near the target; prefer a divisor of the 8-padded row count."""
    m8 = _round_up(max(M, 8), 8)
    tm = min(_round_up(tm_target, 8), m8)
    if m8 % tm == 0:
        return tm, m8
    for cand in range(tm, max(8, tm // 2) - 1, -8):
        if m8 % cand == 0:
            return cand, m8
    return tm, _round_up(m8, tm)


# ---------------------------------------------------------------------------
# Kernel: grid = (row tiles, hidden tiles).  Hidden axis is a reduction onto a
# resident f32 accumulator; init at k==0, bias+store at the last k.
# ---------------------------------------------------------------------------
def _ffn_kernel(x_ref, w1_ref, b1_ref, w2_ref, b2_ref, o_ref, acc_ref):
    kh = pl.program_id(1)

    @pl.when(kh == 0)
    def _():
        acc_ref[...] = jnp.zeros_like(acc_ref)

    x = x_ref[...].astype(jnp.bfloat16)                     # cast in-kernel
    h = jnp.dot(x, w1_ref[...], preferred_element_type=jnp.float32)
    h = jnp.maximum(h + b1_ref[...], 0.0)                   # bias + ReLU in f32
    acc_ref[...] += jnp.dot(h.astype(jnp.bfloat16), w2_ref[...],
                            preferred_element_type=jnp.float32)

    @pl.when(kh == pl.num_programs(1) - 1)
    def _():
        o_ref[...] = (acc_ref[...] + b2_ref[...]).astype(o_ref.dtype)


# ---------------------------------------------------------------------------
# One-time weight preparation (hoisted out of the per-call path).
# ---------------------------------------------------------------------------
def prepare_ffn_params(w1, b1, w2, b2, *, tm_hint=512, x_bytes=4, out_bytes=4):
    in_dim, hidden = w1.shape
    out_dim = w2.shape[1]
    in_p = _round_up(in_dim, 128)
    hid_p = _round_up(hidden, 128)
    out_p = _round_up(out_dim, 128)

    vmem_cap = _tpu_vmem_capacity()
    budget = vmem_cap - (16 << 20)

    # Hidden tile: whole hidden if the resident (double-buffered) weights fit,
    # otherwise halve until they do (matters for wide FFNs on v7x's 64 MiB).
    th = hid_p
    while (_vmem_estimate(tm_hint, in_p, th, out_p, x_bytes, out_bytes) > budget
           and th > 512):
        th = _round_up(-(-th // 2), 128)
    hid_pad = _round_up(hid_p, th)

    def pad2(a, r, c):
        if a.shape == (r, c):
            return a
        return jnp.pad(a, ((0, r - a.shape[0]), (0, c - a.shape[1])))

    def pad1(a, n):
        return a if a.shape[0] == n else jnp.pad(a, (0, n - a.shape[0]))

    w1p = pad2(w1, in_p, hid_pad).astype(jnp.bfloat16)
    w2p = pad2(w2, hid_pad, out_p).astype(jnp.bfloat16)
    b1p = pad1(b1, hid_pad).astype(jnp.float32).reshape(1, hid_pad)
    b2p = pad1(b2, out_p).astype(jnp.float32).reshape(1, out_p)

    meta = dict(in_dim=in_dim, out_dim=out_dim, in_p=in_p, hid_pad=hid_pad,
                out_p=out_p, th=th, vmem_cap=vmem_cap)
    return (w1p, b1p, w2p, b2p), meta


# ---------------------------------------------------------------------------
# Per-call wrapper (uses pre-converted weights).
# ---------------------------------------------------------------------------
def feed_forward_prepared(x, params, meta, *, tm=512, out_dtype=None):
    w1p, b1p, w2p, b2p = params
    B, S, in_dim = x.shape
    assert in_dim == meta["in_dim"]
    M = B * S
    in_p, hid_pad, out_p, th = meta["in_p"], meta["hid_pad"], meta["out_p"], meta["th"]
    out_dim = meta["out_dim"]
    out_dtype = x.dtype if out_dtype is None else jnp.dtype(out_dtype)

    tm_eff, m_pad = _pick_row_tile(M, tm)

    x2d = x.reshape(M, in_dim)
    if (m_pad, in_p) != (M, in_dim):      # skip the pad pass when already dense
        x2d = jnp.pad(x2d, ((0, m_pad - M), (0, in_p - in_dim)))

    grid = (m_pad // tm_eff, hid_pad // th)

    est = _vmem_estimate(tm_eff, in_p, th, out_p,
                         x.dtype.itemsize, jnp.dtype(out_dtype).itemsize)
    vmem_cap = meta.get("vmem_cap", 64 << 20)
    vmem_limit = int(min(max(est * 5 // 4 + (4 << 20), 32 << 20),
                         vmem_cap - (8 << 20)))

    out = pl.pallas_call(
        _ffn_kernel,
        out_shape=jax.ShapeDtypeStruct((m_pad, out_p), out_dtype),
        grid_spec=pltpu.PrefetchScalarGridSpec(
            num_scalar_prefetch=0,
            grid=grid,
            in_specs=[
                pl.BlockSpec((tm_eff, in_p), lambda i, k: (i, 0)),   # x tile
                pl.BlockSpec((in_p, th), lambda i, k: (0, k)),       # W1 tile
                pl.BlockSpec((1, th), lambda i, k: (0, k)),          # b1 tile
                pl.BlockSpec((th, out_p), lambda i, k: (k, 0)),      # W2 tile
                pl.BlockSpec((1, out_p), lambda i, k: (0, 0)),       # b2
            ],
            out_specs=pl.BlockSpec((tm_eff, out_p), lambda i, k: (i, 0)),
            scratch_shapes=[pltpu.VMEM((tm_eff, out_p), jnp.float32)],
        ),
        compiler_params=pltpu.CompilerParams(
            dimension_semantics=("parallel", "arbitrary"),
            vmem_limit_bytes=vmem_limit,
        ),
    )(x2d, w1p, b1p, w2p, b2p)

    if (m_pad, out_p) != (M, out_dim):
        out = out[:M, :out_dim]
    return out.reshape(B, S, out_dim)


def feed_forward(x, w1, b1, w2, b2, *, tm=512):
    """One-shot convenience wrapper (prep + call).  For repeated inference,
    call prepare_ffn_params once and reuse feed_forward_prepared."""
    params, meta = prepare_ffn_params(
        w1, b1, w2, b2, tm_hint=tm,
        x_bytes=x.dtype.itemsize, out_bytes=x.dtype.itemsize)
    return feed_forward_prepared(x, params, meta, tm=tm)


def feed_forward_ref(x, w1, b1, w2, b2):
    """Reference with the same bf16-operand / f32-accumulate numerics."""
    xb = x.astype(jnp.bfloat16)
    w1b = w1.astype(jnp.bfloat16)
    w2b = w2.astype(jnp.bfloat16)
    h = jnp.einsum("bsi,ih->bsh", xb, w1b,
                   preferred_element_type=jnp.float32) + b1
    h = jnp.maximum(h, 0.0)
    y = jnp.einsum("bsh,ho->bso", h.astype(jnp.bfloat16), w2b,
                   preferred_element_type=jnp.float32) + b2
    return y.astype(x.dtype)


if __name__ == "__main__":
    # Module-default channel sizes (in_dim=256, dim_feedforward=1024,
    # out_dim defaults to in_dim); small batch/sequence.
    B, S = 2, 512
    in_dim, hidden, out_dim = 256, 1024, 256

    key = jax.random.PRNGKey(0)
    kx, kw1, kb1, kw2, kb2 = jax.random.split(key, 5)

    x = jax.random.normal(kx, (B, S, in_dim), dtype=jnp.float32)
    # Deterministic "xavier-like" init (synthetic, not a checkpoint load).
    w1 = jax.random.normal(kw1, (in_dim, hidden), dtype=jnp.float32) * (1.0 / in_dim) ** 0.5
    b1 = jax.random.normal(kb1, (hidden,), dtype=jnp.float32) * 0.01
    w2 = jax.random.normal(kw2, (hidden, out_dim), dtype=jnp.float32) * (1.0 / hidden) ** 0.5
    b2 = jax.random.normal(kb2, (out_dim,), dtype=jnp.float32) * 0.01

    # One-time weight prep (pad only if needed + bf16 cast), hoisted out of the
    # per-call path.
    params, meta = prepare_ffn_params(w1, b1, w2, b2, tm_hint=512)
    params = jax.block_until_ready(params)

    y = feed_forward_prepared(x, params, meta, tm=512)
    y = jax.block_until_ready(y)

    y_ref = feed_forward_ref(x, w1, b1, w2, b2)
    assert y.shape == (B, S, out_dim)
    assert jnp.allclose(y, y_ref, atol=5e-3, rtol=5e-3), "mismatch vs reference"

    print("KERNEL_OK")
</pallas_src>

<mosaic_0001>
module attributes {stable_mosaic.version = 11 : i64} {
  func.func @_ffn_kernel(%arg0: i32, %arg1: i32, %arg2: memref<512x256xf32, #tpu.memory_space<vmem>>, %arg3: memref<256x1024xbf16, #tpu.memory_space<vmem>>, %arg4: memref<1x1024xf32, #tpu.memory_space<vmem>>, %arg5: memref<1024x256xbf16, #tpu.memory_space<vmem>>, %arg6: memref<1x256xf32, #tpu.memory_space<vmem>>, %arg7: memref<512x256xf32, #tpu.memory_space<vmem>>, %arg8: memref<512x256xf32, #tpu.memory_space<vmem>>) attributes {dimension_semantics = [#tpu.dimension_semantics<parallel>, #tpu.dimension_semantics<arbitrary>], iteration_bounds = array<i64: 2, 1>, scalar_prefetch = 0 : i64, scratch_operands = 1 : i64, tpu.core_type = #tpu.core_type<tc>, window_params = [{transform_indices = @transform_0, window_bounds = array<i64: 512, 256>}, {transform_indices = @transform_1, window_bounds = array<i64: 256, 1024>}, {transform_indices = @transform_2, window_bounds = array<i64: 1, 1024>}, {transform_indices = @transform_3, window_bounds = array<i64: 1024, 256>}, {pipeline_mode = #tpu.pipeline_mode<synchronous>, transform_indices = @transform_4, window_bounds = array<i64: 1, 256>}, {transform_indices = @transform_5, window_bounds = array<i64: 512, 256>}]} {
    %c0_i32 = arith.constant 0 : i32
    %0 = arith.cmpi eq, %arg1, %c0_i32 : i32
    %1 = arith.extui %0 : i1 to i32
    %c0_i32_0 = arith.constant 0 : i32
    %2 = arith.cmpi ne, %1, %c0_i32_0 : i32
    scf.if %2 {
      %cst_16 = arith.constant 0.000000e+00 : f32
      %21 = vector.broadcast %cst_16 : f32 to vector<512x256xf32>
      %c0_17 = arith.constant 0 : index
      %c0_18 = arith.constant 0 : index
      %22 = vector.load %arg8[%c0_17, %c0_18] : memref<512x256xf32, #tpu.memory_space<vmem>>, vector<512x256xf32>
      tpu.vector_store %arg8[%c0_17, %c0_18], %21 {strides = array<i32>} : memref<512x256xf32, #tpu.memory_space<vmem>>, vector<512x256xf32>,
    } else {
    }
    %c0 = arith.constant 0 : index
    %c0_1 = arith.constant 0 : index
    %3 = vector.load %arg2[%c0, %c0_1] : memref<512x256xf32, #tpu.memory_space<vmem>>, vector<512x256xf32>
    %4 = arith.truncf %3 : vector<512x256xf32> to vector<512x256xbf16>
    %c0_2 = arith.constant 0 : index
    %c0_3 = arith.constant 0 : index
    %5 = vector.load %arg3[%c0_2, %c0_3] : memref<256x1024xbf16, #tpu.memory_space<vmem>>, vector<256x1024xbf16>
    %cst = arith.constant dense<0.000000e+00> : vector<512x1024xf32>
    %6 = tpu.matmul %4, %5, %cst {dimension_numbers = #tpu.dot_dimension_numbers<[1], [0], [0], [1], [0, 0, 1, 1], [], []>} : vector<512x256xbf16>, vector<256x1024xbf16>, vector<512x1024xf32> -> vector<512x1024xf32>
    %c0_4 = arith.constant 0 : index
    %c0_5 = arith.constant 0 : index
    %7 = vector.load %arg4[%c0_4, %c0_5] : memref<1x1024xf32, #tpu.memory_space<vmem>>, vector<1x1024xf32>
    %8 = vector.broadcast %7 : vector<1x1024xf32> to vector<512x1024xf32>
    %9 = arith.addf %6, %8 : vector<512x1024xf32>
    %cst_6 = arith.constant 0.000000e+00 : f32
    %10 = vector.broadcast %cst_6 : f32 to vector<512x1024xf32>
    %11 = arith.maximumf %9, %10 : vector<512x1024xf32>
    %c0_7 = arith.constant 0 : index
    %c0_8 = arith.constant 0 : index
    %12 = vector.load %arg8[%c0_7, %c0_8] : memref<512x256xf32, #tpu.memory_space<vmem>>, vector<512x256xf32>
    %13 = arith.truncf %11 : vector<512x1024xf32> to vector<512x1024xbf16>
    %c0_9 = arith.constant 0 : index
    %c0_10 = arith.constant 0 : index
    %14 = vector.load %arg5[%c0_9, %c0_10] : memref<1024x256xbf16, #tpu.memory_space<vmem>>, vector<1024x256xbf16>
    %cst_11 = arith.constant dense<0.000000e+00> : vector<512x256xf32>
    %15 = tpu.matmul %13, %14, %cst_11 {dimension_numbers = #tpu.dot_dimension_numbers<[1], [0], [0], [1], [0, 0, 1, 1], [], []>} : vector<512x1024xbf16>, vector<1024x256xbf16>, vector<512x256xf32> -> vector<512x256xf32>
    %16 = arith.addf %12, %15 : vector<512x256xf32>
    %c0_12 = arith.constant 0 : index
    %c0_13 = arith.constant 0 : index
    %17 = vector.load %arg8[%c0_12, %c0_13] : memref<512x256xf32, #tpu.memory_space<vmem>>, vector<512x256xf32>
    tpu.vector_store %arg8[%c0_12, %c0_13], %16 {strides = array<i32>} : memref<512x256xf32, #tpu.memory_space<vmem>>, vector<512x256xf32>,
    %c0_i32_14 = arith.constant 0 : i32
    %18 = arith.cmpi eq, %arg1, %c0_i32_14 : i32
    %19 = arith.extui %18 : i1 to i32
    %c0_i32_15 = arith.constant 0 : i32
    %20 = arith.cmpi ne, %19, %c0_i32_15 : i32
    scf.if %20 {
      %c0_16 = arith.constant 0 : index
      %c0_17 = arith.constant 0 : index
      %21 = vector.load %arg8[%c0_16, %c0_17] : memref<512x256xf32, #tpu.memory_space<vmem>>, vector<512x256xf32>
      %c0_18 = arith.constant 0 : index
      %c0_19 = arith.constant 0 : index
      %22 = vector.load %arg6[%c0_18, %c0_19] : memref<1x256xf32, #tpu.memory_space<vmem>>, vector<1x256xf32>
      %23 = vector.broadcast %22 : vector<1x256xf32> to vector<512x256xf32>
      %24 = arith.addf %21, %23 : vector<512x256xf32>
      %c0_20 = arith.constant 0 : index
      %c0_21 = arith.constant 0 : index
      %25 = vector.load %arg7[%c0_20, %c0_21] : memref<512x256xf32, #tpu.memory_space<vmem>>, vector<512x256xf32>
      tpu.vector_store %arg7[%c0_20, %c0_21], %24 {strides = array<i32>} : memref<512x256xf32, #tpu.memory_space<vmem>>, vector<512x256xf32>,
    } else {
    }
    return
  }
  func.func @transform_0(%arg0: i32, %arg1: i32) -> (i32, i32) {
    %c0_i32 = arith.constant 0 : i32
    %c0_i32_0 = arith.constant 0 : i32
    return %arg0, %c0_i32 : i32, i32
  }
  func.func @transform_1(%arg0: i32, %arg1: i32) -> (i32, i32) {
    %c0_i32 = arith.constant 0 : i32
    %c0_i32_0 = arith.constant 0 : i32
    return %c0_i32, %arg1 : i32, i32
  }
  func.func @transform_2(%arg0: i32, %arg1: i32) -> (i32, i32) {
    %c0_i32 = arith.constant 0 : i32
    %c0_i32_0 = arith.constant 0 : i32
    return %c0_i32, %arg1 : i32, i32
  }
  func.func @transform_3(%arg0: i32, %arg1: i32) -> (i32, i32) {
    %c0_i32 = arith.constant 0 : i32
    %c0_i32_0 = arith.constant 0 : i32
    return %arg1, %c0_i32 : i32, i32
  }
  func.func @transform_4(%arg0: i32, %arg1: i32) -> (i32, i32) {
    %c0_i32 = arith.constant 0 : i32
    %c0_i32_0 = arith.constant 0 : i32
    %c0_i32_1 = arith.constant 0 : i32
    return %c0_i32, %c0_i32_0 : i32, i32
  }
  func.func @transform_5(%arg0: i32, %arg1: i32) -> (i32, i32) {
    %c0_i32 = arith.constant 0 : i32
    %c0_i32_0 = arith.constant 0 : i32
    return %arg0, %c0_i32 : i32, i32
  }
}

</mosaic_0001>

<llo_original>
// kernel: tpu_custom_call.1
$region0: #{tpu_custom_call.1}
  #allocation0 [shape = 'u32[]', space=smem, size = 0x4, offset = 0x4, fixed_abs, tag = 'smem constant byte address 0x4 - core index']
  #allocation1 [shape = 'u32[144,128]{1,0:T(1,128)}', space=vmem, size = 0x12000, scoped, tag = 'internal scratch']
  #allocation2 [shape = 'f32[512,256]{1,0:T(8,128)}', space=vmem, size = 0x80000, scoped, tag = 'scratch operand']
  %s0 = inlined_call_operand.hbm [shape: f32[1024,256], index: 0, kind: input, shape index: {}]
  %s1 = inlined_call_operand.hbm [shape: bf16[256,1024], index: 1, kind: input, shape index: {}]
  %s2 = inlined_call_operand.hbm [shape: f32[1,1024], index: 2, kind: input, shape index: {}]
  %s3 = inlined_call_operand.hbm [shape: bf16[1024,256], index: 3, kind: input, shape index: {}]
  %s4 = inlined_call_operand.vmem [shape: f32[1,256], index: 4, kind: input, shape index: {}]
  %s5 = inlined_call_operand.hbm [shape: f32[1024,256], index: 5, kind: output, shape index: {}]
  %s6 = sld [smem:[#allocation0]]
  $region77: #{tpu_custom_call.1} parent=0
    _
  %s8 = ssub.s32 1, %s6
  %s9 = scalar_select 0, %s8, %s6
  $region1: #{tpu_custom_call.1} parent=0
    #allocation3 [shape = 'u8[1048576]{0}', space=vmem, size = 0x100000, scoped, tag = 'input window, operand 0']
    #allocation4 [shape = 's32[2]{0}', space=sflag, size = 0x8, scoped, tag = 'scoped memory for tpu_custom_call.1']
    #allocation5 [shape = 's32[2]{0}', space=sflag, size = 0x8, scoped, tag = 'scoped memory for tpu_custom_call.1']
    #allocation6 [shape = 'u8[524288]{0}', space=vmem, size = 0x80000, scoped, tag = 'input window, operand 1, single buffered']
    #allocation7 [shape = 's32[1]{0}', space=sflag, size = 0x4, scoped, tag = 'scoped memory for tpu_custom_call.1']
    #allocation8 [shape = 'u8[4096]{0}', space=vmem, size = 0x1000, scoped, tag = 'input window, operand 2, single buffered']
    #allocation9 [shape = 'u8[524288]{0}', space=vmem, size = 0x80000, scoped, tag = 'input window, operand 3, single buffered']
    #allocation10 [shape = 's32[1]{0}', space=sflag, size = 0x4, scoped, tag = 'scoped memory for tpu_custom_call.1']
    #allocation11 [shape = 'u8[1048576]{0}', space=vmem, size = 0x100000, scoped, tag = 'output window, operand 0']
    %10 = vsyncpa [#allocation4], 0
    %s11 = scalar_lea.sflag [#allocation4], 1
    %12 = vsyncpa %s11, 0
    %13 = vsyncpa [#allocation7], 0
    %14 = vsyncpa [#allocation10], 0
    %15 = vsyncpa [#allocation5], 0
    %s16 = scalar_lea.sflag [#allocation5], 1
    %17 = vsyncpa %s16, 0
    loop: start=0, step=1, limit=4
    $region2: #{tpu_custom_call.1} parent=1 // loop_pre_header
      _
    $region3: #{tpu_custom_call.1} parent=1 // loop_header
      %s19 = sphi 0, %s23
      %p20 = scmp.ge.s32.totalorder %s19, 4
      %s26 = sphi 0, %s38
      %s27 = sphi 0, %s34
      %s28 = sphi 0, %s26
      %s29 = sphi 0, %s27
      %s30 = sphi 0, %s28
      %s31 = sphi 0, %s29
      %s41 = sphi 0, %s43
      %s44 = sphi 0, %s41
      %s45 = sphi 0, %s44
      %s61 = sphi 0, %s45
      %s67 = sphi 0, %s69
      %s70 = sphi 0, %s67
      %s71 = sphi 0, %s70
      %s87 = sphi 0, %s71
      %s93 = sphi 0, %s95
      %s96 = sphi 0, %s93
      %s97 = sphi 0, %s96
      %s113 = sphi 0, %s97
      %s119 = sphi 0, %s121
      %s122 = sphi 0, %s119
      %s123 = sphi 0, %s122
      %s139 = sphi 0, %s123
      %s143 = sphi 0, %s143
      %s145 = sphi 0, %s143
      %s146 = sphi 0, %s145
      %s160 = sphi 0, %s146
      %s166 = sphi 0, %s168
      %s169 = sphi 0, %s166
      %s170 = sphi 0, %s169
      %s186 = sphi 0, %s170
    $region4: #{tpu_custom_call.1} parent=1 // loop_header_branch
      %22 = sbr.rel (%p20) target = $region8
    $region5: #{tpu_custom_call.1} parent=1 // loop_body
      %s24 = ssub.s32 %s19, 1
      %s25 = ssub.s32 %s19, 2
      %s32 = sadd.s32 1, %s27
      %p33 = scmp.ge.s32.totalorder %s32, 1
      %s34 = scalar_select %p33, 0, %s32
      %s35 = sadd.s32 1, %s26
      %s36 = scalar_select %p33, %s35, %s26
      %p37 = scmp.ge.s32.totalorder %s36, 2
      %s38 = scalar_select %p37, 0, %s36
      %s39 = ssub.s32 %s26, %s38
      %p40 = scmp.eq.s32.totalorder %s39, 0
      %s42 = sadd.s32 %s41, 1
      %s43 = scalar_select %p40, %s41, %s42
      %p46 = pneg %p40
      %p47 = scmp.eq.s32.totalorder %s19, 1
      %p48 = por %p46, %p47
      %p49 = scmp.ne.s32.totalorder %s41, %s44
      %p50 = scmp.eq.s32.totalorder %s19, 0
      %p51 = por %p49, %p50
      %p52 = scmp.ne.s32.totalorder %s41, %s44
      %p53 = scmp.eq.s32.totalorder %s24, 1
      %p54 = por %p52, %p53
      %p55 = scmp.ne.s32.totalorder %s44, %s45
      %p56 = scmp.eq.s32.totalorder %s24, 0
      %p57 = por %p55, %p56
      %p58 = scmp.ne.s32.totalorder %s44, %s45
      %p59 = scmp.eq.s32.totalorder %s25, 1
      %p60 = por %p58, %p59
      %p62 = scmp.ne.s32.totalorder %s45, %s61
      %p63 = scmp.eq.s32.totalorder %s25, 0
      %p64 = por %p62, %p63
      %s65 = ssub.s32 %s27, %s34
      %p66 = scmp.eq.s32.totalorder %s65, 0
      %s68 = sadd.s32 %s67, 1
      %s69 = scalar_select %p66, %s67, %s68
      %p72 = pneg %p66
      %p73 = scmp.eq.s32.totalorder %s19, 1
      %p74 = por %p72, %p73
      %p75 = scmp.ne.s32.totalorder %s67, %s70
      %p76 = scmp.eq.s32.totalorder %s19, 0
      %p77 = por %p75, %p76
      %p78 = scmp.ne.s32.totalorder %s67, %s70
      %p79 = scmp.eq.s32.totalorder %s24, 1
      %p80 = por %p78, %p79
      %p81 = scmp.ne.s32.totalorder %s70, %s71
      %p82 = scmp.eq.s32.totalorder %s24, 0
      %p83 = por %p81, %p82
      %p84 = scmp.ne.s32.totalorder %s70, %s71
      %p85 = scmp.eq.s32.totalorder %s25, 1
      %p86 = por %p84, %p85
      %p88 = scmp.ne.s32.totalorder %s71, %s87
      %p89 = scmp.eq.s32.totalorder %s25, 0
      %p90 = por %p88, %p89
      %s91 = ssub.s32 %s27, %s34
      %p92 = scmp.eq.s32.totalorder %s91, 0
      %s94 = sadd.s32 %s93, 1
      %s95 = scalar_select %p92, %s93, %s94
      %p98 = pneg %p92
      %p99 = scmp.eq.s32.totalorder %s19, 1
      %p100 = por %p98, %p99
      %p101 = scmp.ne.s32.totalorder %s93, %s96
      %p102 = scmp.eq.s32.totalorder %s19, 0
      %p103 = por %p101, %p102
      %p104 = scmp.ne.s32.totalorder %s93, %s96
      %p105 = scmp.eq.s32.totalorder %s24, 1
      %p106 = por %p104, %p105
      %p107 = scmp.ne.s32.totalorder %s96, %s97
      %p108 = scmp.eq.s32.totalorder %s24, 0
      %p109 = por %p107, %p108
      %p110 = scmp.ne.s32.totalorder %s96, %s97
      %p111 = scmp.eq.s32.totalorder %s25, 1
      %p112 = por %p110, %p111
      %p114 = scmp.ne.s32.totalorder %s97, %s113
      %p115 = scmp.eq.s32.totalorder %s25, 0
      %p116 = por %p114, %p115
      %s117 = ssub.s32 %s27, %s34
      %p118 = scmp.eq.s32.totalorder %s117, 0
      %s120 = sadd.s32 %s119, 1
      %s121 = scalar_select %p118, %s119, %s120
      %p124 = pneg %p118
      %p125 = scmp.eq.s32.totalorder %s19, 1
      %p126 = por %p124, %p125
      %p127 = scmp.ne.s32.totalorder %s119, %s122
      %p128 = scmp.eq.s32.totalorder %s19, 0
      %p129 = por %p127, %p128
      %p130 = scmp.ne.s32.totalorder %s119, %s122
      %p131 = scmp.eq.s32.totalorder %s24, 1
      %p132 = por %p130, %p131
      %p133 = scmp.ne.s32.totalorder %s122, %s123
      %p134 = scmp.eq.s32.totalorder %s24, 0
      %p135 = por %p133, %p134
      %p136 = scmp.ne.s32.totalorder %s122, %s123
      %p137 = scmp.eq.s32.totalorder %s25, 1
      %p138 = por %p136, %p137
      %p140 = scmp.ne.s32.totalorder %s123, %s139
      %p141 = scmp.eq.s32.totalorder %s25, 0
      %p142 = por %p140, %p141
      %s144 = sadd.s32 %s143, 1
      %p147 = scmp.eq.s32.totalorder %s19, 1
      %p148 = scmp.ne.s32.totalorder %s143, %s145
      %p149 = scmp.eq.s32.totalorder %s19, 0
      %p150 = por %p148, %p149
      %p151 = scmp.ne.s32.totalorder %s143, %s145
      %p152 = scmp.eq.s32.totalorder %s24, 1
      %p153 = por %p151, %p152
      %p154 = scmp.ne.s32.totalorder %s145, %s146
      %p155 = scmp.eq.s32.totalorder %s24, 0
      %p156 = por %p154, %p155
      %p157 = scmp.ne.s32.totalorder %s145, %s146
      %p158 = scmp.eq.s32.totalorder %s25, 1
      %p159 = por %p157, %p158
      %p161 = scmp.ne.s32.totalorder %s146, %s160
      %p162 = scmp.eq.s32.totalorder %s25, 0
      %p163 = por %p161, %p162
      %s164 = ssub.s32 %s26, %s38
      %p165 = scmp.eq.s32.totalorder %s164, 0
      %s167 = sadd.s32 %s166, 1
      %s168 = scalar_select %p165, %s166, %s167
      %p171 = pneg %p165
      %p172 = scmp.eq.s32.totalorder %s19, 1
      %p173 = por %p171, %p172
      %p174 = scmp.ne.s32.totalorder %s166, %s169
      %p175 = scmp.eq.s32.totalorder %s19, 0
      %p176 = por %p174, %p175
      %p177 = scmp.ne.s32.totalorder %s166, %s169
      %p178 = scmp.eq.s32.totalorder %s24, 1
      %p179 = por %p177, %p178
      %p180 = scmp.ne.s32.totalorder %s169, %s170
      %p181 = scmp.eq.s32.totalorder %s24, 0
      %p182 = por %p180, %p181
      %p183 = scmp.ne.s32.totalorder %s169, %s170
      %p184 = scmp.eq.s32.totalorder %s25, 1
      %p185 = por %p183, %p184
      %p187 = scmp.ne.s32.totalorder %s170, %s186
      %p188 = scmp.eq.s32.totalorder %s25, 0
      %p189 = por %p187, %p188
      %p190 = scmp.le.s32.totalorder 1, %s19
      %p191 = scmp.lt.s32.totalorder %s19, 3
      %p192 = pnand %p190, %p191
      %p193 = pneg %p192
      // Predicated region
      $region9: #{tpu_custom_call.1} parent=5 // pred_check
        _
      $region10: #{tpu_custom_call.1} parent=5 // pred_check_branch
        %195 = sbr.rel (%p192) target = $region12
      $region11: #{tpu_custom_call.1} parent=5 // pred_region
        %s196 = ssub.s32 %s19, 1
        // Predicated region
        $region13: #{tpu_custom_call.1} parent=11 // pred_check
          %p197 = pneg %p83
        $region14: #{tpu_custom_call.1} parent=11 // pred_check_branch
          %199 = sbr.rel (%p197) target = $region16
        $region15: #{tpu_custom_call.1} parent=11 // pred_region
          %s200 = smul.u32 8, %s29
          %s202 = ssub.s32 16384, 16384
          %203 = vsyncadd [#allocation7], %s202
          %s204 = smul.addr %s200, 64
          %s205 = scalar_lea.hbm %s1, %s204
          %s206 = sshll.u32 [#allocation6], 4
          %s207 = int_to_ptr.vmem [resolvable:$true] %s206
          %212 = dma.hbm_to_vmem [thread:$0]  %s205, 16384, %s207, [#allocation7], 512, 512, 32
        $region16: #{tpu_custom_call.1} parent=11 // pred_fallthru
          _
        // Predicated region
        $region17: #{tpu_custom_call.1} parent=11 // pred_check
          %p213 = pneg %p109
        $region18: #{tpu_custom_call.1} parent=11 // pred_check_branch
          %215 = sbr.rel (%p213) target = $region20
        $region19: #{tpu_custom_call.1} parent=11 // pred_region
          %s216 = smul.u32 8, %s29
          %s218 = ssub.s32 128, 128
          %219 = vsyncadd [#allocation7], %s218
          %s220 = smul.addr %s216, 16
          %s221 = scalar_lea.hbm %s2, %s220
          %s223 = sshll.u32 [#allocation8], 4
          %s224 = int_to_ptr.vmem [resolvable:$true] %s223
          %226 = dma.hbm_to_vmem [thread:$0]  %s221, 128, %s224, [#allocation7]
        $region20: #{tpu_custom_call.1} parent=11 // pred_fallthru
          _
        // Predicated region
        $region21: #{tpu_custom_call.1} parent=11 // pred_check
          %p227 = pneg %p135
        $region22: #{tpu_custom_call.1} parent=11 // pred_check_branch
          %229 = sbr.rel (%p227) target = $region24
        $region23: #{tpu_custom_call.1} parent=11 // pred_region
          %s230 = smul.u32 128, %s29
          %s232 = ssub.s32 16384, 16384
          %233 = vsyncadd [#allocation10], %s232
          %s234 = smul.addr %s230, 2
          %s235 = smul.addr %s234, 64
          %s236 = scalar_lea.hbm %s3, %s235
          %s237 = sshll.u32 [#allocation9], 4
          %s238 = int_to_ptr.vmem [resolvable:$true] %s237
          %243 = dma.hbm_to_vmem [thread:$0]  %s236, 16384, %s238, [#allocation10], 128, 128, 8
        $region24: #{tpu_custom_call.1} parent=11 // pred_fallthru
          _
        // Predicated region
        $region25: #{tpu_custom_call.1} parent=11 // pred_check
          %p244 = pneg %p156
        $region26: #{tpu_custom_call.1} parent=11 // pred_check_branch
          %246 = sbr.rel (%p244) target = $region28
        $region27: #{tpu_custom_call.1} parent=11 // pred_region
          _
        $region28: #{tpu_custom_call.1} parent=11 // pred_fallthru
          _
      $region12: #{tpu_custom_call.1} parent=5 // pred_fallthru
        _
      %p247 = scmp.lt.s32.totalorder %s19, 2
      // Predicated region
      $region29: #{tpu_custom_call.1} parent=5 // pred_check
        %p248 = pneg %p247
      $region30: #{tpu_custom_call.1} parent=5 // pred_check_branch
        %250 = sbr.rel (%p248) target = $region32
      $region31: #{tpu_custom_call.1} parent=5 // pred_region
        // Predicated region
        $region33: #{tpu_custom_call.1} parent=31 // pred_check
          %p251 = pneg %p51
        $region34: #{tpu_custom_call.1} parent=31 // pred_check_branch
          %253 = sbr.rel (%p251) target = $region36
        $region35: #{tpu_custom_call.1} parent=31 // pred_region
          %s254 = sand.u32 %s41, 1
          %s255 = scalar_lea.sflag [#allocation4], %s254
          %s256 = sand.u32 %s41, 1
          %s257 = smul.addr %s256, 1024
          %s258 = scalar_lea.vmem [#allocation3], %s257
          %s259 = smul.u32 64, %s26
          %s261 = ssub.s32 16384, 16384
          %262 = vsyncadd %s255, %s261
          %s263 = smul.addr %s259, 2
          %s264 = smul.addr %s263, 128
          %s265 = scalar_lea.hbm %s0, %s264
          %s266 = sshll.u32 %s258, 4
          %s267 = int_to_ptr.vmem [resolvable:$true] %s266
          %272 = dma.hbm_to_vmem [thread:$0]  %s265, 16384, %s267, %s255, 256, 256, 16
        $region36: #{tpu_custom_call.1} parent=31 // pred_fallthru
          _
      $region32: #{tpu_custom_call.1} parent=5 // pred_fallthru
        _
      %p273 = scmp.le.s32.totalorder 1, %s19
      %p274 = scmp.lt.s32.totalorder %s19, 3
      %p275 = pnand %p273, %p274
      %p276 = pneg %p275
      // Predicated region
      $region37: #{tpu_custom_call.1} parent=5 // pred_check
        _
      $region38: #{tpu_custom_call.1} parent=5 // pred_check_branch
        %278 = sbr.rel (%p275) target = $region40
      $region39: #{tpu_custom_call.1} parent=5 // pred_region
        %s279 = ssub.s32 %s19, 1
        %s280 = sand.u32 %s44, 1
        %s281 = scalar_lea.sflag [#allocation4], %s280
        %s282 = sand.u32 %s44, 1
        %s283 = smul.addr %s282, 1024
        %s284 = scalar_lea.vmem [#allocation3], %s283
        // Predicated region
        $region41: #{tpu_custom_call.1} parent=39 // pred_check
          %p285 = pneg %p57
        $region42: #{tpu_custom_call.1} parent=39 // pred_check_branch
          %287 = sbr.rel (%p285) target = $region44
        $region43: #{tpu_custom_call.1} parent=39 // pred_region
          %288 = dma.done %s281, 16384
        $region44: #{tpu_custom_call.1} parent=39 // pred_fallthru
          _
        // Predicated region
        $region45: #{tpu_custom_call.1} parent=39 // pred_check
          %p289 = pneg %p83
        $region46: #{tpu_custom_call.1} parent=39 // pred_check_branch
          %291 = sbr.rel (%p289) target = $region48
        $region47: #{tpu_custom_call.1} parent=39 // pred_region
          %292 = dma.done [#allocation7], 16384
        $region48: #{tpu_custom_call.1} parent=39 // pred_fallthru
          _
        // Predicated region
        $region49: #{tpu_custom_call.1} parent=39 // pred_check
          %p293 = pneg %p109
        $region50: #{tpu_custom_call.1} parent=39 // pred_check_branch
          %295 = sbr.rel (%p293) target = $region52
        $region51: #{tpu_custom_call.1} parent=39 // pred_region
          %296 = dma.done [#allocation7], 128
        $region52: #{tpu_custom_call.1} parent=39 // pred_fallthru
          _
        // Predicated region
        $region53: #{tpu_custom_call.1} parent=39 // pred_check
          %p297 = pneg %p135
        $region54: #{tpu_custom_call.1} parent=39 // pred_check_branch
          %299 = sbr.rel (%p297) target = $region56
        $region55: #{tpu_custom_call.1} parent=39 // pred_region
          %300 = dma.done [#allocation10], 16384
        $region56: #{tpu_custom_call.1} parent=39 // pred_fallthru
          _
        %s301 = sand.u32 %s44, 1
        %s302 = scalar_lea.sflag [#allocation4], %s301
        %s303 = sand.u32 %s44, 1
        %s304 = smul.addr %s303, 1024
        %s305 = scalar_lea.vmem [#allocation3], %s304
        %p306 = pneg %p57
        %p307 = pneg %p54
        %p308 = pneg %p83
        %p309 = pneg %p80
        %p310 = pneg %p109
        %p311 = pneg %p106
        %p312 = pneg %p135
        %p313 = pneg %p132
        %p314 = pneg %p156
        %p315 = pneg %p153
        %p316 = pneg %p182
        %p317 = pneg %p179
        %s318 = sand.u32 %s169, 1
        %s319 = scalar_lea.sflag [#allocation5], %s318
        %s320 = sand.u32 %s169, 1
        %s321 = smul.addr %s320, 1024
        %s322 = scalar_lea.vmem [#allocation11], %s321
        %s323 = smul.u32 64, %s28
        %s324 = smul.u32 8, %s29
        %s325 = smul.u32 8, %s29
        %s326 = smul.u32 128, %s29
        %s327 = smul.u32 64, %s28
        %p328 = scmp.eq.s32.totalorder %s29, 0
        // Predicated region
        $region57: #{tpu_custom_call.1} parent=39 // pred_check
          %p329 = pneg %p328
        $region58: #{tpu_custom_call.1} parent=39 // pred_check_branch
          %331 = sbr.rel (%p329) target = $region60
        $region59: #{tpu_custom_call.1} parent=39 // pred_region
          %332 = vst [vmem:[#allocation2] sm:$0xff] 0.0
          %333 = vst [vmem:[#allocation2 + $0x8] sm:$0xff] 0.0
          %334 = vst [vmem:[#allocation2 + $0x10] sm:$0xff] 0.0
          %335 = vst [vmem:[#allocation2 + $0x18] sm:$0xff] 0.0
          %336 = vst [vmem:[#allocation2 + $0x20] sm:$0xff] 0.0
          %337 = vst [vmem:[#allocation2 + $0x28] sm:$0xff] 0.0
          %338 = vst [vmem:[#allocation2 + $0x30] sm:$0xff] 0.0
          %339 = vst [vmem:[#allocation2 + $0x38] sm:$0xff] 0.0
          %340 = vst [vmem:[#allocation2 + $0x40] sm:$0xff] 0.0
          %341 = vst [vmem:[#allocation2 + $0x48] sm:$0xff] 0.0
          %342 = vst [vmem:[#allocation2 + $0x50] sm:$0xff] 0.0
          %343 = vst [vmem:[#allocation2 + $0x58] sm:$0xff] 0.0
          %344 = vst [vmem:[#allocation2 + $0x60] sm:$0xff] 0.0
          %345 = vst [vmem:[#allocation2 + $0x68] sm:$0xff] 0.0
          %346 = vst [vmem:[#allocation2 + $0x70] sm:$0xff] 0.0
          %347 = vst [vmem:[#allocation2 + $0x78] sm:$0xff] 0.0
          %348 = vst [vmem:[#allocation2 + $0x80] sm:$0xff] 0.0
          %349 = vst [vmem:[#allocation2 + $0x88] sm:$0xff] 0.0
          %350 = vst [vmem:[#allocation2 + $0x90] sm:$0xff] 0.0
          %351 = vst [vmem:[#allocation2 + $0x98] sm:$0xff] 0.0
          %352 = vst [vmem:[#allocation2 + $0xa0] sm:$0xff] 0.0
          %353 = vst [vmem:[#allocation2 + $0xa8] sm:$0xff] 0.0
          %354 = vst [vmem:[#allocation2 + $0xb0] sm:$0xff] 0.0
          %355 = vst [vmem:[#allocation2 + $0xb8] sm:$0xff] 0.0
          %356 = vst [vmem:[#allocation2 + $0xc0] sm:$0xff] 0.0
          %357 = vst [vmem:[#allocation2 + $0xc8] sm:$0xff] 0.0
          %358 = vst [vmem:[#allocation2 + $0xd0] sm:$0xff] 0.0
          %359 = vst [vmem:[#allocation2 + $0xd8] sm:$0xff] 0.0
          %360 = vst [vmem:[#allocation2 + $0xe0] sm:$0xff] 0.0
          %361 = vst [vmem:[#allocation2 + $0xe8] sm:$0xff] 0.0
          %362 = vst [vmem:[#allocation2 + $0xf0] sm:$0xff] 0.0
          %363 = vst [vmem:[#allocation2 + $0xf8] sm:$0xff] 0.0
          %364 = vst [vmem:[#allocation2 + $0x100] sm:$0xff] 0.0
          %365 = vst [vmem:[#allocation2 + $0x108] sm:$0xff] 0.0
          %366 = vst [vmem:[#allocation2 + $0x110] sm:$0xff] 0.0
          %367 = vst [vmem:[#allocation2 + $0x118] sm:$0xff] 0.0
          %368 = vst [vmem:[#allocation2 + $0x120] sm:$0xff] 0.0
          %369 = vst [vmem:[#allocation2 + $0x128] sm:$0xff] 0.0
          %370 = vst [vmem:[#allocation2 + $0x130] sm:$0xff] 0.0
          %371 = vst [vmem:[#allocation2 + $0x138] sm:$0xff] 0.0
          %372 = vst [vmem:[#allocation2 + $0x140] sm:$0xff] 0.0
          %373 = vst [vmem:[#allocation2 + $0x148] sm:$0xff] 0.0
          %374 = vst [vmem:[#allocation2 + $0x150] sm:$0xff] 0.0
          %375 = vst [vmem:[#allocation2 + $0x158] sm:$0xff] 0.0
          %376 = vst [vmem:[#allocation2 + $0x160] sm:$0xff] 0.0
          %377 = vst [vmem:[#allocation2 + $0x168] sm:$0xff] 0.0
          %378 = vst [vmem:[#allocation2 + $0x170] sm:$0xff] 0.0
          %379 = vst [vmem:[#allocation2 + $0x178] sm:$0xff] 0.0
          %380 = vst [vmem:[#allocation2 + $0x180] sm:$0xff] 0.0
          %381 = vst [vmem:[#allocation2 + $0x188] sm:$0xff] 0.0
          %382 = vst [vmem:[#allocation2 + $0x190] sm:$0xff] 0.0
          %383 = vst [vmem:[#allocation2 + $0x198] sm:$0xff] 0.0
          %384 = vst [vmem:[#allocation2 + $0x1a0] sm:$0xff] 0.0
          %385 = vst [vmem:[#allocation2 + $0x1a8] sm:$0xff] 0.0
          %386 = vst [vmem:[#allocation2 + $0x1b0] sm:$0xff] 0.0
          %387 = vst [vmem:[#allocation2 + $0x1b8] sm:$0xff] 0.0
          %388 = vst [vmem:[#allocation2 + $0x1c0] sm:$0xff] 0.0
          %389 = vst [vmem:[#allocation2 + $0x1c8] sm:$0xff] 0.0
          %390 = vst [vmem:[#allocation2 + $0x1d0] sm:$0xff] 0.0
          %391 = vst [vmem:[#allocation2 + $0x1d8] sm:$0xff] 0.0
          %392 = vst [vmem:[#allocation2 + $0x1e0] sm:$0xff] 0.0
          %393 = vst [vmem:[#allocation2 + $0x1e8] sm:$0xff] 0.0
          %394 = vst [vmem:[#allocation2 + $0x1f0] sm:$0xff] 0.0
          %395 = vst [vmem:[#allocation2 + $0x1f8] sm:$0xff] 0.0
          %396 = vst [vmem:[#allocation2 + $0x200] sm:$0xff] 0.0
          %397 = vst [vmem:[#allocation2 + $0x208] sm:$0xff] 0.0
          %398 = vst [vmem:[#allocation2 + $0x210] sm:$0xff] 0.0
          %399 = vst [vmem:[#allocation2 + $0x218] sm:$0xff] 0.0
          %400 = vst [vmem:[#allocation2 + $0x220] sm:$0xff] 0.0
          %401 = vst [vmem:[#allocation2 + $0x228] sm:$0xff] 0.0
          %402 = vst [vmem:[#allocation2 + $0x230] sm:$0xff] 0.0
          %403 = vst [vmem:[#allocation2 + $0x238] sm:$0xff] 0.0
          %404 = vst [vmem:[#allocation2 + $0x240] sm:$0xff] 0.0
          %405 = vst [vmem:[#allocation2 + $0x248] sm:$0xff] 0.0
          %406 = vst [vmem:[#allocation2 + $0x250] sm:$0xff] 0.0
          %407 = vst [vmem:[#allocation2 + $0x258] sm:$0xff] 0.0
          %408 = vst [vmem:[#allocation2 + $0x260] sm:$0xff] 0.0
          %409 = vst [vmem:[#allocation2 + $0x268] sm:$0xff] 0.0
          %410 = vst [vmem:[#allocation2 + $0x270] sm:$0xff] 0.0
          %411 = vst [vmem:[#allocation2 + $0x278] sm:$0xff] 0.0
          %412 = vst [vmem:[#allocation2 + $0x280] sm:$0xff] 0.0
          %413 = vst [vmem:[#allocation2 + $0x288] sm:$0xff] 0.0
          %414 = vst [vmem:[#allocation2 + $0x290] sm:$0xff] 0.0
          %415 = vst [vmem:[#allocation2 + $0x298] sm:$0xff] 0.0
          %416 = vst [vmem:[#allocation2 + $0x2a0] sm:$0xff] 0.0
          %417 = vst [vmem:[#allocation2 + $0x2a8] sm:$0xff] 0.0
          %418 = vst [vmem:[#allocation2 + $0x2b0] sm:$0xff] 0.0
          %419 = vst [vmem:[#allocation2 + $0x2b8] sm:$0xff] 0.0
          %420 = vst [vmem:[#allocation2 + $0x2c0] sm:$0xff] 0.0
          %421 = vst [vmem:[#allocation2 + $0x2c8] sm:$0xff] 0.0
          %422 = vst [vmem:[#allocation2 + $0x2d0] sm:$0xff] 0.0
          %423 = vst [vmem:[#allocation2 + $0x2d8] sm:$0xff] 0.0
          %424 = vst [vmem:[#allocation2 + $0x2e0] sm:$0xff] 0.0
          %425 = vst [vmem:[#allocation2 + $0x2e8] sm:$0xff] 0.0
          %426 = vst [vmem:[#allocation2 + $0x2f0] sm:$0xff] 0.0
          %427 = vst [vmem:[#allocation2 + $0x2f8] sm:$0xff] 0.0
          %428 = vst [vmem:[#allocation2 + $0x300] sm:$0xff] 0.0
          %429 = vst [vmem:[#allocation2 + $0x308] sm:$0xff] 0.0
          %430 = vst [vmem:[#allocation2 + $0x310] sm:$0xff] 0.0
          %431 = vst [vmem:[#allocation2 + $0x318] sm:$0xff] 0.0
          %432 = vst [vmem:[#allocation2 + $0x320] sm:$0xff] 0.0
          %433 = vst [vmem:[#allocation2 + $0x328] sm:$0xff] 0.0
          %434 = vst [vmem:[#allocation2 + $0x330] sm:$0xff] 0.0
          %435 = vst [vmem:[#allocation2 + $0x338] sm:$0xff] 0.0
          %436 = vst [vmem:[#allocation2 + $0x340] sm:$0xff] 0.0
          %437 = vst [vmem:[#allocation2 + $0x348] sm:$0xff] 0.0
          %438 = vst [vmem:[#allocation2 + $0x350] sm:$0xff] 0.0
          %439 = vst [vmem:[#allocation2 + $0x358] sm:$0xff] 0.0
          %440 = vst [vmem:[#allocation2 + $0x360] sm:$0xff] 0.0
          %441 = vst [vmem:[#allocation2 + $0x368] sm:$0xff] 0.0
          %442 = vst [vmem:[#allocation2 + $0x370] sm:$0xff] 0.0
          %443 = vst [vmem:[#allocation2 + $0x378] sm:$0xff] 0.0
          %444 = vst [vmem:[#allocation2 + $0x380] sm:$0xff] 0.0
          %445 = vst [vmem:[#allocation2 + $0x388] sm:$0xff] 0.0
          %446 = vst [vmem:[#allocation2 + $0x390] sm:$0xff] 0.0
          %447 = vst [vmem:[#allocation2 + $0x398] sm:$0xff] 0.0
          %448 = vst [vmem:[#allocation2 + $0x3a0] sm:$0xff] 0.0
          %449 = vst [vmem:[#allocation2 + $0x3a8] sm:$0xff] 0.0
          %450 = vst [vmem:[#allocation2 + $0x3b0] sm:$0xff] 0.0
          %451 = vst [vmem:[#allocation2 + $0x3b8] sm:$0xff] 0.0
          %452 = vst [vmem:[#allocation2 + $0x3c0] sm:$0xff] 0.0
          %453 = vst [vmem:[#allocation2 + $0x3c8] sm:$0xff] 0.0
          %454 = vst [vmem:[#allocation2 + $0x3d0] sm:$0xff] 0.0
          %455 = vst [vmem:[#allocation2 + $0x3d8] sm:$0xff] 0.0
          %456 = vst [vmem:[#allocation2 + $0x3e0] sm:$0xff] 0.0
          %457 = vst [vmem:[#allocation2 + $0x3e8] sm:$0xff] 0.0
          %458 = vst [vmem:[#allocation2 + $0x3f0] sm:$0xff] 0.0
          %459 = vst [vmem:[#allocation2 + $0x3f8] sm:$0xff] 0.0
        $region60: #{tpu_custom_call.1} parent=39 // pred_fallthru
          _
        %v460 = vld [vmem:[%s284] sm:$0xff]
        %v461 = vld [vmem:[%s284 + $0x8] sm:$0xff]
        %v462 = vld [vmem:[%s284 + $0x10] sm:$0xff]
        %v463 = vld [vmem:[%s284 + $0x18] sm:$0xff]
        %v464 = vld [vmem:[%s284 + $0x20] sm:$0xff]
        %v465 = vld [vmem:[%s284 + $0x28] sm:$0xff]
        %v466 = vld [vmem:[%s284 + $0x30] sm:$0xff]
        %v467 = vld [vmem:[%s284 + $0x38] sm:$0xff]
        %v468 = vld [vmem:[%s284 + $0x40] sm:$0xff]
        %v469 = vld [vmem:[%s284 + $0x48] sm:$0xff]
        %v470 = vld [vmem:[%s284 + $0x50] sm:$0xff]
        %v471 = vld [vmem:[%s284 + $0x58] sm:$0xff]
        %v472 = vld [vmem:[%s284 + $0x60] sm:$0xff]
        %v473 = vld [vmem:[%s284 + $0x68] sm:$0xff]
        %v474 = vld [vmem:[%s284 + $0x70] sm:$0xff]
        %v475 = vld [vmem:[%s284 + $0x78] sm:$0xff]
        %v476 = vld [vmem:[%s284 + $0x80] sm:$0xff]
        %v477 = vld [vmem:[%s284 + $0x88] sm:$0xff]
        %v478 = vld [vmem:[%s284 + $0x90] sm:$0xff]
        %v479 = vld [vmem:[%s284 + $0x98] sm:$0xff]
        %v480 = vld [vmem:[%s284 + $0xa0] sm:$0xff]
        %v481 = vld [vmem:[%s284 + $0xa8] sm:$0xff]
        %v482 = vld [vmem:[%s284 + $0xb0] sm:$0xff]
        %v483 = vld [vmem:[%s284 + $0xb8] sm:$0xff]
        %v484 = vld [vmem:[%s284 + $0xc0] sm:$0xff]
        %v485 = vld [vmem:[%s284 + $0xc8] sm:$0xff]
        %v486 = vld [vmem:[%s284 + $0xd0] sm:$0xff]
        %v487 = vld [vmem:[%s284 + $0xd8] sm:$0xff]
        %v488 = vld [vmem:[%s284 + $0xe0] sm:$0xff]
        %v489 = vld [vmem:[%s284 + $0xe8] sm:$0xff]
        %v490 = vld [vmem:[%s284 + $0xf0] sm:$0xff]
        %v491 = vld [vmem:[%s284 + $0xf8] sm:$0xff]
        %v492 = vld [vmem:[%s284 + $0x100] sm:$0xff]
        %v493 = vld [vmem:[%s284 + $0x108] sm:$0xff]
        %v494 = vld [vmem:[%s284 + $0x110] sm:$0xff]
        %v495 = vld [vmem:[%s284 + $0x118] sm:$0xff]
        %v496 = vld [vmem:[%s284 + $0x120] sm:$0xff]
        %v497 = vld [vmem:[%s284 + $0x128] sm:$0xff]
        %v498 = vld [vmem:[%s284 + $0x130] sm:$0xff]
        %v499 = vld [vmem:[%s284 + $0x138] sm:$0xff]
        %v500 = vld [vmem:[%s284 + $0x140] sm:$0xff]
        %v501 = vld [vmem:[%s284 + $0x148] sm:$0xff]
        %v502 = vld [vmem:[%s284 + $0x150] sm:$0xff]
        %v503 = vld [vmem:[%s284 + $0x158] sm:$0xff]
        %v504 = vld [vmem:[%s284 + $0x160] sm:$0xff]
        %v505 = vld [vmem:[%s284 + $0x168] sm:$0xff]
        %v506 = vld [vmem:[%s284 + $0x170] sm:$0xff]
        %v507 = vld [vmem:[%s284 + $0x178] sm:$0xff]
        %v508 = vld [vmem:[%s284 + $0x180] sm:$0xff]
        %v509 = vld [vmem:[%s284 + $0x188] sm:$0xff]
        %v510 = vld [vmem:[%s284 + $0x190] sm:$0xff]
        %v511 = vld [vmem:[%s284 + $0x198] sm:$0xff]
        %v512 = vld [vmem:[%s284 + $0x1a0] sm:$0xff]
        %v513 = vld [vmem:[%s284 + $0x1a8] sm:$0xff]
        %v514 = vld [vmem:[%s284 + $0x1b0] sm:$0xff]
        %v515 = vld [vmem:[%s284 + $0x1b8] sm:$0xff]
        %v516 = vld [vmem:[%s284 + $0x1c0] sm:$0xff]
        %v517 = vld [vmem:[%s284 + $0x1c8] sm:$0xff]
        %v518 = vld [vmem:[%s284 + $0x1d0] sm:$0xff]
        %v519 = vld [vmem:[%s284 + $0x1d8] sm:$0xff]
        %v520 = vld [vmem:[%s284 + $0x1e0] sm:$0xff]
        %v521 = vld [vmem:[%s284 + $0x1e8] sm:$0xff]
        %v522 = vld [vmem:[%s284 + $0x1f0] sm:$0xff]
        %v523 = vld [vmem:[%s284 + $0x1f8] sm:$0xff]
        %v524 = vld [vmem:[%s284 + $0x200] sm:$0xff]
        %v525 = vld [vmem:[%s284 + $0x208] sm:$0xff]
        %v526 = vld [vmem:[%s284 + $0x210] sm:$0xff]
        %v527 = vld [vmem:[%s284 + $0x218] sm:$0xff]
        %v528 = vld [vmem:[%s284 + $0x220] sm:$0xff]
        %v529 = vld [vmem:[%s284 + $0x228] sm:$0xff]
        %v530 = vld [vmem:[%s284 + $0x230] sm:$0xff]
        %v531 = vld [vmem:[%s284 + $0x238] sm:$0xff]
        %v532 = vld [vmem:[%s284 + $0x240] sm:$0xff]
        %v533 = vld [vmem:[%s284 + $0x248] sm:$0xff]
        %v534 = vld [vmem:[%s284 + $0x250] sm:$0xff]
        %v535 = vld [vmem:[%s284 + $0x258] sm:$0xff]
        %v536 = vld [vmem:[%s284 + $0x260] sm:$0xff]
        %v537 = vld [vmem:[%s284 + $0x268] sm:$0xff]
        %v538 = vld [vmem:[%s284 + $0x270] sm:$0xff]
        %v539 = vld [vmem:[%s284 + $0x278] sm:$0xff]
        %v540 = vld [vmem:[%s284 + $0x280] sm:$0xff]
        %v541 = vld [vmem:[%s284 + $0x288] sm:$0xff]
        %v542 = vld [vmem:[%s284 + $0x290] sm:$0xff]
        %v543 = vld [vmem:[%s284 + $0x298] sm:$0xff]
        %v544 = vld [vmem:[%s284 + $0x2a0] sm:$0xff]
        %v545 = vld [vmem:[%s284 + $0x2a8] sm:$0xff]
        %v546 = vld [vmem:[%s284 + $0x2b0] sm:$0xff]
        %v547 = vld [vmem:[%s284 + $0x2b8] sm:$0xff]
        %v548 = vld [vmem:[%s284 + $0x2c0] sm:$0xff]
        %v549 = vld [vmem:[%s284 + $0x2c8] sm:$0xff]
        %v550 = vld [vmem:[%s284 + $0x2d0] sm:$0xff]
        %v551 = vld [vmem:[%s284 + $0x2d8] sm:$0xff]
        %v552 = vld [vmem:[%s284 + $0x2e0] sm:$0xff]
        %v553 = vld [vmem:[%s284 + $0x2e8] sm:$0xff]
        %v554 = vld [vmem:[%s284 + $0x2f0] sm:$0xff]
        %v555 = vld [vmem:[%s284 + $0x2f8] sm:$0xff]
        %v556 = vld [vmem:[%s284 + $0x300] sm:$0xff]
        %v557 = vld [vmem:[%s284 + $0x308] sm:$0xff]
        %v558 = vld [vmem:[%s284 + $0x310] sm:$0xff]
        %v559 = vld [vmem:[%s284 + $0x318] sm:$0xff]
        %v560 = vld [vmem:[%s284 + $0x320] sm:$0xff]
        %v561 = vld [vmem:[%s284 + $0x328] sm:$0xff]
        %v562 = vld [vmem:[%s284 + $0x330] sm:$0xff]
        %v563 = vld [vmem:[%s284 + $0x338] sm:$0xff]
        %v564 = vld [vmem:[%s284 + $0x340] sm:$0xff]
        %v565 = vld [vmem:[%s284 + $0x348] sm:$0xff]
        %v566 = vld [vmem:[%s284 + $0x350] sm:$0xff]
        %v567 = vld [vmem:[%s284 + $0x358] sm:$0xff]
        %v568 = vld [vmem:[%s284 + $0x360] sm:$0xff]
        %v569 = vld [vmem:[%s284 + $0x368] sm:$0xff]
        %v570 = vld [vmem:[%s284 + $0x370] sm:$0xff]
        %v571 = vld [vmem:[%s284 + $0x378] sm:$0xff]
        %v572 = vld [vmem:[%s284 + $0x380] sm:$0xff]
        %v573 = vld [vmem:[%s284 + $0x388] sm:$0xff]
        %v574 = vld [vmem:[%s284 + $0x390] sm:$0xff]
        %v575 = vld [vmem:[%s284 + $0x398] sm:$0xff]
        %v576 = vld [vmem:[%s284 + $0x3a0] sm:$0xff]
        %v577 = vld [vmem:[%s284 + $0x3a8] sm:$0xff]
        %v578 = vld [vmem:[%s284 + $0x3b0] sm:$0xff]
        %v579 = vld [vmem:[%s284 + $0x3b8] sm:$0xff]
        %v580 = vld [vmem:[%s284 + $0x3c0] sm:$0xff]
        %v581 = vld [vmem:[%s284 + $0x3c8] sm:$0xff]
        %v582 = vld [vmem:[%s284 + $0x3d0] sm:$0xff]
        %v583 = vld [vmem:[%s284 + $0x3d8] sm:$0xff]
        %v584 = vld [vmem:[%s284 + $0x3e0] sm:$0xff]
        %v585 = vld [vmem:[%s284 + $0x3e8] sm:$0xff]
        %v586 = vld [vmem:[%s284 + $0x3f0] sm:$0xff]
        %v587 = vld [vmem:[%s284 + $0x3f8] sm:$0xff]
        %v588 = vpack.c.bf16 %v462, %v460
        %v589 = vpack.c.bf16 %v463, %v461
        %v590 = vpack.c.bf16 %v466, %v464
        %v591 = vpack.c.bf16 %v467, %v465
        %v592 = vpack.c.bf16 %v470, %v468
        %v593 = vpack.c.bf16 %v471, %v469
        %v594 = vpack.c.bf16 %v474, %v472
        %v595 = vpack.c.bf16 %v475, %v473
        %v596 = vpack.c.bf16 %v478, %v476
        %v597 = vpack.c.bf16 %v479, %v477
        %v598 = vpack.c.bf16 %v482, %v480
        %v599 = vpack.c.bf16 %v483, %v481
        %v600 = vpack.c.bf16 %v486, %v484
        %v601 = vpack.c.bf16 %v487, %v485
        %v602 = vpack.c.bf16 %v490, %v488
        %v603 = vpack.c.bf16 %v491, %v489
        %v604 = vpack.c.bf16 %v494, %v492
        %v605 = vpack.c.bf16 %v495, %v493
        %v606 = vpack.c.bf16 %v498, %v496
        %v607 = vpack.c.bf16 %v499, %v497
        %v608 = vpack.c.bf16 %v502, %v500
        %v609 = vpack.c.bf16 %v503, %v501
        %v610 = vpack.c.bf16 %v506, %v504
        %v611 = vpack.c.bf16 %v507, %v505
        %v612 = vpack.c.bf16 %v510, %v508
        %v613 = vpack.c.bf16 %v511, %v509
        %v614 = vpack.c.bf16 %v514, %v512
        %v615 = vpack.c.bf16 %v515, %v513
        %v616 = vpack.c.bf16 %v518, %v516
        %v617 = vpack.c.bf16 %v519, %v517
        %v618 = vpack.c.bf16 %v522, %v520
        %v619 = vpack.c.bf16 %v523, %v521
        %v620 = vpack.c.bf16 %v526, %v524
        %v621 = vpack.c.bf16 %v527, %v525
        %v622 = vpack.c.bf16 %v530, %v528
        %v623 = vpack.c.bf16 %v531, %v529
        %v624 = vpack.c.bf16 %v534, %v532
        %v625 = vpack.c.bf16 %v535, %v533
        %v626 = vpack.c.bf16 %v538, %v536
        %v627 = vpack.c.bf16 %v539, %v537
        %v628 = vpack.c.bf16 %v542, %v540
        %v629 = vpack.c.bf16 %v543, %v541
        %v630 = vpack.c.bf16 %v546, %v544
        %v631 = vpack.c.bf16 %v547, %v545
        %v632 = vpack.c.bf16 %v550, %v548
        %v633 = vpack.c.bf16 %v551, %v549
        %v634 = vpack.c.bf16 %v554, %v552
        %v635 = vpack.c.bf16 %v555, %v553
        %v636 = vpack.c.bf16 %v558, %v556
        %v637 = vpack.c.bf16 %v559, %v557
        %v638 = vpack.c.bf16 %v562, %v560
        %v639 = vpack.c.bf16 %v563, %v561
        %v640 = vpack.c.bf16 %v566, %v564
        %v641 = vpack.c.bf16 %v567, %v565
        %v642 = vpack.c.bf16 %v570, %v568
        %v643 = vpack.c.bf16 %v571, %v569
        %v644 = vpack.c.bf16 %v574, %v572
        %v645 = vpack.c.bf16 %v575, %v573
        %v646 = vpack.c.bf16 %v578, %v576
        %v647 = vpack.c.bf16 %v579, %v577
        %v648 = vpack.c.bf16 %v582, %v580
        %v649 = vpack.c.bf16 %v583, %v581
        %v650 = vpack.c.bf16 %v586, %v584
        %v651 = vpack.c.bf16 %v587, %v585
        %v652 = vld [vmem:[#allocation6] sm:$0xff]
        %v653 = vld [vmem:[#allocation6 + $0x8] sm:$0xff]
        %v654 = vld [vmem:[#allocation6 + $0x10] sm:$0xff]
        %v655 = vld [vmem:[#allocation6 + $0x18] sm:$0xff]
        %v656 = vld [vmem:[#allocation6 + $0x20] sm:$0xff]
        %v657 = vld [vmem:[#allocation6 + $0x28] sm:$0xff]
        %v658 = vld [vmem:[#allocation6 + $0x30] sm:$0xff]
        %v659 = vld [vmem:[#allocation6 + $0x38] sm:$0xff]
        %v660 = vld [vmem:[#allocation6 + $0x40] sm:$0xff]
        %v661 = vld [vmem:[#allocation6 + $0x48] sm:$0xff]
        %v662 = vld [vmem:[#allocation6 + $0x50] sm:$0xff]
        %v663 = vld [vmem:[#allocation6 + $0x58] sm:$0xff]
        %v664 = vld [vmem:[#allocation6 + $0x60] sm:$0xff]
        %v665 = vld [vmem:[#allocation6 + $0x68] sm:$0xff]
        %v666 = vld [vmem:[#allocation6 + $0x70] sm:$0xff]
        %v667 = vld [vmem:[#allocation6 + $0x78] sm:$0xff]
        %v668 = vld [vmem:[#allocation6 + $0x80] sm:$0xff]
        %v669 = vld [vmem:[#allocation6 + $0x88] sm:$0xff]
        %v670 = vld [vmem:[#allocation6 + $0x90] sm:$0xff]
        %v671 = vld [vmem:[#allocation6 + $0x98] sm:$0xff]
        %v672 = vld [vmem:[#allocation6 + $0xa0] sm:$0xff]
        %v673 = vld [vmem:[#allocation6 + $0xa8] sm:$0xff]
        %v674 = vld [vmem:[#allocation6 + $0xb0] sm:$0xff]
        %v675 = vld [vmem:[#allocation6 + $0xb8] sm:$0xff]
        %v676 = vld [vmem:[#allocation6 + $0xc0] sm:$0xff]
        %v677 = vld [vmem:[#allocation6 + $0xc8] sm:$0xff]
        %v678 = vld [vmem:[#allocation6 + $0xd0] sm:$0xff]
        %v679 = vld [vmem:[#allocation6 + $0xd8] sm:$0xff]
        %v680 = vld [vmem:[#allocation6 + $0xe0] sm:$0xff]
        %v681 = vld [vmem:[#allocation6 + $0xe8] sm:$0xff]
        %v682 = vld [vmem:[#allocation6 + $0xf0] sm:$0xff]
        %v683 = vld [vmem:[#allocation6 + $0xf8] sm:$0xff]
        %v684 = vld [vmem:[#allocation6 + $0x100] sm:$0xff]
        %v685 = vld [vmem:[#allocation6 + $0x108] sm:$0xff]
        %v686 = vld [vmem:[#allocation6 + $0x110] sm:$0xff]
        %v687 = vld [vmem:[#allocation6 + $0x118] sm:$0xff]
        %v688 = vld [vmem:[#allocation6 + $0x120] sm:$0xff]
        %v689 = vld [vmem:[#allocation6 + $0x128] sm:$0xff]
        %v690 = vld [vmem:[#allocation6 + $0x130] sm:$0xff]
        %v691 = vld [vmem:[#allocation6 + $0x138] sm:$0xff]
        %v692 = vld [vmem:[#allocation6 + $0x140] sm:$0xff]
        %v693 = vld [vmem:[#allocation6 + $0x148] sm:$0xff]
        %v694 = vld [vmem:[#allocation6 + $0x150] sm:$0xff]
        %v695 = vld [vmem:[#allocation6 + $0x158] sm:$0xff]
        %v696 = vld [vmem:[#allocation6 + $0x160] sm:$0xff]
        %v697 = vld [vmem:[#allocation6 + $0x168] sm:$0xff]
        %v698 = vld [vmem:[#allocation6 + $0x170] sm:$0xff]
        %v699 = vld [vmem:[#allocation6 + $0x178] sm:$0xff]
        %v700 = vld [vmem:[#allocation6 + $0x180] sm:$0xff]
        %v701 = vld [vmem:[#allocation6 + $0x188] sm:$0xff]
        %v702 = vld [vmem:[#allocation6 + $0x190] sm:$0xff]
        %v703 = vld [vmem:[#allocation6 + $0x198] sm:$0xff]
        %v704 = vld [vmem:[#allocation6 + $0x1a0] sm:$0xff]
        %v705 = vld [vmem:[#allocation6 + $0x1a8] sm:$0xff]
        %v706 = vld [vmem:[#allocation6 + $0x1b0] sm:$0xff]
        %v707 = vld [vmem:[#allocation6 + $0x1b8] sm:$0xff]
        %v708 = vld [vmem:[#allocation6 + $0x1c0] sm:$0xff]
        %v709 = vld [vmem:[#allocation6 + $0x1c8] sm:$0xff]
        %v710 = vld [vmem:[#allocation6 + $0x1d0] sm:$0xff]
        %v711 = vld [vmem:[#allocation6 + $0x1d8] sm:$0xff]
        %v712 = vld [vmem:[#allocation6 + $0x1e0] sm:$0xff]
        %v713 = vld [vmem:[#allocation6 + $0x1e8] sm:$0xff]
        %v714 = vld [vmem:[#allocation6 + $0x1f0] sm:$0xff]
        %v715 = vld [vmem:[#allocation6 + $0x1f8] sm:$0xff]
        %v716 = vld [vmem:[#allocation6 + $0x200] sm:$0xff]
        %v717 = vld [vmem:[#allocation6 + $0x208] sm:$0xff]
        %v718 = vld [vmem:[#allocation6 + $0x210] sm:$0xff]
        %v719 = vld [vmem:[#allocation6 + $0x218] sm:$0xff]
        %v720 = vld [vmem:[#allocation6 + $0x220] sm:$0xff]
        %v721 = vld [vmem:[#allocation6 + $0x228] sm:$0xff]
        %v722 = vld [vmem:[#allocation6 + $0x230] sm:$0xff]
        %v723 = vld [vmem:[#allocation6 + $0x238] sm:$0xff]
        %v724 = vld [vmem:[#allocation6 + $0x240] sm:$0xff]
        %v725 = vld [vmem:[#allocation6 + $0x248] sm:$0xff]
        %v726 = vld [vmem:[#allocation6 + $0x250] sm:$0xff]
        %v727 = vld [vmem:[#allocation6 + $0x258] sm:$0xff]
        %v728 = vld [vmem:[#allocation6 + $0x260] sm:$0xff]
        %v729 = vld [vmem:[#allocation6 + $0x268] sm:$0xff]
        %v730 = vld [vmem:[#allocation6 + $0x270] sm:$0xff]
        %v731 = vld [vmem:[#allocation6 + $0x278] sm:$0xff]
        %v732 = vld [vmem:[#allocation6 + $0x280] sm:$0xff]
        %v733 = vld [vmem:[#allocation6 + $0x288] sm:$0xff]
        %v734 = vld [vmem:[#allocation6 + $0x290] sm:$0xff]
        %v735 = vld [vmem:[#allocation6 + $0x298] sm:$0xff]
        %v736 = vld [vmem:[#allocation6 + $0x2a0] sm:$0xff]
        %v737 = vld [vmem:[#allocation6 + $0x2a8] sm:$0xff]
        %v738 = vld [vmem:[#allocation6 + $0x2b0] sm:$0xff]
        %v739 = vld [vmem:[#allocation6 + $0x2b8] sm:$0xff]
        %v740 = vld [vmem:[#allocation6 + $0x2c0] sm:$0xff]
        %v741 = vld [vmem:[#allocation6 + $0x2c8] sm:$0xff]
        %v742 = vld [vmem:[#allocation6 + $0x2d0] sm:$0xff]
        %v743 = vld [vmem:[#allocation6 + $0x2d8] sm:$0xff]
        %v744 = vld [vmem:[#allocation6 + $0x2e0] sm:$0xff]
        %v745 = vld [vmem:[#allocation6 + $0x2e8] sm:$0xff]
        %v746 = vld [vmem:[#allocation6 + $0x2f0] sm:$0xff]
        %v747 = vld [vmem:[#allocation6 + $0x2f8] sm:$0xff]
        %v748 = vld [vmem:[#allocation6 + $0x300] sm:$0xff]
        %v749 = vld [vmem:[#allocation6 + $0x308] sm:$0xff]
        %v750 = vld [vmem:[#allocation6 + $0x310] sm:$0xff]
        %v751 = vld [vmem:[#allocation6 + $0x318] sm:$0xff]
        %v752 = vld [vmem:[#allocation6 + $0x320] sm:$0xff]
        %v753 = vld [vmem:[#allocation6 + $0x328] sm:$0xff]
        %v754 = vld [vmem:[#allocation6 + $0x330] sm:$0xff]
        %v755 = vld [vmem:[#allocation6 + $0x338] sm:$0xff]
        %v756 = vld [vmem:[#allocation6 + $0x340] sm:$0xff]
        %v757 = vld [vmem:[#allocation6 + $0x348] sm:$0xff]
        %v758 = vld [vmem:[#allocation6 + $0x350] sm:$0xff]
        %v759 = vld [vmem:[#allocation6 + $0x358] sm:$0xff]
        %v760 = vld [vmem:[#allocation6 + $0x360] sm:$0xff]
        %v761 = vld [vmem:[#allocation6 + $0x368] sm:$0xff]
        %v762 = vld [vmem:[#allocation6 + $0x370] sm:$0xff]
        %v763 = vld [vmem:[#allocation6 + $0x378] sm:$0xff]
        %v764 = vld [vmem:[#allocation6 + $0x380] sm:$0xff]
        %v765 = vld [vmem:[#allocation6 + $0x388] sm:$0xff]
        %v766 = vld [vmem:[#allocation6 + $0x390] sm:$0xff]
        %v767 = vld [vmem:[#allocation6 + $0x398] sm:$0xff]
        %v768 = vld [vmem:[#allocation6 + $0x3a0] sm:$0xff]
        %v769 = vld [vmem:[#allocation6 + $0x3a8] sm:$0xff]
        %v770 = vld [vmem:[#allocation6 + $0x3b0] sm:$0xff]
        %v771 = vld [vmem:[#allocation6 + $0x3b8] sm:$0xff]
        %v772 = vld [vmem:[#allocation6 + $0x3c0] sm:$0xff]
        %v773 = vld [vmem:[#allocation6 + $0x3c8] sm:$0xff]
        %v774 = vld [vmem:[#allocation6 + $0x3d0] sm:$0xff]
        %v775 = vld [vmem:[#allocation6 + $0x3d8] sm:$0xff]
        %v776 = vld [vmem:[#allocation6 + $0x3e0] sm:$0xff]
        %v777 = vld [vmem:[#allocation6 + $0x3e8] sm:$0xff]
        %v778 = vld [vmem:[#allocation6 + $0x3f0] sm:$0xff]
        %v779 = vld [vmem:[#allocation6 + $0x3f8] sm:$0xff]
        %v780 = vld [vmem:[#allocation8] sm:$0xff]
        %v782 = vlaneseq
        %v783 = vshrl.u32 %v782, 7
        %v784 = vsub.s32 0, %v783
        %v785 = vrot.slane %v780, %v784
        %v786 = vlaneseq
        %v787 = vshrl.u32 %v786, 7
        %v788 = vsub.s32 1, %v787
        %v789 = vrot.slane %v780, %v788
        %v790 = vlaneseq
        %v791 = vshrl.u32 %v790, 7
        %v792 = vsub.s32 2, %v791
        %v793 = vrot.slane %v780, %v792
        %v794 = vlaneseq
        %v795 = vshrl.u32 %v794, 7
        %v796 = vsub.s32 3, %v795
        %v797 = vrot.slane %v780, %v796
        %v798 = vlaneseq
        %v799 = vshrl.u32 %v798, 7
        %v800 = vsub.s32 4, %v799
        %v801 = vrot.slane %v780, %v800
        %v802 = vlaneseq
        %v803 = vshrl.u32 %v802, 7
        %v804 = vsub.s32 5, %v803
        %v805 = vrot.slane %v780, %v804
        %v806 = vlaneseq
        %v807 = vshrl.u32 %v806, 7
        %v808 = vsub.s32 6, %v807
        %v809 = vrot.slane %v780, %v808
        %v810 = vlaneseq
        %v811 = vshrl.u32 %v810, 7
        %v812 = vsub.s32 7, %v811
        %v813 = vrot.slane %v780, %v812
        %v950 = vunpack.c.l.b16 %v652
        %v951 = vunpack.c.h.b16 %v652
        %v952 = vunpack.c.l.b16 %v653
        %v953 = vunpack.c.h.b16 %v653
        %v954 = vunpack.c.l.b16 %v654
        %v955 = vunpack.c.h.b16 %v654
        %v956 = vunpack.c.l.b16 %v655
        %v957 = vunpack.c.h.b16 %v655
        %v958 = vunpack.c.l.b16 %v656
        %v959 = vunpack.c.h.b16 %v656
        %v960 = vunpack.c.l.b16 %v657
        %v961 = vunpack.c.h.b16 %v657
        %v962 = vunpack.c.l.b16 %v658
        %v963 = vunpack.c.h.b16 %v658
        %v964 = vunpack.c.l.b16 %v659
        %v965 = vunpack.c.h.b16 %v659
        %v966 = vunpack.c.l.b16 %v660
        %v967 = vunpack.c.h.b16 %v660
        %v968 = vunpack.c.l.b16 %v661
        %v969 = vunpack.c.h.b16 %v661
        %v970 = vunpack.c.l.b16 %v662
        %v971 = vunpack.c.h.b16 %v662
        %v972 = vunpack.c.l.b16 %v663
        %v973 = vunpack.c.h.b16 %v663
        %v974 = vunpack.c.l.b16 %v664
        %v975 = vunpack.c.h.b16 %v664
        %v976 = vunpack.c.l.b16 %v665
        %v977 = vunpack.c.h.b16 %v665
        %v978 = vunpack.c.l.b16 %v666
        %v979 = vunpack.c.h.b16 %v666
        %v980 = vunpack.c.l.b16 %v667
        %v981 = vunpack.c.h.b16 %v667
        %v982 = vunpack.c.l.b16 %v668
        %v983 = vunpack.c.h.b16 %v668
        %v984 = vunpack.c.l.b16 %v669
        %v985 = vunpack.c.h.b16 %v669
        %v986 = vunpack.c.l.b16 %v670
        %v987 = vunpack.c.h.b16 %v670
        %v988 = vunpack.c.l.b16 %v671
        %v989 = vunpack.c.h.b16 %v671
        %v990 = vunpack.c.l.b16 %v672
        %v991 = vunpack.c.h.b16 %v672
        %v992 = vunpack.c.l.b16 %v673
        %v993 = vunpack.c.h.b16 %v673
        %v994 = vunpack.c.l.b16 %v674
        %v995 = vunpack.c.h.b16 %v674
        %v996 = vunpack.c.l.b16 %v675
        %v997 = vunpack.c.h.b16 %v675
        %v998 = vunpack.c.l.b16 %v676
        %v999 = vunpack.c.h.b16 %v676
        %v1000 = vunpack.c.l.b16 %v677
        %v1001 = vunpack.c.h.b16 %v677
        %v1002 = vunpack.c.l.b16 %v678
        %v1003 = vunpack.c.h.b16 %v678
        %v1004 = vunpack.c.l.b16 %v679
        %v1005 = vunpack.c.h.b16 %v679
        %v1006 = vunpack.c.l.b16 %v680
        %v1007 = vunpack.c.h.b16 %v680
        %v1008 = vunpack.c.l.b16 %v681
        %v1009 = vunpack.c.h.b16 %v681
        %v1010 = vunpack.c.l.b16 %v682
        %v1011 = vunpack.c.h.b16 %v682
        %v1012 = vunpack.c.l.b16 %v683
        %v1013 = vunpack.c.h.b16 %v683
        %v1014 = vunpack.c.l.b16 %v684
        %v1015 = vunpack.c.h.b16 %v684
        %v1016 = vunpack.c.l.b16 %v685
        %v1017 = vunpack.c.h.b16 %v685
        %v1018 = vunpack.c.l.b16 %v686
        %v1019 = vunpack.c.h.b16 %v686
        %v1020 = vunpack.c.l.b16 %v687
        %v1021 = vunpack.c.h.b16 %v687
        %v1022 = vunpack.c.l.b16 %v688
        %v1023 = vunpack.c.h.b16 %v688
        %v1024 = vunpack.c.l.b16 %v689
        %v1025 = vunpack.c.h.b16 %v689
        %v1026 = vunpack.c.l.b16 %v690
        %v1027 = vunpack.c.h.b16 %v690
        %v1028 = vunpack.c.l.b16 %v691
        %v1029 = vunpack.c.h.b16 %v691
        %v1030 = vunpack.c.l.b16 %v692
        %v1031 = vunpack.c.h.b16 %v692
        %v1032 = vunpack.c.l.b16 %v693
        %v1033 = vunpack.c.h.b16 %v693
        %v1034 = vunpack.c.l.b16 %v694
        %v1035 = vunpack.c.h.b16 %v694
        %v1036 = vunpack.c.l.b16 %v695
        %v1037 = vunpack.c.h.b16 %v695
        %v1038 = vunpack.c.l.b16 %v696
        %v1039 = vunpack.c.h.b16 %v696
        %v1040 = vunpack.c.l.b16 %v697
        %v1041 = vunpack.c.h.b16 %v697
        %v1042 = vunpack.c.l.b16 %v698
        %v1043 = vunpack.c.h.b16 %v698
        %v1044 = vunpack.c.l.b16 %v699
        %v1045 = vunpack.c.h.b16 %v699
        %v1046 = vunpack.c.l.b16 %v700
        %v1047 = vunpack.c.h.b16 %v700
        %v1048 = vunpack.c.l.b16 %v701
        %v1049 = vunpack.c.h.b16 %v701
        %v1050 = vunpack.c.l.b16 %v702
        %v1051 = vunpack.c.h.b16 %v702
        %v1052 = vunpack.c.l.b16 %v703
        %v1053 = vunpack.c.h.b16 %v703
        %v1054 = vunpack.c.l.b16 %v704
        %v1055 = vunpack.c.h.b16 %v704
        %v1056 = vunpack.c.l.b16 %v705
        %v1057 = vunpack.c.h.b16 %v705
        %v1058 = vunpack.c.l.b16 %v706
        %v1059 = vunpack.c.h.b16 %v706
        %v1060 = vunpack.c.l.b16 %v707
        %v1061 = vunpack.c.h.b16 %v707
        %v1062 = vunpack.c.l.b16 %v708
        %v1063 = vunpack.c.h.b16 %v708
        %v1064 = vunpack.c.l.b16 %v709
        %v1065 = vunpack.c.h.b16 %v709
        %v1066 = vunpack.c.l.b16 %v710
        %v1067 = vunpack.c.h.b16 %v710
        %v1068 = vunpack.c.l.b16 %v711
        %v1069 = vunpack.c.h.b16 %v711
        %v1070 = vunpack.c.l.b16 %v712
        %v1071 = vunpack.c.h.b16 %v712
        %v1072 = vunpack.c.l.b16 %v713
        %v1073 = vunpack.c.h.b16 %v713
        %v1074 = vunpack.c.l.b16 %v714
        %v1075 = vunpack.c.h.b16 %v714
        %v1076 = vunpack.c.l.b16 %v715
        %v1077 = vunpack.c.h.b16 %v715
        %v1078 = vunpack.c.l.b16 %v716
        %v1079 = vunpack.c.h.b16 %v716
        %v1080 = vunpack.c.l.b16 %v717
        %v1081 = vunpack.c.h.b16 %v717
        %v1082 = vunpack.c.l.b16 %v718
        %v1083 = vunpack.c.h.b16 %v718
        %v1084 = vunpack.c.l.b16 %v719
        %v1085 = vunpack.c.h.b16 %v719
        %v1086 = vunpack.c.l.b16 %v720
        %v1087 = vunpack.c.h.b16 %v720
        %v1088 = vunpack.c.l.b16 %v721
        %v1089 = vunpack.c.h.b16 %v721
        %v1090 = vunpack.c.l.b16 %v722
        %v1091 = vunpack.c.h.b16 %v722
        %v1092 = vunpack.c.l.b16 %v723
        %v1093 = vunpack.c.h.b16 %v723
        %v1094 = vunpack.c.l.b16 %v724
        %v1095 = vunpack.c.h.b16 %v724
        %v1096 = vunpack.c.l.b16 %v725
        %v1097 = vunpack.c.h.b16 %v725
        %v1098 = vunpack.c.l.b16 %v726
        %v1099 = vunpack.c.h.b16 %v726
        %v1100 = vunpack.c.l.b16 %v727
        %v1101 = vunpack.c.h.b16 %v727
        %v1102 = vunpack.c.l.b16 %v728
        %v1103 = vunpack.c.h.b16 %v728
        %v1104 = vunpack.c.l.b16 %v729
        %v1105 = vunpack.c.h.b16 %v729
        %v1106 = vunpack.c.l.b16 %v730
        %v1107 = vunpack.c.h.b16 %v730
        %v1108 = vunpack.c.l.b16 %v731
        %v1109 = vunpack.c.h.b16 %v731
        %v1110 = vunpack.c.l.b16 %v732
        %v1111 = vunpack.c.h.b16 %v732
        %v1112 = vunpack.c.l.b16 %v733
        %v1113 = vunpack.c.h.b16 %v733
        %v1114 = vunpack.c.l.b16 %v734
        %v1115 = vunpack.c.h.b16 %v734
        %v1116 = vunpack.c.l.b16 %v735
        %v1117 = vunpack.c.h.b16 %v735
        %v1118 = vunpack.c.l.b16 %v736
        %v1119 = vunpack.c.h.b16 %v736
        %v1120 = vunpack.c.l.b16 %v737
        %v1121 = vunpack.c.h.b16 %v737
        %v1122 = vunpack.c.l.b16 %v738
        %v1123 = vunpack.c.h.b16 %v738
        %v1124 = vunpack.c.l.b16 %v739
        %v1125 = vunpack.c.h.b16 %v739
        %v1126 = vunpack.c.l.b16 %v740
        %v1127 = vunpack.c.h.b16 %v740
        %v1128 = vunpack.c.l.b16 %v741
        %v1129 = vunpack.c.h.b16 %v741
        %v1130 = vunpack.c.l.b16 %v742
        %v1131 = vunpack.c.h.b16 %v742
        %v1132 = vunpack.c.l.b16 %v743
        %v1133 = vunpack.c.h.b16 %v743
        %v1134 = vunpack.c.l.b16 %v744
        %v1135 = vunpack.c.h.b16 %v744
        %v1136 = vunpack.c.l.b16 %v745
        %v1137 = vunpack.c.h.b16 %v745
        %v1138 = vunpack.c.l.b16 %v746
        %v1139 = vunpack.c.h.b16 %v746
        %v1140 = vunpack.c.l.b16 %v747
        %v1141 = vunpack.c.h.b16 %v747
        %v1142 = vunpack.c.l.b16 %v748
        %v1143 = vunpack.c.h.b16 %v748
        %v1144 = vunpack.c.l.b16 %v749
        %v1145 = vunpack.c.h.b16 %v749
        %v1146 = vunpack.c.l.b16 %v750
        %v1147 = vunpack.c.h.b16 %v750
        %v1148 = vunpack.c.l.b16 %v751
        %v1149 = vunpack.c.h.b16 %v751
        %v1150 = vunpack.c.l.b16 %v752
        %v1151 = vunpack.c.h.b16 %v752
        %v1152 = vunpack.c.l.b16 %v753
        %v1153 = vunpack.c.h.b16 %v753
        %v1154 = vunpack.c.l.b16 %v754
        %v1155 = vunpack.c.h.b16 %v754
        %v1156 = vunpack.c.l.b16 %v755
        %v1157 = vunpack.c.h.b16 %v755
        %v1158 = vunpack.c.l.b16 %v756
        %v1159 = vunpack.c.h.b16 %v756
        %v1160 = vunpack.c.l.b16 %v757
        %v1161 = vunpack.c.h.b16 %v757
        %v1162 = vunpack.c.l.b16 %v758
        %v1163 = vunpack.c.h.b16 %v758
        %v1164 = vunpack.c.l.b16 %v759
        %v1165 = vunpack.c.h.b16 %v759
        %v1166 = vunpack.c.l.b16 %v760
        %v1167 = vunpack.c.h.b16 %v760
        %v1168 = vunpack.c.l.b16 %v761
        %v1169 = vunpack.c.h.b16 %v761
        %v1170 = vunpack.c.l.b16 %v762
        %v1171 = vunpack.c.h.b16 %v762
        %v1172 = vunpack.c.l.b16 %v763
        %v1173 = vunpack.c.h.b16 %v763
        %v1174 = vunpack.c.l.b16 %v764
        %v1175 = vunpack.c.h.b16 %v764
        %v1176 = vunpack.c.l.b16 %v765
        %v1177 = vunpack.c.h.b16 %v765
        %v1178 = vunpack.c.l.b16 %v766
        %v1179 = vunpack.c.h.b16 %v766
        %v1180 = vunpack.c.l.b16 %v767
        %v1181 = vunpack.c.h.b16 %v767
        %v1182 = vunpack.c.l.b16 %v768
        %v1183 = vunpack.c.h.b16 %v768
        %v1184 = vunpack.c.l.b16 %v769
        %v1185 = vunpack.c.h.b16 %v769
        %v1186 = vunpack.c.l.b16 %v770
        %v1187 = vunpack.c.h.b16 %v770
        %v1188 = vunpack.c.l.b16 %v771
        %v1189 = vunpack.c.h.b16 %v771
        %v1190 = vunpack.c.l.b16 %v772
        %v1191 = vunpack.c.h.b16 %v772
        %v1192 = vunpack.c.l.b16 %v773
        %v1193 = vunpack.c.h.b16 %v773
        %v1194 = vunpack.c.l.b16 %v774
        %v1195 = vunpack.c.h.b16 %v774
        %v1196 = vunpack.c.l.b16 %v775
        %v1197 = vunpack.c.h.b16 %v775
        %v1198 = vunpack.c.l.b16 %v776
        %v1199 = vunpack.c.h.b16 %v776
        %v1200 = vunpack.c.l.b16 %v777
        %v1201 = vunpack.c.h.b16 %v777
        %v1202 = vunpack.c.l.b16 %v778
        %v1203 = vunpack.c.h.b16 %v778
        %v1204 = vunpack.c.l.b16 %v779
        %v1205 = vunpack.c.h.b16 %v779
        %v1206 = vpack.c.b16 %v958, %v950
        %v1207 = vpack.c.b16 %v959, %v951
        %v1208 = vpack.c.b16 %v960, %v952
        %v1209 = vpack.c.b16 %v961, %v953
        %v1210 = vpack.c.b16 %v962, %v954
        %v1211 = vpack.c.b16 %v963, %v955
        %v1212 = vpack.c.b16 %v964, %v956
        %v1213 = vpack.c.b16 %v965, %v957
        %v1214 = vpack.c.b16 %v974, %v966
        %v1215 = vpack.c.b16 %v975, %v967
        %v1216 = vpack.c.b16 %v976, %v968
        %v1217 = vpack.c.b16 %v977, %v969
        %v1218 = vpack.c.b16 %v978, %v970
        %v1219 = vpack.c.b16 %v979, %v971
        %v1220 = vpack.c.b16 %v980, %v972
        %v1221 = vpack.c.b16 %v981, %v973
        %v1222 = vpack.c.b16 %v990, %v982
        %v1223 = vpack.c.b16 %v991, %v983
        %v1224 = vpack.c.b16 %v992, %v984
        %v1225 = vpack.c.b16 %v993, %v985
        %v1226 = vpack.c.b16 %v994, %v986
        %v1227 = vpack.c.b16 %v995, %v987
        %v1228 = vpack.c.b16 %v996, %v988
        %v1229 = vpack.c.b16 %v997, %v989
        %v1230 = vpack.c.b16 %v1006, %v998
        %v1231 = vpack.c.b16 %v1007, %v999
        %v1232 = vpack.c.b16 %v1008, %v1000
        %v1233 = vpack.c.b16 %v1009, %v1001
        %v1234 = vpack.c.b16 %v1010, %v1002
        %v1235 = vpack.c.b16 %v1011, %v1003
        %v1236 = vpack.c.b16 %v1012, %v1004
        %v1237 = vpack.c.b16 %v1013, %v1005
        %v1238 = vpack.c.b16 %v1022, %v1014
        %v1239 = vpack.c.b16 %v1023, %v1015
        %v1240 = vpack.c.b16 %v1024, %v1016
        %v1241 = vpack.c.b16 %v1025, %v1017
        %v1242 = vpack.c.b16 %v1026, %v1018
        %v1243 = vpack.c.b16 %v1027, %v1019
        %v1244 = vpack.c.b16 %v1028, %v1020
        %v1245 = vpack.c.b16 %v1029, %v1021
        %v1246 = vpack.c.b16 %v1038, %v1030
        %v1247 = vpack.c.b16 %v1039, %v1031
        %v1248 = vpack.c.b16 %v1040, %v1032
        %v1249 = vpack.c.b16 %v1041, %v1033
        %v1250 = vpack.c.b16 %v1042, %v1034
        %v1251 = vpack.c.b16 %v1043, %v1035
        %v1252 = vpack.c.b16 %v1044, %v1036
        %v1253 = vpack.c.b16 %v1045, %v1037
        %v1254 = vpack.c.b16 %v1054, %v1046
        %v1255 = vpack.c.b16 %v1055, %v1047
        %v1256 = vpack.c.b16 %v1056, %v1048
        %v1257 = vpack.c.b16 %v1057, %v1049
        %v1258 = vpack.c.b16 %v1058, %v1050
        %v1259 = vpack.c.b16 %v1059, %v1051
        %v1260 = vpack.c.b16 %v1060, %v1052
        %v1261 = vpack.c.b16 %v1061, %v1053
        %v1262 = vpack.c.b16 %v1070, %v1062
        %v1263 = vpack.c.b16 %v1071, %v1063
        %v1264 = vpack.c.b16 %v1072, %v1064
        %v1265 = vpack.c.b16 %v1073, %v1065
        %v1266 = vpack.c.b16 %v1074, %v1066
        %v1267 = vpack.c.b16 %v1075, %v1067
        %v1268 = vpack.c.b16 %v1076, %v1068
        %v1269 = vpack.c.b16 %v1077, %v1069
        %v1270 = vpack.c.b16 %v1086, %v1078
        %v1271 = vpack.c.b16 %v1087, %v1079
        %v1272 = vpack.c.b16 %v1088, %v1080
        %v1273 = vpack.c.b16 %v1089, %v1081
        %v1274 = vpack.c.b16 %v1090, %v1082
        %v1275 = vpack.c.b16 %v1091, %v1083
        %v1276 = vpack.c.b16 %v1092, %v1084
        %v1277 = vpack.c.b16 %v1093, %v1085
        %v1278 = vpack.c.b16 %v1102, %v1094
        %v1279 = vpack.c.b16 %v1103, %v1095
        %v1280 = vpack.c.b16 %v1104, %v1096
        %v1281 = vpack.c.b16 %v1105, %v1097
        %v1282 = vpack.c.b16 %v1106, %v1098
        %v1283 = vpack.c.b16 %v1107, %v1099
        %v1284 = vpack.c.b16 %v1108, %v1100
        %v1285 = vpack.c.b16 %v1109, %v1101
        %v1286 = vpack.c.b16 %v1118, %v1110
        %v1287 = vpack.c.b16 %v1119, %v1111
        %v1288 = vpack.c.b16 %v1120, %v1112
        %v1289 = vpack.c.b16 %v1121, %v1113
        %v1290 = vpack.c.b16 %v1122, %v1114
        %v1291 = vpack.c.b16 %v1123, %v1115
        %v1292 = vpack.c.b16 %v1124, %v1116
        %v1293 = vpack.c.b16 %v1125, %v1117
        %v1294 = vpack.c.b16 %v1134, %v1126
        %v1295 = vpack.c.b16 %v1135, %v1127
        %v1296 = vpack.c.b16 %v1136, %v1128
        %v1297 = vpack.c.b16 %v1137, %v1129
        %v1298 = vpack.c.b16 %v1138, %v1130
        %v1299 = vpack.c.b16 %v1139, %v1131
        %v1300 = vpack.c.b16 %v1140, %v1132
        %v1301 = vpack.c.b16 %v1141, %v1133
        %v1302 = vpack.c.b16 %v1150, %v1142
        %v1303 = vpack.c.b16 %v1151, %v1143
        %v1304 = vpack.c.b16 %v1152, %v1144
        %v1305 = vpack.c.b16 %v1153, %v1145
        %v1306 = vpack.c.b16 %v1154, %v1146
        %v1307 = vpack.c.b16 %v1155, %v1147
        %v1308 = vpack.c.b16 %v1156, %v1148
        %v1309 = vpack.c.b16 %v1157, %v1149
        %v1310 = vpack.c.b16 %v1166, %v1158
        %v1311 = vpack.c.b16 %v1167, %v1159
        %v1312 = vpack.c.b16 %v1168, %v1160
        %v1313 = vpack.c.b16 %v1169, %v1161
        %v1314 = vpack.c.b16 %v1170, %v1162
        %v1315 = vpack.c.b16 %v1171, %v1163
        %v1316 = vpack.c.b16 %v1172, %v1164
        %v1317 = vpack.c.b16 %v1173, %v1165
        %v1318 = vpack.c.b16 %v1182, %v1174
        %v1319 = vpack.c.b16 %v1183, %v1175
        %v1320 = vpack.c.b16 %v1184, %v1176
        %v1321 = vpack.c.b16 %v1185, %v1177
        %v1322 = vpack.c.b16 %v1186, %v1178
        %v1323 = vpack.c.b16 %v1187, %v1179
        %v1324 = vpack.c.b16 %v1188, %v1180
        %v1325 = vpack.c.b16 %v1189, %v1181
        %v1326 = vpack.c.b16 %v1198, %v1190
        %v1327 = vpack.c.b16 %v1199, %v1191
        %v1328 = vpack.c.b16 %v1200, %v1192
        %v1329 = vpack.c.b16 %v1201, %v1193
        %v1330 = vpack.c.b16 %v1202, %v1194
        %v1331 = vpack.c.b16 %v1203, %v1195
        %v1332 = vpack.c.b16 %v1204, %v1196
        %v1333 = vpack.c.b16 %v1205, %v1197
        %1462 = vmatprep.subr.bf16.mxu0 %v1207
        %1463 = vmatpush1.bf16.msra.mxu0 %v1206
        %1464 = vmatprep.subr.bf16.mxu0 %v1215
        %1465 = vmatpush1.bf16.msra.mxu0 %v1214
        %1466 = vmatprep.subr.bf16.mxu0 %v1223
        %1467 = vmatpush1.bf16.msra.mxu0 %v1222
        %1468 = vmatprep.subr.bf16.mxu0 %v1231
        %1469 = vmatpush1.bf16.msra.mxu0 %v1230
        %1470 = vmatprep.subr.bf16.mxu0 %v1239
        %1471 = vmatpush1.bf16.msra.mxu0 %v1238
        %1472 = vmatprep.subr.bf16.mxu0 %v1247
        %1473 = vmatpush1.bf16.msra.mxu0 %v1246
        %1474 = vmatprep.subr.bf16.mxu0 %v1255
        %1475 = vmatpush1.bf16.msra.mxu0 %v1254
        %1476 = vmatprep.subr.bf16.mxu0 %v1263
        %1477 = vmatpush1.bf16.msra.mxu0 %v1262
        %1478 = vmatprep.subr.bf16.mxu0 %v1271
        %1479 = vmatpush1.bf16.msra.mxu0 %v1270
        %1480 = vmatprep.subr.bf16.mxu0 %v1279
        %1481 = vmatpush1.bf16.msra.mxu0 %v1278
        %1482 = vmatprep.subr.bf16.mxu0 %v1287
        %1483 = vmatpush1.bf16.msra.mxu0 %v1286
        %1484 = vmatprep.subr.bf16.mxu0 %v1295
        %1485 = vmatpush1.bf16.msra.mxu0 %v1294
        %1486 = vmatprep.subr.bf16.mxu0 %v1303
        %1487 = vmatpush1.bf16.msra.mxu0 %v1302
        %1488 = vmatprep.subr.bf16.mxu0 %v1311
        %1489 = vmatpush1.bf16.msra.mxu0 %v1310
        %1490 = vmatprep.subr.bf16.mxu0 %v1319
        %1491 = vmatpush1.bf16.msra.mxu0 %v1318
        %1492 = vmatprep.subr.bf16.mxu0 %v1327
        %1493 = vmatpush1.bf16.msra.mxu0 %v1326
        %1494 = vmatprep.mubr.bf16.mxu0 %v589
        %1495 = vmatmul.mubr.bf16.gmra.mrb[0].mxu0 %v588
        %v1496 = vpop.f32.mrb[0].mxu0
        %v1497 = vadd.f32 %v785, %v1496
        %v1498 = vpop.f32.mrb[0].mxu0
        %v1499 = vadd.f32 %v789, %v1498
        %v1500 = vpop.f32.mrb[0].mxu0
        %v1501 = vadd.f32 %v785, %v1500
        %v1502 = vpop.f32.mrb[0].mxu0
        %v1503 = vadd.f32 %v789, %v1502
        %1504 = vmatprep.mubr.bf16.mxu0 %v591
        %1505 = vmatmul.mubr.bf16.gmra.mrb[0].mxu0 %v590
        %v1506 = vpop.f32.mrb[0].mxu0
        %v1507 = vadd.f32 %v785, %v1506
        %v1508 = vpop.f32.mrb[0].mxu0
        %v1509 = vadd.f32 %v789, %v1508
        %v1510 = vpop.f32.mrb[0].mxu0
        %v1511 = vadd.f32 %v785, %v1510
        %v1512 = vpop.f32.mrb[0].mxu0
        %v1513 = vadd.f32 %v789, %v1512
        %1514 = vmatprep.mubr.bf16.mxu0 %v593
        %1515 = vmatmul.mubr.bf16.gmra.mrb[0].mxu0 %v592
        %v1516 = vpop.f32.mrb[0].mxu0
        %v1517 = vadd.f32 %v785, %v1516
        %v1518 = vpop.f32.mrb[0].mxu0
        %v1519 = vadd.f32 %v789, %v1518
        %v1520 = vpop.f32.mrb[0].mxu0
        %v1521 = vadd.f32 %v785, %v1520
        %v1522 = vpop.f32.mrb[0].mxu0
        %v1523 = vadd.f32 %v789, %v1522
        %1524 = vmatprep.mubr.bf16.mxu0 %v595
        %1525 = vmatmul.mubr.bf16.gmra.mrb[0].mxu0 %v594
        %v1526 = vpop.f32.mrb[0].mxu0
        %v1527 = vadd.f32 %v785, %v1526
        %v1528 = vpop.f32.mrb[0].mxu0
        %v1529 = vadd.f32 %v789, %v1528
        %v1530 = vpop.f32.mrb[0].mxu0
        %v1531 = vadd.f32 %v785, %v1530
        %v1532 = vpop.f32.mrb[0].mxu0
        %v1533 = vadd.f32 %v789, %v1532
        %1534 = vmatprep.mubr.bf16.mxu0 %v597
        %1535 = vmatmul.mubr.bf16.gmra.mrb[0].mxu0 %v596
        %v1536 = vpop.f32.mrb[0].mxu0
        %v1537 = vadd.f32 %v785, %v1536
        %v1538 = vpop.f32.mrb[0].mxu0
        %v1539 = vadd.f32 %v789, %v1538
        %v1540 = vpop.f32.mrb[0].mxu0
        %v1541 = vadd.f32 %v785, %v1540
        %v1542 = vpop.f32.mrb[0].mxu0
        %v1543 = vadd.f32 %v789, %v1542
        %1544 = vmatprep.mubr.bf16.mxu0 %v599
        %1545 = vmatmul.mubr.bf16.gmra.mrb[0].mxu0 %v598
        %v1546 = vpop.f32.mrb[0].mxu0
        %v1547 = vadd.f32 %v785, %v1546
        %v1548 = vpop.f32.mrb[0].mxu0
        %v1549 = vadd.f32 %v789, %v1548
        %v1550 = vpop.f32.mrb[0].mxu0
        %v1551 = vadd.f32 %v785, %v1550
        %v1552 = vpop.f32.mrb[0].mxu0
        %v1553 = vadd.f32 %v789, %v1552
        %1554 = vmatprep.mubr.bf16.mxu0 %v601
        %1555 = vmatmul.mubr.bf16.gmra.mrb[0].mxu0 %v600
        %v1556 = vpop.f32.mrb[0].mxu0
        %v1557 = vadd.f32 %v785, %v1556
        %v1558 = vpop.f32.mrb[0].mxu0
        %v1559 = vadd.f32 %v789, %v1558
        %v1560 = vpop.f32.mrb[0].mxu0
        %v1561 = vadd.f32 %v785, %v1560
        %v1562 = vpop.f32.mrb[0].mxu0
        %v1563 = vadd.f32 %v789, %v1562
        %1564 = vmatprep.mubr.bf16.mxu0 %v603
        %1565 = vmatmul.mubr.bf16.gmra.mrb[0].mxu0 %v602
        %v1566 = vpop.f32.mrb[0].mxu0
        %v1567 = vadd.f32 %v785, %v1566
        %v1568 = vpop.f32.mrb[0].mxu0
        %v1569 = vadd.f32 %v789, %v1568
        %v1570 = vpop.f32.mrb[0].mxu0
        %v1571 = vadd.f32 %v785, %v1570
        %v1572 = vpop.f32.mrb[0].mxu0
        %v1573 = vadd.f32 %v789, %v1572
        %1574 = vmatprep.mubr.bf16.mxu0 %v605
        %1575 = vmatmul.mubr.bf16.gmra.mrb[0].mxu0 %v604
        %v1576 = vpop.f32.mrb[0].mxu0
        %v1577 = vadd.f32 %v785, %v1576
        %v1578 = vpop.f32.mrb[0].mxu0
        %v1579 = vadd.f32 %v789, %v1578
        %v1580 = vpop.f32.mrb[0].mxu0
        %v1581 = vadd.f32 %v785, %v1580
        %v1582 = vpop.f32.mrb[0].mxu0
        %v1583 = vadd.f32 %v789, %v1582
        %1584 = vmatprep.mubr.bf16.mxu0 %v607
        %1585 = vmatmul.mubr.bf16.gmra.mrb[0].mxu0 %v606
        %v1586 = vpop.f32.mrb[0].mxu0
        %v1587 = vadd.f32 %v785, %v1586
        %v1588 = vpop.f32.mrb[0].mxu0
        %v1589 = vadd.f32 %v789, %v1588
        %v1590 = vpop.f32.mrb[0].mxu0
        %v1591 = vadd.f32 %v785, %v1590
        %v1592 = vpop.f32.mrb[0].mxu0
        %v1593 = vadd.f32 %v789, %v1592
        %1594 = vmatprep.mubr.bf16.mxu0 %v609
        %1595 = vmatmul.mubr.bf16.gmra.mrb[0].mxu0 %v608
        %v1596 = vpop.f32.mrb[0].mxu0
        %v1597 = vadd.f32 %v785, %v1596
        %v1598 = vpop.f32.mrb[0].mxu0
        %v1599 = vadd.f32 %v789, %v1598
        %v1600 = vpop.f32.mrb[0].mxu0
        %v1601 = vadd.f32 %v785, %v1600
        %v1602 = vpop.f32.mrb[0].mxu0
        %v1603 = vadd.f32 %v789, %v1602
        %1604 = vmatprep.mubr.bf16.mxu0 %v611
        %1605 = vmatmul.mubr.bf16.gmra.mrb[0].mxu0 %v610
        %v1606 = vpop.f32.mrb[0].mxu0
        %v1607 = vadd.f32 %v785, %v1606
        %v1608 = vpop.f32.mrb[0].mxu0
        %v1609 = vadd.f32 %v789, %v1608
        %v1610 = vpop.f32.mrb[0].mxu0
        %v1611 = vadd.f32 %v785, %v1610
        %v1612 = vpop.f32.mrb[0].mxu0
        %v1613 = vadd.f32 %v789, %v1612
        %1614 = vmatprep.mubr.bf16.mxu0 %v613
        %1615 = vmatmul.mubr.bf16.gmra.mrb[0].mxu0 %v612
        %v1616 = vpop.f32.mrb[0].mxu0
        %v1617 = vadd.f32 %v785, %v1616
        %v1618 = vpop.f32.mrb[0].mxu0
        %v1619 = vadd.f32 %v789, %v1618
        %v1620 = vpop.f32.mrb[0].mxu0
        %v1621 = vadd.f32 %v785, %v1620
        %v1622 = vpop.f32.mrb[0].mxu0
        %v1623 = vadd.f32 %v789, %v1622
        %1624 = vmatprep.mubr.bf16.mxu0 %v615
        %1625 = vmatmul.mubr.bf16.gmra.mrb[0].mxu0 %v614
        %v1626 = vpop.f32.mrb[0].mxu0
        %v1627 = vadd.f32 %v785, %v1626
        %v1628 = vpop.f32.mrb[0].mxu0
        %v1629 = vadd.f32 %v789, %v1628
        %v1630 = vpop.f32.mrb[0].mxu0
        %v1631 = vadd.f32 %v785, %v1630
        %v1632 = vpop.f32.mrb[0].mxu0
        %v1633 = vadd.f32 %v789, %v1632
        %1634 = vmatprep.mubr.bf16.mxu0 %v617
        %1635 = vmatmul.mubr.bf16.gmra.mrb[0].mxu0 %v616
        %v1636 = vpop.f32.mrb[0].mxu0
        %v1637 = vadd.f32 %v785, %v1636
        %v1638 = vpop.f32.mrb[0].mxu0
        %v1639 = vadd.f32 %v789, %v1638
        %v1640 = vpop.f32.mrb[0].mxu0
        %v1641 = vadd.f32 %v785, %v1640
        %v1642 = vpop.f32.mrb[0].mxu0
        %v1643 = vadd.f32 %v789, %v1642
        %1644 = vmatprep.mubr.bf16.mxu0 %v619
        %1645 = vmatmul.mubr.bf16.gmra.mrb[0].mxu0 %v618
        %v1646 = vpop.f32.mrb[0].mxu0
        %v1647 = vadd.f32 %v785, %v1646
        %v1648 = vpop.f32.mrb[0].mxu0
        %v1649 = vadd.f32 %v789, %v1648
        %v1650 = vpop.f32.mrb[0].mxu0
        %v1651 = vadd.f32 %v785, %v1650
        %v1652 = vpop.f32.mrb[0].mxu0
        %v1653 = vadd.f32 %v789, %v1652
        %1654 = vmatprep.mubr.bf16.mxu0 %v621
        %1655 = vmatmul.mubr.bf16.gmra.mrb[0].mxu0 %v620
        %v1656 = vpop.f32.mrb[0].mxu0
        %v1657 = vadd.f32 %v785, %v1656
        %v1658 = vpop.f32.mrb[0].mxu0
        %v1659 = vadd.f32 %v789, %v1658
        %v1660 = vpop.f32.mrb[0].mxu0
        %v1661 = vadd.f32 %v785, %v1660
        %v1662 = vpop.f32.mrb[0].mxu0
        %v1663 = vadd.f32 %v789, %v1662
        %1664 = vmatprep.mubr.bf16.mxu0 %v623
        %1665 = vmatmul.mubr.bf16.gmra.mrb[0].mxu0 %v622
        %v1666 = vpop.f32.mrb[0].mxu0
        %v1667 = vadd.f32 %v785, %v1666
        %v1668 = vpop.f32.mrb[0].mxu0
        %v1669 = vadd.f32 %v789, %v1668
        %v1670 = vpop.f32.mrb[0].mxu0
        %v1671 = vadd.f32 %v785, %v1670
        %v1672 = vpop.f32.mrb[0].mxu0
        %v1673 = vadd.f32 %v789, %v1672
        %1674 = vmatprep.mubr.bf16.mxu0 %v625
        %1675 = vmatmul.mubr.bf16.gmra.mrb[0].mxu0 %v624
        %v1676 = vpop.f32.mrb[0].mxu0
        %v1677 = vadd.f32 %v785, %v1676
        %v1678 = vpop.f32.mrb[0].mxu0
        %v1679 = vadd.f32 %v789, %v1678
        %v1680 = vpop.f32.mrb[0].mxu0
        %v1681 = vadd.f32 %v785, %v1680
        %v1682 = vpop.f32.mrb[0].mxu0
        %v1683 = vadd.f32 %v789, %v1682
        %1684 = vmatprep.mubr.bf16.mxu0 %v627
        %1685 = vmatmul.mubr.bf16.gmra.mrb[0].mxu0 %v626
        %v1686 = vpop.f32.mrb[0].mxu0
        %v1687 = vadd.f32 %v785, %v1686
        %v1688 = vpop.f32.mrb[0].mxu0
        %v1689 = vadd.f32 %v789, %v1688
        %v1690 = vpop.f32.mrb[0].mxu0
        %v1691 = vadd.f32 %v785, %v1690
        %v1692 = vpop.f32.mrb[0].mxu0
        %v1693 = vadd.f32 %v789, %v1692
        %1694 = vmatprep.mubr.bf16.mxu0 %v629
        %1695 = vmatmul.mubr.bf16.gmra.mrb[0].mxu0 %v628
        %v1696 = vpop.f32.mrb[0].mxu0
        %v1697 = vadd.f32 %v785, %v1696
        %v1698 = vpop.f32.mrb[0].mxu0
        %v1699 = vadd.f32 %v789, %v1698
        %v1700 = vpop.f32.mrb[0].mxu0
        %v1701 = vadd.f32 %v785, %v1700
        %v1702 = vpop.f32.mrb[0].mxu0
        %v1703 = vadd.f32 %v789, %v1702
        %1704 = vmatprep.mubr.bf16.mxu0 %v631
        %1705 = vmatmul.mubr.bf16.gmra.mrb[0].mxu0 %v630
        %v1706 = vpop.f32.mrb[0].mxu0
        %v1707 = vadd.f32 %v785, %v1706
        %v1708 = vpop.f32.mrb[0].mxu0
        %v1709 = vadd.f32 %v789, %v1708
        %v1710 = vpop.f32.mrb[0].mxu0
        %v1711 = vadd.f32 %v785, %v1710
        %v1712 = vpop.f32.mrb[0].mxu0
        %v1713 = vadd.f32 %v789, %v1712
        %1714 = vmatprep.mubr.bf16.mxu0 %v633
        %1715 = vmatmul.mubr.bf16.gmra.mrb[0].mxu0 %v632
        %v1716 = vpop.f32.mrb[0].mxu0
        %v1717 = vadd.f32 %v785, %v1716
        %v1718 = vpop.f32.mrb[0].mxu0
        %v1719 = vadd.f32 %v789, %v1718
        %v1720 = vpop.f32.mrb[0].mxu0
        %v1721 = vadd.f32 %v785, %v1720
        %v1722 = vpop.f32.mrb[0].mxu0
        %v1723 = vadd.f32 %v789, %v1722
        %1724 = vmatprep.mubr.bf16.mxu0 %v635
        %1725 = vmatmul.mubr.bf16.gmra.mrb[0].mxu0 %v634
        %v1726 = vpop.f32.mrb[0].mxu0
        %v1727 = vadd.f32 %v785, %v1726
        %v1728 = vpop.f32.mrb[0].mxu0
        %v1729 = vadd.f32 %v789, %v1728
        %v1730 = vpop.f32.mrb[0].mxu0
        %v1731 = vadd.f32 %v785, %v1730
        %v1732 = vpop.f32.mrb[0].mxu0
        %v1733 = vadd.f32 %v789, %v1732
        %1734 = vmatprep.mubr.bf16.mxu0 %v637
        %1735 = vmatmul.mubr.bf16.gmra.mrb[0].mxu0 %v636
        %v1736 = vpop.f32.mrb[0].mxu0
        %v1737 = vadd.f32 %v785, %v1736
        %v1738 = vpop.f32.mrb[0].mxu0
        %v1739 = vadd.f32 %v789, %v1738
        %v1740 = vpop.f32.mrb[0].mxu0
        %v1741 = vadd.f32 %v785, %v1740
        %v1742 = vpop.f32.mrb[0].mxu0
        %v1743 = vadd.f32 %v789, %v1742
        %1744 = vmatprep.mubr.bf16.mxu0 %v639
        %1745 = vmatmul.mubr.bf16.gmra.mrb[0].mxu0 %v638
        %v1746 = vpop.f32.mrb[0].mxu0
        %v1747 = vadd.f32 %v785, %v1746
        %v1748 = vpop.f32.mrb[0].mxu0
        %v1749 = vadd.f32 %v789, %v1748
        %v1750 = vpop.f32.mrb[0].mxu0
        %v1751 = vadd.f32 %v785, %v1750
        %v1752 = vpop.f32.mrb[0].mxu0
        %v1753 = vadd.f32 %v789, %v1752
        %1754 = vmatprep.mubr.bf16.mxu0 %v641
        %1755 = vmatmul.mubr.bf16.gmra.mrb[0].mxu0 %v640
        %v1756 = vpop.f32.mrb[0].mxu0
        %v1757 = vadd.f32 %v785, %v1756
        %v1758 = vpop.f32.mrb[0].mxu0
        %v1759 = vadd.f32 %v789, %v1758
        %v1760 = vpop.f32.mrb[0].mxu0
        %v1761 = vadd.f32 %v785, %v1760
        %v1762 = vpop.f32.mrb[0].mxu0
        %v1763 = vadd.f32 %v789, %v1762
        %1764 = vmatprep.mubr.bf16.mxu0 %v643
        %1765 = vmatmul.mubr.bf16.gmra.mrb[0].mxu0 %v642
        %v1766 = vpop.f32.mrb[0].mxu0
        %v1767 = vadd.f32 %v785, %v1766
        %v1768 = vpop.f32.mrb[0].mxu0
        %v1769 = vadd.f32 %v789, %v1768
        %v1770 = vpop.f32.mrb[0].mxu0
        %v1771 = vadd.f32 %v785, %v1770
        %v1772 = vpop.f32.mrb[0].mxu0
        %v1773 = vadd.f32 %v789, %v1772
        %1774 = vmatprep.mubr.bf16.mxu0 %v645
        %1775 = vmatmul.mubr.bf16.gmra.mrb[0].mxu0 %v644
        %v1776 = vpop.f32.mrb[0].mxu0
        %v1777 = vadd.f32 %v785, %v1776
        %v1778 = vpop.f32.mrb[0].mxu0
        %v1779 = vadd.f32 %v789, %v1778
        %v1780 = vpop.f32.mrb[0].mxu0
        %v1781 = vadd.f32 %v785, %v1780
        %v1782 = vpop.f32.mrb[0].mxu0
        %v1783 = vadd.f32 %v789, %v1782
        %1784 = vmatprep.mubr.bf16.mxu0 %v647
        %1785 = vmatmul.mubr.bf16.gmra.mrb[0].mxu0 %v646
        %v1786 = vpop.f32.mrb[0].mxu0
        %v1787 = vadd.f32 %v785, %v1786
        %v1788 = vpop.f32.mrb[0].mxu0
        %v1789 = vadd.f32 %v789, %v1788
        %v1790 = vpop.f32.mrb[0].mxu0
        %v1791 = vadd.f32 %v785, %v1790
        %v1792 = vpop.f32.mrb[0].mxu0
        %v1793 = vadd.f32 %v789, %v1792
        %1794 = vmatprep.mubr.bf16.mxu0 %v649
        %1795 = vmatmul.mubr.bf16.gmra.mrb[0].mxu0 %v648
        %v1796 = vpop.f32.mrb[0].mxu0
        %v1797 = vadd.f32 %v785, %v1796
        %v1798 = vpop.f32.mrb[0].mxu0
        %v1799 = vadd.f32 %v789, %v1798
        %v1800 = vpop.f32.mrb[0].mxu0
        %v1801 = vadd.f32 %v785, %v1800
        %v1802 = vpop.f32.mrb[0].mxu0
        %v1803 = vadd.f32 %v789, %v1802
        %1804 = vmatprep.mubr.bf16.mxu0 %v651
        %1805 = vmatmul.mubr.bf16.gmra.mrb[0].mxu0 %v650
        %v1806 = vpop.f32.mrb[0].mxu0
        %v1807 = vadd.f32 %v785, %v1806
        %v1808 = vpop.f32.mrb[0].mxu0
        %v1809 = vadd.f32 %v789, %v1808
        %v1810 = vpop.f32.mrb[0].mxu0
        %v1811 = vadd.f32 %v785, %v1810
        %v1812 = vpop.f32.mrb[0].mxu0
        %v1813 = vadd.f32 %v789, %v1812
        %1814 = vdwg.mxu0
        %1815 = vmatprep.subr.bf16.mxu0 %v1209
        %1816 = vmatpush1.bf16.msra.mxu0 %v1208
        %1817 = vmatprep.subr.bf16.mxu0 %v1217
        %1818 = vmatpush1.bf16.msra.mxu0 %v1216
        %1819 = vmatprep.subr.bf16.mxu0 %v1225
        %1820 = vmatpush1.bf16.msra.mxu0 %v1224
        %1821 = vmatprep.subr.bf16.mxu0 %v1233
        %1822 = vmatpush1.bf16.msra.mxu0 %v1232
        %1823 = vmatprep.subr.bf16.mxu0 %v1241
        %1824 = vmatpush1.bf16.msra.mxu0 %v1240
        %1825 = vmatprep.subr.bf16.mxu0 %v1249
        %1826 = vmatpush1.bf16.msra.mxu0 %v1248
        %1827 = vmatprep.subr.bf16.mxu0 %v1257
        %1828 = vmatpush1.bf16.msra.mxu0 %v1256
        %1829 = vmatprep.subr.bf16.mxu0 %v1265
        %1830 = vmatpush1.bf16.msra.mxu0 %v1264
        %1831 = vmatprep.subr.bf16.mxu0 %v1273
        %1832 = vmatpush1.bf16.msra.mxu0 %v1272
        %1833 = vmatprep.subr.bf16.mxu0 %v1281
        %1834 = vmatpush1.bf16.msra.mxu0 %v1280
        %1835 = vmatprep.subr.bf16.mxu0 %v1289
        %1836 = vmatpush1.bf16.msra.mxu0 %v1288
        %1837 = vmatprep.subr.bf16.mxu0 %v1297
        %1838 = vmatpush1.bf16.msra.mxu0 %v1296
        %1839 = vmatprep.subr.bf16.mxu0 %v1305
        %1840 = vmatpush1.bf16.msra.mxu0 %v1304
        %1841 = vmatprep.subr.bf16.mxu0 %v1313
        %1842 = vmatpush1.bf16.msra.mxu0 %v1312
        %1843 = vmatprep.subr.bf16.mxu0 %v1321
        %1844 = vmatpush1.bf16.msra.mxu0 %v1320
        %1845 = vmatprep.subr.bf16.mxu0 %v1329
        %1846 = vmatpush1.bf16.msra.mxu0 %v1328
        %1847 = vmatprep.mubr.bf16.mxu0 %v589
        %1848 = vmatmul.mubr.bf16.gmra.mrb[0].mxu0 %v588
        %v1849 = vpop.f32.mrb[0].mxu0
        %v1850 = vadd.f32 %v793, %v1849
        %v1851 = vpop.f32.mrb[0].mxu0
        %v1852 = vadd.f32 %v797, %v1851
        %v1853 = vpop.f32.mrb[0].mxu0
        %v1854 = vadd.f32 %v793, %v1853
        %v1855 = vpop.f32.mrb[0].mxu0
        %v1856 = vadd.f32 %v797, %v1855
        %1857 = vmatprep.mubr.bf16.mxu0 %v591
        %1858 = vmatmul.mubr.bf16.gmra.mrb[0].mxu0 %v590
        %v1859 = vpop.f32.mrb[0].mxu0
        %v1860 = vadd.f32 %v793, %v1859
        %v1861 = vpop.f32.mrb[0].mxu0
        %v1862 = vadd.f32 %v797, %v1861
        %v1863 = vpop.f32.mrb[0].mxu0
        %v1864 = vadd.f32 %v793, %v1863
        %v1865 = vpop.f32.mrb[0].mxu0
        %v1866 = vadd.f32 %v797, %v1865
        %1867 = vmatprep.mubr.bf16.mxu0 %v593
        %1868 = vmatmul.mubr.bf16.gmra.mrb[0].mxu0 %v592
        %v1869 = vpop.f32.mrb[0].mxu0
        %v1870 = vadd.f32 %v793, %v1869
        %v1871 = vpop.f32.mrb[0].mxu0
        %v1872 = vadd.f32 %v797, %v1871
        %v1873 = vpop.f32.mrb[0].mxu0
        %v1874 = vadd.f32 %v793, %v1873
        %v1875 = vpop.f32.mrb[0].mxu0
        %v1876 = vadd.f32 %v797, %v1875
        %1877 = vmatprep.mubr.bf16.mxu0 %v595
        %1878 = vmatmul.mubr.bf16.gmra.mrb[0].mxu0 %v594
        %v1879 = vpop.f32.mrb[0].mxu0
        %v1880 = vadd.f32 %v793, %v1879
        %v1881 = vpop.f32.mrb[0].mxu0
        %v1882 = vadd.f32 %v797, %v1881
        %v1883 = vpop.f32.mrb[0].mxu0
        %v1884 = vadd.f32 %v793, %v1883
        %v1885 = vpop.f32.mrb[0].mxu0
        %v1886 = vadd.f32 %v797, %v1885
        %1887 = vmatprep.mubr.bf16.mxu0 %v597
        %1888 = vmatmul.mubr.bf16.gmra.mrb[0].mxu0 %v596
        %v1889 = vpop.f32.mrb[0].mxu0
        %v1890 = vadd.f32 %v793, %v1889
        %v1891 = vpop.f32.mrb[0].mxu0
        %v1892 = vadd.f32 %v797, %v1891
        %v1893 = vpop.f32.mrb[0].mxu0
        %v1894 = vadd.f32 %v793, %v1893
        %v1895 = vpop.f32.mrb[0].mxu0
        %v1896 = vadd.f32 %v797, %v1895
        %1897 = vmatprep.mubr.bf16.mxu0 %v599
        %1898 = vmatmul.mubr.bf16.gmra.mrb[0].mxu0 %v598
        %v1899 = vpop.f32.mrb[0].mxu0
        %v1900 = vadd.f32 %v793, %v1899
        %v1901 = vpop.f32.mrb[0].mxu0
        %v1902 = vadd.f32 %v797, %v1901
        %v1903 = vpop.f32.mrb[0].mxu0
        %v1904 = vadd.f32 %v793, %v1903
        %v1905 = vpop.f32.mrb[0].mxu0
        %v1906 = vadd.f32 %v797, %v1905
        %1907 = vmatprep.mubr.bf16.mxu0 %v601
        %1908 = vmatmul.mubr.bf16.gmra.mrb[0].mxu0 %v600
        %v1909 = vpop.f32.mrb[0].mxu0
        %v1910 = vadd.f32 %v793, %v1909
        %v1911 = vpop.f32.mrb[0].mxu0
        %v1912 = vadd.f32 %v797, %v1911
        %v1913 = vpop.f32.mrb[0].mxu0
        %v1914 = vadd.f32 %v793, %v1913
        %v1915 = vpop.f32.mrb[0].mxu0
        %v1916 = vadd.f32 %v797, %v1915
        %1917 = vmatprep.mubr.bf16.mxu0 %v603
        %1918 = vmatmul.mubr.bf16.gmra.mrb[0].mxu0 %v602
        %v1919 = vpop.f32.mrb[0].mxu0
        %v1920 = vadd.f32 %v793, %v1919
        %v1921 = vpop.f32.mrb[0].mxu0
        %v1922 = vadd.f32 %v797, %v1921
        %v1923 = vpop.f32.mrb[0].mxu0
        %v1924 = vadd.f32 %v793, %v1923
        %v1925 = vpop.f32.mrb[0].mxu0
        %v1926 = vadd.f32 %v797, %v1925
        %1927 = vmatprep.mubr.bf16.mxu0 %v605
        %1928 = vmatmul.mubr.bf16.gmra.mrb[0].mxu0 %v604
        %v1929 = vpop.f32.mrb[0].mxu0
        %v1930 = vadd.f32 %v793, %v1929
        %v1931 = vpop.f32.mrb[0].mxu0
        %v1932 = vadd.f32 %v797, %v1931
        %v1933 = vpop.f32.mrb[0].mxu0
        %v1934 = vadd.f32 %v793, %v1933
        %v1935 = vpop.f32.mrb[0].mxu0
        %v1936 = vadd.f32 %v797, %v1935
        %1937 = vmatprep.mubr.bf16.mxu0 %v607
        %1938 = vmatmul.mubr.bf16.gmra.mrb[0].mxu0 %v606
        %v1939 = vpop.f32.mrb[0].mxu0
        %v1940 = vadd.f32 %v793, %v1939
        %v1941 = vpop.f32.mrb[0].mxu0
        %v1942 = vadd.f32 %v797, %v1941
        %v1943 = vpop.f32.mrb[0].mxu0
        %v1944 = vadd.f32 %v793, %v1943
        %v1945 = vpop.f32.mrb[0].mxu0
        %v1946 = vadd.f32 %v797, %v1945
        %1947 = vmatprep.mubr.bf16.mxu0 %v609
        %1948 = vmatmul.mubr.bf16.gmra.mrb[0].mxu0 %v608
        %v1949 = vpop.f32.mrb[0].mxu0
        %v1950 = vadd.f32 %v793, %v1949
        %v1951 = vpop.f32.mrb[0].mxu0
        %v1952 = vadd.f32 %v797, %v1951
        %v1953 = vpop.f32.mrb[0].mxu0
        %v1954 = vadd.f32 %v793, %v1953
        %v1955 = vpop.f32.mrb[0].mxu0
        %v1956 = vadd.f32 %v797, %v1955
        %1957 = vmatprep.mubr.bf16.mxu0 %v611
        %1958 = vmatmul.mubr.bf16.gmra.mrb[0].mxu0 %v610
        %v1959 = vpop.f32.mrb[0].mxu0
        %v1960 = vadd.f32 %v793, %v1959
        %v1961 = vpop.f32.mrb[0].mxu0
        %v1962 = vadd.f32 %v797, %v1961
        %v1963 = vpop.f32.mrb[0].mxu0
        %v1964 = vadd.f32 %v793, %v1963
        %v1965 = vpop.f32.mrb[0].mxu0
        %v1966 = vadd.f32 %v797, %v1965
        %1967 = vmatprep.mubr.bf16.mxu0 %v613
        %1968 = vmatmul.mubr.bf16.gmra.mrb[0].mxu0 %v612
        %v1969 = vpop.f32.mrb[0].mxu0
        %v1970 = vadd.f32 %v793, %v1969
        %v1971 = vpop.f32.mrb[0].mxu0
        %v1972 = vadd.f32 %v797, %v1971
        %v1973 = vpop.f32.mrb[0].mxu0
        %v1974 = vadd.f32 %v793, %v1973
        %v1975 = vpop.f32.mrb[0].mxu0
        %v1976 = vadd.f32 %v797, %v1975
        %1977 = vmatprep.mubr.bf16.mxu0 %v615
        %1978 = vmatmul.mubr.bf16.gmra.mrb[0].mxu0 %v614
        %v1979 = vpop.f32.mrb[0].mxu0
        %v1980 = vadd.f32 %v793, %v1979
        %v1981 = vpop.f32.mrb[0].mxu0
        %v1982 = vadd.f32 %v797, %v1981
        %v1983 = vpop.f32.mrb[0].mxu0
        %v1984 = vadd.f32 %v793, %v1983
        %v1985 = vpop.f32.mrb[0].mxu0
        %v1986 = vadd.f32 %v797, %v1985
        %1987 = vmatprep.mubr.bf16.mxu0 %v617
        %1988 = vmatmul.mubr.bf16.gmra.mrb[0].mxu0 %v616
        %v1989 = vpop.f32.mrb[0].mxu0
        %v1990 = vadd.f32 %v793, %v1989
        %v1991 = vpop.f32.mrb[0].mxu0
        %v1992 = vadd.f32 %v797, %v1991
        %v1993 = vpop.f32.mrb[0].mxu0
        %v1994 = vadd.f32 %v793, %v1993
        %v1995 = vpop.f32.mrb[0].mxu0
        %v1996 = vadd.f32 %v797, %v1995
        %1997 = vmatprep.mubr.bf16.mxu0 %v619
        %1998 = vmatmul.mubr.bf16.gmra.mrb[0].mxu0 %v618
        %v1999 = vpop.f32.mrb[0].mxu0
        %v2000 = vadd.f32 %v793, %v1999
        %v2001 = vpop.f32.mrb[0].mxu0
        %v2002 = vadd.f32 %v797, %v2001
        %v2003 = vpop.f32.mrb[0].mxu0
        %v2004 = vadd.f32 %v793, %v2003
        %v2005 = vpop.f32.mrb[0].mxu0
        %v2006 = vadd.f32 %v797, %v2005
        %2007 = vmatprep.mubr.bf16.mxu0 %v621
        %2008 = vmatmul.mubr.bf16.gmra.mrb[0].mxu0 %v620
        %v2009 = vpop.f32.mrb[0].mxu0
        %v2010 = vadd.f32 %v793, %v2009
        %v2011 = vpop.f32.mrb[0].mxu0
        %v2012 = vadd.f32 %v797, %v2011
        %v2013 = vpop.f32.mrb[0].mxu0
        %v2014 = vadd.f32 %v793, %v2013
        %v2015 = vpop.f32.mrb[0].mxu0
        %v2016 = vadd.f32 %v797, %v2015
        %2017 = vmatprep.mubr.bf16.mxu0 %v623
        %2018 = vmatmul.mubr.bf16.gmra.mrb[0].mxu0 %v622
        %v2019 = vpop.f32.mrb[0].mxu0
        %v2020 = vadd.f32 %v793, %v2019
        %v2021 = vpop.f32.mrb[0].mxu0
        %v2022 = vadd.f32 %v797, %v2021
        %v2023 = vpop.f32.mrb[0].mxu0
        %v2024 = vadd.f32 %v793, %v2023
        %v2025 = vpop.f32.mrb[0].mxu0
        %v2026 = vadd.f32 %v797, %v2025
        %2027 = vmatprep.mubr.bf16.mxu0 %v625
        %2028 = vmatmul.mubr.bf16.gmra.mrb[0].mxu0 %v624
        %v2029 = vpop.f32.mrb[0].mxu0
        %v2030 = vadd.f32 %v793, %v2029
        %v2031 = vpop.f32.mrb[0].mxu0
        %v2032 = vadd.f32 %v797, %v2031
        %v2033 = vpop.f32.mrb[0].mxu0
        %v2034 = vadd.f32 %v793, %v2033
        %v2035 = vpop.f32.mrb[0].mxu0
        %v2036 = vadd.f32 %v797, %v2035
        %2037 = vmatprep.mubr.bf16.mxu0 %v627
        %2038 = vmatmul.mubr.bf16.gmra.mrb[0].mxu0 %v626
        %v2039 = vpop.f32.mrb[0].mxu0
        %v2040 = vadd.f32 %v793, %v2039
        %v2041 = vpop.f32.mrb[0].mxu0
        %v2042 = vadd.f32 %v797, %v2041
        %v2043 = vpop.f32.mrb[0].mxu0
        %v2044 = vadd.f32 %v793, %v2043
        %v2045 = vpop.f32.mrb[0].mxu0
        %v2046 = vadd.f32 %v797, %v2045
        %2047 = vmatprep.mubr.bf16.mxu0 %v629
        %2048 = vmatmul.mubr.bf16.gmra.mrb[0].mxu0 %v628
        %v2049 = vpop.f32.mrb[0].mxu0
        %v2050 = vadd.f32 %v793, %v2049
        %v2051 = vpop.f32.mrb[0].mxu0
        %v2052 = vadd.f32 %v797, %v2051
        %v2053 = vpop.f32.mrb[0].mxu0
        %v2054 = vadd.f32 %v793, %v2053
        %v2055 = vpop.f32.mrb[0].mxu0
        %v2056 = vadd.f32 %v797, %v2055
        %2057 = vmatprep.mubr.bf16.mxu0 %v631
        %2058 = vmatmul.mubr.bf16.gmra.mrb[0].mxu0 %v630
        %v2059 = vpop.f32.mrb[0].mxu0
        %v2060 = vadd.f32 %v793, %v2059
        %v2061 = vpop.f32.mrb[0].mxu0
        %v2062 = vadd.f32 %v797, %v2061
        %v2063 = vpop.f32.mrb[0].mxu0
        %v2064 = vadd.f32 %v793, %v2063
        %v2065 = vpop.f32.mrb[0].mxu0
        %v2066 = vadd.f32 %v797, %v2065
        %2067 = vmatprep.mubr.bf16.mxu0 %v633
        %2068 = vmatmul.mubr.bf16.gmra.mrb[0].mxu0 %v632
        %v2069 = vpop.f32.mrb[0].mxu0
        %v2070 = vadd.f32 %v793, %v2069
        %v2071 = vpop.f32.mrb[0].mxu0
        %v2072 = vadd.f32 %v797, %v2071
        %v2073 = vpop.f32.mrb[0].mxu0
        %v2074 = vadd.f32 %v793, %v2073
        %v2075 = vpop.f32.mrb[0].mxu0
        %v2076 = vadd.f32 %v797, %v2075
        %2077 = vmatprep.mubr.bf16.mxu0 %v635
        %2078 = vmatmul.mubr.bf16.gmra.mrb[0].mxu0 %v634
        %v2079 = vpop.f32.mrb[0].mxu0
        %v2080 = vadd.f32 %v793, %v2079
        %v2081 = vpop.f32.mrb[0].mxu0
        %v2082 = vadd.f32 %v797, %v2081
        %v2083 = vpop.f32.mrb[0].mxu0
        %v2084 = vadd.f32 %v793, %v2083
        %v2085 = vpop.f32.mrb[0].mxu0
        %v2086 = vadd.f32 %v797, %v2085
        %2087 = vmatprep.mubr.bf16.mxu0 %v637
        %2088 = vmatmul.mubr.bf16.gmra.mrb[0].mxu0 %v636
        %v2089 = vpop.f32.mrb[0].mxu0
        %v2090 = vadd.f32 %v793, %v2089
        %v2091 = vpop.f32.mrb[0].mxu0
        %v2092 = vadd.f32 %v797, %v2091
        %v2093 = vpop.f32.mrb[0].mxu0
        %v2094 = vadd.f32 %v793, %v2093
        %v2095 = vpop.f32.mrb[0].mxu0
        %v2096 = vadd.f32 %v797, %v2095
        %2097 = vmatprep.mubr.bf16.mxu0 %v639
        %2098 = vmatmul.mubr.bf16.gmra.mrb[0].mxu0 %v638
        %v2099 = vpop.f32.mrb[0].mxu0
        %v2100 = vadd.f32 %v793, %v2099
        %v2101 = vpop.f32.mrb[0].mxu0
        %v2102 = vadd.f32 %v797, %v2101
        %v2103 = vpop.f32.mrb[0].mxu0
        %v2104 = vadd.f32 %v793, %v2103
        %v2105 = vpop.f32.mrb[0].mxu0
        %v2106 = vadd.f32 %v797, %v2105
        %2107 = vmatprep.mubr.bf16.mxu0 %v641
        %2108 = vmatmul.mubr.bf16.gmra.mrb[0].mxu0 %v640
        %v2109 = vpop.f32.mrb[0].mxu0
        %v2110 = vadd.f32 %v793, %v2109
        %v2111 = vpop.f32.mrb[0].mxu0
        %v2112 = vadd.f32 %v797, %v2111
        %v2113 = vpop.f32.mrb[0].mxu0
        %v2114 = vadd.f32 %v793, %v2113
        %v2115 = vpop.f32.mrb[0].mxu0
        %v2116 = vadd.f32 %v797, %v2115
        %2117 = vmatprep.mubr.bf16.mxu0 %v643
        %2118 = vmatmul.mubr.bf16.gmra.mrb[0].mxu0 %v642
        %v2119 = vpop.f32.mrb[0].mxu0
        %v2120 = vadd.f32 %v793, %v2119
        %v2121 = vpop.f32.mrb[0].mxu0
        %v2122 = vadd.f32 %v797, %v2121
        %v2123 = vpop.f32.mrb[0].mxu0
        %v2124 = vadd.f32 %v793, %v2123
        %v2125 = vpop.f32.mrb[0].mxu0
        %v2126 = vadd.f32 %v797, %v2125
        %2127 = vmatprep.mubr.bf16.mxu0 %v645
        %2128 = vmatmul.mubr.bf16.gmra.mrb[0].mxu0 %v644
        %v2129 = vpop.f32.mrb[0].mxu0
        %v2130 = vadd.f32 %v793, %v2129
        %v2131 = vpop.f32.mrb[0].mxu0
        %v2132 = vadd.f32 %v797, %v2131
        %v2133 = vpop.f32.mrb[0].mxu0
        %v2134 = vadd.f32 %v793, %v2133
        %v2135 = vpop.f32.mrb[0].mxu0
        %v2136 = vadd.f32 %v797, %v2135
        %2137 = vmatprep.mubr.bf16.mxu0 %v647
        %2138 = vmatmul.mubr.bf16.gmra.mrb[0].mxu0 %v646
        %v2139 = vpop.f32.mrb[0].mxu0
        %v2140 = vadd.f32 %v793, %v2139
        %v2141 = vpop.f32.mrb[0].mxu0
        %v2142 = vadd.f32 %v797, %v2141
        %v2143 = vpop.f32.mrb[0].mxu0
        %v2144 = vadd.f32 %v793, %v2143
        %v2145 = vpop.f32.mrb[0].mxu0
        %v2146 = vadd.f32 %v797, %v2145
        %2147 = vmatprep.mubr.bf16.mxu0 %v649
        %2148 = vmatmul.mubr.bf16.gmra.mrb[0].mxu0 %v648
        %v2149 = vpop.f32.mrb[0].mxu0
        %v2150 = vadd.f32 %v793, %v2149
        %v2151 = vpop.f32.mrb[0].mxu0
        %v2152 = vadd.f32 %v797, %v2151
        %v2153 = vpop.f32.mrb[0].mxu0
        %v2154 = vadd.f32 %v793, %v2153
        %v2155 = vpop.f32.mrb[0].mxu0
        %v2156 = vadd.f32 %v797, %v2155
        %2157 = vmatprep.mubr.bf16.mxu0 %v651
        %2158 = vmatmul.mubr.bf16.gmra.mrb[0].mxu0 %v650
        %v2159 = vpop.f32.mrb[0].mxu0
        %v2160 = vadd.f32 %v793, %v2159
        %v2161 = vpop.f32.mrb[0].mxu0
        %v2162 = vadd.f32 %v797, %v2161
        %v2163 = vpop.f32.mrb[0].mxu0
        %v2164 = vadd.f32 %v793, %v2163
        %v2165 = vpop.f32.mrb[0].mxu0
        %v2166 = vadd.f32 %v797, %v2165
        %2167 = vdwg.mxu0
        %2168 = vmatprep.subr.bf16.mxu0 %v1211
        %2169 = vmatpush1.bf16.msra.mxu0 %v1210
        %2170 = vmatprep.subr.bf16.mxu0 %v1219
        %2171 = vmatpush1.bf16.msra.mxu0 %v1218
        %2172 = vmatprep.subr.bf16.mxu0 %v1227
        %2173 = vmatpush1.bf16.msra.mxu0 %v1226
        %2174 = vmatprep.subr.bf16.mxu0 %v1235
        %2175 = vmatpush1.bf16.msra.mxu0 %v1234
        %2176 = vmatprep.subr.bf16.mxu0 %v1243
        %2177 = vmatpush1.bf16.msra.mxu0 %v1242
        %2178 = vmatprep.subr.bf16.mxu0 %v1251
        %2179 = vmatpush1.bf16.msra.mxu0 %v1250
        %2180 = vmatprep.subr.bf16.mxu0 %v1259
        %2181 = vmatpush1.bf16.msra.mxu0 %v1258
        %2182 = vmatprep.subr.bf16.mxu0 %v1267
        %2183 = vmatpush1.bf16.msra.mxu0 %v1266
        %2184 = vmatprep.subr.bf16.mxu0 %v1275
        %2185 = vmatpush1.bf16.msra.mxu0 %v1274
        %2186 = vmatprep.subr.bf16.mxu0 %v1283
        %2187 = vmatpush1.bf16.msra.mxu0 %v1282
        %2188 = vmatprep.subr.bf16.mxu0 %v1291
        %2189 = vmatpush1.bf16.msra.mxu0 %v1290
        %2190 = vmatprep.subr.bf16.mxu0 %v1299
        %2191 = vmatpush1.bf16.msra.mxu0 %v1298
        %2192 = vmatprep.subr.bf16.mxu0 %v1307
        %2193 = vmatpush1.bf16.msra.mxu0 %v1306
        %2194 = vmatprep.subr.bf16.mxu0 %v1315
        %2195 = vmatpush1.bf16.msra.mxu0 %v1314
        %2196 = vmatprep.subr.bf16.mxu0 %v1323
        %2197 = vmatpush1.bf16.msra.mxu0 %v1322
        %2198 = vmatprep.subr.bf16.mxu0 %v1331
        %2199 = vmatpush1.bf16.msra.mxu0 %v1330
        %2200 = vmatprep.mubr.bf16.mxu0 %v589
        %2201 = vmatmul.mubr.bf16.gmra.mrb[0].mxu0 %v588
        %v2202 = vpop.f32.mrb[0].mxu0
        %v2203 = vadd.f32 %v801, %v2202
        %v2204 = vpop.f32.mrb[0].mxu0
        %v2205 = vadd.f32 %v805, %v2204
        %v2206 = vpop.f32.mrb[0].mxu0
        %v2207 = vadd.f32 %v801, %v2206
        %v2208 = vpop.f32.mrb[0].mxu0
        %v2209 = vadd.f32 %v805, %v2208
        %2210 = vmatprep.mubr.bf16.mxu0 %v591
        %2211 = vmatmul.mubr.bf16.gmra.mrb[0].mxu0 %v590
        %v2212 = vpop.f32.mrb[0].mxu0
        %v2213 = vadd.f32 %v801, %v2212
        %v2214 = vpop.f32.mrb[0].mxu0
        %v2215 = vadd.f32 %v805, %v2214
        %v2216 = vpop.f32.mrb[0].mxu0
        %v2217 = vadd.f32 %v801, %v2216
        %v2218 = vpop.f32.mrb[0].mxu0
        %v2219 = vadd.f32 %v805, %v2218
        %2220 = vmatprep.mubr.bf16.mxu0 %v593
        %2221 = vmatmul.mubr.bf16.gmra.mrb[0].mxu0 %v592
        %v2222 = vpop.f32.mrb[0].mxu0
        %v2223 = vadd.f32 %v801, %v2222
        %v2224 = vpop.f32.mrb[0].mxu0
        %v2225 = vadd.f32 %v805, %v2224
        %v2226 = vpop.f32.mrb[0].mxu0
        %v2227 = vadd.f32 %v801, %v2226
        %v2228 = vpop.f32.mrb[0].mxu0
        %v2229 = vadd.f32 %v805, %v2228
        %2230 = vmatprep.mubr.bf16.mxu0 %v595
        %2231 = vmatmul.mubr.bf16.gmra.mrb[0].mxu0 %v594
        %v2232 = vpop.f32.mrb[0].mxu0
        %v2233 = vadd.f32 %v801, %v2232
        %v2234 = vpop.f32.mrb[0].mxu0
        %v2235 = vadd.f32 %v805, %v2234
        %v2236 = vpop.f32.mrb[0].mxu0
        %v2237 = vadd.f32 %v801, %v2236
        %v2238 = vpop.f32.mrb[0].mxu0
        %v2239 = vadd.f32 %v805, %v2238
        %2240 = vmatprep.mubr.bf16.mxu0 %v597
        %2241 = vmatmul.mubr.bf16.gmra.mrb[0].mxu0 %v596
        %v2242 = vpop.f32.mrb[0].mxu0
        %v2243 = vadd.f32 %v801, %v2242
        %v2244 = vpop.f32.mrb[0].mxu0
        %v2245 = vadd.f32 %v805, %v2244
        %v2246 = vpop.f32.mrb[0].mxu0
        %v2247 = vadd.f32 %v801, %v2246
        %v2248 = vpop.f32.mrb[0].mxu0
        %v2249 = vadd.f32 %v805, %v2248
        %2250 = vmatprep.mubr.bf16.mxu0 %v599
        %2251 = vmatmul.mubr.bf16.gmra.mrb[0].mxu0 %v598
        %v2252 = vpop.f32.mrb[0].mxu0
        %v2253 = vadd.f32 %v801, %v2252
        %v2254 = vpop.f32.mrb[0].mxu0
        %v2255 = vadd.f32 %v805, %v2254
        %v2256 = vpop.f32.mrb[0].mxu0
        %v2257 = vadd.f32 %v801, %v2256
        %v2258 = vpop.f32.mrb[0].mxu0
        %v2259 = vadd.f32 %v805, %v2258
        %2260 = vmatprep.mubr.bf16.mxu0 %v601
        %2261 = vmatmul.mubr.bf16.gmra.mrb[0].mxu0 %v600
        %v2262 = vpop.f32.mrb[0].mxu0
        %v2263 = vadd.f32 %v801, %v2262
        %v2264 = vpop.f32.mrb[0].mxu0
        %v2265 = vadd.f32 %v805, %v2264
        %v2266 = vpop.f32.mrb[0].mxu0
        %v2267 = vadd.f32 %v801, %v2266
        %v2268 = vpop.f32.mrb[0].mxu0
        %v2269 = vadd.f32 %v805, %v2268
        %2270 = vmatprep.mubr.bf16.mxu0 %v603
        %2271 = vmatmul.mubr.bf16.gmra.mrb[0].mxu0 %v602
        %v2272 = vpop.f32.mrb[0].mxu0
        %v2273 = vadd.f32 %v801, %v2272
        %v2274 = vpop.f32.mrb[0].mxu0
        %v2275 = vadd.f32 %v805, %v2274
        %v2276 = vpop.f32.mrb[0].mxu0
        %v2277 = vadd.f32 %v801, %v2276
        %v2278 = vpop.f32.mrb[0].mxu0
        %v2279 = vadd.f32 %v805, %v2278
        %2280 = vmatprep.mubr.bf16.mxu0 %v605
        %2281 = vmatmul.mubr.bf16.gmra.mrb[0].mxu0 %v604
        %v2282 = vpop.f32.mrb[0].mxu0
        %v2283 = vadd.f32 %v801, %v2282
        %v2284 = vpop.f32.mrb[0].mxu0
        %v2285 = vadd.f32 %v805, %v2284
        %v2286 = vpop.f32.mrb[0].mxu0
        %v2287 = vadd.f32 %v801, %v2286
        %v2288 = vpop.f32.mrb[0].mxu0
        %v2289 = vadd.f32 %v805, %v2288
        %2290 = vmatprep.mubr.bf16.mxu0 %v607
        %2291 = vmatmul.mubr.bf16.gmra.mrb[0].mxu0 %v606
        %v2292 = vpop.f32.mrb[0].mxu0
        %v2293 = vadd.f32 %v801, %v2292
        %v2294 = vpop.f32.mrb[0].mxu0
        %v2295 = vadd.f32 %v805, %v2294
        %v2296 = vpop.f32.mrb[0].mxu0
        %v2297 = vadd.f32 %v801, %v2296
        %v2298 = vpop.f32.mrb[0].mxu0
        %v2299 = vadd.f32 %v805, %v2298
        %2300 = vmatprep.mubr.bf16.mxu0 %v609
        %2301 = vmatmul.mubr.bf16.gmra.mrb[0].mxu0 %v608
        %v2302 = vpop.f32.mrb[0].mxu0
        %v2303 = vadd.f32 %v801, %v2302
        %v2304 = vpop.f32.mrb[0].mxu0
        %v2305 = vadd.f32 %v805, %v2304
        %v2306 = vpop.f32.mrb[0].mxu0
        %v2307 = vadd.f32 %v801, %v2306
        %v2308 = vpop.f32.mrb[0].mxu0
        %v2309 = vadd.f32 %v805, %v2308
        %2310 = vmatprep.mubr.bf16.mxu0 %v611
        %2311 = vmatmul.mubr.bf16.gmra.mrb[0].mxu0 %v610
        %v2312 = vpop.f32.mrb[0].mxu0
        %v2313 = vadd.f32 %v801, %v2312
        %v2314 = vpop.f32.mrb[0].mxu0
        %v2315 = vadd.f32 %v805, %v2314
        %v2316 = vpop.f32.mrb[0].mxu0
        %v2317 = vadd.f32 %v801, %v2316
        %v2318 = vpop.f32.mrb[0].mxu0
        %v2319 = vadd.f32 %v805, %v2318
        %2320 = vmatprep.mubr.bf16.mxu0 %v613
        %2321 = vmatmul.mubr.bf16.gmra.mrb[0].mxu0 %v612
        %v2322 = vpop.f32.mrb[0].mxu0
        %v2323 = vadd.f32 %v801, %v2322
        %v2324 = vpop.f32.mrb[0].mxu0
        %v2325 = vadd.f32 %v805, %v2324
        %v2326 = vpop.f32.mrb[0].mxu0
        %v2327 = vadd.f32 %v801, %v2326
        %v2328 = vpop.f32.mrb[0].mxu0
        %v2329 = vadd.f32 %v805, %v2328
        %2330 = vmatprep.mubr.bf16.mxu0 %v615
        %2331 = vmatmul.mubr.bf16.gmra.mrb[0].mxu0 %v614
        %v2332 = vpop.f32.mrb[0].mxu0
        %v2333 = vadd.f32 %v801, %v2332
        %v2334 = vpop.f32.mrb[0].mxu0
        %v2335 = vadd.f32 %v805, %v2334
        %v2336 = vpop.f32.mrb[0].mxu0
        %v2337 = vadd.f32 %v801, %v2336
        %v2338 = vpop.f32.mrb[0].mxu0
        %v2339 = vadd.f32 %v805, %v2338
        %2340 = vmatprep.mubr.bf16.mxu0 %v617
        %2341 = vmatmul.mubr.bf16.gmra.mrb[0].mxu0 %v616
        %v2342 = vpop.f32.mrb[0].mxu0
        %v2343 = vadd.f32 %v801, %v2342
        %v2344 = vpop.f32.mrb[0].mxu0
        %v2345 = vadd.f32 %v805, %v2344
        %v2346 = vpop.f32.mrb[0].mxu0
        %v2347 = vadd.f32 %v801, %v2346
        %v2348 = vpop.f32.mrb[0].mxu0
        %v2349 = vadd.f32 %v805, %v2348
        %2350 = vmatprep.mubr.bf16.mxu0 %v619
        %2351 = vmatmul.mubr.bf16.gmra.mrb[0].mxu0 %v618
        %v2352 = vpop.f32.mrb[0].mxu0
        %v2353 = vadd.f32 %v801, %v2352
        %v2354 = vpop.f32.mrb[0].mxu0
        %v2355 = vadd.f32 %v805, %v2354
        %v2356 = vpop.f32.mrb[0].mxu0
        %v2357 = vadd.f32 %v801, %v2356
        %v2358 = vpop.f32.mrb[0].mxu0
        %v2359 = vadd.f32 %v805, %v2358
        %2360 = vmatprep.mubr.bf16.mxu0 %v621
        %2361 = vmatmul.mubr.bf16.gmra.mrb[0].mxu0 %v620
        %v2362 = vpop.f32.mrb[0].mxu0
        %v2363 = vadd.f32 %v801, %v2362
        %v2364 = vpop.f32.mrb[0].mxu0
        %v2365 = vadd.f32 %v805, %v2364
        %v2366 = vpop.f32.mrb[0].mxu0
        %v2367 = vadd.f32 %v801, %v2366
        %v2368 = vpop.f32.mrb[0].mxu0
        %v2369 = vadd.f32 %v805, %v2368
        %2370 = vmatprep.mubr.bf16.mxu0 %v623
        %2371 = vmatmul.mubr.bf16.gmra.mrb[0].mxu0 %v622
        %v2372 = vpop.f32.mrb[0].mxu0
        %v2373 = vadd.f32 %v801, %v2372
        %v2374 = vpop.f32.mrb[0].mxu0
        %v2375 = vadd.f32 %v805, %v2374
        %v2376 = vpop.f32.mrb[0].mxu0
        %v2377 = vadd.f32 %v801, %v2376
        %v2378 = vpop.f32.mrb[0].mxu0
        %v2379 = vadd.f32 %v805, %v2378
        %2380 = vmatprep.mubr.bf16.mxu0 %v625
        %2381 = vmatmul.mubr.bf16.gmra.mrb[0].mxu0 %v624
        %v2382 = vpop.f32.mrb[0].mxu0
        %v2383 = vadd.f32 %v801, %v2382
        %v2384 = vpop.f32.mrb[0].mxu0
        %v2385 = vadd.f32 %v805, %v2384
        %v2386 = vpop.f32.mrb[0].mxu0
        %v2387 = vadd.f32 %v801, %v2386
        %v2388 = vpop.f32.mrb[0].mxu0
        %v2389 = vadd.f32 %v805, %v2388
        %2390 = vmatprep.mubr.bf16.mxu0 %v627
        %2391 = vmatmul.mubr.bf16.gmra.mrb[0].mxu0 %v626
        %v2392 = vpop.f32.mrb[0].mxu0
        %v2393 = vadd.f32 %v801, %v2392
        %v2394 = vpop.f32.mrb[0].mxu0
        %v2395 = vadd.f32 %v805, %v2394
        %v2396 = vpop.f32.mrb[0].mxu0
        %v2397 = vadd.f32 %v801, %v2396
        %v2398 = vpop.f32.mrb[0].mxu0
        %v2399 = vadd.f32 %v805, %v2398
        %2400 = vmatprep.mubr.bf16.mxu0 %v629
        %2401 = vmatmul.mubr.bf16.gmra.mrb[0].mxu0 %v628
        %v2402 = vpop.f32.mrb[0].mxu0
        %v2403 = vadd.f32 %v801, %v2402
        %v2404 = vpop.f32.mrb[0].mxu0
        %v2405 = vadd.f32 %v805, %v2404
        %v2406 = vpop.f32.mrb[0].mxu0
        %v2407 = vadd.f32 %v801, %v2406
        %v2408 = vpop.f32.mrb[0].mxu0
        %v2409 = vadd.f32 %v805, %v2408
        %2410 = vmatprep.mubr.bf16.mxu0 %v631
        %2411 = vmatmul.mubr.bf16.gmra.mrb[0].mxu0 %v630
        %v2412 = vpop.f32.mrb[0].mxu0
        %v2413 = vadd.f32 %v801, %v2412
        %v2414 = vpop.f32.mrb[0].mxu0
        %v2415 = vadd.f32 %v805, %v2414
        %v2416 = vpop.f32.mrb[0].mxu0
        %v2417 = vadd.f32 %v801, %v2416
        %v2418 = vpop.f32.mrb[0].mxu0
        %v2419 = vadd.f32 %v805, %v2418
        %2420 = vmatprep.mubr.bf16.mxu0 %v633
        %2421 = vmatmul.mubr.bf16.gmra.mrb[0].mxu0 %v632
        %v2422 = vpop.f32.mrb[0].mxu0
        %v2423 = vadd.f32 %v801, %v2422
        %v2424 = vpop.f32.mrb[0].mxu0
        %v2425 = vadd.f32 %v805, %v2424
        %v2426 = vpop.f32.mrb[0].mxu0
        %v2427 = vadd.f32 %v801, %v2426
        %v2428 = vpop.f32.mrb[0].mxu0
        %v2429 = vadd.f32 %v805, %v2428
        %2430 = vmatprep.mubr.bf16.mxu0 %v635
        %2431 = vmatmul.mubr.bf16.gmra.mrb[0].mxu0 %v634
        %v2432 = vpop.f32.mrb[0].mxu0
        %v2433 = vadd.f32 %v801, %v2432
        %v2434 = vpop.f32.mrb[0].mxu0
        %v2435 = vadd.f32 %v805, %v2434
        %v2436 = vpop.f32.mrb[0].mxu0
        %v2437 = vadd.f32 %v801, %v2436
        %v2438 = vpop.f32.mrb[0].mxu0
        %v2439 = vadd.f32 %v805, %v2438
        %2440 = vmatprep.mubr.bf16.mxu0 %v637
        %2441 = vmatmul.mubr.bf16.gmra.mrb[0].mxu0 %v636
        %v2442 = vpop.f32.mrb[0].mxu0
        %v2443 = vadd.f32 %v801, %v2442
        %v2444 = vpop.f32.mrb[0].mxu0
        %v2445 = vadd.f32 %v805, %v2444
        %v2446 = vpop.f32.mrb[0].mxu0
        %v2447 = vadd.f32 %v801, %v2446
        %v2448 = vpop.f32.mrb[0].mxu0
        %v2449 = vadd.f32 %v805, %v2448
        %2450 = vmatprep.mubr.bf16.mxu0 %v639
        %2451 = vmatmul.mubr.bf16.gmra.mrb[0].mxu0 %v638
        %v2452 = vpop.f32.mrb[0].mxu0
        %v2453 = vadd.f32 %v801, %v2452
        %v2454 = vpop.f32.mrb[0].mxu0
        %v2455 = vadd.f32 %v805, %v2454
        %v2456 = vpop.f32.mrb[0].mxu0
        %v2457 = vadd.f32 %v801, %v2456
        %v2458 = vpop.f32.mrb[0].mxu0
        %v2459 = vadd.f32 %v805, %v2458
        %2460 = vmatprep.mubr.bf16.mxu0 %v641
        %2461 = vmatmul.mubr.bf16.gmra.mrb[0].mxu0 %v640
        %v2462 = vpop.f32.mrb[0].mxu0
        %v2463 = vadd.f32 %v801, %v2462
        %v2464 = vpop.f32.mrb[0].mxu0
        %v2465 = vadd.f32 %v805, %v2464
        %v2466 = vpop.f32.mrb[0].mxu0
        %v2467 = vadd.f32 %v801, %v2466
        %v2468 = vpop.f32.mrb[0].mxu0
        %v2469 = vadd.f32 %v805, %v2468
        %2470 = vmatprep.mubr.bf16.mxu0 %v643
        %2471 = vmatmul.mubr.bf16.gmra.mrb[0].mxu0 %v642
        %v2472 = vpop.f32.mrb[0].mxu0
        %v2473 = vadd.f32 %v801, %v2472
        %v2474 = vpop.f32.mrb[0].mxu0
        %v2475 = vadd.f32 %v805, %v2474
        %v2476 = vpop.f32.mrb[0].mxu0
        %v2477 = vadd.f32 %v801, %v2476
        %v2478 = vpop.f32.mrb[0].mxu0
        %v2479 = vadd.f32 %v805, %v2478
        %2480 = vmatprep.mubr.bf16.mxu0 %v645
        %2481 = vmatmul.mubr.bf16.gmra.mrb[0].mxu0 %v644
        %v2482 = vpop.f32.mrb[0].mxu0
        %v2483 = vadd.f32 %v801, %v2482
        %v2484 = vpop.f32.mrb[0].mxu0
        %v2485 = vadd.f32 %v805, %v2484
        %v2486 = vpop.f32.mrb[0].mxu0
        %v2487 = vadd.f32 %v801, %v2486
        %v2488 = vpop.f32.mrb[0].mxu0
        %v2489 = vadd.f32 %v805, %v2488
        %2490 = vmatprep.mubr.bf16.mxu0 %v647
        %2491 = vmatmul.mubr.bf16.gmra.mrb[0].mxu0 %v646
        %v2492 = vpop.f32.mrb[0].mxu0
        %v2493 = vadd.f32 %v801, %v2492
        %v2494 = vpop.f32.mrb[0].mxu0
        %v2495 = vadd.f32 %v805, %v2494
        %v2496 = vpop.f32.mrb[0].mxu0
        %v2497 = vadd.f32 %v801, %v2496
        %v2498 = vpop.f32.mrb[0].mxu0
        %v2499 = vadd.f32 %v805, %v2498
        %2500 = vmatprep.mubr.bf16.mxu0 %v649
        %2501 = vmatmul.mubr.bf16.gmra.mrb[0].mxu0 %v648
        %v2502 = vpop.f32.mrb[0].mxu0
        %v2503 = vadd.f32 %v801, %v2502
        %v2504 = vpop.f32.mrb[0].mxu0
        %v2505 = vadd.f32 %v805, %v2504
        %v2506 = vpop.f32.mrb[0].mxu0
        %v2507 = vadd.f32 %v801, %v2506
        %v2508 = vpop.f32.mrb[0].mxu0
        %v2509 = vadd.f32 %v805, %v2508
        %2510 = vmatprep.mubr.bf16.mxu0 %v651
        %2511 = vmatmul.mubr.bf16.gmra.mrb[0].mxu0 %v650
        %v2512 = vpop.f32.mrb[0].mxu0
        %v2513 = vadd.f32 %v801, %v2512
        %v2514 = vpop.f32.mrb[0].mxu0
        %v2515 = vadd.f32 %v805, %v2514
        %v2516 = vpop.f32.mrb[0].mxu0
        %v2517 = vadd.f32 %v801, %v2516
        %v2518 = vpop.f32.mrb[0].mxu0
        %v2519 = vadd.f32 %v805, %v2518
        %2520 = vdwg.mxu0
        %2521 = vmatprep.subr.bf16.mxu0 %v1213
        %2522 = vmatpush1.bf16.msra.mxu0 %v1212
        %2523 = vmatprep.subr.bf16.mxu0 %v1221
        %2524 = vmatpush1.bf16.msra.mxu0 %v1220
        %2525 = vmatprep.subr.bf16.mxu0 %v1229
        %2526 = vmatpush1.bf16.msra.mxu0 %v1228
        %2527 = vmatprep.subr.bf16.mxu0 %v1237
        %2528 = vmatpush1.bf16.msra.mxu0 %v1236
        %2529 = vmatprep.subr.bf16.mxu0 %v1245
        %2530 = vmatpush1.bf16.msra.mxu0 %v1244
        %2531 = vmatprep.subr.bf16.mxu0 %v1253
        %2532 = vmatpush1.bf16.msra.mxu0 %v1252
        %2533 = vmatprep.subr.bf16.mxu0 %v1261
        %2534 = vmatpush1.bf16.msra.mxu0 %v1260
        %2535 = vmatprep.subr.bf16.mxu0 %v1269
        %2536 = vmatpush1.bf16.msra.mxu0 %v1268
        %2537 = vmatprep.subr.bf16.mxu0 %v1277
        %2538 = vmatpush1.bf16.msra.mxu0 %v1276
        %2539 = vmatprep.subr.bf16.mxu0 %v1285
        %2540 = vmatpush1.bf16.msra.mxu0 %v1284
        %2541 = vmatprep.subr.bf16.mxu0 %v1293
        %2542 = vmatpush1.bf16.msra.mxu0 %v1292
        %2543 = vmatprep.subr.bf16.mxu0 %v1301
        %2544 = vmatpush1.bf16.msra.mxu0 %v1300
        %2545 = vmatprep.subr.bf16.mxu0 %v1309
        %2546 = vmatpush1.bf16.msra.mxu0 %v1308
        %2547 = vmatprep.subr.bf16.mxu0 %v1317
        %2548 = vmatpush1.bf16.msra.mxu0 %v1316
        %2549 = vmatprep.subr.bf16.mxu0 %v1325
        %2550 = vmatpush1.bf16.msra.mxu0 %v1324
        %2551 = vmatprep.subr.bf16.mxu0 %v1333
        %2552 = vmatpush1.bf16.msra.mxu0 %v1332
        %2553 = vmatprep.mubr.bf16.mxu0 %v589
        %2554 = vmatmul.mubr.bf16.gmra.mrb[0].mxu0 %v588
        %v2555 = vpop.f32.mrb[0].mxu0
        %v2556 = vadd.f32 %v809, %v2555
        %v2557 = vpop.f32.mrb[0].mxu0
        %v2558 = vadd.f32 %v813, %v2557
        %v2559 = vpop.f32.mrb[0].mxu0
        %v2560 = vadd.f32 %v809, %v2559
        %v2561 = vpop.f32.mrb[0].mxu0
        %v2562 = vadd.f32 %v813, %v2561
        %2563 = vmatprep.mubr.bf16.mxu0 %v591
        %2564 = vmatmul.mubr.bf16.gmra.mrb[0].mxu0 %v590
        %v2565 = vpop.f32.mrb[0].mxu0
        %v2566 = vadd.f32 %v809, %v2565
        %v2567 = vpop.f32.mrb[0].mxu0
        %v2568 = vadd.f32 %v813, %v2567
        %v2569 = vpop.f32.mrb[0].mxu0
        %v2570 = vadd.f32 %v809, %v2569
        %v2571 = vpop.f32.mrb[0].mxu0
        %v2572 = vadd.f32 %v813, %v2571
        %2573 = vmatprep.mubr.bf16.mxu0 %v593
        %2574 = vmatmul.mubr.bf16.gmra.mrb[0].mxu0 %v592
        %v2575 = vpop.f32.mrb[0].mxu0
        %v2576 = vadd.f32 %v809, %v2575
        %v2577 = vpop.f32.mrb[0].mxu0
        %v2578 = vadd.f32 %v813, %v2577
        %v2579 = vpop.f32.mrb[0].mxu0
        %v2580 = vadd.f32 %v809, %v2579
        %v2581 = vpop.f32.mrb[0].mxu0
        %v2582 = vadd.f32 %v813, %v2581
        %2583 = vmatprep.mubr.bf16.mxu0 %v595
        %2584 = vmatmul.mubr.bf16.gmra.mrb[0].mxu0 %v594
        %v2585 = vpop.f32.mrb[0].mxu0
        %v2586 = vadd.f32 %v809, %v2585
        %v2587 = vpop.f32.mrb[0].mxu0
        %v2588 = vadd.f32 %v813, %v2587
        %v2589 = vpop.f32.mrb[0].mxu0
        %v2590 = vadd.f32 %v809, %v2589
        %v2591 = vpop.f32.mrb[0].mxu0
        %v2592 = vadd.f32 %v813, %v2591
        %2593 = vmatprep.mubr.bf16.mxu0 %v597
        %2594 = vmatmul.mubr.bf16.gmra.mrb[0].mxu0 %v596
        %v2595 = vpop.f32.mrb[0].mxu0
        %v2596 = vadd.f32 %v809, %v2595
        %v2597 = vpop.f32.mrb[0].mxu0
        %v2598 = vadd.f32 %v813, %v2597
        %v2599 = vpop.f32.mrb[0].mxu0
        %v2600 = vadd.f32 %v809, %v2599
        %v2601 = vpop.f32.mrb[0].mxu0
        %v2602 = vadd.f32 %v813, %v2601
        %2603 = vmatprep.mubr.bf16.mxu0 %v599
        %2604 = vmatmul.mubr.bf16.gmra.mrb[0].mxu0 %v598
        %v2605 = vpop.f32.mrb[0].mxu0
        %v2606 = vadd.f32 %v809, %v2605
        %v2607 = vpop.f32.mrb[0].mxu0
        %v2608 = vadd.f32 %v813, %v2607
        %v2609 = vpop.f32.mrb[0].mxu0
        %v2610 = vadd.f32 %v809, %v2609
        %v2611 = vpop.f32.mrb[0].mxu0
        %v2612 = vadd.f32 %v813, %v2611
        %2613 = vmatprep.mubr.bf16.mxu0 %v601
        %2614 = vmatmul.mubr.bf16.gmra.mrb[0].mxu0 %v600
        %v2615 = vpop.f32.mrb[0].mxu0
        %v2616 = vadd.f32 %v809, %v2615
        %v2617 = vpop.f32.mrb[0].mxu0
        %v2618 = vadd.f32 %v813, %v2617
        %v2619 = vpop.f32.mrb[0].mxu0
        %v2620 = vadd.f32 %v809, %v2619
        %v2621 = vpop.f32.mrb[0].mxu0
        %v2622 = vadd.f32 %v813, %v2621
        %2623 = vmatprep.mubr.bf16.mxu0 %v603
        %2624 = vmatmul.mubr.bf16.gmra.mrb[0].mxu0 %v602
        %v2625 = vpop.f32.mrb[0].mxu0
        %v2626 = vadd.f32 %v809, %v2625
        %v2627 = vpop.f32.mrb[0].mxu0
        %v2628 = vadd.f32 %v813, %v2627
        %v2629 = vpop.f32.mrb[0].mxu0
        %v2630 = vadd.f32 %v809, %v2629
        %v2631 = vpop.f32.mrb[0].mxu0
        %v2632 = vadd.f32 %v813, %v2631
        %2633 = vmatprep.mubr.bf16.mxu0 %v605
        %2634 = vmatmul.mubr.bf16.gmra.mrb[0].mxu0 %v604
        %v2635 = vpop.f32.mrb[0].mxu0
        %v2636 = vadd.f32 %v809, %v2635
        %v2637 = vpop.f32.mrb[0].mxu0
        %v2638 = vadd.f32 %v813, %v2637
        %v2639 = vpop.f32.mrb[0].mxu0
        %v2640 = vadd.f32 %v809, %v2639
        %v2641 = vpop.f32.mrb[0].mxu0
        %v2642 = vadd.f32 %v813, %v2641
        %2643 = vmatprep.mubr.bf16.mxu0 %v607
        %2644 = vmatmul.mubr.bf16.gmra.mrb[0].mxu0 %v606
        %v2645 = vpop.f32.mrb[0].mxu0
        %v2646 = vadd.f32 %v809, %v2645
        %v2647 = vpop.f32.mrb[0].mxu0
        %v2648 = vadd.f32 %v813, %v2647
        %v2649 = vpop.f32.mrb[0].mxu0
        %v2650 = vadd.f32 %v809, %v2649
        %v2651 = vpop.f32.mrb[0].mxu0
        %v2652 = vadd.f32 %v813, %v2651
        %2653 = vmatprep.mubr.bf16.mxu0 %v609
        %2654 = vmatmul.mubr.bf16.gmra.mrb[0].mxu0 %v608
        %v2655 = vpop.f32.mrb[0].mxu0
        %v2656 = vadd.f32 %v809, %v2655
        %v2657 = vpop.f32.mrb[0].mxu0
        %v2658 = vadd.f32 %v813, %v2657
        %v2659 = vpop.f32.mrb[0].mxu0
        %v2660 = vadd.f32 %v809, %v2659
        %v2661 = vpop.f32.mrb[0].mxu0
        %v2662 = vadd.f32 %v813, %v2661
        %2663 = vmatprep.mubr.bf16.mxu0 %v611
        %2664 = vmatmul.mubr.bf16.gmra.mrb[0].mxu0 %v610
        %v2665 = vpop.f32.mrb[0].mxu0
        %v2666 = vadd.f32 %v809, %v2665
        %v2667 = vpop.f32.mrb[0].mxu0
        %v2668 = vadd.f32 %v813, %v2667
        %v2669 = vpop.f32.mrb[0].mxu0
        %v2670 = vadd.f32 %v809, %v2669
        %v2671 = vpop.f32.mrb[0].mxu0
        %v2672 = vadd.f32 %v813, %v2671
        %2673 = vmatprep.mubr.bf16.mxu0 %v613
        %2674 = vmatmul.mubr.bf16.gmra.mrb[0].mxu0 %v612
        %v2675 = vpop.f32.mrb[0].mxu0
        %v2676 = vadd.f32 %v809, %v2675
        %v2677 = vpop.f32.mrb[0].mxu0
        %v2678 = vadd.f32 %v813, %v2677
        %v2679 = vpop.f32.mrb[0].mxu0
        %v2680 = vadd.f32 %v809, %v2679
        %v2681 = vpop.f32.mrb[0].mxu0
        %v2682 = vadd.f32 %v813, %v2681
        %2683 = vmatprep.mubr.bf16.mxu0 %v615
        %2684 = vmatmul.mubr.bf16.gmra.mrb[0].mxu0 %v614
        %v2685 = vpop.f32.mrb[0].mxu0
        %v2686 = vadd.f32 %v809, %v2685
        %v2687 = vpop.f32.mrb[0].mxu0
        %v2688 = vadd.f32 %v813, %v2687
        %v2689 = vpop.f32.mrb[0].mxu0
        %v2690 = vadd.f32 %v809, %v2689
        %v2691 = vpop.f32.mrb[0].mxu0
        %v2692 = vadd.f32 %v813, %v2691
        %2693 = vmatprep.mubr.bf16.mxu0 %v617
        %2694 = vmatmul.mubr.bf16.gmra.mrb[0].mxu0 %v616
        %v2695 = vpop.f32.mrb[0].mxu0
        %v2696 = vadd.f32 %v809, %v2695
        %v2697 = vpop.f32.mrb[0].mxu0
        %v2698 = vadd.f32 %v813, %v2697
        %v2699 = vpop.f32.mrb[0].mxu0
        %v2700 = vadd.f32 %v809, %v2699
        %v2701 = vpop.f32.mrb[0].mxu0
        %v2702 = vadd.f32 %v813, %v2701
        %2703 = vmatprep.mubr.bf16.mxu0 %v619
        %2704 = vmatmul.mubr.bf16.gmra.mrb[0].mxu0 %v618
        %v2705 = vpop.f32.mrb[0].mxu0
        %v2706 = vadd.f32 %v809, %v2705
        %v2707 = vpop.f32.mrb[0].mxu0
        %v2708 = vadd.f32 %v813, %v2707
        %v2709 = vpop.f32.mrb[0].mxu0
        %v2710 = vadd.f32 %v809, %v2709
        %v2711 = vpop.f32.mrb[0].mxu0
        %v2712 = vadd.f32 %v813, %v2711
        %2713 = vmatprep.mubr.bf16.mxu0 %v621
        %2714 = vmatmul.mubr.bf16.gmra.mrb[0].mxu0 %v620
        %v2715 = vpop.f32.mrb[0].mxu0
        %v2716 = vadd.f32 %v809, %v2715
        %v2717 = vpop.f32.mrb[0].mxu0
        %v2718 = vadd.f32 %v813, %v2717
        %v2719 = vpop.f32.mrb[0].mxu0
        %v2720 = vadd.f32 %v809, %v2719
        %v2721 = vpop.f32.mrb[0].mxu0
        %v2722 = vadd.f32 %v813, %v2721
        %2723 = vmatprep.mubr.bf16.mxu0 %v623
        %2724 = vmatmul.mubr.bf16.gmra.mrb[0].mxu0 %v622
        %v2725 = vpop.f32.mrb[0].mxu0
        %v2726 = vadd.f32 %v809, %v2725
        %v2727 = vpop.f32.mrb[0].mxu0
        %v2728 = vadd.f32 %v813, %v2727
        %v2729 = vpop.f32.mrb[0].mxu0
        %v2730 = vadd.f32 %v809, %v2729
        %v2731 = vpop.f32.mrb[0].mxu0
        %v2732 = vadd.f32 %v813, %v2731
        %2733 = vmatprep.mubr.bf16.mxu0 %v625
        %2734 = vmatmul.mubr.bf16.gmra.mrb[0].mxu0 %v624
        %v2735 = vpop.f32.mrb[0].mxu0
        %v2736 = vadd.f32 %v809, %v2735
        %v2737 = vpop.f32.mrb[0].mxu0
        %v2738 = vadd.f32 %v813, %v2737
        %v2739 = vpop.f32.mrb[0].mxu0
        %v2740 = vadd.f32 %v809, %v2739
        %v2741 = vpop.f32.mrb[0].mxu0
        %v2742 = vadd.f32 %v813, %v2741
        %2743 = vmatprep.mubr.bf16.mxu0 %v627
        %2744 = vmatmul.mubr.bf16.gmra.mrb[0].mxu0 %v626
        %v2745 = vpop.f32.mrb[0].mxu0
        %v2746 = vadd.f32 %v809, %v2745
        %v2747 = vpop.f32.mrb[0].mxu0
        %v2748 = vadd.f32 %v813, %v2747
        %v2749 = vpop.f32.mrb[0].mxu0
        %v2750 = vadd.f32 %v809, %v2749
        %v2751 = vpop.f32.mrb[0].mxu0
        %v2752 = vadd.f32 %v813, %v2751
        %2753 = vmatprep.mubr.bf16.mxu0 %v629
        %2754 = vmatmul.mubr.bf16.gmra.mrb[0].mxu0 %v628
        %v2755 = vpop.f32.mrb[0].mxu0
        %v2756 = vadd.f32 %v809, %v2755
        %v2757 = vpop.f32.mrb[0].mxu0
        %v2758 = vadd.f32 %v813, %v2757
        %v2759 = vpop.f32.mrb[0].mxu0
        %v2760 = vadd.f32 %v809, %v2759
        %v2761 = vpop.f32.mrb[0].mxu0
        %v2762 = vadd.f32 %v813, %v2761
        %2763 = vmatprep.mubr.bf16.mxu0 %v631
        %2764 = vmatmul.mubr.bf16.gmra.mrb[0].mxu0 %v630
        %v2765 = vpop.f32.mrb[0].mxu0
        %v2766 = vadd.f32 %v809, %v2765
        %v2767 = vpop.f32.mrb[0].mxu0
        %v2768 = vadd.f32 %v813, %v2767
        %v2769 = vpop.f32.mrb[0].mxu0
        %v2770 = vadd.f32 %v809, %v2769
        %v2771 = vpop.f32.mrb[0].mxu0
        %v2772 = vadd.f32 %v813, %v2771
        %2773 = vmatprep.mubr.bf16.mxu0 %v633
        %2774 = vmatmul.mubr.bf16.gmra.mrb[0].mxu0 %v632
        %v2775 = vpop.f32.mrb[0].mxu0
        %v2776 = vadd.f32 %v809, %v2775
        %v2777 = vpop.f32.mrb[0].mxu0
        %v2778 = vadd.f32 %v813, %v2777
        %v2779 = vpop.f32.mrb[0].mxu0
        %v2780 = vadd.f32 %v809, %v2779
        %v2781 = vpop.f32.mrb[0].mxu0
        %v2782 = vadd.f32 %v813, %v2781
        %2783 = vmatprep.mubr.bf16.mxu0 %v635
        %2784 = vmatmul.mubr.bf16.gmra.mrb[0].mxu0 %v634
        %v2785 = vpop.f32.mrb[0].mxu0
        %v2786 = vadd.f32 %v809, %v2785
        %v2787 = vpop.f32.mrb[0].mxu0
        %v2788 = vadd.f32 %v813, %v2787
        %v2789 = vpop.f32.mrb[0].mxu0
        %v2790 = vadd.f32 %v809, %v2789
        %v2791 = vpop.f32.mrb[0].mxu0
        %v2792 = vadd.f32 %v813, %v2791
        %2793 = vmatprep.mubr.bf16.mxu0 %v637
        %2794 = vmatmul.mubr.bf16.gmra.mrb[0].mxu0 %v636
        %v2795 = vpop.f32.mrb[0].mxu0
        %v2796 = vadd.f32 %v809, %v2795
        %v2797 = vpop.f32.mrb[0].mxu0
        %v2798 = vadd.f32 %v813, %v2797
        %v2799 = vpop.f32.mrb[0].mxu0
        %v2800 = vadd.f32 %v809, %v2799
        %v2801 = vpop.f32.mrb[0].mxu0
        %v2802 = vadd.f32 %v813, %v2801
        %2803 = vmatprep.mubr.bf16.mxu0 %v639
        %2804 = vmatmul.mubr.bf16.gmra.mrb[0].mxu0 %v638
        %v2805 = vpop.f32.mrb[0].mxu0
        %v2806 = vadd.f32 %v809, %v2805
        %v2807 = vpop.f32.mrb[0].mxu0
        %v2808 = vadd.f32 %v813, %v2807
        %v2809 = vpop.f32.mrb[0].mxu0
        %v2810 = vadd.f32 %v809, %v2809
        %v2811 = vpop.f32.mrb[0].mxu0
        %v2812 = vadd.f32 %v813, %v2811
        %2813 = vmatprep.mubr.bf16.mxu0 %v641
        %2814 = vmatmul.mubr.bf16.gmra.mrb[0].mxu0 %v640
        %v2815 = vpop.f32.mrb[0].mxu0
        %v2816 = vadd.f32 %v809, %v2815
        %v2817 = vpop.f32.mrb[0].mxu0
        %v2818 = vadd.f32 %v813, %v2817
        %v2819 = vpop.f32.mrb[0].mxu0
        %v2820 = vadd.f32 %v809, %v2819
        %v2821 = vpop.f32.mrb[0].mxu0
        %v2822 = vadd.f32 %v813, %v2821
        %2823 = vmatprep.mubr.bf16.mxu0 %v643
        %2824 = vmatmul.mubr.bf16.gmra.mrb[0].mxu0 %v642
        %v2825 = vpop.f32.mrb[0].mxu0
        %v2826 = vadd.f32 %v809, %v2825
        %v2827 = vpop.f32.mrb[0].mxu0
        %v2828 = vadd.f32 %v813, %v2827
        %v2829 = vpop.f32.mrb[0].mxu0
        %v2830 = vadd.f32 %v809, %v2829
        %v2831 = vpop.f32.mrb[0].mxu0
        %v2832 = vadd.f32 %v813, %v2831
        %2833 = vmatprep.mubr.bf16.mxu0 %v645
        %2834 = vmatmul.mubr.bf16.gmra.mrb[0].mxu0 %v644
        %v2835 = vpop.f32.mrb[0].mxu0
        %v2836 = vadd.f32 %v809, %v2835
        %v2837 = vpop.f32.mrb[0].mxu0
        %v2838 = vadd.f32 %v813, %v2837
        %v2839 = vpop.f32.mrb[0].mxu0
        %v2840 = vadd.f32 %v809, %v2839
        %v2841 = vpop.f32.mrb[0].mxu0
        %v2842 = vadd.f32 %v813, %v2841
        %2843 = vmatprep.mubr.bf16.mxu0 %v647
        %2844 = vmatmul.mubr.bf16.gmra.mrb[0].mxu0 %v646
        %v2845 = vpop.f32.mrb[0].mxu0
        %v2846 = vadd.f32 %v809, %v2845
        %v2847 = vpop.f32.mrb[0].mxu0
        %v2848 = vadd.f32 %v813, %v2847
        %v2849 = vpop.f32.mrb[0].mxu0
        %v2850 = vadd.f32 %v809, %v2849
        %v2851 = vpop.f32.mrb[0].mxu0
        %v2852 = vadd.f32 %v813, %v2851
        %2853 = vmatprep.mubr.bf16.mxu0 %v649
        %2854 = vmatmul.mubr.bf16.gmra.mrb[0].mxu0 %v648
        %v2855 = vpop.f32.mrb[0].mxu0
        %v2856 = vadd.f32 %v809, %v2855
        %v2857 = vpop.f32.mrb[0].mxu0
        %v2858 = vadd.f32 %v813, %v2857
        %v2859 = vpop.f32.mrb[0].mxu0
        %v2860 = vadd.f32 %v809, %v2859
        %v2861 = vpop.f32.mrb[0].mxu0
        %v2862 = vadd.f32 %v813, %v2861
        %2863 = vmatprep.mubr.bf16.mxu0 %v651
        %2864 = vmatmul.mubr.bf16.gmra.mrb[0].mxu0 %v650
        %v2865 = vpop.f32.mrb[0].mxu0
        %v2866 = vadd.f32 %v809, %v2865
        %v2867 = vpop.f32.mrb[0].mxu0
        %v2868 = vadd.f32 %v813, %v2867
        %v2869 = vpop.f32.mrb[0].mxu0
        %v2870 = vadd.f32 %v809, %v2869
        %v2871 = vpop.f32.mrb[0].mxu0
        %v2872 = vadd.f32 %v813, %v2871
        %2873 = vdwg.mxu0
        %v2874 = vmax.f32 %v1497, 0.0
        %v2875 = vmax.f32 %v1499, 0.0
        %v2876 = vmax.f32 %v1850, 0.0
        %v2877 = vmax.f32 %v1852, 0.0
        %v2878 = vmax.f32 %v2203, 0.0
        %v2879 = vmax.f32 %v2205, 0.0
        %v2880 = vmax.f32 %v2556, 0.0
        %v2881 = vmax.f32 %v2558, 0.0
        %v2882 = vmax.f32 %v1501, 0.0
        %v2883 = vmax.f32 %v1503, 0.0
        %v2884 = vmax.f32 %v1854, 0.0
        %v2885 = vmax.f32 %v1856, 0.0
        %v2886 = vmax.f32 %v2207, 0.0
        %v2887 = vmax.f32 %v2209, 0.0
        %v2888 = vmax.f32 %v2560, 0.0
        %v2889 = vmax.f32 %v2562, 0.0
        %v2890 = vmax.f32 %v1507, 0.0
        %v2891 = vmax.f32 %v1509, 0.0
        %v2892 = vmax.f32 %v1860, 0.0
        %v2893 = vmax.f32 %v1862, 0.0
        %v2894 = vmax.f32 %v2213, 0.0
        %v2895 = vmax.f32 %v2215, 0.0
        %v2896 = vmax.f32 %v2566, 0.0
        %v2897 = vmax.f32 %v2568, 0.0
        %v2898 = vmax.f32 %v1511, 0.0
        %v2899 = vmax.f32 %v1513, 0.0
        %v2900 = vmax.f32 %v1864, 0.0
        %v2901 = vmax.f32 %v1866, 0.0
        %v2902 = vmax.f32 %v2217, 0.0
        %v2903 = vmax.f32 %v2219, 0.0
        %v2904 = vmax.f32 %v2570, 0.0
        %v2905 = vmax.f32 %v2572, 0.0
        %v2906 = vmax.f32 %v1517, 0.0
        %v2907 = vmax.f32 %v1519, 0.0
        %v2908 = vmax.f32 %v1870, 0.0
        %v2909 = vmax.f32 %v1872, 0.0
        %v2910 = vmax.f32 %v2223, 0.0
        %v2911 = vmax.f32 %v2225, 0.0
        %v2912 = vmax.f32 %v2576, 0.0
        %v2913 = vmax.f32 %v2578, 0.0
        %v2914 = vmax.f32 %v1521, 0.0
        %v2915 = vmax.f32 %v1523, 0.0
        %v2916 = vmax.f32 %v1874, 0.0
        %v2917 = vmax.f32 %v1876, 0.0
        %v2918 = vmax.f32 %v2227, 0.0
        %v2919 = vmax.f32 %v2229, 0.0
        %v2920 = vmax.f32 %v2580, 0.0
        %v2921 = vmax.f32 %v2582, 0.0
        %v2922 = vmax.f32 %v1527, 0.0
        %v2923 = vmax.f32 %v1529, 0.0
        %v2924 = vmax.f32 %v1880, 0.0
        %v2925 = vmax.f32 %v1882, 0.0
        %v2926 = vmax.f32 %v2233, 0.0
        %v2927 = vmax.f32 %v2235, 0.0
        %v2928 = vmax.f32 %v2586, 0.0
        %v2929 = vmax.f32 %v2588, 0.0
        %v2930 = vmax.f32 %v1531, 0.0
        %v2931 = vmax.f32 %v1533, 0.0
        %v2932 = vmax.f32 %v1884, 0.0
        %v2933 = vmax.f32 %v1886, 0.0
        %v2934 = vmax.f32 %v2237, 0.0
        %v2935 = vmax.f32 %v2239, 0.0
        %v2936 = vmax.f32 %v2590, 0.0
        %v2937 = vmax.f32 %v2592, 0.0
        %v2938 = vmax.f32 %v1537, 0.0
        %v2939 = vmax.f32 %v1539, 0.0
        %v2940 = vmax.f32 %v1890, 0.0
        %v2941 = vmax.f32 %v1892, 0.0
        %v2942 = vmax.f32 %v2243, 0.0
        %v2943 = vmax.f32 %v2245, 0.0
        %v2944 = vmax.f32 %v2596, 0.0
        %v2945 = vmax.f32 %v2598, 0.0
        %v2946 = vmax.f32 %v1541, 0.0
        %v2947 = vmax.f32 %v1543, 0.0
        %v2948 = vmax.f32 %v1894, 0.0
        %v2949 = vmax.f32 %v1896, 0.0
        %v2950 = vmax.f32 %v2247, 0.0
        %v2951 = vmax.f32 %v2249, 0.0
        %v2952 = vmax.f32 %v2600, 0.0
        %v2953 = vmax.f32 %v2602, 0.0
        %v2954 = vmax.f32 %v1547, 0.0
        %v2955 = vmax.f32 %v1549, 0.0
        %v2956 = vmax.f32 %v1900, 0.0
        %v2957 = vmax.f32 %v1902, 0.0
        %v2958 = vmax.f32 %v2253, 0.0
        %v2959 = vmax.f32 %v2255, 0.0
        %v2960 = vmax.f32 %v2606, 0.0
        %v2961 = vmax.f32 %v2608, 0.0
        %v2962 = vmax.f32 %v1551, 0.0
        %v2963 = vmax.f32 %v1553, 0.0
        %v2964 = vmax.f32 %v1904, 0.0
        %v2965 = vmax.f32 %v1906, 0.0
        %v2966 = vmax.f32 %v2257, 0.0
        %v2967 = vmax.f32 %v2259, 0.0
        %v2968 = vmax.f32 %v2610, 0.0
        %v2969 = vmax.f32 %v2612, 0.0
        %v2970 = vmax.f32 %v1557, 0.0
        %v2971 = vmax.f32 %v1559, 0.0
        %v2972 = vmax.f32 %v1910, 0.0
        %v2973 = vmax.f32 %v1912, 0.0
        %v2974 = vmax.f32 %v2263, 0.0
        %v2975 = vmax.f32 %v2265, 0.0
        %v2976 = vmax.f32 %v2616, 0.0
        %v2977 = vmax.f32 %v2618, 0.0
        %v2978 = vmax.f32 %v1561, 0.0
        %v2979 = vmax.f32 %v1563, 0.0
        %v2980 = vmax.f32 %v1914, 0.0
        %v2981 = vmax.f32 %v1916, 0.0
        %v2982 = vmax.f32 %v2267, 0.0
        %v2983 = vmax.f32 %v2269, 0.0
        %v2984 = vmax.f32 %v2620, 0.0
        %v2985 = vmax.f32 %v2622, 0.0
        %v2986 = vmax.f32 %v1567, 0.0
        %v2987 = vmax.f32 %v1569, 0.0
        %v2988 = vmax.f32 %v1920, 0.0
        %v2989 = vmax.f32 %v1922, 0.0
        %v2990 = vmax.f32 %v2273, 0.0
        %v2991 = vmax.f32 %v2275, 0.0
        %v2992 = vmax.f32 %v2626, 0.0
        %v2993 = vmax.f32 %v2628, 0.0
        %v2994 = vmax.f32 %v1571, 0.0
        %v2995 = vmax.f32 %v1573, 0.0
        %v2996 = vmax.f32 %v1924, 0.0
        %v2997 = vmax.f32 %v1926, 0.0
        %v2998 = vmax.f32 %v2277, 0.0
        %v2999 = vmax.f32 %v2279, 0.0
        %v3000 = vmax.f32 %v2630, 0.0
        %v3001 = vmax.f32 %v2632, 0.0
        %v3002 = vmax.f32 %v1577, 0.0
        %v3003 = vmax.f32 %v1579, 0.0
        %v3004 = vmax.f32 %v1930, 0.0
        %v3005 = vmax.f32 %v1932, 0.0
        %v3006 = vmax.f32 %v2283, 0.0
        %v3007 = vmax.f32 %v2285, 0.0
        %v3008 = vmax.f32 %v2636, 0.0
        %v3009 = vmax.f32 %v2638, 0.0
        %v3010 = vmax.f32 %v1581, 0.0
        %v3011 = vmax.f32 %v1583, 0.0
        %v3012 = vmax.f32 %v1934, 0.0
        %v3013 = vmax.f32 %v1936, 0.0
        %v3014 = vmax.f32 %v2287, 0.0
        %v3015 = vmax.f32 %v2289, 0.0
        %v3016 = vmax.f32 %v2640, 0.0
        %v3017 = vmax.f32 %v2642, 0.0
        %v3018 = vmax.f32 %v1587, 0.0
        %v3019 = vmax.f32 %v1589, 0.0
        %v3020 = vmax.f32 %v1940, 0.0
        %v3021 = vmax.f32 %v1942, 0.0
        %v3022 = vmax.f32 %v2293, 0.0
        %v3023 = vmax.f32 %v2295, 0.0
        %v3024 = vmax.f32 %v2646, 0.0
        %v3025 = vmax.f32 %v2648, 0.0
        %v3026 = vmax.f32 %v1591, 0.0
        %v3027 = vmax.f32 %v1593, 0.0
        %v3028 = vmax.f32 %v1944, 0.0
        %v3029 = vmax.f32 %v1946, 0.0
        %v3030 = vmax.f32 %v2297, 0.0
        %v3031 = vmax.f32 %v2299, 0.0
        %v3032 = vmax.f32 %v2650, 0.0
        %v3033 = vmax.f32 %v2652, 0.0
        %v3034 = vmax.f32 %v1597, 0.0
        %v3035 = vmax.f32 %v1599, 0.0
        %v3036 = vmax.f32 %v1950, 0.0
        %v3037 = vmax.f32 %v1952, 0.0
        %v3038 = vmax.f32 %v2303, 0.0
        %v3039 = vmax.f32 %v2305, 0.0
        %v3040 = vmax.f32 %v2656, 0.0
        %v3041 = vmax.f32 %v2658, 0.0
        %v3042 = vmax.f32 %v1601, 0.0
        %v3043 = vmax.f32 %v1603, 0.0
        %v3044 = vmax.f32 %v1954, 0.0
        %v3045 = vmax.f32 %v1956, 0.0
        %v3046 = vmax.f32 %v2307, 0.0
        %v3047 = vmax.f32 %v2309, 0.0
        %v3048 = vmax.f32 %v2660, 0.0
        %v3049 = vmax.f32 %v2662, 0.0
        %v3050 = vmax.f32 %v1607, 0.0
        %v3051 = vmax.f32 %v1609, 0.0
        %v3052 = vmax.f32 %v1960, 0.0
        %v3053 = vmax.f32 %v1962, 0.0
        %v3054 = vmax.f32 %v2313, 0.0
        %v3055 = vmax.f32 %v2315, 0.0
        %v3056 = vmax.f32 %v2666, 0.0
        %v3057 = vmax.f32 %v2668, 0.0
        %v3058 = vmax.f32 %v1611, 0.0
        %v3059 = vmax.f32 %v1613, 0.0
        %v3060 = vmax.f32 %v1964, 0.0
        %v3061 = vmax.f32 %v1966, 0.0
        %v3062 = vmax.f32 %v2317, 0.0
        %v3063 = vmax.f32 %v2319, 0.0
        %v3064 = vmax.f32 %v2670, 0.0
        %v3065 = vmax.f32 %v2672, 0.0
        %v3066 = vmax.f32 %v1617, 0.0
        %v3067 = vmax.f32 %v1619, 0.0
        %v3068 = vmax.f32 %v1970, 0.0
        %v3069 = vmax.f32 %v1972, 0.0
        %v3070 = vmax.f32 %v2323, 0.0
        %v3071 = vmax.f32 %v2325, 0.0
        %v3072 = vmax.f32 %v2676, 0.0
        %v3073 = vmax.f32 %v2678, 0.0
        %v3074 = vmax.f32 %v1621, 0.0
        %v3075 = vmax.f32 %v1623, 0.0
        %v3076 = vmax.f32 %v1974, 0.0
        %v3077 = vmax.f32 %v1976, 0.0
        %v3078 = vmax.f32 %v2327, 0.0
        %v3079 = vmax.f32 %v2329, 0.0
        %v3080 = vmax.f32 %v2680, 0.0
        %v3081 = vmax.f32 %v2682, 0.0
        %v3082 = vmax.f32 %v1627, 0.0
        %v3083 = vmax.f32 %v1629, 0.0
        %v3084 = vmax.f32 %v1980, 0.0
        %v3085 = vmax.f32 %v1982, 0.0
        %v3086 = vmax.f32 %v2333, 0.0
        %v3087 = vmax.f32 %v2335, 0.0
        %v3088 = vmax.f32 %v2686, 0.0
        %v3089 = vmax.f32 %v2688, 0.0
        %v3090 = vmax.f32 %v1631, 0.0
        %v3091 = vmax.f32 %v1633, 0.0
        %v3092 = vmax.f32 %v1984, 0.0
        %v3093 = vmax.f32 %v1986, 0.0
        %v3094 = vmax.f32 %v2337, 0.0
        %v3095 = vmax.f32 %v2339, 0.0
        %v3096 = vmax.f32 %v2690, 0.0
        %v3097 = vmax.f32 %v2692, 0.0
        %v3098 = vmax.f32 %v1637, 0.0
        %v3099 = vmax.f32 %v1639, 0.0
        %v3100 = vmax.f32 %v1990, 0.0
        %v3101 = vmax.f32 %v1992, 0.0
        %v3102 = vmax.f32 %v2343, 0.0
        %v3103 = vmax.f32 %v2345, 0.0
        %v3104 = vmax.f32 %v2696, 0.0
        %v3105 = vmax.f32 %v2698, 0.0
        %v3106 = vmax.f32 %v1641, 0.0
        %v3107 = vmax.f32 %v1643, 0.0
        %v3108 = vmax.f32 %v1994, 0.0
        %v3109 = vmax.f32 %v1996, 0.0
        %v3110 = vmax.f32 %v2347, 0.0
        %v3111 = vmax.f32 %v2349, 0.0
        %v3112 = vmax.f32 %v2700, 0.0
        %v3113 = vmax.f32 %v2702, 0.0
        %v3114 = vmax.f32 %v1647, 0.0
        %v3115 = vmax.f32 %v1649, 0.0
        %v3116 = vmax.f32 %v2000, 0.0
        %v3117 = vmax.f32 %v2002, 0.0
        %v3118 = vmax.f32 %v2353, 0.0
        %v3119 = vmax.f32 %v2355, 0.0
        %v3120 = vmax.f32 %v2706, 0.0
        %v3121 = vmax.f32 %v2708, 0.0
        %v3122 = vmax.f32 %v1651, 0.0
        %v3123 = vmax.f32 %v1653, 0.0
        %v3124 = vmax.f32 %v2004, 0.0
        %v3125 = vmax.f32 %v2006, 0.0
        %v3126 = vmax.f32 %v2357, 0.0
        %v3127 = vmax.f32 %v2359, 0.0
        %v3128 = vmax.f32 %v2710, 0.0
        %v3129 = vmax.f32 %v2712, 0.0
        %v3130 = vmax.f32 %v1657, 0.0
        %v3131 = vmax.f32 %v1659, 0.0
        %v3132 = vmax.f32 %v2010, 0.0
        %v3133 = vmax.f32 %v2012, 0.0
        %v3134 = vmax.f32 %v2363, 0.0
        %v3135 = vmax.f32 %v2365, 0.0
        %v3136 = vmax.f32 %v2716, 0.0
        %v3137 = vmax.f32 %v2718, 0.0
        %v3138 = vmax.f32 %v1661, 0.0
        %v3139 = vmax.f32 %v1663, 0.0
        %v3140 = vmax.f32 %v2014, 0.0
        %v3141 = vmax.f32 %v2016, 0.0
        %v3142 = vmax.f32 %v2367, 0.0
        %v3143 = vmax.f32 %v2369, 0.0
        %v3144 = vmax.f32 %v2720, 0.0
        %v3145 = vmax.f32 %v2722, 0.0
        %v3146 = vmax.f32 %v1667, 0.0
        %v3147 = vmax.f32 %v1669, 0.0
        %v3148 = vmax.f32 %v2020, 0.0
        %v3149 = vmax.f32 %v2022, 0.0
        %v3150 = vmax.f32 %v2373, 0.0
        %v3151 = vmax.f32 %v2375, 0.0
        %v3152 = vmax.f32 %v2726, 0.0
        %v3153 = vmax.f32 %v2728, 0.0
        %v3154 = vmax.f32 %v1671, 0.0
        %v3155 = vmax.f32 %v1673, 0.0
        %v3156 = vmax.f32 %v2024, 0.0
        %v3157 = vmax.f32 %v2026, 0.0
        %v3158 = vmax.f32 %v2377, 0.0
        %v3159 = vmax.f32 %v2379, 0.0
        %v3160 = vmax.f32 %v2730, 0.0
        %v3161 = vmax.f32 %v2732, 0.0
        %v3162 = vmax.f32 %v1677, 0.0
        %v3163 = vmax.f32 %v1679, 0.0
        %v3164 = vmax.f32 %v2030, 0.0
        %v3165 = vmax.f32 %v2032, 0.0
        %v3166 = vmax.f32 %v2383, 0.0
        %v3167 = vmax.f32 %v2385, 0.0
        %v3168 = vmax.f32 %v2736, 0.0
        %v3169 = vmax.f32 %v2738, 0.0
        %v3170 = vmax.f32 %v1681, 0.0
        %v3171 = vmax.f32 %v1683, 0.0
        %v3172 = vmax.f32 %v2034, 0.0
        %v3173 = vmax.f32 %v2036, 0.0
        %v3174 = vmax.f32 %v2387, 0.0
        %v3175 = vmax.f32 %v2389, 0.0
        %v3176 = vmax.f32 %v2740, 0.0
        %v3177 = vmax.f32 %v2742, 0.0
        %v3178 = vmax.f32 %v1687, 0.0
        %v3179 = vmax.f32 %v1689, 0.0
        %v3180 = vmax.f32 %v2040, 0.0
        %v3181 = vmax.f32 %v2042, 0.0
        %v3182 = vmax.f32 %v2393, 0.0
        %v3183 = vmax.f32 %v2395, 0.0
        %v3184 = vmax.f32 %v2746, 0.0
        %v3185 = vmax.f32 %v2748, 0.0
        %v3186 = vmax.f32 %v1691, 0.0
        %v3187 = vmax.f32 %v1693, 0.0
        %v3188 = vmax.f32 %v2044, 0.0
        %v3189 = vmax.f32 %v2046, 0.0
        %v3190 = vmax.f32 %v2397, 0.0
        %v3191 = vmax.f32 %v2399, 0.0
        %v3192 = vmax.f32 %v2750, 0.0
        %v3193 = vmax.f32 %v2752, 0.0
        %v3194 = vmax.f32 %v1697, 0.0
        %v3195 = vmax.f32 %v1699, 0.0
        %v3196 = vmax.f32 %v2050, 0.0
        %v3197 = vmax.f32 %v2052, 0.0
        %v3198 = vmax.f32 %v2403, 0.0
        %v3199 = vmax.f32 %v2405, 0.0
        %v3200 = vmax.f32 %v2756, 0.0
        %v3201 = vmax.f32 %v2758, 0.0
        %v3202 = vmax.f32 %v1701, 0.0
        %v3203 = vmax.f32 %v1703, 0.0
        %v3204 = vmax.f32 %v2054, 0.0
        %v3205 = vmax.f32 %v2056, 0.0
        %v3206 = vmax.f32 %v2407, 0.0
        %v3207 = vmax.f32 %v2409, 0.0
        %v3208 = vmax.f32 %v2760, 0.0
        %v3209 = vmax.f32 %v2762, 0.0
        %v3210 = vmax.f32 %v1707, 0.0
        %v3211 = vmax.f32 %v1709, 0.0
        %v3212 = vmax.f32 %v2060, 0.0
        %v3213 = vmax.f32 %v2062, 0.0
        %v3214 = vmax.f32 %v2413, 0.0
        %v3215 = vmax.f32 %v2415, 0.0
        %v3216 = vmax.f32 %v2766, 0.0
        %v3217 = vmax.f32 %v2768, 0.0
        %v3218 = vmax.f32 %v1711, 0.0
        %v3219 = vmax.f32 %v1713, 0.0
        %v3220 = vmax.f32 %v2064, 0.0
        %v3221 = vmax.f32 %v2066, 0.0
        %v3222 = vmax.f32 %v2417, 0.0
        %v3223 = vmax.f32 %v2419, 0.0
        %v3224 = vmax.f32 %v2770, 0.0
        %v3225 = vmax.f32 %v2772, 0.0
        %v3226 = vmax.f32 %v1717, 0.0
        %v3227 = vmax.f32 %v1719, 0.0
        %v3228 = vmax.f32 %v2070, 0.0
        %v3229 = vmax.f32 %v2072, 0.0
        %v3230 = vmax.f32 %v2423, 0.0
        %v3231 = vmax.f32 %v2425, 0.0
        %v3232 = vmax.f32 %v2776, 0.0
        %v3233 = vmax.f32 %v2778, 0.0
        %v3234 = vmax.f32 %v1721, 0.0
        %v3235 = vmax.f32 %v1723, 0.0
        %v3236 = vmax.f32 %v2074, 0.0
        %v3237 = vmax.f32 %v2076, 0.0
        %v3238 = vmax.f32 %v2427, 0.0
        %v3239 = vmax.f32 %v2429, 0.0
        %v3240 = vmax.f32 %v2780, 0.0
        %v3241 = vmax.f32 %v2782, 0.0
        %v3242 = vmax.f32 %v1727, 0.0
        %v3243 = vmax.f32 %v1729, 0.0
        %v3244 = vmax.f32 %v2080, 0.0
        %v3245 = vmax.f32 %v2082, 0.0
        %v3246 = vmax.f32 %v2433, 0.0
        %v3247 = vmax.f32 %v2435, 0.0
        %v3248 = vmax.f32 %v2786, 0.0
        %v3249 = vmax.f32 %v2788, 0.0
        %v3250 = vmax.f32 %v1731, 0.0
        %v3251 = vmax.f32 %v1733, 0.0
        %v3252 = vmax.f32 %v2084, 0.0
        %v3253 = vmax.f32 %v2086, 0.0
        %v3254 = vmax.f32 %v2437, 0.0
        %v3255 = vmax.f32 %v2439, 0.0
        %v3256 = vmax.f32 %v2790, 0.0
        %v3257 = vmax.f32 %v2792, 0.0
        %v3258 = vmax.f32 %v1737, 0.0
        %v3259 = vmax.f32 %v1739, 0.0
        %v3260 = vmax.f32 %v2090, 0.0
        %v3261 = vmax.f32 %v2092, 0.0
        %v3262 = vmax.f32 %v2443, 0.0
        %v3263 = vmax.f32 %v2445, 0.0
        %v3264 = vmax.f32 %v2796, 0.0
        %v3265 = vmax.f32 %v2798, 0.0
        %v3266 = vmax.f32 %v1741, 0.0
        %v3267 = vmax.f32 %v1743, 0.0
        %v3268 = vmax.f32 %v2094, 0.0
        %v3269 = vmax.f32 %v2096, 0.0
        %v3270 = vmax.f32 %v2447, 0.0
        %v3271 = vmax.f32 %v2449, 0.0
        %v3272 = vmax.f32 %v2800, 0.0
        %v3273 = vmax.f32 %v2802, 0.0
        %v3274 = vmax.f32 %v1747, 0.0
        %v3275 = vmax.f32 %v1749, 0.0
        %v3276 = vmax.f32 %v2100, 0.0
        %v3277 = vmax.f32 %v2102, 0.0
        %v3278 = vmax.f32 %v2453, 0.0
        %v3279 = vmax.f32 %v2455, 0.0
        %v3280 = vmax.f32 %v2806, 0.0
        %v3281 = vmax.f32 %v2808, 0.0
        %v3282 = vmax.f32 %v1751, 0.0
        %v3283 = vmax.f32 %v1753, 0.0
        %v3284 = vmax.f32 %v2104, 0.0
        %v3285 = vmax.f32 %v2106, 0.0
        %v3286 = vmax.f32 %v2457, 0.0
        %v3287 = vmax.f32 %v2459, 0.0
        %v3288 = vmax.f32 %v2810, 0.0
        %v3289 = vmax.f32 %v2812, 0.0
        %v3290 = vmax.f32 %v1757, 0.0
        %v3291 = vmax.f32 %v1759, 0.0
        %v3292 = vmax.f32 %v2110, 0.0
        %v3293 = vmax.f32 %v2112, 0.0
        %v3294 = vmax.f32 %v2463, 0.0
        %v3295 = vmax.f32 %v2465, 0.0
        %v3296 = vmax.f32 %v2816, 0.0
        %v3297 = vmax.f32 %v2818, 0.0
        %v3298 = vmax.f32 %v1761, 0.0
        %v3299 = vmax.f32 %v1763, 0.0
        %v3300 = vmax.f32 %v2114, 0.0
        %v3301 = vmax.f32 %v2116, 0.0
        %v3302 = vmax.f32 %v2467, 0.0
        %v3303 = vmax.f32 %v2469, 0.0
        %v3304 = vmax.f32 %v2820, 0.0
        %v3305 = vmax.f32 %v2822, 0.0
        %v3306 = vmax.f32 %v1767, 0.0
        %v3307 = vmax.f32 %v1769, 0.0
        %v3308 = vmax.f32 %v2120, 0.0
        %v3309 = vmax.f32 %v2122, 0.0
        %v3310 = vmax.f32 %v2473, 0.0
        %v3311 = vmax.f32 %v2475, 0.0
        %v3312 = vmax.f32 %v2826, 0.0
        %v3313 = vmax.f32 %v2828, 0.0
        %v3314 = vmax.f32 %v1771, 0.0
        %v3315 = vmax.f32 %v1773, 0.0
        %v3316 = vmax.f32 %v2124, 0.0
        %v3317 = vmax.f32 %v2126, 0.0
        %v3318 = vmax.f32 %v2477, 0.0
        %v3319 = vmax.f32 %v2479, 0.0
        %v3320 = vmax.f32 %v2830, 0.0
        %v3321 = vmax.f32 %v2832, 0.0
        %v3322 = vmax.f32 %v1777, 0.0
        %v3323 = vmax.f32 %v1779, 0.0
        %v3324 = vmax.f32 %v2130, 0.0
        %v3325 = vmax.f32 %v2132, 0.0
        %v3326 = vmax.f32 %v2483, 0.0
        %v3327 = vmax.f32 %v2485, 0.0
        %v3328 = vmax.f32 %v2836, 0.0
        %v3329 = vmax.f32 %v2838, 0.0
        %v3330 = vmax.f32 %v1781, 0.0
        %v3331 = vmax.f32 %v1783, 0.0
        %v3332 = vmax.f32 %v2134, 0.0
        %v3333 = vmax.f32 %v2136, 0.0
        %v3334 = vmax.f32 %v2487, 0.0
        %v3335 = vmax.f32 %v2489, 0.0
        %v3336 = vmax.f32 %v2840, 0.0
        %v3337 = vmax.f32 %v2842, 0.0
        %v3338 = vmax.f32 %v1787, 0.0
        %v3339 = vmax.f32 %v1789, 0.0
        %v3340 = vmax.f32 %v2140, 0.0
        %v3341 = vmax.f32 %v2142, 0.0
        %v3342 = vmax.f32 %v2493, 0.0
        %v3343 = vmax.f32 %v2495, 0.0
        %v3344 = vmax.f32 %v2846, 0.0
        %v3345 = vmax.f32 %v2848, 0.0
        %v3346 = vmax.f32 %v1791, 0.0
        %v3347 = vmax.f32 %v1793, 0.0
        %v3348 = vmax.f32 %v2144, 0.0
        %v3349 = vmax.f32 %v2146, 0.0
        %v3350 = vmax.f32 %v2497, 0.0
        %v3351 = vmax.f32 %v2499, 0.0
        %v3352 = vmax.f32 %v2850, 0.0
        %v3353 = vmax.f32 %v2852, 0.0
        %v3354 = vmax.f32 %v1797, 0.0
        %v3355 = vmax.f32 %v1799, 0.0
        %v3356 = vmax.f32 %v2150, 0.0
        %v3357 = vmax.f32 %v2152, 0.0
        %v3358 = vmax.f32 %v2503, 0.0
        %v3359 = vmax.f32 %v2505, 0.0
        %v3360 = vmax.f32 %v2856, 0.0
        %v3361 = vmax.f32 %v2858, 0.0
        %v3362 = vmax.f32 %v1801, 0.0
        %v3363 = vmax.f32 %v1803, 0.0
        %v3364 = vmax.f32 %v2154, 0.0
        %v3365 = vmax.f32 %v2156, 0.0
        %v3366 = vmax.f32 %v2507, 0.0
        %v3367 = vmax.f32 %v2509, 0.0
        %v3368 = vmax.f32 %v2860, 0.0
        %v3369 = vmax.f32 %v2862, 0.0
        %v3370 = vmax.f32 %v1807, 0.0
        %v3371 = vmax.f32 %v1809, 0.0
        %v3372 = vmax.f32 %v2160, 0.0
        %v3373 = vmax.f32 %v2162, 0.0
        %v3374 = vmax.f32 %v2513, 0.0
        %v3375 = vmax.f32 %v2515, 0.0
        %v3376 = vmax.f32 %v2866, 0.0
        %v3377 = vmax.f32 %v2868, 0.0
        %v3378 = vmax.f32 %v1811, 0.0
        %v3379 = vmax.f32 %v1813, 0.0
        %v3380 = vmax.f32 %v2164, 0.0
        %v3381 = vmax.f32 %v2166, 0.0
        %v3382 = vmax.f32 %v2517, 0.0
        %v3383 = vmax.f32 %v2519, 0.0
        %v3384 = vmax.f32 %v2870, 0.0
        %v3385 = vmax.f32 %v2872, 0.0
        %v3386 = vld [vmem:[#allocation2] sm:$0xff]
        %v3387 = vld [vmem:[#allocation2 + $0x8] sm:$0xff]
        %v3388 = vld [vmem:[#allocation2 + $0x10] sm:$0xff]
        %v3389 = vld [vmem:[#allocation2 + $0x18] sm:$0xff]
        %v3390 = vld [vmem:[#allocation2 + $0x20] sm:$0xff]
        %v3391 = vld [vmem:[#allocation2 + $0x28] sm:$0xff]
        %v3392 = vld [vmem:[#allocation2 + $0x30] sm:$0xff]
        %v3393 = vld [vmem:[#allocation2 + $0x38] sm:$0xff]
        %v3394 = vld [vmem:[#allocation2 + $0x40] sm:$0xff]
        %v3395 = vld [vmem:[#allocation2 + $0x48] sm:$0xff]
        %v3396 = vld [vmem:[#allocation2 + $0x50] sm:$0xff]
        %v3397 = vld [vmem:[#allocation2 + $0x58] sm:$0xff]
        %v3398 = vld [vmem:[#allocation2 + $0x60] sm:$0xff]
        %v3399 = vld [vmem:[#allocation2 + $0x68] sm:$0xff]
        %v3400 = vld [vmem:[#allocation2 + $0x70] sm:$0xff]
        %v3401 = vld [vmem:[#allocation2 + $0x78] sm:$0xff]
        %v3402 = vld [vmem:[#allocation2 + $0x80] sm:$0xff]
        %v3403 = vld [vmem:[#allocation2 + $0x88] sm:$0xff]
        %v3404 = vld [vmem:[#allocation2 + $0x90] sm:$0xff]
        %v3405 = vld [vmem:[#allocation2 + $0x98] sm:$0xff]
        %v3406 = vld [vmem:[#allocation2 + $0xa0] sm:$0xff]
        %v3407 = vld [vmem:[#allocation2 + $0xa8] sm:$0xff]
        %v3408 = vld [vmem:[#allocation2 + $0xb0] sm:$0xff]
        %v3409 = vld [vmem:[#allocation2 + $0xb8] sm:$0xff]
        %v3410 = vld [vmem:[#allocation2 + $0xc0] sm:$0xff]
        %v3411 = vld [vmem:[#allocation2 + $0xc8] sm:$0xff]
        %v3412 = vld [vmem:[#allocation2 + $0xd0] sm:$0xff]
        %v3413 = vld [vmem:[#allocation2 + $0xd8] sm:$0xff]
        %v3414 = vld [vmem:[#allocation2 + $0xe0] sm:$0xff]
        %v3415 = vld [vmem:[#allocation2 + $0xe8] sm:$0xff]
        %v3416 = vld [vmem:[#allocation2 + $0xf0] sm:$0xff]
        %v3417 = vld [vmem:[#allocation2 + $0xf8] sm:$0xff]
        %v3418 = vld [vmem:[#allocation2 + $0x100] sm:$0xff]
        %v3419 = vld [vmem:[#allocation2 + $0x108] sm:$0xff]
        %v3420 = vld [vmem:[#allocation2 + $0x110] sm:$0xff]
        %v3421 = vld [vmem:[#allocation2 + $0x118] sm:$0xff]
        %v3422 = vld [vmem:[#allocation2 + $0x120] sm:$0xff]
        %v3423 = vld [vmem:[#allocation2 + $0x128] sm:$0xff]
        %v3424 = vld [vmem:[#allocation2 + $0x130] sm:$0xff]
        %v3425 = vld [vmem:[#allocation2 + $0x138] sm:$0xff]
        %v3426 = vld [vmem:[#allocation2 + $0x140] sm:$0xff]
        %v3427 = vld [vmem:[#allocation2 + $0x148] sm:$0xff]
        %v3428 = vld [vmem:[#allocation2 + $0x150] sm:$0xff]
        %v3429 = vld [vmem:[#allocation2 + $0x158] sm:$0xff]
        %v3430 = vld [vmem:[#allocation2 + $0x160] sm:$0xff]
        %v3431 = vld [vmem:[#allocation2 + $0x168] sm:$0xff]
        %v3432 = vld [vmem:[#allocation2 + $0x170] sm:$0xff]
        %v3433 = vld [vmem:[#allocation2 + $0x178] sm:$0xff]
        %v3434 = vld [vmem:[#allocation2 + $0x180] sm:$0xff]
        %v3435 = vld [vmem:[#allocation2 + $0x188] sm:$0xff]
        %v3436 = vld [vmem:[#allocation2 + $0x190] sm:$0xff]
        %v3437 = vld [vmem:[#allocation2 + $0x198] sm:$0xff]
        %v3438 = vld [vmem:[#allocation2 + $0x1a0] sm:$0xff]
        %v3439 = vld [vmem:[#allocation2 + $0x1a8] sm:$0xff]
        %v3440 = vld [vmem:[#allocation2 + $0x1b0] sm:$0xff]
        %v3441 = vld [vmem:[#allocation2 + $0x1b8] sm:$0xff]
        %v3442 = vld [vmem:[#allocation2 + $0x1c0] sm:$0xff]
        %v3443 = vld [vmem:[#allocation2 + $0x1c8] sm:$0xff]
        %v3444 = vld [vmem:[#allocation2 + $0x1d0] sm:$0xff]
        %v3445 = vld [vmem:[#allocation2 + $0x1d8] sm:$0xff]
        %v3446 = vld [vmem:[#allocation2 + $0x1e0] sm:$0xff]
        %v3447 = vld [vmem:[#allocation2 + $0x1e8] sm:$0xff]
        %v3448 = vld [vmem:[#allocation2 + $0x1f0] sm:$0xff]
        %v3449 = vld [vmem:[#allocation2 + $0x1f8] sm:$0xff]
        %v3450 = vld [vmem:[#allocation2 + $0x200] sm:$0xff]
        %v3451 = vld [vmem:[#allocation2 + $0x208] sm:$0xff]
        %v3452 = vld [vmem:[#allocation2 + $0x210] sm:$0xff]
        %v3453 = vld [vmem:[#allocation2 + $0x218] sm:$0xff]
        %v3454 = vld [vmem:[#allocation2 + $0x220] sm:$0xff]
        %v3455 = vld [vmem:[#allocation2 + $0x228] sm:$0xff]
        %v3456 = vld [vmem:[#allocation2 + $0x230] sm:$0xff]
        %v3457 = vld [vmem:[#allocation2 + $0x238] sm:$0xff]
        %v3458 = vld [vmem:[#allocation2 + $0x240] sm:$0xff]
        %v3459 = vld [vmem:[#allocation2 + $0x248] sm:$0xff]
        %v3460 = vld [vmem:[#allocation2 + $0x250] sm:$0xff]
        %v3461 = vld [vmem:[#allocation2 + $0x258] sm:$0xff]
        %v3462 = vld [vmem:[#allocation2 + $0x260] sm:$0xff]
        %v3463 = vld [vmem:[#allocation2 + $0x268] sm:$0xff]
        %v3464 = vld [vmem:[#allocation2 + $0x270] sm:$0xff]
        %v3465 = vld [vmem:[#allocation2 + $0x278] sm:$0xff]
        %v3466 = vld [vmem:[#allocation2 + $0x280] sm:$0xff]
        %v3467 = vld [vmem:[#allocation2 + $0x288] sm:$0xff]
        %v3468 = vld [vmem:[#allocation2 + $0x290] sm:$0xff]
        %v3469 = vld [vmem:[#allocation2 + $0x298] sm:$0xff]
        %v3470 = vld [vmem:[#allocation2 + $0x2a0] sm:$0xff]
        %v3471 = vld [vmem:[#allocation2 + $0x2a8] sm:$0xff]
        %v3472 = vld [vmem:[#allocation2 + $0x2b0] sm:$0xff]
        %v3473 = vld [vmem:[#allocation2 + $0x2b8] sm:$0xff]
        %v3474 = vld [vmem:[#allocation2 + $0x2c0] sm:$0xff]
        %v3475 = vld [vmem:[#allocation2 + $0x2c8] sm:$0xff]
        %v3476 = vld [vmem:[#allocation2 + $0x2d0] sm:$0xff]
        %v3477 = vld [vmem:[#allocation2 + $0x2d8] sm:$0xff]
        %v3478 = vld [vmem:[#allocation2 + $0x2e0] sm:$0xff]
        %v3479 = vld [vmem:[#allocation2 + $0x2e8] sm:$0xff]
        %v3480 = vld [vmem:[#allocation2 + $0x2f0] sm:$0xff]
        %v3481 = vld [vmem:[#allocation2 + $0x2f8] sm:$0xff]
        %v3482 = vld [vmem:[#allocation2 + $0x300] sm:$0xff]
        %v3483 = vld [vmem:[#allocation2 + $0x308] sm:$0xff]
        %v3484 = vld [vmem:[#allocation2 + $0x310] sm:$0xff]
        %v3485 = vld [vmem:[#allocation2 + $0x318] sm:$0xff]
        %v3486 = vld [vmem:[#allocation2 + $0x320] sm:$0xff]
        %v3487 = vld [vmem:[#allocation2 + $0x328] sm:$0xff]
        %v3488 = vld [vmem:[#allocation2 + $0x330] sm:$0xff]
        %v3489 = vld [vmem:[#allocation2 + $0x338] sm:$0xff]
        %v3490 = vld [vmem:[#allocation2 + $0x340] sm:$0xff]
        %v3491 = vld [vmem:[#allocation2 + $0x348] sm:$0xff]
        %v3492 = vld [vmem:[#allocation2 + $0x350] sm:$0xff]
        %v3493 = vld [vmem:[#allocation2 + $0x358] sm:$0xff]
        %v3494 = vld [vmem:[#allocation2 + $0x360] sm:$0xff]
        %v3495 = vld [vmem:[#allocation2 + $0x368] sm:$0xff]
        %v3496 = vld [vmem:[#allocation2 + $0x370] sm:$0xff]
        %v3497 = vld [vmem:[#allocation2 + $0x378] sm:$0xff]
        %v3498 = vld [vmem:[#allocation2 + $0x380] sm:$0xff]
        %v3499 = vld [vmem:[#allocation2 + $0x388] sm:$0xff]
        %v3500 = vld [vmem:[#allocation2 + $0x390] sm:$0xff]
        %v3501 = vld [vmem:[#allocation2 + $0x398] sm:$0xff]
        %v3502 = vld [vmem:[#allocation2 + $0x3a0] sm:$0xff]
        %v3503 = vld [vmem:[#allocation2 + $0x3a8] sm:$0xff]
        %v3504 = vld [vmem:[#allocation2 + $0x3b0] sm:$0xff]
        %v3505 = vld [vmem:[#allocation2 + $0x3b8] sm:$0xff]
        %v3506 = vld [vmem:[#allocation2 + $0x3c0] sm:$0xff]
        %v3507 = vld [vmem:[#allocation2 + $0x3c8] sm:$0xff]
        %v3508 = vld [vmem:[#allocation2 + $0x3d0] sm:$0xff]
        %v3509 = vld [vmem:[#allocation2 + $0x3d8] sm:$0xff]
        %v3510 = vld [vmem:[#allocation2 + $0x3e0] sm:$0xff]
        %v3511 = vld [vmem:[#allocation2 + $0x3e8] sm:$0xff]
        %v3512 = vld [vmem:[#allocation2 + $0x3f0] sm:$0xff]
        %v3513 = vld [vmem:[#allocation2 + $0x3f8] sm:$0xff]
        %v3514 = vpack.c.bf16 %v2882, %v2874
        %v3515 = vpack.c.bf16 %v2883, %v2875
        %v3516 = vpack.c.bf16 %v2884, %v2876
        %v3517 = vpack.c.bf16 %v2885, %v2877
        %v3518 = vpack.c.bf16 %v2886, %v2878
        %v3519 = vpack.c.bf16 %v2887, %v2879
        %v3520 = vpack.c.bf16 %v2888, %v2880
        %v3521 = vpack.c.bf16 %v2889, %v2881
        %v3522 = vpack.c.bf16 %v2898, %v2890
        %v3523 = vpack.c.bf16 %v2899, %v2891
        %v3524 = vpack.c.bf16 %v2900, %v2892
        %v3525 = vpack.c.bf16 %v2901, %v2893
        %v3526 = vpack.c.bf16 %v2902, %v2894
        %v3527 = vpack.c.bf16 %v2903, %v2895
        %v3528 = vpack.c.bf16 %v2904, %v2896
        %v3529 = vpack.c.bf16 %v2905, %v2897
        %v3530 = vpack.c.bf16 %v2914, %v2906
        %v3531 = vpack.c.bf16 %v2915, %v2907
        %v3532 = vpack.c.bf16 %v2916, %v2908
        %v3533 = vpack.c.bf16 %v2917, %v2909
        %v3534 = vpack.c.bf16 %v2918, %v2910
        %v3535 = vpack.c.bf16 %v2919, %v2911
        %v3536 = vpack.c.bf16 %v2920, %v2912
        %v3537 = vpack.c.bf16 %v2921, %v2913
        %v3538 = vpack.c.bf16 %v2930, %v2922
        %v3539 = vpack.c.bf16 %v2931, %v2923
        %v3540 = vpack.c.bf16 %v2932, %v2924
        %v3541 = vpack.c.bf16 %v2933, %v2925
        %v3542 = vpack.c.bf16 %v2934, %v2926
        %v3543 = vpack.c.bf16 %v2935, %v2927
        %v3544 = vpack.c.bf16 %v2936, %v2928
        %v3545 = vpack.c.bf16 %v2937, %v2929
        %v3546 = vpack.c.bf16 %v2946, %v2938
        %v3547 = vpack.c.bf16 %v2947, %v2939
        %v3548 = vpack.c.bf16 %v2948, %v2940
        %v3549 = vpack.c.bf16 %v2949, %v2941
        %v3550 = vpack.c.bf16 %v2950, %v2942
        %v3551 = vpack.c.bf16 %v2951, %v2943
        %v3552 = vpack.c.bf16 %v2952, %v2944
        %v3553 = vpack.c.bf16 %v2953, %v2945
        %v3554 = vpack.c.bf16 %v2962, %v2954
        %v3555 = vpack.c.bf16 %v2963, %v2955
        %v3556 = vpack.c.bf16 %v2964, %v2956
        %v3557 = vpack.c.bf16 %v2965, %v2957
        %v3558 = vpack.c.bf16 %v2966, %v2958
        %v3559 = vpack.c.bf16 %v2967, %v2959
        %v3560 = vpack.c.bf16 %v2968, %v2960
        %v3561 = vpack.c.bf16 %v2969, %v2961
        %v3562 = vpack.c.bf16 %v2978, %v2970
        %v3563 = vpack.c.bf16 %v2979, %v2971
        %v3564 = vpack.c.bf16 %v2980, %v2972
        %v3565 = vpack.c.bf16 %v2981, %v2973
        %v3566 = vpack.c.bf16 %v2982, %v2974
        %v3567 = vpack.c.bf16 %v2983, %v2975
        %v3568 = vpack.c.bf16 %v2984, %v2976
        %v3569 = vpack.c.bf16 %v2985, %v2977
        %v3570 = vpack.c.bf16 %v2994, %v2986
        %v3571 = vpack.c.bf16 %v2995, %v2987
        %v3572 = vpack.c.bf16 %v2996, %v2988
        %v3573 = vpack.c.bf16 %v2997, %v2989
        %v3574 = vpack.c.bf16 %v2998, %v2990
        %v3575 = vpack.c.bf16 %v2999, %v2991
        %v3576 = vpack.c.bf16 %v3000, %v2992
        %v3577 = vpack.c.bf16 %v3001, %v2993
        %v3578 = vpack.c.bf16 %v3010, %v3002
        %v3579 = vpack.c.bf16 %v3011, %v3003
        %v3580 = vpack.c.bf16 %v3012, %v3004
        %v3581 = vpack.c.bf16 %v3013, %v3005
        %v3582 = vpack.c.bf16 %v3014, %v3006
        %v3583 = vpack.c.bf16 %v3015, %v3007
        %v3584 = vpack.c.bf16 %v3016, %v3008
        %v3585 = vpack.c.bf16 %v3017, %v3009
        %v3586 = vpack.c.bf16 %v3026, %v3018
        %v3587 = vpack.c.bf16 %v3027, %v3019
        %v3588 = vpack.c.bf16 %v3028, %v3020
        %v3589 = vpack.c.bf16 %v3029, %v3021
        %v3590 = vpack.c.bf16 %v3030, %v3022
        %v3591 = vpack.c.bf16 %v3031, %v3023
        %v3592 = vpack.c.bf16 %v3032, %v3024
        %v3593 = vpack.c.bf16 %v3033, %v3025
        %v3594 = vpack.c.bf16 %v3042, %v3034
        %v3595 = vpack.c.bf16 %v3043, %v3035
        %v3596 = vpack.c.bf16 %v3044, %v3036
        %v3597 = vpack.c.bf16 %v3045, %v3037
        %v3598 = vpack.c.bf16 %v3046, %v3038
        %v3599 = vpack.c.bf16 %v3047, %v3039
        %v3600 = vpack.c.bf16 %v3048, %v3040
        %v3601 = vpack.c.bf16 %v3049, %v3041
        %v3602 = vpack.c.bf16 %v3058, %v3050
        %v3603 = vpack.c.bf16 %v3059, %v3051
        %v3604 = vpack.c.bf16 %v3060, %v3052
        %v3605 = vpack.c.bf16 %v3061, %v3053
        %v3606 = vpack.c.bf16 %v3062, %v3054
        %v3607 = vpack.c.bf16 %v3063, %v3055
        %v3608 = vpack.c.bf16 %v3064, %v3056
        %v3609 = vpack.c.bf16 %v3065, %v3057
        %v3610 = vpack.c.bf16 %v3074, %v3066
        %v3611 = vpack.c.bf16 %v3075, %v3067
        %v3612 = vpack.c.bf16 %v3076, %v3068
        %v3613 = vpack.c.bf16 %v3077, %v3069
        %v3614 = vpack.c.bf16 %v3078, %v3070
        %v3615 = vpack.c.bf16 %v3079, %v3071
        %v3616 = vpack.c.bf16 %v3080, %v3072
        %v3617 = vpack.c.bf16 %v3081, %v3073
        %v3618 = vpack.c.bf16 %v3090, %v3082
        %v3619 = vpack.c.bf16 %v3091, %v3083
        %v3620 = vpack.c.bf16 %v3092, %v3084
        %v3621 = vpack.c.bf16 %v3093, %v3085
        %v3622 = vpack.c.bf16 %v3094, %v3086
        %v3623 = vpack.c.bf16 %v3095, %v3087
        %v3624 = vpack.c.bf16 %v3096, %v3088
        %v3625 = vpack.c.bf16 %v3097, %v3089
        %v3626 = vpack.c.bf16 %v3106, %v3098
        %v3627 = vpack.c.bf16 %v3107, %v3099
        %v3628 = vpack.c.bf16 %v3108, %v3100
        %v3629 = vpack.c.bf16 %v3109, %v3101
        %v3630 = vpack.c.bf16 %v3110, %v3102
        %v3631 = vpack.c.bf16 %v3111, %v3103
        %v3632 = vpack.c.bf16 %v3112, %v3104
        %v3633 = vpack.c.bf16 %v3113, %v3105
        %v3634 = vpack.c.bf16 %v3122, %v3114
        %v3635 = vpack.c.bf16 %v3123, %v3115
        %v3636 = vpack.c.bf16 %v3124, %v3116
        %v3637 = vpack.c.bf16 %v3125, %v3117
        %v3638 = vpack.c.bf16 %v3126, %v3118
        %v3639 = vpack.c.bf16 %v3127, %v3119
        %v3640 = vpack.c.bf16 %v3128, %v3120
        %v3641 = vpack.c.bf16 %v3129, %v3121
        %v3642 = vpack.c.bf16 %v3138, %v3130
        %v3643 = vpack.c.bf16 %v3139, %v3131
        %v3644 = vpack.c.bf16 %v3140, %v3132
        %v3645 = vpack.c.bf16 %v3141, %v3133
        %v3646 = vpack.c.bf16 %v3142, %v3134
        %v3647 = vpack.c.bf16 %v3143, %v3135
        %v3648 = vpack.c.bf16 %v3144, %v3136
        %v3649 = vpack.c.bf16 %v3145, %v3137
        %v3650 = vpack.c.bf16 %v3154, %v3146
        %v3651 = vpack.c.bf16 %v3155, %v3147
        %v3652 = vpack.c.bf16 %v3156, %v3148
        %v3653 = vpack.c.bf16 %v3157, %v3149
        %v3654 = vpack.c.bf16 %v3158, %v3150
        %v3655 = vpack.c.bf16 %v3159, %v3151
        %v3656 = vpack.c.bf16 %v3160, %v3152
        %v3657 = vpack.c.bf16 %v3161, %v3153
        %v3658 = vpack.c.bf16 %v3170, %v3162
        %v3659 = vpack.c.bf16 %v3171, %v3163
        %v3660 = vpack.c.bf16 %v3172, %v3164
        %v3661 = vpack.c.bf16 %v3173, %v3165
        %v3662 = vpack.c.bf16 %v3174, %v3166
        %v3663 = vpack.c.bf16 %v3175, %v3167
        %v3664 = vpack.c.bf16 %v3176, %v3168
        %v3665 = vpack.c.bf16 %v3177, %v3169
        %v3666 = vpack.c.bf16 %v3186, %v3178
        %v3667 = vpack.c.bf16 %v3187, %v3179
        %v3668 = vpack.c.bf16 %v3188, %v3180
        %v3669 = vpack.c.bf16 %v3189, %v3181
        %v3670 = vpack.c.bf16 %v3190, %v3182
        %v3671 = vpack.c.bf16 %v3191, %v3183
        %v3672 = vpack.c.bf16 %v3192, %v3184
        %v3673 = vpack.c.bf16 %v3193, %v3185
        %v3674 = vpack.c.bf16 %v3202, %v3194
        %v3675 = vpack.c.bf16 %v3203, %v3195
        %v3676 = vpack.c.bf16 %v3204, %v3196
        %v3677 = vpack.c.bf16 %v3205, %v3197
        %v3678 = vpack.c.bf16 %v3206, %v3198
        %v3679 = vpack.c.bf16 %v3207, %v3199
        %v3680 = vpack.c.bf16 %v3208, %v3200
        %v3681 = vpack.c.bf16 %v3209, %v3201
        %v3682 = vpack.c.bf16 %v3218, %v3210
        %v3683 = vpack.c.bf16 %v3219, %v3211
        %v3684 = vpack.c.bf16 %v3220, %v3212
        %v3685 = vpack.c.bf16 %v3221, %v3213
        %v3686 = vpack.c.bf16 %v3222, %v3214
        %v3687 = vpack.c.bf16 %v3223, %v3215
        %v3688 = vpack.c.bf16 %v3224, %v3216
        %v3689 = vpack.c.bf16 %v3225, %v3217
        %v3690 = vpack.c.bf16 %v3234, %v3226
        %v3691 = vpack.c.bf16 %v3235, %v3227
        %v3692 = vpack.c.bf16 %v3236, %v3228
        %v3693 = vpack.c.bf16 %v3237, %v3229
        %v3694 = vpack.c.bf16 %v3238, %v3230
        %v3695 = vpack.c.bf16 %v3239, %v3231
        %v3696 = vpack.c.bf16 %v3240, %v3232
        %v3697 = vpack.c.bf16 %v3241, %v3233
        %v3698 = vpack.c.bf16 %v3250, %v3242
        %v3699 = vpack.c.bf16 %v3251, %v3243
        %v3700 = vpack.c.bf16 %v3252, %v3244
        %v3701 = vpack.c.bf16 %v3253, %v3245
        %v3702 = vpack.c.bf16 %v3254, %v3246
        %v3703 = vpack.c.bf16 %v3255, %v3247
        %v3704 = vpack.c.bf16 %v3256, %v3248
        %v3705 = vpack.c.bf16 %v3257, %v3249
        %v3706 = vpack.c.bf16 %v3266, %v3258
        %v3707 = vpack.c.bf16 %v3267, %v3259
        %v3708 = vpack.c.bf16 %v3268, %v3260
        %v3709 = vpack.c.bf16 %v3269, %v3261
        %v3710 = vpack.c.bf16 %v3270, %v3262
        %v3711 = vpack.c.bf16 %v3271, %v3263
        %v3712 = vpack.c.bf16 %v3272, %v3264
        %v3713 = vpack.c.bf16 %v3273, %v3265
        %v3714 = vpack.c.bf16 %v3282, %v3274
        %v3715 = vpack.c.bf16 %v3283, %v3275
        %v3716 = vpack.c.bf16 %v3284, %v3276
        %v3717 = vpack.c.bf16 %v3285, %v3277
        %v3718 = vpack.c.bf16 %v3286, %v3278
        %v3719 = vpack.c.bf16 %v3287, %v3279
        %v3720 = vpack.c.bf16 %v3288, %v3280
        %v3721 = vpack.c.bf16 %v3289, %v3281
        %v3722 = vpack.c.bf16 %v3298, %v3290
        %v3723 = vpack.c.bf16 %v3299, %v3291
        %v3724 = vpack.c.bf16 %v3300, %v3292
        %v3725 = vpack.c.bf16 %v3301, %v3293
        %v3726 = vpack.c.bf16 %v3302, %v3294
        %v3727 = vpack.c.bf16 %v3303, %v3295
        %v3728 = vpack.c.bf16 %v3304, %v3296
        %v3729 = vpack.c.bf16 %v3305, %v3297
        %v3730 = vpack.c.bf16 %v3314, %v3306
        %v3731 = vpack.c.bf16 %v3315, %v3307
        %v3732 = vpack.c.bf16 %v3316, %v3308
        %v3733 = vpack.c.bf16 %v3317, %v3309
        %v3734 = vpack.c.bf16 %v3318, %v3310
        %v3735 = vpack.c.bf16 %v3319, %v3311
        %v3736 = vpack.c.bf16 %v3320, %v3312
        %v3737 = vpack.c.bf16 %v3321, %v3313
        %v3738 = vpack.c.bf16 %v3330, %v3322
        %v3739 = vpack.c.bf16 %v3331, %v3323
        %v3740 = vpack.c.bf16 %v3332, %v3324
        %v3741 = vpack.c.bf16 %v3333, %v3325
        %v3742 = vpack.c.bf16 %v3334, %v3326
        %v3743 = vpack.c.bf16 %v3335, %v3327
        %v3744 = vpack.c.bf16 %v3336, %v3328
        %v3745 = vpack.c.bf16 %v3337, %v3329
        %v3746 = vpack.c.bf16 %v3346, %v3338
        %v3747 = vpack.c.bf16 %v3347, %v3339
        %v3748 = vpack.c.bf16 %v3348, %v3340
        %v3749 = vpack.c.bf16 %v3349, %v3341
        %v3750 = vpack.c.bf16 %v3350, %v3342
        %v3751 = vpack.c.bf16 %v3351, %v3343
        %v3752 = vpack.c.bf16 %v3352, %v3344
        %v3753 = vpack.c.bf16 %v3353, %v3345
        %v3754 = vpack.c.bf16 %v3362, %v3354
        %v3755 = vpack.c.bf16 %v3363, %v3355
        %v3756 = vpack.c.bf16 %v3364, %v3356
        %v3757 = vpack.c.bf16 %v3365, %v3357
        %v3758 = vpack.c.bf16 %v3366, %v3358
        %v3759 = vpack.c.bf16 %v3367, %v3359
        %v3760 = vpack.c.bf16 %v3368, %v3360
        %v3761 = vpack.c.bf16 %v3369, %v3361
        %v3762 = vpack.c.bf16 %v3378, %v3370
        %v3763 = vpack.c.bf16 %v3379, %v3371
        %v3764 = vpack.c.bf16 %v3380, %v3372
        %v3765 = vpack.c.bf16 %v3381, %v3373
        %v3766 = vpack.c.bf16 %v3382, %v3374
        %v3767 = vpack.c.bf16 %v3383, %v3375
        %v3768 = vpack.c.bf16 %v3384, %v3376
        %v3769 = vpack.c.bf16 %v3385, %v3377
        %v3770 = vld [vmem:[#allocation9] sm:$0xff]
        %v3771 = vld [vmem:[#allocation9 + $0x8] sm:$0xff]
        %v3772 = vld [vmem:[#allocation9 + $0x10] sm:$0xff]
        %v3773 = vld [vmem:[#allocation9 + $0x18] sm:$0xff]
        %v3774 = vld [vmem:[#allocation9 + $0x20] sm:$0xff]
        %v3775 = vld [vmem:[#allocation9 + $0x28] sm:$0xff]
        %v3776 = vld [vmem:[#allocation9 + $0x30] sm:$0xff]
        %v3777 = vld [vmem:[#allocation9 + $0x38] sm:$0xff]
        %v3778 = vld [vmem:[#allocation9 + $0x40] sm:$0xff]
        %v3779 = vld [vmem:[#allocation9 + $0x48] sm:$0xff]
        %v3780 = vld [vmem:[#allocation9 + $0x50] sm:$0xff]
        %v3781 = vld [vmem:[#allocation9 + $0x58] sm:$0xff]
        %v3782 = vld [vmem:[#allocation9 + $0x60] sm:$0xff]
        %v3783 = vld [vmem:[#allocation9 + $0x68] sm:$0xff]
        %v3784 = vld [vmem:[#allocation9 + $0x70] sm:$0xff]
        %v3785 = vld [vmem:[#allocation9 + $0x78] sm:$0xff]
        %v3786 = vld [vmem:[#allocation9 + $0x80] sm:$0xff]
        %v3787 = vld [vmem:[#allocation9 + $0x88] sm:$0xff]
        %v3788 = vld [vmem:[#allocation9 + $0x90] sm:$0xff]
        %v3789 = vld [vmem:[#allocation9 + $0x98] sm:$0xff]
        %v3790 = vld [vmem:[#allocation9 + $0xa0] sm:$0xff]
        %v3791 = vld [vmem:[#allocation9 + $0xa8] sm:$0xff]
        %v3792 = vld [vmem:[#allocation9 + $0xb0] sm:$0xff]
        %v3793 = vld [vmem:[#allocation9 + $0xb8] sm:$0xff]
        %v3794 = vld [vmem:[#allocation9 + $0xc0] sm:$0xff]
        %v3795 = vld [vmem:[#allocation9 + $0xc8] sm:$0xff]
        %v3796 = vld [vmem:[#allocation9 + $0xd0] sm:$0xff]
        %v3797 = vld [vmem:[#allocation9 + $0xd8] sm:$0xff]
        %v3798 = vld [vmem:[#allocation9 + $0xe0] sm:$0xff]
        %v3799 = vld [vmem:[#allocation9 + $0xe8] sm:$0xff]
        %v3800 = vld [vmem:[#allocation9 + $0xf0] sm:$0xff]
        %v3801 = vld [vmem:[#allocation9 + $0xf8] sm:$0xff]
        %v3802 = vld [vmem:[#allocation9 + $0x100] sm:$0xff]
        %v3803 = vld [vmem:[#allocation9 + $0x108] sm:$0xff]
        %v3804 = vld [vmem:[#allocation9 + $0x110] sm:$0xff]
        %v3805 = vld [vmem:[#allocation9 + $0x118] sm:$0xff]
        %v3806 = vld [vmem:[#allocation9 + $0x120] sm:$0xff]
        %v3807 = vld [vmem:[#allocation9 + $0x128] sm:$0xff]
        %v3808 = vld [vmem:[#allocation9 + $0x130] sm:$0xff]
        %v3809 = vld [vmem:[#allocation9 + $0x138] sm:$0xff]
        %v3810 = vld [vmem:[#allocation9 + $0x140] sm:$0xff]
        %v3811 = vld [vmem:[#allocation9 + $0x148] sm:$0xff]
        %v3812 = vld [vmem:[#allocation9 + $0x150] sm:$0xff]
        %v3813 = vld [vmem:[#allocation9 + $0x158] sm:$0xff]
        %v3814 = vld [vmem:[#allocation9 + $0x160] sm:$0xff]
        %v3815 = vld [vmem:[#allocation9 + $0x168] sm:$0xff]
        %v3816 = vld [vmem:[#allocation9 + $0x170] sm:$0xff]
        %v3817 = vld [vmem:[#allocation9 + $0x178] sm:$0xff]
        %v3818 = vld [vmem:[#allocation9 + $0x180] sm:$0xff]
        %v3819 = vld [vmem:[#allocation9 + $0x188] sm:$0xff]
        %v3820 = vld [vmem:[#allocation9 + $0x190] sm:$0xff]
        %v3821 = vld [vmem:[#allocation9 + $0x198] sm:$0xff]
        %v3822 = vld [vmem:[#allocation9 + $0x1a0] sm:$0xff]
        %v3823 = vld [vmem:[#allocation9 + $0x1a8] sm:$0xff]
        %v3824 = vld [vmem:[#allocation9 + $0x1b0] sm:$0xff]
        %v3825 = vld [vmem:[#allocation9 + $0x1b8] sm:$0xff]
        %v3826 = vld [vmem:[#allocation9 + $0x1c0] sm:$0xff]
        %v3827 = vld [vmem:[#allocation9 + $0x1c8] sm:$0xff]
        %v3828 = vld [vmem:[#allocation9 + $0x1d0] sm:$0xff]
        %v3829 = vld [vmem:[#allocation9 + $0x1d8] sm:$0xff]
        %v3830 = vld [vmem:[#allocation9 + $0x1e0] sm:$0xff]
        %v3831 = vld [vmem:[#allocation9 + $0x1e8] sm:$0xff]
        %v3832 = vld [vmem:[#allocation9 + $0x1f0] sm:$0xff]
        %v3833 = vld [vmem:[#allocation9 + $0x1f8] sm:$0xff]
        %v3834 = vld [vmem:[#allocation9 + $0x200] sm:$0xff]
        %v3835 = vld [vmem:[#allocation9 + $0x208] sm:$0xff]
        %v3836 = vld [vmem:[#allocation9 + $0x210] sm:$0xff]
        %v3837 = vld [vmem:[#allocation9 + $0x218] sm:$0xff]
        %v3838 = vld [vmem:[#allocation9 + $0x220] sm:$0xff]
        %v3839 = vld [vmem:[#allocation9 + $0x228] sm:$0xff]
        %v3840 = vld [vmem:[#allocation9 + $0x230] sm:$0xff]
        %v3841 = vld [vmem:[#allocation9 + $0x238] sm:$0xff]
        %v3842 = vld [vmem:[#allocation9 + $0x240] sm:$0xff]
        %v3843 = vld [vmem:[#allocation9 + $0x248] sm:$0xff]
        %v3844 = vld [vmem:[#allocation9 + $0x250] sm:$0xff]
        %v3845 = vld [vmem:[#allocation9 + $0x258] sm:$0xff]
        %v3846 = vld [vmem:[#allocation9 + $0x260] sm:$0xff]
        %v3847 = vld [vmem:[#allocation9 + $0x268] sm:$0xff]
        %v3848 = vld [vmem:[#allocation9 + $0x270] sm:$0xff]
        %v3849 = vld [vmem:[#allocation9 + $0x278] sm:$0xff]
        %v3850 = vld [vmem:[#allocation9 + $0x280] sm:$0xff]
        %v3851 = vld [vmem:[#allocation9 + $0x288] sm:$0xff]
        %v3852 = vld [vmem:[#allocation9 + $0x290] sm:$0xff]
        %v3853 = vld [vmem:[#allocation9 + $0x298] sm:$0xff]
        %v3854 = vld [vmem:[#allocation9 + $0x2a0] sm:$0xff]
        %v3855 = vld [vmem:[#allocation9 + $0x2a8] sm:$0xff]
        %v3856 = vld [vmem:[#allocation9 + $0x2b0] sm:$0xff]
        %v3857 = vld [vmem:[#allocation9 + $0x2b8] sm:$0xff]
        %v3858 = vld [vmem:[#allocation9 + $0x2c0] sm:$0xff]
        %v3859 = vld [vmem:[#allocation9 + $0x2c8] sm:$0xff]
        %v3860 = vld [vmem:[#allocation9 + $0x2d0] sm:$0xff]
        %v3861 = vld [vmem:[#allocation9 + $0x2d8] sm:$0xff]
        %v3862 = vld [vmem:[#allocation9 + $0x2e0] sm:$0xff]
        %v3863 = vld [vmem:[#allocation9 + $0x2e8] sm:$0xff]
        %v3864 = vld [vmem:[#allocation9 + $0x2f0] sm:$0xff]
        %v3865 = vld [vmem:[#allocation9 + $0x2f8] sm:$0xff]
        %v3866 = vld [vmem:[#allocation9 + $0x300] sm:$0xff]
        %v3867 = vld [vmem:[#allocation9 + $0x308] sm:$0xff]
        %v3868 = vld [vmem:[#allocation9 + $0x310] sm:$0xff]
        %v3869 = vld [vmem:[#allocation9 + $0x318] sm:$0xff]
        %v3870 = vld [vmem:[#allocation9 + $0x320] sm:$0xff]
        %v3871 = vld [vmem:[#allocation9 + $0x328] sm:$0xff]
        %v3872 = vld [vmem:[#allocation9 + $0x330] sm:$0xff]
        %v3873 = vld [vmem:[#allocation9 + $0x338] sm:$0xff]
        %v3874 = vld [vmem:[#allocation9 + $0x340] sm:$0xff]
        %v3875 = vld [vmem:[#allocation9 + $0x348] sm:$0xff]
        %v3876 = vld [vmem:[#allocation9 + $0x350] sm:$0xff]
        %v3877 = vld [vmem:[#allocation9 + $0x358] sm:$0xff]
        %v3878 = vld [vmem:[#allocation9 + $0x360] sm:$0xff]
        %v3879 = vld [vmem:[#allocation9 + $0x368] sm:$0xff]
        %v3880 = vld [vmem:[#allocation9 + $0x370] sm:$0xff]
        %v3881 = vld [vmem:[#allocation9 + $0x378] sm:$0xff]
        %v3882 = vld [vmem:[#allocation9 + $0x380] sm:$0xff]
        %v3883 = vld [vmem:[#allocation9 + $0x388] sm:$0xff]
        %v3884 = vld [vmem:[#allocation9 + $0x390] sm:$0xff]
        %v3885 = vld [vmem:[#allocation9 + $0x398] sm:$0xff]
        %v3886 = vld [vmem:[#allocation9 + $0x3a0] sm:$0xff]
        %v3887 = vld [vmem:[#allocation9 + $0x3a8] sm:$0xff]
        %v3888 = vld [vmem:[#allocation9 + $0x3b0] sm:$0xff]
        %v3889 = vld [vmem:[#allocation9 + $0x3b8] sm:$0xff]
        %v3890 = vld [vmem:[#allocation9 + $0x3c0] sm:$0xff]
        %v3891 = vld [vmem:[#allocation9 + $0x3c8] sm:$0xff]
        %v3892 = vld [vmem:[#allocation9 + $0x3d0] sm:$0xff]
        %v3893 = vld [vmem:[#allocation9 + $0x3d8] sm:$0xff]
        %v3894 = vld [vmem:[#allocation9 + $0x3e0] sm:$0xff]
        %v3895 = vld [vmem:[#allocation9 + $0x3e8] sm:$0xff]
        %v3896 = vld [vmem:[#allocation9 + $0x3f0] sm:$0xff]
        %v3897 = vld [vmem:[#allocation9 + $0x3f8] sm:$0xff]
        %v4026 = vunpack.c.l.b16 %v3770
        %v4027 = vunpack.c.h.b16 %v3770
        %v4028 = vunpack.c.l.b16 %v3771
        %v4029 = vunpack.c.h.b16 %v3771
        %v4030 = vunpack.c.l.b16 %v3772
        %v4031 = vunpack.c.h.b16 %v3772
        %v4032 = vunpack.c.l.b16 %v3773
        %v4033 = vunpack.c.h.b16 %v3773
        %v4034 = vunpack.c.l.b16 %v3774
        %v4035 = vunpack.c.h.b16 %v3774
        %v4036 = vunpack.c.l.b16 %v3775
        %v4037 = vunpack.c.h.b16 %v3775
        %v4038 = vunpack.c.l.b16 %v3776
        %v4039 = vunpack.c.h.b16 %v3776
        %v4040 = vunpack.c.l.b16 %v3777
        %v4041 = vunpack.c.h.b16 %v3777
        %v4042 = vunpack.c.l.b16 %v3778
        %v4043 = vunpack.c.h.b16 %v3778
        %v4044 = vunpack.c.l.b16 %v3779
        %v4045 = vunpack.c.h.b16 %v3779
        %v4046 = vunpack.c.l.b16 %v3780
        %v4047 = vunpack.c.h.b16 %v3780
        %v4048 = vunpack.c.l.b16 %v3781
        %v4049 = vunpack.c.h.b16 %v3781
        %v4050 = vunpack.c.l.b16 %v3782
        %v4051 = vunpack.c.h.b16 %v3782
        %v4052 = vunpack.c.l.b16 %v3783
        %v4053 = vunpack.c.h.b16 %v3783
        %v4054 = vunpack.c.l.b16 %v3784
        %v4055 = vunpack.c.h.b16 %v3784
        %v4056 = vunpack.c.l.b16 %v3785
        %v4057 = vunpack.c.h.b16 %v3785
        %v4058 = vunpack.c.l.b16 %v3786
        %v4059 = vunpack.c.h.b16 %v3786
        %v4060 = vunpack.c.l.b16 %v3787
        %v4061 = vunpack.c.h.b16 %v3787
        %v4062 = vunpack.c.l.b16 %v3788
        %v4063 = vunpack.c.h.b16 %v3788
        %v4064 = vunpack.c.l.b16 %v3789
        %v4065 = vunpack.c.h.b16 %v3789
        %v4066 = vunpack.c.l.b16 %v3790
        %v4067 = vunpack.c.h.b16 %v3790
        %v4068 = vunpack.c.l.b16 %v3791
        %v4069 = vunpack.c.h.b16 %v3791
        %v4070 = vunpack.c.l.b16 %v3792
        %v4071 = vunpack.c.h.b16 %v3792
        %v4072 = vunpack.c.l.b16 %v3793
        %v4073 = vunpack.c.h.b16 %v3793
        %v4074 = vunpack.c.l.b16 %v3794
        %v4075 = vunpack.c.h.b16 %v3794
        %v4076 = vunpack.c.l.b16 %v3795
        %v4077 = vunpack.c.h.b16 %v3795
        %v4078 = vunpack.c.l.b16 %v3796
        %v4079 = vunpack.c.h.b16 %v3796
        %v4080 = vunpack.c.l.b16 %v3797
        %v4081 = vunpack.c.h.b16 %v3797
        %v4082 = vunpack.c.l.b16 %v3798
        %v4083 = vunpack.c.h.b16 %v3798
        %v4084 = vunpack.c.l.b16 %v3799
        %v4085 = vunpack.c.h.b16 %v3799
        %v4086 = vunpack.c.l.b16 %v3800
        %v4087 = vunpack.c.h.b16 %v3800
        %v4088 = vunpack.c.l.b16 %v3801
        %v4089 = vunpack.c.h.b16 %v3801
        %v4090 = vunpack.c.l.b16 %v3802
        %v4091 = vunpack.c.h.b16 %v3802
        %v4092 = vunpack.c.l.b16 %v3803
        %v4093 = vunpack.c.h.b16 %v3803
        %v4094 = vunpack.c.l.b16 %v3804
        %v4095 = vunpack.c.h.b16 %v3804
        %v4096 = vunpack.c.l.b16 %v3805
        %v4097 = vunpack.c.h.b16 %v3805
        %v4098 = vunpack.c.l.b16 %v3806
        %v4099 = vunpack.c.h.b16 %v3806
        %v4100 = vunpack.c.l.b16 %v3807
        %v4101 = vunpack.c.h.b16 %v3807
        %v4102 = vunpack.c.l.b16 %v3808
        %v4103 = vunpack.c.h.b16 %v3808
        %v4104 = vunpack.c.l.b16 %v3809
        %v4105 = vunpack.c.h.b16 %v3809
        %v4106 = vunpack.c.l.b16 %v3810
        %v4107 = vunpack.c.h.b16 %v3810
        %v4108 = vunpack.c.l.b16 %v3811
        %v4109 = vunpack.c.h.b16 %v3811
        %v4110 = vunpack.c.l.b16 %v3812
        %v4111 = vunpack.c.h.b16 %v3812
        %v4112 = vunpack.c.l.b16 %v3813
        %v4113 = vunpack.c.h.b16 %v3813
        %v4114 = vunpack.c.l.b16 %v3814
        %v4115 = vunpack.c.h.b16 %v3814
        %v4116 = vunpack.c.l.b16 %v3815
        %v4117 = vunpack.c.h.b16 %v3815
        %v4118 = vunpack.c.l.b16 %v3816
        %v4119 = vunpack.c.h.b16 %v3816
        %v4120 = vunpack.c.l.b16 %v3817
        %v4121 = vunpack.c.h.b16 %v3817
        %v4122 = vunpack.c.l.b16 %v3818
        %v4123 = vunpack.c.h.b16 %v3818
        %v4124 = vunpack.c.l.b16 %v3819
        %v4125 = vunpack.c.h.b16 %v3819
        %v4126 = vunpack.c.l.b16 %v3820
        %v4127 = vunpack.c.h.b16 %v3820
        %v4128 = vunpack.c.l.b16 %v3821
        %v4129 = vunpack.c.h.b16 %v3821
        %v4130 = vunpack.c.l.b16 %v3822
        %v4131 = vunpack.c.h.b16 %v3822
        %v4132 = vunpack.c.l.b16 %v3823
        %v4133 = vunpack.c.h.b16 %v3823
        %v4134 = vunpack.c.l.b16 %v3824
        %v4135 = vunpack.c.h.b16 %v3824
        %v4136 = vunpack.c.l.b16 %v3825
        %v4137 = vunpack.c.h.b16 %v3825
        %v4138 = vunpack.c.l.b16 %v3826
        %v4139 = vunpack.c.h.b16 %v3826
        %v4140 = vunpack.c.l.b16 %v3827
        %v4141 = vunpack.c.h.b16 %v3827
        %v4142 = vunpack.c.l.b16 %v3828
        %v4143 = vunpack.c.h.b16 %v3828
        %v4144 = vunpack.c.l.b16 %v3829
        %v4145 = vunpack.c.h.b16 %v3829
        %v4146 = vunpack.c.l.b16 %v3830
        %v4147 = vunpack.c.h.b16 %v3830
        %v4148 = vunpack.c.l.b16 %v3831
        %v4149 = vunpack.c.h.b16 %v3831
        %v4150 = vunpack.c.l.b16 %v3832
        %v4151 = vunpack.c.h.b16 %v3832
        %v4152 = vunpack.c.l.b16 %v3833
        %v4153 = vunpack.c.h.b16 %v3833
        %v4154 = vunpack.c.l.b16 %v3834
        %v4155 = vunpack.c.h.b16 %v3834
        %v4156 = vunpack.c.l.b16 %v3835
        %v4157 = vunpack.c.h.b16 %v3835
        %v4158 = vunpack.c.l.b16 %v3836
        %v4159 = vunpack.c.h.b16 %v3836
        %v4160 = vunpack.c.l.b16 %v3837
        %v4161 = vunpack.c.h.b16 %v3837
        %v4162 = vunpack.c.l.b16 %v3838
        %v4163 = vunpack.c.h.b16 %v3838
        %v4164 = vunpack.c.l.b16 %v3839
        %v4165 = vunpack.c.h.b16 %v3839
        %v4166 = vunpack.c.l.b16 %v3840
        %v4167 = vunpack.c.h.b16 %v3840
        %v4168 = vunpack.c.l.b16 %v3841
        %v4169 = vunpack.c.h.b16 %v3841
        %v4170 = vunpack.c.l.b16 %v3842
        %v4171 = vunpack.c.h.b16 %v3842
        %v4172 = vunpack.c.l.b16 %v3843
        %v4173 = vunpack.c.h.b16 %v3843
        %v4174 = vunpack.c.l.b16 %v3844
        %v4175 = vunpack.c.h.b16 %v3844
        %v4176 = vunpack.c.l.b16 %v3845
        %v4177 = vunpack.c.h.b16 %v3845
        %v4178 = vunpack.c.l.b16 %v3846
        %v4179 = vunpack.c.h.b16 %v3846
        %v4180 = vunpack.c.l.b16 %v3847
        %v4181 = vunpack.c.h.b16 %v3847
        %v4182 = vunpack.c.l.b16 %v3848
        %v4183 = vunpack.c.h.b16 %v3848
        %v4184 = vunpack.c.l.b16 %v3849
        %v4185 = vunpack.c.h.b16 %v3849
        %v4186 = vunpack.c.l.b16 %v3850
        %v4187 = vunpack.c.h.b16 %v3850
        %v4188 = vunpack.c.l.b16 %v3851
        %v4189 = vunpack.c.h.b16 %v3851
        %v4190 = vunpack.c.l.b16 %v3852
        %v4191 = vunpack.c.h.b16 %v3852
        %v4192 = vunpack.c.l.b16 %v3853
        %v4193 = vunpack.c.h.b16 %v3853
        %v4194 = vunpack.c.l.b16 %v3854
        %v4195 = vunpack.c.h.b16 %v3854
        %v4196 = vunpack.c.l.b16 %v3855
        %v4197 = vunpack.c.h.b16 %v3855
        %v4198 = vunpack.c.l.b16 %v3856
        %v4199 = vunpack.c.h.b16 %v3856
        %v4200 = vunpack.c.l.b16 %v3857
        %v4201 = vunpack.c.h.b16 %v3857
        %v4202 = vunpack.c.l.b16 %v3858
        %v4203 = vunpack.c.h.b16 %v3858
        %v4204 = vunpack.c.l.b16 %v3859
        %v4205 = vunpack.c.h.b16 %v3859
        %v4206 = vunpack.c.l.b16 %v3860
        %v4207 = vunpack.c.h.b16 %v3860
        %v4208 = vunpack.c.l.b16 %v3861
        %v4209 = vunpack.c.h.b16 %v3861
        %v4210 = vunpack.c.l.b16 %v3862
        %v4211 = vunpack.c.h.b16 %v3862
        %v4212 = vunpack.c.l.b16 %v3863
        %v4213 = vunpack.c.h.b16 %v3863
        %v4214 = vunpack.c.l.b16 %v3864
        %v4215 = vunpack.c.h.b16 %v3864
        %v4216 = vunpack.c.l.b16 %v3865
        %v4217 = vunpack.c.h.b16 %v3865
        %v4218 = vunpack.c.l.b16 %v3866
        %v4219 = vunpack.c.h.b16 %v3866
        %v4220 = vunpack.c.l.b16 %v3867
        %v4221 = vunpack.c.h.b16 %v3867
        %v4222 = vunpack.c.l.b16 %v3868
        %v4223 = vunpack.c.h.b16 %v3868
        %v4224 = vunpack.c.l.b16 %v3869
        %v4225 = vunpack.c.h.b16 %v3869
        %v4226 = vunpack.c.l.b16 %v3870
        %v4227 = vunpack.c.h.b16 %v3870
        %v4228 = vunpack.c.l.b16 %v3871
        %v4229 = vunpack.c.h.b16 %v3871
        %v4230 = vunpack.c.l.b16 %v3872
        %v4231 = vunpack.c.h.b16 %v3872
        %v4232 = vunpack.c.l.b16 %v3873
        %v4233 = vunpack.c.h.b16 %v3873
        %v4234 = vunpack.c.l.b16 %v3874
        %v4235 = vunpack.c.h.b16 %v3874
        %v4236 = vunpack.c.l.b16 %v3875
        %v4237 = vunpack.c.h.b16 %v3875
        %v4238 = vunpack.c.l.b16 %v3876
        %v4239 = vunpack.c.h.b16 %v3876
        %v4240 = vunpack.c.l.b16 %v3877
        %v4241 = vunpack.c.h.b16 %v3877
        %v4242 = vunpack.c.l.b16 %v3878
        %v4243 = vunpack.c.h.b16 %v3878
        %v4244 = vunpack.c.l.b16 %v3879
        %v4245 = vunpack.c.h.b16 %v3879
        %v4246 = vunpack.c.l.b16 %v3880
        %v4247 = vunpack.c.h.b16 %v3880
        %v4248 = vunpack.c.l.b16 %v3881
        %v4249 = vunpack.c.h.b16 %v3881
        %v4250 = vunpack.c.l.b16 %v3882
        %v4251 = vunpack.c.h.b16 %v3882
        %v4252 = vunpack.c.l.b16 %v3883
        %v4253 = vunpack.c.h.b16 %v3883
        %v4254 = vunpack.c.l.b16 %v3884
        %v4255 = vunpack.c.h.b16 %v3884
        %v4256 = vunpack.c.l.b16 %v3885
        %v4257 = vunpack.c.h.b16 %v3885
        %v4258 = vunpack.c.l.b16 %v3886
        %v4259 = vunpack.c.h.b16 %v3886
        %v4260 = vunpack.c.l.b16 %v3887
        %v4261 = vunpack.c.h.b16 %v3887
        %v4262 = vunpack.c.l.b16 %v3888
        %v4263 = vunpack.c.h.b16 %v3888
        %v4264 = vunpack.c.l.b16 %v3889
        %v4265 = vunpack.c.h.b16 %v3889
        %v4266 = vunpack.c.l.b16 %v3890
        %v4267 = vunpack.c.h.b16 %v3890
        %v4268 = vunpack.c.l.b16 %v3891
        %v4269 = vunpack.c.h.b16 %v3891
        %v4270 = vunpack.c.l.b16 %v3892
        %v4271 = vunpack.c.h.b16 %v3892
        %v4272 = vunpack.c.l.b16 %v3893
        %v4273 = vunpack.c.h.b16 %v3893
        %v4274 = vunpack.c.l.b16 %v3894
        %v4275 = vunpack.c.h.b16 %v3894
        %v4276 = vunpack.c.l.b16 %v3895
        %v4277 = vunpack.c.h.b16 %v3895
        %v4278 = vunpack.c.l.b16 %v3896
        %v4279 = vunpack.c.h.b16 %v3896
        %v4280 = vunpack.c.l.b16 %v3897
        %v4281 = vunpack.c.h.b16 %v3897
        %v4282 = vpack.c.b16 %v4028, %v4026
        %v4283 = vpack.c.b16 %v4029, %v4027
        %v4284 = vpack.c.b16 %v4032, %v4030
        %v4285 = vpack.c.b16 %v4033, %v4031
        %v4286 = vpack.c.b16 %v4036, %v4034
        %v4287 = vpack.c.b16 %v4037, %v4035
        %v4288 = vpack.c.b16 %v4040, %v4038
        %v4289 = vpack.c.b16 %v4041, %v4039
        %v4290 = vpack.c.b16 %v4044, %v4042
        %v4291 = vpack.c.b16 %v4045, %v4043
        %v4292 = vpack.c.b16 %v4048, %v4046
        %v4293 = vpack.c.b16 %v4049, %v4047
        %v4294 = vpack.c.b16 %v4052, %v4050
        %v4295 = vpack.c.b16 %v4053, %v4051
        %v4296 = vpack.c.b16 %v4056, %v4054
        %v4297 = vpack.c.b16 %v4057, %v4055
        %v4298 = vpack.c.b16 %v4060, %v4058
        %v4299 = vpack.c.b16 %v4061, %v4059
        %v4300 = vpack.c.b16 %v4064, %v4062
        %v4301 = vpack.c.b16 %v4065, %v4063
        %v4302 = vpack.c.b16 %v4068, %v4066
        %v4303 = vpack.c.b16 %v4069, %v4067
        %v4304 = vpack.c.b16 %v4072, %v4070
        %v4305 = vpack.c.b16 %v4073, %v4071
        %v4306 = vpack.c.b16 %v4076, %v4074
        %v4307 = vpack.c.b16 %v4077, %v4075
        %v4308 = vpack.c.b16 %v4080, %v4078
        %v4309 = vpack.c.b16 %v4081, %v4079
        %v4310 = vpack.c.b16 %v4084, %v4082
        %v4311 = vpack.c.b16 %v4085, %v4083
        %v4312 = vpack.c.b16 %v4088, %v4086
        %v4313 = vpack.c.b16 %v4089, %v4087
        %v4314 = vpack.c.b16 %v4092, %v4090
        %v4315 = vpack.c.b16 %v4093, %v4091
        %v4316 = vpack.c.b16 %v4096, %v4094
        %v4317 = vpack.c.b16 %v4097, %v4095
        %v4318 = vpack.c.b16 %v4100, %v4098
        %v4319 = vpack.c.b16 %v4101, %v4099
        %v4320 = vpack.c.b16 %v4104, %v4102
        %v4321 = vpack.c.b16 %v4105, %v4103
        %v4322 = vpack.c.b16 %v4108, %v4106
        %v4323 = vpack.c.b16 %v4109, %v4107
        %v4324 = vpack.c.b16 %v4112, %v4110
        %v4325 = vpack.c.b16 %v4113, %v4111
        %v4326 = vpack.c.b16 %v4116, %v4114
        %v4327 = vpack.c.b16 %v4117, %v4115
        %v4328 = vpack.c.b16 %v4120, %v4118
        %v4329 = vpack.c.b16 %v4121, %v4119
        %v4330 = vpack.c.b16 %v4124, %v4122
        %v4331 = vpack.c.b16 %v4125, %v4123
        %v4332 = vpack.c.b16 %v4128, %v4126
        %v4333 = vpack.c.b16 %v4129, %v4127
        %v4334 = vpack.c.b16 %v4132, %v4130
        %v4335 = vpack.c.b16 %v4133, %v4131
        %v4336 = vpack.c.b16 %v4136, %v4134
        %v4337 = vpack.c.b16 %v4137, %v4135
        %v4338 = vpack.c.b16 %v4140, %v4138
        %v4339 = vpack.c.b16 %v4141, %v4139
        %v4340 = vpack.c.b16 %v4144, %v4142
        %v4341 = vpack.c.b16 %v4145, %v4143
        %v4342 = vpack.c.b16 %v4148, %v4146
        %v4343 = vpack.c.b16 %v4149, %v4147
        %v4344 = vpack.c.b16 %v4152, %v4150
        %v4345 = vpack.c.b16 %v4153, %v4151
        %v4346 = vpack.c.b16 %v4156, %v4154
        %v4347 = vpack.c.b16 %v4157, %v4155
        %v4348 = vpack.c.b16 %v4160, %v4158
        %v4349 = vpack.c.b16 %v4161, %v4159
        %v4350 = vpack.c.b16 %v4164, %v4162
        %v4351 = vpack.c.b16 %v4165, %v4163
        %v4352 = vpack.c.b16 %v4168, %v4166
        %v4353 = vpack.c.b16 %v4169, %v4167
        %v4354 = vpack.c.b16 %v4172, %v4170
        %v4355 = vpack.c.b16 %v4173, %v4171
        %v4356 = vpack.c.b16 %v4176, %v4174
        %v4357 = vpack.c.b16 %v4177, %v4175
        %v4358 = vpack.c.b16 %v4180, %v4178
        %v4359 = vpack.c.b16 %v4181, %v4179
        %v4360 = vpack.c.b16 %v4184, %v4182
        %v4361 = vpack.c.b16 %v4185, %v4183
        %v4362 = vpack.c.b16 %v4188, %v4186
        %v4363 = vpack.c.b16 %v4189, %v4187
        %v4364 = vpack.c.b16 %v4192, %v4190
        %v4365 = vpack.c.b16 %v4193, %v4191
        %v4366 = vpack.c.b16 %v4196, %v4194
        %v4367 = vpack.c.b16 %v4197, %v4195
        %v4368 = vpack.c.b16 %v4200, %v4198
        %v4369 = vpack.c.b16 %v4201, %v4199
        %v4370 = vpack.c.b16 %v4204, %v4202
        %v4371 = vpack.c.b16 %v4205, %v4203
        %v4372 = vpack.c.b16 %v4208, %v4206
        %v4373 = vpack.c.b16 %v4209, %v4207
        %v4374 = vpack.c.b16 %v4212, %v4210
        %v4375 = vpack.c.b16 %v4213, %v4211
        %v4376 = vpack.c.b16 %v4216, %v4214
        %v4377 = vpack.c.b16 %v4217, %v4215
        %v4378 = vpack.c.b16 %v4220, %v4218
        %v4379 = vpack.c.b16 %v4221, %v4219
        %v4380 = vpack.c.b16 %v4224, %v4222
        %v4381 = vpack.c.b16 %v4225, %v4223
        %v4382 = vpack.c.b16 %v4228, %v4226
        %v4383 = vpack.c.b16 %v4229, %v4227
        %v4384 = vpack.c.b16 %v4232, %v4230
        %v4385 = vpack.c.b16 %v4233, %v4231
        %v4386 = vpack.c.b16 %v4236, %v4234
        %v4387 = vpack.c.b16 %v4237, %v4235
        %v4388 = vpack.c.b16 %v4240, %v4238
        %v4389 = vpack.c.b16 %v4241, %v4239
        %v4390 = vpack.c.b16 %v4244, %v4242
        %v4391 = vpack.c.b16 %v4245, %v4243
        %v4392 = vpack.c.b16 %v4248, %v4246
        %v4393 = vpack.c.b16 %v4249, %v4247
        %v4394 = vpack.c.b16 %v4252, %v4250
        %v4395 = vpack.c.b16 %v4253, %v4251
        %v4396 = vpack.c.b16 %v4256, %v4254
        %v4397 = vpack.c.b16 %v4257, %v4255
        %v4398 = vpack.c.b16 %v4260, %v4258
        %v4399 = vpack.c.b16 %v4261, %v4259
        %v4400 = vpack.c.b16 %v4264, %v4262
        %v4401 = vpack.c.b16 %v4265, %v4263
        %v4402 = vpack.c.b16 %v4268, %v4266
        %v4403 = vpack.c.b16 %v4269, %v4267
        %v4404 = vpack.c.b16 %v4272, %v4270
        %v4405 = vpack.c.b16 %v4273, %v4271
        %v4406 = vpack.c.b16 %v4276, %v4274
        %v4407 = vpack.c.b16 %v4277, %v4275
        %v4408 = vpack.c.b16 %v4280, %v4278
        %v4409 = vpack.c.b16 %v4281, %v4279
        %4538 = vmatprep.subr.bf16.mxu0 %v4283
        %4539 = vmatpush1.bf16.msra.mxu0 %v4282
        %4540 = vmatprep.subr.bf16.mxu0 %v4285
        %4541 = vmatpush1.bf16.msra.mxu0 %v4284
        %4542 = vmatprep.subr.bf16.mxu0 %v4287
        %4543 = vmatpush1.bf16.msra.mxu0 %v4286
        %4544 = vmatprep.subr.bf16.mxu0 %v4289
        %4545 = vmatpush1.bf16.msra.mxu0 %v4288
        %4546 = vmatprep.subr.bf16.mxu0 %v4291
        %4547 = vmatpush1.bf16.msra.mxu0 %v4290
        %4548 = vmatprep.subr.bf16.mxu0 %v4293
        %4549 = vmatpush1.bf16.msra.mxu0 %v4292
        %4550 = vmatprep.subr.bf16.mxu0 %v4295
        %4551 = vmatpush1.bf16.msra.mxu0 %v4294
        %4552 = vmatprep.subr.bf16.mxu0 %v4297
        %4553 = vmatpush1.bf16.msra.mxu0 %v4296
        %4554 = vmatprep.subr.bf16.mxu0 %v4299
        %4555 = vmatpush1.bf16.msra.mxu0 %v4298
        %4556 = vmatprep.subr.bf16.mxu0 %v4301
        %4557 = vmatpush1.bf16.msra.mxu0 %v4300
        %4558 = vmatprep.subr.bf16.mxu0 %v4303
        %4559 = vmatpush1.bf16.msra.mxu0 %v4302
        %4560 = vmatprep.subr.bf16.mxu0 %v4305
        %4561 = vmatpush1.bf16.msra.mxu0 %v4304
        %4562 = vmatprep.subr.bf16.mxu0 %v4307
        %4563 = vmatpush1.bf16.msra.mxu0 %v4306
        %4564 = vmatprep.subr.bf16.mxu0 %v4309
        %4565 = vmatpush1.bf16.msra.mxu0 %v4308
        %4566 = vmatprep.subr.bf16.mxu0 %v4311
        %4567 = vmatpush1.bf16.msra.mxu0 %v4310
        %4568 = vmatprep.subr.bf16.mxu0 %v4313
        %4569 = vmatpush1.bf16.msra.mxu0 %v4312
        %4570 = vmatprep.mubr.bf16.mxu0 %v3515
        %4571 = vmatmul.mubr.bf16.gmra.mrb[0].mxu0 %v3514
        %v4572 = vpop.f32.mrb[0].mxu0
        %v4573 = vadd.f32 0.0, %v4572
        %v4574 = vpop.f32.mrb[0].mxu0
        %v4575 = vadd.f32 0.0, %v4574
        %v4576 = vpop.f32.mrb[0].mxu0
        %v4577 = vadd.f32 0.0, %v4576
        %v4578 = vpop.f32.mrb[0].mxu0
        %v4579 = vadd.f32 0.0, %v4578
        %4580 = vmatprep.mubr.bf16.mxu0 %v3523
        %4581 = vmatmul.mubr.bf16.gmra.mrb[0].mxu0 %v3522
        %v4582 = vpop.f32.mrb[0].mxu0
        %v4583 = vadd.f32 0.0, %v4582
        %v4584 = vpop.f32.mrb[0].mxu0
        %v4585 = vadd.f32 0.0, %v4584
        %v4586 = vpop.f32.mrb[0].mxu0
        %v4587 = vadd.f32 0.0, %v4586
        %v4588 = vpop.f32.mrb[0].mxu0
        %v4589 = vadd.f32 0.0, %v4588
        %4590 = vmatprep.mubr.bf16.mxu0 %v3531
        %4591 = vmatmul.mubr.bf16.gmra.mrb[0].mxu0 %v3530
        %v4592 = vpop.f32.mrb[0].mxu0
        %v4593 = vadd.f32 0.0, %v4592
        %v4594 = vpop.f32.mrb[0].mxu0
        %v4595 = vadd.f32 0.0, %v4594
        %v4596 = vpop.f32.mrb[0].mxu0
        %v4597 = vadd.f32 0.0, %v4596
        %v4598 = vpop.f32.mrb[0].mxu0
        %v4599 = vadd.f32 0.0, %v4598
        %4600 = vmatprep.mubr.bf16.mxu0 %v3539
        %4601 = vmatmul.mubr.bf16.gmra.mrb[0].mxu0 %v3538
        %v4602 = vpop.f32.mrb[0].mxu0
        %v4603 = vadd.f32 0.0, %v4602
        %v4604 = vpop.f32.mrb[0].mxu0
        %v4605 = vadd.f32 0.0, %v4604
        %v4606 = vpop.f32.mrb[0].mxu0
        %v4607 = vadd.f32 0.0, %v4606
        %v4608 = vpop.f32.mrb[0].mxu0
        %v4609 = vadd.f32 0.0, %v4608
        %4610 = vmatprep.mubr.bf16.mxu0 %v3547
        %4611 = vmatmul.mubr.bf16.gmra.mrb[0].mxu0 %v3546
        %v4612 = vpop.f32.mrb[0].mxu0
        %v4613 = vadd.f32 0.0, %v4612
        %v4614 = vpop.f32.mrb[0].mxu0
        %v4615 = vadd.f32 0.0, %v4614
        %v4616 = vpop.f32.mrb[0].mxu0
        %v4617 = vadd.f32 0.0, %v4616
        %v4618 = vpop.f32.mrb[0].mxu0
        %v4619 = vadd.f32 0.0, %v4618
        %4620 = vmatprep.mubr.bf16.mxu0 %v3555
        %4621 = vmatmul.mubr.bf16.gmra.mrb[0].mxu0 %v3554
        %v4622 = vpop.f32.mrb[0].mxu0
        %v4623 = vadd.f32 0.0, %v4622
        %v4624 = vpop.f32.mrb[0].mxu0
        %v4625 = vadd.f32 0.0, %v4624
        %v4626 = vpop.f32.mrb[0].mxu0
        %v4627 = vadd.f32 0.0, %v4626
        %v4628 = vpop.f32.mrb[0].mxu0
        %v4629 = vadd.f32 0.0, %v4628
        %4630 = vmatprep.mubr.bf16.mxu0 %v3563
        %4631 = vmatmul.mubr.bf16.gmra.mrb[0].mxu0 %v3562
        %v4632 = vpop.f32.mrb[0].mxu0
        %v4633 = vadd.f32 0.0, %v4632
        %v4634 = vpop.f32.mrb[0].mxu0
        %v4635 = vadd.f32 0.0, %v4634
        %v4636 = vpop.f32.mrb[0].mxu0
        %v4637 = vadd.f32 0.0, %v4636
        %v4638 = vpop.f32.mrb[0].mxu0
        %v4639 = vadd.f32 0.0, %v4638
        %4640 = vmatprep.mubr.bf16.mxu0 %v3571
        %4641 = vmatmul.mubr.bf16.gmra.mrb[0].mxu0 %v3570
        %v4642 = vpop.f32.mrb[0].mxu0
        %v4643 = vadd.f32 0.0, %v4642
        %v4644 = vpop.f32.mrb[0].mxu0
        %v4645 = vadd.f32 0.0, %v4644
        %v4646 = vpop.f32.mrb[0].mxu0
        %v4647 = vadd.f32 0.0, %v4646
        %v4648 = vpop.f32.mrb[0].mxu0
        %v4649 = vadd.f32 0.0, %v4648
        %4650 = vmatprep.mubr.bf16.mxu0 %v3579
        %4651 = vmatmul.mubr.bf16.gmra.mrb[0].mxu0 %v3578
        %v4652 = vpop.f32.mrb[0].mxu0
        %v4653 = vadd.f32 0.0, %v4652
        %v4654 = vpop.f32.mrb[0].mxu0
        %v4655 = vadd.f32 0.0, %v4654
        %v4656 = vpop.f32.mrb[0].mxu0
        %v4657 = vadd.f32 0.0, %v4656
        %v4658 = vpop.f32.mrb[0].mxu0
        %v4659 = vadd.f32 0.0, %v4658
        %4660 = vmatprep.mubr.bf16.mxu0 %v3587
        %4661 = vmatmul.mubr.bf16.gmra.mrb[0].mxu0 %v3586
        %v4662 = vpop.f32.mrb[0].mxu0
        %v4663 = vadd.f32 0.0, %v4662
        %v4664 = vpop.f32.mrb[0].mxu0
        %v4665 = vadd.f32 0.0, %v4664
        %v4666 = vpop.f32.mrb[0].mxu0
        %v4667 = vadd.f32 0.0, %v4666
        %v4668 = vpop.f32.mrb[0].mxu0
        %v4669 = vadd.f32 0.0, %v4668
        %4670 = vmatprep.mubr.bf16.mxu0 %v3595
        %4671 = vmatmul.mubr.bf16.gmra.mrb[0].mxu0 %v3594
        %v4672 = vpop.f32.mrb[0].mxu0
        %v4673 = vadd.f32 0.0, %v4672
        %v4674 = vpop.f32.mrb[0].mxu0
        %v4675 = vadd.f32 0.0, %v4674
        %v4676 = vpop.f32.mrb[0].mxu0
        %v4677 = vadd.f32 0.0, %v4676
        %v4678 = vpop.f32.mrb[0].mxu0
        %v4679 = vadd.f32 0.0, %v4678
        %4680 = vmatprep.mubr.bf16.mxu0 %v3603
        %4681 = vmatmul.mubr.bf16.gmra.mrb[0].mxu0 %v3602
        %v4682 = vpop.f32.mrb[0].mxu0
        %v4683 = vadd.f32 0.0, %v4682
        %v4684 = vpop.f32.mrb[0].mxu0
        %v4685 = vadd.f32 0.0, %v4684
        %v4686 = vpop.f32.mrb[0].mxu0
        %v4687 = vadd.f32 0.0, %v4686
        %v4688 = vpop.f32.mrb[0].mxu0
        %v4689 = vadd.f32 0.0, %v4688
        %4690 = vmatprep.mubr.bf16.mxu0 %v3611
        %4691 = vmatmul.mubr.bf16.gmra.mrb[0].mxu0 %v3610
        %v4692 = vpop.f32.mrb[0].mxu0
        %v4693 = vadd.f32 0.0, %v4692
        %v4694 = vpop.f32.mrb[0].mxu0
        %v4695 = vadd.f32 0.0, %v4694
        %v4696 = vpop.f32.mrb[0].mxu0
        %v4697 = vadd.f32 0.0, %v4696
        %v4698 = vpop.f32.mrb[0].mxu0
        %v4699 = vadd.f32 0.0, %v4698
        %4700 = vmatprep.mubr.bf16.mxu0 %v3619
        %4701 = vmatmul.mubr.bf16.gmra.mrb[0].mxu0 %v3618
        %v4702 = vpop.f32.mrb[0].mxu0
        %v4703 = vadd.f32 0.0, %v4702
        %v4704 = vpop.f32.mrb[0].mxu0
        %v4705 = vadd.f32 0.0, %v4704
        %v4706 = vpop.f32.mrb[0].mxu0
        %v4707 = vadd.f32 0.0, %v4706
        %v4708 = vpop.f32.mrb[0].mxu0
        %v4709 = vadd.f32 0.0, %v4708
        %4710 = vmatprep.mubr.bf16.mxu0 %v3627
        %4711 = vmatmul.mubr.bf16.gmra.mrb[0].mxu0 %v3626
        %v4712 = vpop.f32.mrb[0].mxu0
        %v4713 = vadd.f32 0.0, %v4712
        %v4714 = vpop.f32.mrb[0].mxu0
        %v4715 = vadd.f32 0.0, %v4714
        %v4716 = vpop.f32.mrb[0].mxu0
        %v4717 = vadd.f32 0.0, %v4716
        %v4718 = vpop.f32.mrb[0].mxu0
        %v4719 = vadd.f32 0.0, %v4718
        %4720 = vmatprep.mubr.bf16.mxu0 %v3635
        %4721 = vmatmul.mubr.bf16.gmra.mrb[0].mxu0 %v3634
        %v4722 = vpop.f32.mrb[0].mxu0
        %v4723 = vadd.f32 0.0, %v4722
        %v4724 = vpop.f32.mrb[0].mxu0
        %v4725 = vadd.f32 0.0, %v4724
        %v4726 = vpop.f32.mrb[0].mxu0
        %v4727 = vadd.f32 0.0, %v4726
        %v4728 = vpop.f32.mrb[0].mxu0
        %v4729 = vadd.f32 0.0, %v4728
        %4730 = vmatprep.mubr.bf16.mxu0 %v3643
        %4731 = vmatmul.mubr.bf16.gmra.mrb[0].mxu0 %v3642
        %v4732 = vpop.f32.mrb[0].mxu0
        %v4733 = vadd.f32 0.0, %v4732
        %v4734 = vpop.f32.mrb[0].mxu0
        %v4735 = vadd.f32 0.0, %v4734
        %v4736 = vpop.f32.mrb[0].mxu0
        %v4737 = vadd.f32 0.0, %v4736
        %v4738 = vpop.f32.mrb[0].mxu0
        %v4739 = vadd.f32 0.0, %v4738
        %4740 = vmatprep.mubr.bf16.mxu0 %v3651
        %4741 = vmatmul.mubr.bf16.gmra.mrb[0].mxu0 %v3650
        %v4742 = vpop.f32.mrb[0].mxu0
        %v4743 = vadd.f32 0.0, %v4742
        %v4744 = vpop.f32.mrb[0].mxu0
        %v4745 = vadd.f32 0.0, %v4744
        %v4746 = vpop.f32.mrb[0].mxu0
        %v4747 = vadd.f32 0.0, %v4746
        %v4748 = vpop.f32.mrb[0].mxu0
        %v4749 = vadd.f32 0.0, %v4748
        %4750 = vmatprep.mubr.bf16.mxu0 %v3659
        %4751 = vmatmul.mubr.bf16.gmra.mrb[0].mxu0 %v3658
        %v4752 = vpop.f32.mrb[0].mxu0
        %v4753 = vadd.f32 0.0, %v4752
        %v4754 = vpop.f32.mrb[0].mxu0
        %v4755 = vadd.f32 0.0, %v4754
        %v4756 = vpop.f32.mrb[0].mxu0
        %v4757 = vadd.f32 0.0, %v4756
        %v4758 = vpop.f32.mrb[0].mxu0
        %v4759 = vadd.f32 0.0, %v4758
        %4760 = vmatprep.mubr.bf16.mxu0 %v3667
        %4761 = vmatmul.mubr.bf16.gmra.mrb[0].mxu0 %v3666
        %v4762 = vpop.f32.mrb[0].mxu0
        %v4763 = vadd.f32 0.0, %v4762
        %v4764 = vpop.f32.mrb[0].mxu0
        %v4765 = vadd.f32 0.0, %v4764
        %v4766 = vpop.f32.mrb[0].mxu0
        %v4767 = vadd.f32 0.0, %v4766
        %v4768 = vpop.f32.mrb[0].mxu0
        %v4769 = vadd.f32 0.0, %v4768
        %4770 = vmatprep.mubr.bf16.mxu0 %v3675
        %4771 = vmatmul.mubr.bf16.gmra.mrb[0].mxu0 %v3674
        %v4772 = vpop.f32.mrb[0].mxu0
        %v4773 = vadd.f32 0.0, %v4772
        %v4774 = vpop.f32.mrb[0].mxu0
        %v4775 = vadd.f32 0.0, %v4774
        %v4776 = vpop.f32.mrb[0].mxu0
        %v4777 = vadd.f32 0.0, %v4776
        %v4778 = vpop.f32.mrb[0].mxu0
        %v4779 = vadd.f32 0.0, %v4778
        %4780 = vmatprep.mubr.bf16.mxu0 %v3683
        %4781 = vmatmul.mubr.bf16.gmra.mrb[0].mxu0 %v3682
        %v4782 = vpop.f32.mrb[0].mxu0
        %v4783 = vadd.f32 0.0, %v4782
        %v4784 = vpop.f32.mrb[0].mxu0
        %v4785 = vadd.f32 0.0, %v4784
        %v4786 = vpop.f32.mrb[0].mxu0
        %v4787 = vadd.f32 0.0, %v4786
        %v4788 = vpop.f32.mrb[0].mxu0
        %v4789 = vadd.f32 0.0, %v4788
        %4790 = vmatprep.mubr.bf16.mxu0 %v3691
        %4791 = vmatmul.mubr.bf16.gmra.mrb[0].mxu0 %v3690
        %v4792 = vpop.f32.mrb[0].mxu0
        %v4793 = vadd.f32 0.0, %v4792
        %v4794 = vpop.f32.mrb[0].mxu0
        %v4795 = vadd.f32 0.0, %v4794
        %v4796 = vpop.f32.mrb[0].mxu0
        %v4797 = vadd.f32 0.0, %v4796
        %v4798 = vpop.f32.mrb[0].mxu0
        %v4799 = vadd.f32 0.0, %v4798
        %4800 = vmatprep.mubr.bf16.mxu0 %v3699
        %4801 = vmatmul.mubr.bf16.gmra.mrb[0].mxu0 %v3698
        %v4802 = vpop.f32.mrb[0].mxu0
        %v4803 = vadd.f32 0.0, %v4802
        %v4804 = vpop.f32.mrb[0].mxu0
        %v4805 = vadd.f32 0.0, %v4804
        %v4806 = vpop.f32.mrb[0].mxu0
        %v4807 = vadd.f32 0.0, %v4806
        %v4808 = vpop.f32.mrb[0].mxu0
        %v4809 = vadd.f32 0.0, %v4808
        %4810 = vmatprep.mubr.bf16.mxu0 %v3707
        %4811 = vmatmul.mubr.bf16.gmra.mrb[0].mxu0 %v3706
        %v4812 = vpop.f32.mrb[0].mxu0
        %v4813 = vadd.f32 0.0, %v4812
        %v4814 = vpop.f32.mrb[0].mxu0
        %v4815 = vadd.f32 0.0, %v4814
        %v4816 = vpop.f32.mrb[0].mxu0
        %v4817 = vadd.f32 0.0, %v4816
        %v4818 = vpop.f32.mrb[0].mxu0
        %v4819 = vadd.f32 0.0, %v4818
        %4820 = vmatprep.mubr.bf16.mxu0 %v3715
        %4821 = vmatmul.mubr.bf16.gmra.mrb[0].mxu0 %v3714
        %v4822 = vpop.f32.mrb[0].mxu0
        %v4823 = vadd.f32 0.0, %v4822
        %v4824 = vpop.f32.mrb[0].mxu0
        %v4825 = vadd.f32 0.0, %v4824
        %v4826 = vpop.f32.mrb[0].mxu0
        %v4827 = vadd.f32 0.0, %v4826
        %v4828 = vpop.f32.mrb[0].mxu0
        %v4829 = vadd.f32 0.0, %v4828
        %4830 = vmatprep.mubr.bf16.mxu0 %v3723
        %4831 = vmatmul.mubr.bf16.gmra.mrb[0].mxu0 %v3722
        %v4832 = vpop.f32.mrb[0].mxu0
        %v4833 = vadd.f32 0.0, %v4832
        %v4834 = vpop.f32.mrb[0].mxu0
        %v4835 = vadd.f32 0.0, %v4834
        %v4836 = vpop.f32.mrb[0].mxu0
        %v4837 = vadd.f32 0.0, %v4836
        %v4838 = vpop.f32.mrb[0].mxu0
        %v4839 = vadd.f32 0.0, %v4838
        %4840 = vmatprep.mubr.bf16.mxu0 %v3731
        %4841 = vmatmul.mubr.bf16.gmra.mrb[0].mxu0 %v3730
        %v4842 = vpop.f32.mrb[0].mxu0
        %v4843 = vadd.f32 0.0, %v4842
        %v4844 = vpop.f32.mrb[0].mxu0
        %v4845 = vadd.f32 0.0, %v4844
        %v4846 = vpop.f32.mrb[0].mxu0
        %v4847 = vadd.f32 0.0, %v4846
        %v4848 = vpop.f32.mrb[0].mxu0
        %v4849 = vadd.f32 0.0, %v4848
        %4850 = vmatprep.mubr.bf16.mxu0 %v3739
        %4851 = vmatmul.mubr.bf16.gmra.mrb[0].mxu0 %v3738
        %v4852 = vpop.f32.mrb[0].mxu0
        %v4853 = vadd.f32 0.0, %v4852
        %v4854 = vpop.f32.mrb[0].mxu0
        %v4855 = vadd.f32 0.0, %v4854
        %v4856 = vpop.f32.mrb[0].mxu0
        %v4857 = vadd.f32 0.0, %v4856
        %v4858 = vpop.f32.mrb[0].mxu0
        %v4859 = vadd.f32 0.0, %v4858
        %4860 = vmatprep.mubr.bf16.mxu0 %v3747
        %4861 = vmatmul.mubr.bf16.gmra.mrb[0].mxu0 %v3746
        %v4862 = vpop.f32.mrb[0].mxu0
        %v4863 = vadd.f32 0.0, %v4862
        %v4864 = vpop.f32.mrb[0].mxu0
        %v4865 = vadd.f32 0.0, %v4864
        %v4866 = vpop.f32.mrb[0].mxu0
        %v4867 = vadd.f32 0.0, %v4866
        %v4868 = vpop.f32.mrb[0].mxu0
        %v4869 = vadd.f32 0.0, %v4868
        %4870 = vmatprep.mubr.bf16.mxu0 %v3755
        %4871 = vmatmul.mubr.bf16.gmra.mrb[0].mxu0 %v3754
        %v4872 = vpop.f32.mrb[0].mxu0
        %v4873 = vadd.f32 0.0, %v4872
        %v4874 = vpop.f32.mrb[0].mxu0
        %v4875 = vadd.f32 0.0, %v4874
        %v4876 = vpop.f32.mrb[0].mxu0
        %v4877 = vadd.f32 0.0, %v4876
        %v4878 = vpop.f32.mrb[0].mxu0
        %v4879 = vadd.f32 0.0, %v4878
        %4880 = vmatprep.mubr.bf16.mxu0 %v3763
        %4881 = vmatmul.mubr.bf16.gmra.mrb[0].mxu0 %v3762
        %v4882 = vpop.f32.mrb[0].mxu0
        %v4883 = vadd.f32 0.0, %v4882
        %v4884 = vpop.f32.mrb[0].mxu0
        %v4885 = vadd.f32 0.0, %v4884
        %v4886 = vpop.f32.mrb[0].mxu0
        %v4887 = vadd.f32 0.0, %v4886
        %v4888 = vpop.f32.mrb[0].mxu0
        %v4889 = vadd.f32 0.0, %v4888
        %4890 = vdwg.mxu0
        %4891 = vmatprep.subr.bf16.mxu0 %v4315
        %4892 = vmatpush1.bf16.msra.mxu0 %v4314
        %4893 = vmatprep.subr.bf16.mxu0 %v4317
        %4894 = vmatpush1.bf16.msra.mxu0 %v4316
        %4895 = vmatprep.subr.bf16.mxu0 %v4319
        %4896 = vmatpush1.bf16.msra.mxu0 %v4318
        %4897 = vmatprep.subr.bf16.mxu0 %v4321
        %4898 = vmatpush1.bf16.msra.mxu0 %v4320
        %4899 = vmatprep.subr.bf16.mxu0 %v4323
        %4900 = vmatpush1.bf16.msra.mxu0 %v4322
        %4901 = vmatprep.subr.bf16.mxu0 %v4325
        %4902 = vmatpush1.bf16.msra.mxu0 %v4324
        %4903 = vmatprep.subr.bf16.mxu0 %v4327
        %4904 = vmatpush1.bf16.msra.mxu0 %v4326
        %4905 = vmatprep.subr.bf16.mxu0 %v4329
        %4906 = vmatpush1.bf16.msra.mxu0 %v4328
        %4907 = vmatprep.subr.bf16.mxu0 %v4331
        %4908 = vmatpush1.bf16.msra.mxu0 %v4330
        %4909 = vmatprep.subr.bf16.mxu0 %v4333
        %4910 = vmatpush1.bf16.msra.mxu0 %v4332
        %4911 = vmatprep.subr.bf16.mxu0 %v4335
        %4912 = vmatpush1.bf16.msra.mxu0 %v4334
        %4913 = vmatprep.subr.bf16.mxu0 %v4337
        %4914 = vmatpush1.bf16.msra.mxu0 %v4336
        %4915 = vmatprep.subr.bf16.mxu0 %v4339
        %4916 = vmatpush1.bf16.msra.mxu0 %v4338
        %4917 = vmatprep.subr.bf16.mxu0 %v4341
        %4918 = vmatpush1.bf16.msra.mxu0 %v4340
        %4919 = vmatprep.subr.bf16.mxu0 %v4343
        %4920 = vmatpush1.bf16.msra.mxu0 %v4342
        %4921 = vmatprep.subr.bf16.mxu0 %v4345
        %4922 = vmatpush1.bf16.msra.mxu0 %v4344
        %4923 = vmatprep.mubr.bf16.mxu0 %v3517
        %4924 = vmatmul.mubr.bf16.gmra.mrb[0].mxu0 %v3516
        %v4925 = vpop.f32.mrb[0].mxu0
        %v4926 = vadd.f32 %v4573, %v4925
        %v4927 = vpop.f32.mrb[0].mxu0
        %v4928 = vadd.f32 %v4575, %v4927
        %v4929 = vpop.f32.mrb[0].mxu0
        %v4930 = vadd.f32 %v4577, %v4929
        %v4931 = vpop.f32.mrb[0].mxu0
        %v4932 = vadd.f32 %v4579, %v4931
        %4933 = vmatprep.mubr.bf16.mxu0 %v3525
        %4934 = vmatmul.mubr.bf16.gmra.mrb[0].mxu0 %v3524
        %v4935 = vpop.f32.mrb[0].mxu0
        %v4936 = vadd.f32 %v4583, %v4935
        %v4937 = vpop.f32.mrb[0].mxu0
        %v4938 = vadd.f32 %v4585, %v4937
        %v4939 = vpop.f32.mrb[0].mxu0
        %v4940 = vadd.f32 %v4587, %v4939
        %v4941 = vpop.f32.mrb[0].mxu0
        %v4942 = vadd.f32 %v4589, %v4941
        %4943 = vmatprep.mubr.bf16.mxu0 %v3533
        %4944 = vmatmul.mubr.bf16.gmra.mrb[0].mxu0 %v3532
        %v4945 = vpop.f32.mrb[0].mxu0
        %v4946 = vadd.f32 %v4593, %v4945
        %v4947 = vpop.f32.mrb[0].mxu0
        %v4948 = vadd.f32 %v4595, %v4947
        %v4949 = vpop.f32.mrb[0].mxu0
        %v4950 = vadd.f32 %v4597, %v4949
        %v4951 = vpop.f32.mrb[0].mxu0
        %v4952 = vadd.f32 %v4599, %v4951
        %4953 = vmatprep.mubr.bf16.mxu0 %v3541
        %4954 = vmatmul.mubr.bf16.gmra.mrb[0].mxu0 %v3540
        %v4955 = vpop.f32.mrb[0].mxu0
        %v4956 = vadd.f32 %v4603, %v4955
        %v4957 = vpop.f32.mrb[0].mxu0
        %v4958 = vadd.f32 %v4605, %v4957
        %v4959 = vpop.f32.mrb[0].mxu0
        %v4960 = vadd.f32 %v4607, %v4959
        %v4961 = vpop.f32.mrb[0].mxu0
        %v4962 = vadd.f32 %v4609, %v4961
        %4963 = vmatprep.mubr.bf16.mxu0 %v3549
        %4964 = vmatmul.mubr.bf16.gmra.mrb[0].mxu0 %v3548
        %v4965 = vpop.f32.mrb[0].mxu0
        %v4966 = vadd.f32 %v4613, %v4965
        %v4967 = vpop.f32.mrb[0].mxu0
        %v4968 = vadd.f32 %v4615, %v4967
        %v4969 = vpop.f32.mrb[0].mxu0
        %v4970 = vadd.f32 %v4617, %v4969
        %v4971 = vpop.f32.mrb[0].mxu0
        %v4972 = vadd.f32 %v4619, %v4971
        %4973 = vmatprep.mubr.bf16.mxu0 %v3557
        %4974 = vmatmul.mubr.bf16.gmra.mrb[0].mxu0 %v3556
        %v4975 = vpop.f32.mrb[0].mxu0
        %v4976 = vadd.f32 %v4623, %v4975
        %v4977 = vpop.f32.mrb[0].mxu0
        %v4978 = vadd.f32 %v4625, %v4977
        %v4979 = vpop.f32.mrb[0].mxu0
        %v4980 = vadd.f32 %v4627, %v4979
        %v4981 = vpop.f32.mrb[0].mxu0
        %v4982 = vadd.f32 %v4629, %v4981
        %4983 = vmatprep.mubr.bf16.mxu0 %v3565
        %4984 = vmatmul.mubr.bf16.gmra.mrb[0].mxu0 %v3564
        %v4985 = vpop.f32.mrb[0].mxu0
        %v4986 = vadd.f32 %v4633, %v4985
        %v4987 = vpop.f32.mrb[0].mxu0
        %v4988 = vadd.f32 %v4635, %v4987
        %v4989 = vpop.f32.mrb[0].mxu0
        %v4990 = vadd.f32 %v4637, %v4989
        %v4991 = vpop.f32.mrb[0].mxu0
        %v4992 = vadd.f32 %v4639, %v4991
        %4993 = vmatprep.mubr.bf16.mxu0 %v3573
        %4994 = vmatmul.mubr.bf16.gmra.mrb[0].mxu0 %v3572
        %v4995 = vpop.f32.mrb[0].mxu0
        %v4996 = vadd.f32 %v4643, %v4995
        %v4997 = vpop.f32.mrb[0].mxu0
        %v4998 = vadd.f32 %v4645, %v4997
        %v4999 = vpop.f32.mrb[0].mxu0
        %v5000 = vadd.f32 %v4647, %v4999
        %v5001 = vpop.f32.mrb[0].mxu0
        %v5002 = vadd.f32 %v4649, %v5001
        %5003 = vmatprep.mubr.bf16.mxu0 %v3581
        %5004 = vmatmul.mubr.bf16.gmra.mrb[0].mxu0 %v3580
        %v5005 = vpop.f32.mrb[0].mxu0
        %v5006 = vadd.f32 %v4653, %v5005
        %v5007 = vpop.f32.mrb[0].mxu0
        %v5008 = vadd.f32 %v4655, %v5007
        %v5009 = vpop.f32.mrb[0].mxu0
        %v5010 = vadd.f32 %v4657, %v5009
        %v5011 = vpop.f32.mrb[0].mxu0
        %v5012 = vadd.f32 %v4659, %v5011
        %5013 = vmatprep.mubr.bf16.mxu0 %v3589
        %5014 = vmatmul.mubr.bf16.gmra.mrb[0].mxu0 %v3588
        %v5015 = vpop.f32.mrb[0].mxu0
        %v5016 = vadd.f32 %v4663, %v5015
        %v5017 = vpop.f32.mrb[0].mxu0
        %v5018 = vadd.f32 %v4665, %v5017
        %v5019 = vpop.f32.mrb[0].mxu0
        %v5020 = vadd.f32 %v4667, %v5019
        %v5021 = vpop.f32.mrb[0].mxu0
        %v5022 = vadd.f32 %v4669, %v5021
        %5023 = vmatprep.mubr.bf16.mxu0 %v3597
        %5024 = vmatmul.mubr.bf16.gmra.mrb[0].mxu0 %v3596
        %v5025 = vpop.f32.mrb[0].mxu0
        %v5026 = vadd.f32 %v4673, %v5025
        %v5027 = vpop.f32.mrb[0].mxu0
        %v5028 = vadd.f32 %v4675, %v5027
        %v5029 = vpop.f32.mrb[0].mxu0
        %v5030 = vadd.f32 %v4677, %v5029
        %v5031 = vpop.f32.mrb[0].mxu0
        %v5032 = vadd.f32 %v4679, %v5031
        %5033 = vmatprep.mubr.bf16.mxu0 %v3605
        %5034 = vmatmul.mubr.bf16.gmra.mrb[0].mxu0 %v3604
        %v5035 = vpop.f32.mrb[0].mxu0
        %v5036 = vadd.f32 %v4683, %v5035
        %v5037 = vpop.f32.mrb[0].mxu0
        %v5038 = vadd.f32 %v4685, %v5037
        %v5039 = vpop.f32.mrb[0].mxu0
        %v5040 = vadd.f32 %v4687, %v5039
        %v5041 = vpop.f32.mrb[0].mxu0
        %v5042 = vadd.f32 %v4689, %v5041
        %5043 = vmatprep.mubr.bf16.mxu0 %v3613
        %5044 = vmatmul.mubr.bf16.gmra.mrb[0].mxu0 %v3612
        %v5045 = vpop.f32.mrb[0].mxu0
        %v5046 = vadd.f32 %v4693, %v5045
        %v5047 = vpop.f32.mrb[0].mxu0
        %v5048 = vadd.f32 %v4695, %v5047
        %v5049 = vpop.f32.mrb[0].mxu0
        %v5050 = vadd.f32 %v4697, %v5049
        %v5051 = vpop.f32.mrb[0].mxu0
        %v5052 = vadd.f32 %v4699, %v5051
        %5053 = vmatprep.mubr.bf16.mxu0 %v3621
        %5054 = vmatmul.mubr.bf16.gmra.mrb[0].mxu0 %v3620
        %v5055 = vpop.f32.mrb[0].mxu0
        %v5056 = vadd.f32 %v4703, %v5055
        %v5057 = vpop.f32.mrb[0].mxu0
        %v5058 = vadd.f32 %v4705, %v5057
        %v5059 = vpop.f32.mrb[0].mxu0
        %v5060 = vadd.f32 %v4707, %v5059
        %v5061 = vpop.f32.mrb[0].mxu0
        %v5062 = vadd.f32 %v4709, %v5061
        %5063 = vmatprep.mubr.bf16.mxu0 %v3629
        %5064 = vmatmul.mubr.bf16.gmra.mrb[0].mxu0 %v3628
        %v5065 = vpop.f32.mrb[0].mxu0
        %v5066 = vadd.f32 %v4713, %v5065
        %v5067 = vpop.f32.mrb[0].mxu0
        %v5068 = vadd.f32 %v4715, %v5067
        %v5069 = vpop.f32.mrb[0].mxu0
        %v5070 = vadd.f32 %v4717, %v5069
        %v5071 = vpop.f32.mrb[0].mxu0
        %v5072 = vadd.f32 %v4719, %v5071
        %5073 = vmatprep.mubr.bf16.mxu0 %v3637
        %5074 = vmatmul.mubr.bf16.gmra.mrb[0].mxu0 %v3636
        %v5075 = vpop.f32.mrb[0].mxu0
        %v5076 = vadd.f32 %v4723, %v5075
        %v5077 = vpop.f32.mrb[0].mxu0
        %v5078 = vadd.f32 %v4725, %v5077
        %v5079 = vpop.f32.mrb[0].mxu0
        %v5080 = vadd.f32 %v4727, %v5079
        %v5081 = vpop.f32.mrb[0].mxu0
        %v5082 = vadd.f32 %v4729, %v5081
        %5083 = vmatprep.mubr.bf16.mxu0 %v3645
        %5084 = vmatmul.mubr.bf16.gmra.mrb[0].mxu0 %v3644
        %v5085 = vpop.f32.mrb[0].mxu0
        %v5086 = vadd.f32 %v4733, %v5085
        %v5087 = vpop.f32.mrb[0].mxu0
        %v5088 = vadd.f32 %v4735, %v5087
        %v5089 = vpop.f32.mrb[0].mxu0
        %v5090 = vadd.f32 %v4737, %v5089
        %v5091 = vpop.f32.mrb[0].mxu0
        %v5092 = vadd.f32 %v4739, %v5091
        %5093 = vmatprep.mubr.bf16.mxu0 %v3653
        %5094 = vmatmul.mubr.bf16.gmra.mrb[0].mxu0 %v3652
        %v5095 = vpop.f32.mrb[0].mxu0
        %v5096 = vadd.f32 %v4743, %v5095
        %v5097 = vpop.f32.mrb[0].mxu0
        %v5098 = vadd.f32 %v4745, %v5097
        %v5099 = vpop.f32.mrb[0].mxu0
        %v5100 = vadd.f32 %v4747, %v5099
        %v5101 = vpop.f32.mrb[0].mxu0
        %v5102 = vadd.f32 %v4749, %v5101
        %5103 = vmatprep.mubr.bf16.mxu0 %v3661
        %5104 = vmatmul.mubr.bf16.gmra.mrb[0].mxu0 %v3660
        %v5105 = vpop.f32.mrb[0].mxu0
        %v5106 = vadd.f32 %v4753, %v5105
        %v5107 = vpop.f32.mrb[0].mxu0
        %v5108 = vadd.f32 %v4755, %v5107
        %v5109 = vpop.f32.mrb[0].mxu0
        %v5110 = vadd.f32 %v4757, %v5109
        %v5111 = vpop.f32.mrb[0].mxu0
        %v5112 = vadd.f32 %v4759, %v5111
        %5113 = vmatprep.mubr.bf16.mxu0 %v3669
        %5114 = vmatmul.mubr.bf16.gmra.mrb[0].mxu0 %v3668
        %v5115 = vpop.f32.mrb[0].mxu0
        %v5116 = vadd.f32 %v4763, %v5115
        %v5117 = vpop.f32.mrb[0].mxu0
        %v5118 = vadd.f32 %v4765, %v5117
        %v5119 = vpop.f32.mrb[0].mxu0
        %v5120 = vadd.f32 %v4767, %v5119
        %v5121 = vpop.f32.mrb[0].mxu0
        %v5122 = vadd.f32 %v4769, %v5121
        %5123 = vmatprep.mubr.bf16.mxu0 %v3677
        %5124 = vmatmul.mubr.bf16.gmra.mrb[0].mxu0 %v3676
        %v5125 = vpop.f32.mrb[0].mxu0
        %v5126 = vadd.f32 %v4773, %v5125
        %v5127 = vpop.f32.mrb[0].mxu0
        %v5128 = vadd.f32 %v4775, %v5127
        %v5129 = vpop.f32.mrb[0].mxu0
        %v5130 = vadd.f32 %v4777, %v5129
        %v5131 = vpop.f32.mrb[0].mxu0
        %v5132 = vadd.f32 %v4779, %v5131
        %5133 = vmatprep.mubr.bf16.mxu0 %v3685
        %5134 = vmatmul.mubr.bf16.gmra.mrb[0].mxu0 %v3684
        %v5135 = vpop.f32.mrb[0].mxu0
        %v5136 = vadd.f32 %v4783, %v5135
        %v5137 = vpop.f32.mrb[0].mxu0
        %v5138 = vadd.f32 %v4785, %v5137
        %v5139 = vpop.f32.mrb[0].mxu0
        %v5140 = vadd.f32 %v4787, %v5139
        %v5141 = vpop.f32.mrb[0].mxu0
        %v5142 = vadd.f32 %v4789, %v5141
        %5143 = vmatprep.mubr.bf16.mxu0 %v3693
        %5144 = vmatmul.mubr.bf16.gmra.mrb[0].mxu0 %v3692
        %v5145 = vpop.f32.mrb[0].mxu0
        %v5146 = vadd.f32 %v4793, %v5145
        %v5147 = vpop.f32.mrb[0].mxu0
        %v5148 = vadd.f32 %v4795, %v5147
        %v5149 = vpop.f32.mrb[0].mxu0
        %v5150 = vadd.f32 %v4797, %v5149
        %v5151 = vpop.f32.mrb[0].mxu0
        %v5152 = vadd.f32 %v4799, %v5151
        %5153 = vmatprep.mubr.bf16.mxu0 %v3701
        %5154 = vmatmul.mubr.bf16.gmra.mrb[0].mxu0 %v3700
        %v5155 = vpop.f32.mrb[0].mxu0
        %v5156 = vadd.f32 %v4803, %v5155
        %v5157 = vpop.f32.mrb[0].mxu0
        %v5158 = vadd.f32 %v4805, %v5157
        %v5159 = vpop.f32.mrb[0].mxu0
        %v5160 = vadd.f32 %v4807, %v5159
        %v5161 = vpop.f32.mrb[0].mxu0
        %v5162 = vadd.f32 %v4809, %v5161
        %5163 = vmatprep.mubr.bf16.mxu0 %v3709
        %5164 = vmatmul.mubr.bf16.gmra.mrb[0].mxu0 %v3708
        %v5165 = vpop.f32.mrb[0].mxu0
        %v5166 = vadd.f32 %v4813, %v5165
        %v5167 = vpop.f32.mrb[0].mxu0
        %v5168 = vadd.f32 %v4815, %v5167
        %v5169 = vpop.f32.mrb[0].mxu0
        %v5170 = vadd.f32 %v4817, %v5169
        %v5171 = vpop.f32.mrb[0].mxu0
        %v5172 = vadd.f32 %v4819, %v5171
        %5173 = vmatprep.mubr.bf16.mxu0 %v3717
        %5174 = vmatmul.mubr.bf16.gmra.mrb[0].mxu0 %v3716
        %v5175 = vpop.f32.mrb[0].mxu0
        %v5176 = vadd.f32 %v4823, %v5175
        %v5177 = vpop.f32.mrb[0].mxu0
        %v5178 = vadd.f32 %v4825, %v5177
        %v5179 = vpop.f32.mrb[0].mxu0
        %v5180 = vadd.f32 %v4827, %v5179
        %v5181 = vpop.f32.mrb[0].mxu0
        %v5182 = vadd.f32 %v4829, %v5181
        %5183 = vmatprep.mubr.bf16.mxu0 %v3725
        %5184 = vmatmul.mubr.bf16.gmra.mrb[0].mxu0 %v3724
        %v5185 = vpop.f32.mrb[0].mxu0
        %v5186 = vadd.f32 %v4833, %v5185
        %v5187 = vpop.f32.mrb[0].mxu0
        %v5188 = vadd.f32 %v4835, %v5187
        %v5189 = vpop.f32.mrb[0].mxu0
        %v5190 = vadd.f32 %v4837, %v5189
        %v5191 = vpop.f32.mrb[0].mxu0
        %v5192 = vadd.f32 %v4839, %v5191
        %5193 = vmatprep.mubr.bf16.mxu0 %v3733
        %5194 = vmatmul.mubr.bf16.gmra.mrb[0].mxu0 %v3732
        %v5195 = vpop.f32.mrb[0].mxu0
        %v5196 = vadd.f32 %v4843, %v5195
        %v5197 = vpop.f32.mrb[0].mxu0
        %v5198 = vadd.f32 %v4845, %v5197
        %v5199 = vpop.f32.mrb[0].mxu0
        %v5200 = vadd.f32 %v4847, %v5199
        %v5201 = vpop.f32.mrb[0].mxu0
        %v5202 = vadd.f32 %v4849, %v5201
        %5203 = vmatprep.mubr.bf16.mxu0 %v3741
        %5204 = vmatmul.mubr.bf16.gmra.mrb[0].mxu0 %v3740
        %v5205 = vpop.f32.mrb[0].mxu0
        %v5206 = vadd.f32 %v4853, %v5205
        %v5207 = vpop.f32.mrb[0].mxu0
        %v5208 = vadd.f32 %v4855, %v5207
        %v5209 = vpop.f32.mrb[0].mxu0
        %v5210 = vadd.f32 %v4857, %v5209
        %v5211 = vpop.f32.mrb[0].mxu0
        %v5212 = vadd.f32 %v4859, %v5211
        %5213 = vmatprep.mubr.bf16.mxu0 %v3749
        %5214 = vmatmul.mubr.bf16.gmra.mrb[0].mxu0 %v3748
        %v5215 = vpop.f32.mrb[0].mxu0
        %v5216 = vadd.f32 %v4863, %v5215
        %v5217 = vpop.f32.mrb[0].mxu0
        %v5218 = vadd.f32 %v4865, %v5217
        %v5219 = vpop.f32.mrb[0].mxu0
        %v5220 = vadd.f32 %v4867, %v5219
        %v5221 = vpop.f32.mrb[0].mxu0
        %v5222 = vadd.f32 %v4869, %v5221
        %5223 = vmatprep.mubr.bf16.mxu0 %v3757
        %5224 = vmatmul.mubr.bf16.gmra.mrb[0].mxu0 %v3756
        %v5225 = vpop.f32.mrb[0].mxu0
        %v5226 = vadd.f32 %v4873, %v5225
        %v5227 = vpop.f32.mrb[0].mxu0
        %v5228 = vadd.f32 %v4875, %v5227
        %v5229 = vpop.f32.mrb[0].mxu0
        %v5230 = vadd.f32 %v4877, %v5229
        %v5231 = vpop.f32.mrb[0].mxu0
        %v5232 = vadd.f32 %v4879, %v5231
        %5233 = vmatprep.mubr.bf16.mxu0 %v3765
        %5234 = vmatmul.mubr.bf16.gmra.mrb[0].mxu0 %v3764
        %v5235 = vpop.f32.mrb[0].mxu0
        %v5236 = vadd.f32 %v4883, %v5235
        %v5237 = vpop.f32.mrb[0].mxu0
        %v5238 = vadd.f32 %v4885, %v5237
        %v5239 = vpop.f32.mrb[0].mxu0
        %v5240 = vadd.f32 %v4887, %v5239
        %v5241 = vpop.f32.mrb[0].mxu0
        %v5242 = vadd.f32 %v4889, %v5241
        %5243 = vdwg.mxu0
        %5244 = vmatprep.subr.bf16.mxu0 %v4347
        %5245 = vmatpush1.bf16.msra.mxu0 %v4346
        %5246 = vmatprep.subr.bf16.mxu0 %v4349
        %5247 = vmatpush1.bf16.msra.mxu0 %v4348
        %5248 = vmatprep.subr.bf16.mxu0 %v4351
        %5249 = vmatpush1.bf16.msra.mxu0 %v4350
        %5250 = vmatprep.subr.bf16.mxu0 %v4353
        %5251 = vmatpush1.bf16.msra.mxu0 %v4352
        %5252 = vmatprep.subr.bf16.mxu0 %v4355
        %5253 = vmatpush1.bf16.msra.mxu0 %v4354
        %5254 = vmatprep.subr.bf16.mxu0 %v4357
        %5255 = vmatpush1.bf16.msra.mxu0 %v4356
        %5256 = vmatprep.subr.bf16.mxu0 %v4359
        %5257 = vmatpush1.bf16.msra.mxu0 %v4358
        %5258 = vmatprep.subr.bf16.mxu0 %v4361
        %5259 = vmatpush1.bf16.msra.mxu0 %v4360
        %5260 = vmatprep.subr.bf16.mxu0 %v4363
        %5261 = vmatpush1.bf16.msra.mxu0 %v4362
        %5262 = vmatprep.subr.bf16.mxu0 %v4365
        %5263 = vmatpush1.bf16.msra.mxu0 %v4364
        %5264 = vmatprep.subr.bf16.mxu0 %v4367
        %5265 = vmatpush1.bf16.msra.mxu0 %v4366
        %5266 = vmatprep.subr.bf16.mxu0 %v4369
        %5267 = vmatpush1.bf16.msra.mxu0 %v4368
        %5268 = vmatprep.subr.bf16.mxu0 %v4371
        %5269 = vmatpush1.bf16.msra.mxu0 %v4370
        %5270 = vmatprep.subr.bf16.mxu0 %v4373
        %5271 = vmatpush1.bf16.msra.mxu0 %v4372
        %5272 = vmatprep.subr.bf16.mxu0 %v4375
        %5273 = vmatpush1.bf16.msra.mxu0 %v4374
        %5274 = vmatprep.subr.bf16.mxu0 %v4377
        %5275 = vmatpush1.bf16.msra.mxu0 %v4376
        %5276 = vmatprep.mubr.bf16.mxu0 %v3519
        %5277 = vmatmul.mubr.bf16.gmra.mrb[0].mxu0 %v3518
        %v5278 = vpop.f32.mrb[0].mxu0
        %v5279 = vadd.f32 %v4926, %v5278
        %v5280 = vpop.f32.mrb[0].mxu0
        %v5281 = vadd.f32 %v4928, %v5280
        %v5282 = vpop.f32.mrb[0].mxu0
        %v5283 = vadd.f32 %v4930, %v5282
        %v5284 = vpop.f32.mrb[0].mxu0
        %v5285 = vadd.f32 %v4932, %v5284
        %5286 = vmatprep.mubr.bf16.mxu0 %v3527
        %5287 = vmatmul.mubr.bf16.gmra.mrb[0].mxu0 %v3526
        %v5288 = vpop.f32.mrb[0].mxu0
        %v5289 = vadd.f32 %v4936, %v5288
        %v5290 = vpop.f32.mrb[0].mxu0
        %v5291 = vadd.f32 %v4938, %v5290
        %v5292 = vpop.f32.mrb[0].mxu0
        %v5293 = vadd.f32 %v4940, %v5292
        %v5294 = vpop.f32.mrb[0].mxu0
        %v5295 = vadd.f32 %v4942, %v5294
        %5296 = vmatprep.mubr.bf16.mxu0 %v3535
        %5297 = vmatmul.mubr.bf16.gmra.mrb[0].mxu0 %v3534
        %v5298 = vpop.f32.mrb[0].mxu0
        %v5299 = vadd.f32 %v4946, %v5298
        %v5300 = vpop.f32.mrb[0].mxu0
        %v5301 = vadd.f32 %v4948, %v5300
        %v5302 = vpop.f32.mrb[0].mxu0
        %v5303 = vadd.f32 %v4950, %v5302
        %v5304 = vpop.f32.mrb[0].mxu0
        %v5305 = vadd.f32 %v4952, %v5304
        %5306 = vmatprep.mubr.bf16.mxu0 %v3543
        %5307 = vmatmul.mubr.bf16.gmra.mrb[0].mxu0 %v3542
        %v5308 = vpop.f32.mrb[0].mxu0
        %v5309 = vadd.f32 %v4956, %v5308
        %v5310 = vpop.f32.mrb[0].mxu0
        %v5311 = vadd.f32 %v4958, %v5310
        %v5312 = vpop.f32.mrb[0].mxu0
        %v5313 = vadd.f32 %v4960, %v5312
        %v5314 = vpop.f32.mrb[0].mxu0
        %v5315 = vadd.f32 %v4962, %v5314
        %5316 = vmatprep.mubr.bf16.mxu0 %v3551
        %5317 = vmatmul.mubr.bf16.gmra.mrb[0].mxu0 %v3550
        %v5318 = vpop.f32.mrb[0].mxu0
        %v5319 = vadd.f32 %v4966, %v5318
        %v5320 = vpop.f32.mrb[0].mxu0
        %v5321 = vadd.f32 %v4968, %v5320
        %v5322 = vpop.f32.mrb[0].mxu0
        %v5323 = vadd.f32 %v4970, %v5322
        %v5324 = vpop.f32.mrb[0].mxu0
        %v5325 = vadd.f32 %v4972, %v5324
        %5326 = vmatprep.mubr.bf16.mxu0 %v3559
        %5327 = vmatmul.mubr.bf16.gmra.mrb[0].mxu0 %v3558
        %v5328 = vpop.f32.mrb[0].mxu0
        %v5329 = vadd.f32 %v4976, %v5328
        %v5330 = vpop.f32.mrb[0].mxu0
        %v5331 = vadd.f32 %v4978, %v5330
        %v5332 = vpop.f32.mrb[0].mxu0
        %v5333 = vadd.f32 %v4980, %v5332
        %v5334 = vpop.f32.mrb[0].mxu0
        %v5335 = vadd.f32 %v4982, %v5334
        %5336 = vmatprep.mubr.bf16.mxu0 %v3567
        %5337 = vmatmul.mubr.bf16.gmra.mrb[0].mxu0 %v3566
        %v5338 = vpop.f32.mrb[0].mxu0
        %v5339 = vadd.f32 %v4986, %v5338
        %v5340 = vpop.f32.mrb[0].mxu0
        %v5341 = vadd.f32 %v4988, %v5340
        %v5342 = vpop.f32.mrb[0].mxu0
        %v5343 = vadd.f32 %v4990, %v5342
        %v5344 = vpop.f32.mrb[0].mxu0
        %v5345 = vadd.f32 %v4992, %v5344
        %5346 = vmatprep.mubr.bf16.mxu0 %v3575
        %5347 = vmatmul.mubr.bf16.gmra.mrb[0].mxu0 %v3574
        %v5348 = vpop.f32.mrb[0].mxu0
        %v5349 = vadd.f32 %v4996, %v5348
        %v5350 = vpop.f32.mrb[0].mxu0
        %v5351 = vadd.f32 %v4998, %v5350
        %v5352 = vpop.f32.mrb[0].mxu0
        %v5353 = vadd.f32 %v5000, %v5352
        %v5354 = vpop.f32.mrb[0].mxu0
        %v5355 = vadd.f32 %v5002, %v5354
        %5356 = vmatprep.mubr.bf16.mxu0 %v3583
        %5357 = vmatmul.mubr.bf16.gmra.mrb[0].mxu0 %v3582
        %v5358 = vpop.f32.mrb[0].mxu0
        %v5359 = vadd.f32 %v5006, %v5358
        %v5360 = vpop.f32.mrb[0].mxu0
        %v5361 = vadd.f32 %v5008, %v5360
        %v5362 = vpop.f32.mrb[0].mxu0
        %v5363 = vadd.f32 %v5010, %v5362
        %v5364 = vpop.f32.mrb[0].mxu0
        %v5365 = vadd.f32 %v5012, %v5364
        %5366 = vmatprep.mubr.bf16.mxu0 %v3591
        %5367 = vmatmul.mubr.bf16.gmra.mrb[0].mxu0 %v3590
        %v5368 = vpop.f32.mrb[0].mxu0
        %v5369 = vadd.f32 %v5016, %v5368
        %v5370 = vpop.f32.mrb[0].mxu0
        %v5371 = vadd.f32 %v5018, %v5370
        %v5372 = vpop.f32.mrb[0].mxu0
        %v5373 = vadd.f32 %v5020, %v5372
        %v5374 = vpop.f32.mrb[0].mxu0
        %v5375 = vadd.f32 %v5022, %v5374
        %5376 = vmatprep.mubr.bf16.mxu0 %v3599
        %5377 = vmatmul.mubr.bf16.gmra.mrb[0].mxu0 %v3598
        %v5378 = vpop.f32.mrb[0].mxu0
        %v5379 = vadd.f32 %v5026, %v5378
        %v5380 = vpop.f32.mrb[0].mxu0
        %v5381 = vadd.f32 %v5028, %v5380
        %v5382 = vpop.f32.mrb[0].mxu0
        %v5383 = vadd.f32 %v5030, %v5382
        %v5384 = vpop.f32.mrb[0].mxu0
        %v5385 = vadd.f32 %v5032, %v5384
        %5386 = vmatprep.mubr.bf16.mxu0 %v3607
        %5387 = vmatmul.mubr.bf16.gmra.mrb[0].mxu0 %v3606
        %v5388 = vpop.f32.mrb[0].mxu0
        %v5389 = vadd.f32 %v5036, %v5388
        %v5390 = vpop.f32.mrb[0].mxu0
        %v5391 = vadd.f32 %v5038, %v5390
        %v5392 = vpop.f32.mrb[0].mxu0
        %v5393 = vadd.f32 %v5040, %v5392
        %v5394 = vpop.f32.mrb[0].mxu0
        %v5395 = vadd.f32 %v5042, %v5394
        %5396 = vmatprep.mubr.bf16.mxu0 %v3615
        %5397 = vmatmul.mubr.bf16.gmra.mrb[0].mxu0 %v3614
        %v5398 = vpop.f32.mrb[0].mxu0
        %v5399 = vadd.f32 %v5046, %v5398
        %v5400 = vpop.f32.mrb[0].mxu0
        %v5401 = vadd.f32 %v5048, %v5400
        %v5402 = vpop.f32.mrb[0].mxu0
        %v5403 = vadd.f32 %v5050, %v5402
        %v5404 = vpop.f32.mrb[0].mxu0
        %v5405 = vadd.f32 %v5052, %v5404
        %5406 = vmatprep.mubr.bf16.mxu0 %v3623
        %5407 = vmatmul.mubr.bf16.gmra.mrb[0].mxu0 %v3622
        %v5408 = vpop.f32.mrb[0].mxu0
        %v5409 = vadd.f32 %v5056, %v5408
        %v5410 = vpop.f32.mrb[0].mxu0
        %v5411 = vadd.f32 %v5058, %v5410
        %v5412 = vpop.f32.mrb[0].mxu0
        %v5413 = vadd.f32 %v5060, %v5412
        %v5414 = vpop.f32.mrb[0].mxu0
        %v5415 = vadd.f32 %v5062, %v5414
        %5416 = vmatprep.mubr.bf16.mxu0 %v3631
        %5417 = vmatmul.mubr.bf16.gmra.mrb[0].mxu0 %v3630
        %v5418 = vpop.f32.mrb[0].mxu0
        %v5419 = vadd.f32 %v5066, %v5418
        %v5420 = vpop.f32.mrb[0].mxu0
        %v5421 = vadd.f32 %v5068, %v5420
        %v5422 = vpop.f32.mrb[0].mxu0
        %v5423 = vadd.f32 %v5070, %v5422
        %v5424 = vpop.f32.mrb[0].mxu0
        %v5425 = vadd.f32 %v5072, %v5424
        %5426 = vmatprep.mubr.bf16.mxu0 %v3639
        %5427 = vmatmul.mubr.bf16.gmra.mrb[0].mxu0 %v3638
        %v5428 = vpop.f32.mrb[0].mxu0
        %v5429 = vadd.f32 %v5076, %v5428
        %v5430 = vpop.f32.mrb[0].mxu0
        %v5431 = vadd.f32 %v5078, %v5430
        %v5432 = vpop.f32.mrb[0].mxu0
        %v5433 = vadd.f32 %v5080, %v5432
        %v5434 = vpop.f32.mrb[0].mxu0
        %v5435 = vadd.f32 %v5082, %v5434
        %5436 = vmatprep.mubr.bf16.mxu0 %v3647
        %5437 = vmatmul.mubr.bf16.gmra.mrb[0].mxu0 %v3646
        %v5438 = vpop.f32.mrb[0].mxu0
        %v5439 = vadd.f32 %v5086, %v5438
        %v5440 = vpop.f32.mrb[0].mxu0
        %v5441 = vadd.f32 %v5088, %v5440
        %v5442 = vpop.f32.mrb[0].mxu0
        %v5443 = vadd.f32 %v5090, %v5442
        %v5444 = vpop.f32.mrb[0].mxu0
        %v5445 = vadd.f32 %v5092, %v5444
        %5446 = vmatprep.mubr.bf16.mxu0 %v3655
        %5447 = vmatmul.mubr.bf16.gmra.mrb[0].mxu0 %v3654
        %v5448 = vpop.f32.mrb[0].mxu0
        %v5449 = vadd.f32 %v5096, %v5448
        %v5450 = vpop.f32.mrb[0].mxu0
        %v5451 = vadd.f32 %v5098, %v5450
        %v5452 = vpop.f32.mrb[0].mxu0
        %v5453 = vadd.f32 %v5100, %v5452
        %v5454 = vpop.f32.mrb[0].mxu0
        %v5455 = vadd.f32 %v5102, %v5454
        %5456 = vmatprep.mubr.bf16.mxu0 %v3663
        %5457 = vmatmul.mubr.bf16.gmra.mrb[0].mxu0 %v3662
        %v5458 = vpop.f32.mrb[0].mxu0
        %v5459 = vadd.f32 %v5106, %v5458
        %v5460 = vpop.f32.mrb[0].mxu0
        %v5461 = vadd.f32 %v5108, %v5460
        %v5462 = vpop.f32.mrb[0].mxu0
        %v5463 = vadd.f32 %v5110, %v5462
        %v5464 = vpop.f32.mrb[0].mxu0
        %v5465 = vadd.f32 %v5112, %v5464
        %5466 = vmatprep.mubr.bf16.mxu0 %v3671
        %5467 = vmatmul.mubr.bf16.gmra.mrb[0].mxu0 %v3670
        %v5468 = vpop.f32.mrb[0].mxu0
        %v5469 = vadd.f32 %v5116, %v5468
        %v5470 = vpop.f32.mrb[0].mxu0
        %v5471 = vadd.f32 %v5118, %v5470
        %v5472 = vpop.f32.mrb[0].mxu0
        %v5473 = vadd.f32 %v5120, %v5472
        %v5474 = vpop.f32.mrb[0].mxu0
        %v5475 = vadd.f32 %v5122, %v5474
        %5476 = vmatprep.mubr.bf16.mxu0 %v3679
        %5477 = vmatmul.mubr.bf16.gmra.mrb[0].mxu0 %v3678
        %v5478 = vpop.f32.mrb[0].mxu0
        %v5479 = vadd.f32 %v5126, %v5478
        %v5480 = vpop.f32.mrb[0].mxu0
        %v5481 = vadd.f32 %v5128, %v5480
        %v5482 = vpop.f32.mrb[0].mxu0
        %v5483 = vadd.f32 %v5130, %v5482
        %v5484 = vpop.f32.mrb[0].mxu0
        %v5485 = vadd.f32 %v5132, %v5484
        %5486 = vmatprep.mubr.bf16.mxu0 %v3687
        %5487 = vmatmul.mubr.bf16.gmra.mrb[0].mxu0 %v3686
        %v5488 = vpop.f32.mrb[0].mxu0
        %v5489 = vadd.f32 %v5136, %v5488
        %v5490 = vpop.f32.mrb[0].mxu0
        %v5491 = vadd.f32 %v5138, %v5490
        %v5492 = vpop.f32.mrb[0].mxu0
        %v5493 = vadd.f32 %v5140, %v5492
        %v5494 = vpop.f32.mrb[0].mxu0
        %v5495 = vadd.f32 %v5142, %v5494
        %5496 = vmatprep.mubr.bf16.mxu0 %v3695
        %5497 = vmatmul.mubr.bf16.gmra.mrb[0].mxu0 %v3694
        %v5498 = vpop.f32.mrb[0].mxu0
        %v5499 = vadd.f32 %v5146, %v5498
        %v5500 = vpop.f32.mrb[0].mxu0
        %v5501 = vadd.f32 %v5148, %v5500
        %v5502 = vpop.f32.mrb[0].mxu0
        %v5503 = vadd.f32 %v5150, %v5502
        %v5504 = vpop.f32.mrb[0].mxu0
        %v5505 = vadd.f32 %v5152, %v5504
        %5506 = vmatprep.mubr.bf16.mxu0 %v3703
        %5507 = vmatmul.mubr.bf16.gmra.mrb[0].mxu0 %v3702
        %v5508 = vpop.f32.mrb[0].mxu0
        %v5509 = vadd.f32 %v5156, %v5508
        %v5510 = vpop.f32.mrb[0].mxu0
        %v5511 = vadd.f32 %v5158, %v5510
        %v5512 = vpop.f32.mrb[0].mxu0
        %v5513 = vadd.f32 %v5160, %v5512
        %v5514 = vpop.f32.mrb[0].mxu0
        %v5515 = vadd.f32 %v5162, %v5514
        %5516 = vmatprep.mubr.bf16.mxu0 %v3711
        %5517 = vmatmul.mubr.bf16.gmra.mrb[0].mxu0 %v3710
        %v5518 = vpop.f32.mrb[0].mxu0
        %v5519 = vadd.f32 %v5166, %v5518
        %v5520 = vpop.f32.mrb[0].mxu0
        %v5521 = vadd.f32 %v5168, %v5520
        %v5522 = vpop.f32.mrb[0].mxu0
        %v5523 = vadd.f32 %v5170, %v5522
        %v5524 = vpop.f32.mrb[0].mxu0
        %v5525 = vadd.f32 %v5172, %v5524
        %5526 = vmatprep.mubr.bf16.mxu0 %v3719
        %5527 = vmatmul.mubr.bf16.gmra.mrb[0].mxu0 %v3718
        %v5528 = vpop.f32.mrb[0].mxu0
        %v5529 = vadd.f32 %v5176, %v5528
        %v5530 = vpop.f32.mrb[0].mxu0
        %v5531 = vadd.f32 %v5178, %v5530
        %v5532 = vpop.f32.mrb[0].mxu0
        %v5533 = vadd.f32 %v5180, %v5532
        %v5534 = vpop.f32.mrb[0].mxu0
        %v5535 = vadd.f32 %v5182, %v5534
        %5536 = vmatprep.mubr.bf16.mxu0 %v3727
        %5537 = vmatmul.mubr.bf16.gmra.mrb[0].mxu0 %v3726
        %v5538 = vpop.f32.mrb[0].mxu0
        %v5539 = vadd.f32 %v5186, %v5538
        %v5540 = vpop.f32.mrb[0].mxu0
        %v5541 = vadd.f32 %v5188, %v5540
        %v5542 = vpop.f32.mrb[0].mxu0
        %v5543 = vadd.f32 %v5190, %v5542
        %v5544 = vpop.f32.mrb[0].mxu0
        %v5545 = vadd.f32 %v5192, %v5544
        %5546 = vmatprep.mubr.bf16.mxu0 %v3735
        %5547 = vmatmul.mubr.bf16.gmra.mrb[0].mxu0 %v3734
        %v5548 = vpop.f32.mrb[0].mxu0
        %v5549 = vadd.f32 %v5196, %v5548
        %v5550 = vpop.f32.mrb[0].mxu0
        %v5551 = vadd.f32 %v5198, %v5550
        %v5552 = vpop.f32.mrb[0].mxu0
        %v5553 = vadd.f32 %v5200, %v5552
        %v5554 = vpop.f32.mrb[0].mxu0
        %v5555 = vadd.f32 %v5202, %v5554
        %5556 = vmatprep.mubr.bf16.mxu0 %v3743
        %5557 = vmatmul.mubr.bf16.gmra.mrb[0].mxu0 %v3742
        %v5558 = vpop.f32.mrb[0].mxu0
        %v5559 = vadd.f32 %v5206, %v5558
        %v5560 = vpop.f32.mrb[0].mxu0
        %v5561 = vadd.f32 %v5208, %v5560
        %v5562 = vpop.f32.mrb[0].mxu0
        %v5563 = vadd.f32 %v5210, %v5562
        %v5564 = vpop.f32.mrb[0].mxu0
        %v5565 = vadd.f32 %v5212, %v5564
        %5566 = vmatprep.mubr.bf16.mxu0 %v3751
        %5567 = vmatmul.mubr.bf16.gmra.mrb[0].mxu0 %v3750
        %v5568 = vpop.f32.mrb[0].mxu0
        %v5569 = vadd.f32 %v5216, %v5568
        %v5570 = vpop.f32.mrb[0].mxu0
        %v5571 = vadd.f32 %v5218, %v5570
        %v5572 = vpop.f32.mrb[0].mxu0
        %v5573 = vadd.f32 %v5220, %v5572
        %v5574 = vpop.f32.mrb[0].mxu0
        %v5575 = vadd.f32 %v5222, %v5574
        %5576 = vmatprep.mubr.bf16.mxu0 %v3759
        %5577 = vmatmul.mubr.bf16.gmra.mrb[0].mxu0 %v3758
        %v5578 = vpop.f32.mrb[0].mxu0
        %v5579 = vadd.f32 %v5226, %v5578
        %v5580 = vpop.f32.mrb[0].mxu0
        %v5581 = vadd.f32 %v5228, %v5580
        %v5582 = vpop.f32.mrb[0].mxu0
        %v5583 = vadd.f32 %v5230, %v5582
        %v5584 = vpop.f32.mrb[0].mxu0
        %v5585 = vadd.f32 %v5232, %v5584
        %5586 = vmatprep.mubr.bf16.mxu0 %v3767
        %5587 = vmatmul.mubr.bf16.gmra.mrb[0].mxu0 %v3766
        %v5588 = vpop.f32.mrb[0].mxu0
        %v5589 = vadd.f32 %v5236, %v5588
        %v5590 = vpop.f32.mrb[0].mxu0
        %v5591 = vadd.f32 %v5238, %v5590
        %v5592 = vpop.f32.mrb[0].mxu0
        %v5593 = vadd.f32 %v5240, %v5592
        %v5594 = vpop.f32.mrb[0].mxu0
        %v5595 = vadd.f32 %v5242, %v5594
        %5596 = vdwg.mxu0
        %5597 = vmatprep.subr.bf16.mxu0 %v4379
        %5598 = vmatpush1.bf16.msra.mxu0 %v4378
        %5599 = vmatprep.subr.bf16.mxu0 %v4381
        %5600 = vmatpush1.bf16.msra.mxu0 %v4380
        %5601 = vmatprep.subr.bf16.mxu0 %v4383
        %5602 = vmatpush1.bf16.msra.mxu0 %v4382
        %5603 = vmatprep.subr.bf16.mxu0 %v4385
        %5604 = vmatpush1.bf16.msra.mxu0 %v4384
        %5605 = vmatprep.subr.bf16.mxu0 %v4387
        %5606 = vmatpush1.bf16.msra.mxu0 %v4386
        %5607 = vmatprep.subr.bf16.mxu0 %v4389
        %5608 = vmatpush1.bf16.msra.mxu0 %v4388
        %5609 = vmatprep.subr.bf16.mxu0 %v4391
        %5610 = vmatpush1.bf16.msra.mxu0 %v4390
        %5611 = vmatprep.subr.bf16.mxu0 %v4393
        %5612 = vmatpush1.bf16.msra.mxu0 %v4392
        %5613 = vmatprep.subr.bf16.mxu0 %v4395
        %5614 = vmatpush1.bf16.msra.mxu0 %v4394
        %5615 = vmatprep.subr.bf16.mxu0 %v4397
        %5616 = vmatpush1.bf16.msra.mxu0 %v4396
        %5617 = vmatprep.subr.bf16.mxu0 %v4399
        %5618 = vmatpush1.bf16.msra.mxu0 %v4398
        %5619 = vmatprep.subr.bf16.mxu0 %v4401
        %5620 = vmatpush1.bf16.msra.mxu0 %v4400
        %5621 = vmatprep.subr.bf16.mxu0 %v4403
        %5622 = vmatpush1.bf16.msra.mxu0 %v4402
        %5623 = vmatprep.subr.bf16.mxu0 %v4405
        %5624 = vmatpush1.bf16.msra.mxu0 %v4404
        %5625 = vmatprep.subr.bf16.mxu0 %v4407
        %5626 = vmatpush1.bf16.msra.mxu0 %v4406
        %5627 = vmatprep.subr.bf16.mxu0 %v4409
        %5628 = vmatpush1.bf16.msra.mxu0 %v4408
        %5629 = vmatprep.mubr.bf16.mxu0 %v3521
        %5630 = vmatmul.mubr.bf16.gmra.mrb[0].mxu0 %v3520
        %v5631 = vpop.f32.mrb[0].mxu0
        %v5632 = vadd.f32 %v5279, %v5631
        %v5633 = vpop.f32.mrb[0].mxu0
        %v5634 = vadd.f32 %v5281, %v5633
        %v5635 = vpop.f32.mrb[0].mxu0
        %v5636 = vadd.f32 %v5283, %v5635
        %v5637 = vpop.f32.mrb[0].mxu0
        %v5638 = vadd.f32 %v5285, %v5637
        %5639 = vmatprep.mubr.bf16.mxu0 %v3529
        %5640 = vmatmul.mubr.bf16.gmra.mrb[0].mxu0 %v3528
        %v5641 = vpop.f32.mrb[0].mxu0
        %v5642 = vadd.f32 %v5289, %v5641
        %v5643 = vpop.f32.mrb[0].mxu0
        %v5644 = vadd.f32 %v5291, %v5643
        %v5645 = vpop.f32.mrb[0].mxu0
        %v5646 = vadd.f32 %v5293, %v5645
        %v5647 = vpop.f32.mrb[0].mxu0
        %v5648 = vadd.f32 %v5295, %v5647
        %5649 = vmatprep.mubr.bf16.mxu0 %v3537
        %5650 = vmatmul.mubr.bf16.gmra.mrb[0].mxu0 %v3536
        %v5651 = vpop.f32.mrb[0].mxu0
        %v5652 = vadd.f32 %v5299, %v5651
        %v5653 = vpop.f32.mrb[0].mxu0
        %v5654 = vadd.f32 %v5301, %v5653
        %v5655 = vpop.f32.mrb[0].mxu0
        %v5656 = vadd.f32 %v5303, %v5655
        %v5657 = vpop.f32.mrb[0].mxu0
        %v5658 = vadd.f32 %v5305, %v5657
        %5659 = vmatprep.mubr.bf16.mxu0 %v3545
        %5660 = vmatmul.mubr.bf16.gmra.mrb[0].mxu0 %v3544
        %v5661 = vpop.f32.mrb[0].mxu0
        %v5662 = vadd.f32 %v5309, %v5661
        %v5663 = vpop.f32.mrb[0].mxu0
        %v5664 = vadd.f32 %v5311, %v5663
        %v5665 = vpop.f32.mrb[0].mxu0
        %v5666 = vadd.f32 %v5313, %v5665
        %v5667 = vpop.f32.mrb[0].mxu0
        %v5668 = vadd.f32 %v5315, %v5667
        %5669 = vmatprep.mubr.bf16.mxu0 %v3553
        %5670 = vmatmul.mubr.bf16.gmra.mrb[0].mxu0 %v3552
        %v5671 = vpop.f32.mrb[0].mxu0
        %v5672 = vadd.f32 %v5319, %v5671
        %v5673 = vpop.f32.mrb[0].mxu0
        %v5674 = vadd.f32 %v5321, %v5673
        %v5675 = vpop.f32.mrb[0].mxu0
        %v5676 = vadd.f32 %v5323, %v5675
        %v5677 = vpop.f32.mrb[0].mxu0
        %v5678 = vadd.f32 %v5325, %v5677
        %5679 = vmatprep.mubr.bf16.mxu0 %v3561
        %5680 = vmatmul.mubr.bf16.gmra.mrb[0].mxu0 %v3560
        %v5681 = vpop.f32.mrb[0].mxu0
        %v5682 = vadd.f32 %v5329, %v5681
        %v5683 = vpop.f32.mrb[0].mxu0
        %v5684 = vadd.f32 %v5331, %v5683
        %v5685 = vpop.f32.mrb[0].mxu0
        %v5686 = vadd.f32 %v5333, %v5685
        %v5687 = vpop.f32.mrb[0].mxu0
        %v5688 = vadd.f32 %v5335, %v5687
        %5689 = vmatprep.mubr.bf16.mxu0 %v3569
        %5690 = vmatmul.mubr.bf16.gmra.mrb[0].mxu0 %v3568
        %v5691 = vpop.f32.mrb[0].mxu0
        %v5692 = vadd.f32 %v5339, %v5691
        %v5693 = vpop.f32.mrb[0].mxu0
        %v5694 = vadd.f32 %v5341, %v5693
        %v5695 = vpop.f32.mrb[0].mxu0
        %v5696 = vadd.f32 %v5343, %v5695
        %v5697 = vpop.f32.mrb[0].mxu0
        %v5698 = vadd.f32 %v5345, %v5697
        %5699 = vmatprep.mubr.bf16.mxu0 %v3577
        %5700 = vmatmul.mubr.bf16.gmra.mrb[0].mxu0 %v3576
        %v5701 = vpop.f32.mrb[0].mxu0
        %v5702 = vadd.f32 %v5349, %v5701
        %v5703 = vpop.f32.mrb[0].mxu0
        %v5704 = vadd.f32 %v5351, %v5703
        %v5705 = vpop.f32.mrb[0].mxu0
        %v5706 = vadd.f32 %v5353, %v5705
        %v5707 = vpop.f32.mrb[0].mxu0
        %v5708 = vadd.f32 %v5355, %v5707
        %5709 = vmatprep.mubr.bf16.mxu0 %v3585
        %5710 = vmatmul.mubr.bf16.gmra.mrb[0].mxu0 %v3584
        %v5711 = vpop.f32.mrb[0].mxu0
        %v5712 = vadd.f32 %v5359, %v5711
        %v5713 = vpop.f32.mrb[0].mxu0
        %v5714 = vadd.f32 %v5361, %v5713
        %v5715 = vpop.f32.mrb[0].mxu0
        %v5716 = vadd.f32 %v5363, %v5715
        %v5717 = vpop.f32.mrb[0].mxu0
        %v5718 = vadd.f32 %v5365, %v5717
        %5719 = vmatprep.mubr.bf16.mxu0 %v3593
        %5720 = vmatmul.mubr.bf16.gmra.mrb[0].mxu0 %v3592
        %v5721 = vpop.f32.mrb[0].mxu0
        %v5722 = vadd.f32 %v5369, %v5721
        %v5723 = vpop.f32.mrb[0].mxu0
        %v5724 = vadd.f32 %v5371, %v5723
        %v5725 = vpop.f32.mrb[0].mxu0
        %v5726 = vadd.f32 %v5373, %v5725
        %v5727 = vpop.f32.mrb[0].mxu0
        %v5728 = vadd.f32 %v5375, %v5727
        %5729 = vmatprep.mubr.bf16.mxu0 %v3601
        %5730 = vmatmul.mubr.bf16.gmra.mrb[0].mxu0 %v3600
        %v5731 = vpop.f32.mrb[0].mxu0
        %v5732 = vadd.f32 %v5379, %v5731
        %v5733 = vpop.f32.mrb[0].mxu0
        %v5734 = vadd.f32 %v5381, %v5733
        %v5735 = vpop.f32.mrb[0].mxu0
        %v5736 = vadd.f32 %v5383, %v5735
        %v5737 = vpop.f32.mrb[0].mxu0
        %v5738 = vadd.f32 %v5385, %v5737
        %5739 = vmatprep.mubr.bf16.mxu0 %v3609
        %5740 = vmatmul.mubr.bf16.gmra.mrb[0].mxu0 %v3608
        %v5741 = vpop.f32.mrb[0].mxu0
        %v5742 = vadd.f32 %v5389, %v5741
        %v5743 = vpop.f32.mrb[0].mxu0
        %v5744 = vadd.f32 %v5391, %v5743
        %v5745 = vpop.f32.mrb[0].mxu0
        %v5746 = vadd.f32 %v5393, %v5745
        %v5747 = vpop.f32.mrb[0].mxu0
        %v5748 = vadd.f32 %v5395, %v5747
        %5749 = vmatprep.mubr.bf16.mxu0 %v3617
        %5750 = vmatmul.mubr.bf16.gmra.mrb[0].mxu0 %v3616
        %v5751 = vpop.f32.mrb[0].mxu0
        %v5752 = vadd.f32 %v5399, %v5751
        %v5753 = vpop.f32.mrb[0].mxu0
        %v5754 = vadd.f32 %v5401, %v5753
        %v5755 = vpop.f32.mrb[0].mxu0
        %v5756 = vadd.f32 %v5403, %v5755
        %v5757 = vpop.f32.mrb[0].mxu0
        %v5758 = vadd.f32 %v5405, %v5757
        %5759 = vmatprep.mubr.bf16.mxu0 %v3625
        %5760 = vmatmul.mubr.bf16.gmra.mrb[0].mxu0 %v3624
        %v5761 = vpop.f32.mrb[0].mxu0
        %v5762 = vadd.f32 %v5409, %v5761
        %v5763 = vpop.f32.mrb[0].mxu0
        %v5764 = vadd.f32 %v5411, %v5763
        %v5765 = vpop.f32.mrb[0].mxu0
        %v5766 = vadd.f32 %v5413, %v5765
        %v5767 = vpop.f32.mrb[0].mxu0
        %v5768 = vadd.f32 %v5415, %v5767
        %5769 = vmatprep.mubr.bf16.mxu0 %v3633
        %5770 = vmatmul.mubr.bf16.gmra.mrb[0].mxu0 %v3632
        %v5771 = vpop.f32.mrb[0].mxu0
        %v5772 = vadd.f32 %v5419, %v5771
        %v5773 = vpop.f32.mrb[0].mxu0
        %v5774 = vadd.f32 %v5421, %v5773
        %v5775 = vpop.f32.mrb[0].mxu0
        %v5776 = vadd.f32 %v5423, %v5775
        %v5777 = vpop.f32.mrb[0].mxu0
        %v5778 = vadd.f32 %v5425, %v5777
        %5779 = vmatprep.mubr.bf16.mxu0 %v3641
        %5780 = vmatmul.mubr.bf16.gmra.mrb[0].mxu0 %v3640
        %v5781 = vpop.f32.mrb[0].mxu0
        %v5782 = vadd.f32 %v5429, %v5781
        %v5783 = vpop.f32.mrb[0].mxu0
        %v5784 = vadd.f32 %v5431, %v5783
        %v5785 = vpop.f32.mrb[0].mxu0
        %v5786 = vadd.f32 %v5433, %v5785
        %v5787 = vpop.f32.mrb[0].mxu0
        %v5788 = vadd.f32 %v5435, %v5787
        %5789 = vmatprep.mubr.bf16.mxu0 %v3649
        %5790 = vmatmul.mubr.bf16.gmra.mrb[0].mxu0 %v3648
        %v5791 = vpop.f32.mrb[0].mxu0
        %v5792 = vadd.f32 %v5439, %v5791
        %v5793 = vpop.f32.mrb[0].mxu0
        %v5794 = vadd.f32 %v5441, %v5793
        %v5795 = vpop.f32.mrb[0].mxu0
        %v5796 = vadd.f32 %v5443, %v5795
        %v5797 = vpop.f32.mrb[0].mxu0
        %v5798 = vadd.f32 %v5445, %v5797
        %5799 = vmatprep.mubr.bf16.mxu0 %v3657
        %5800 = vmatmul.mubr.bf16.gmra.mrb[0].mxu0 %v3656
        %v5801 = vpop.f32.mrb[0].mxu0
        %v5802 = vadd.f32 %v5449, %v5801
        %v5803 = vpop.f32.mrb[0].mxu0
        %v5804 = vadd.f32 %v5451, %v5803
        %v5805 = vpop.f32.mrb[0].mxu0
        %v5806 = vadd.f32 %v5453, %v5805
        %v5807 = vpop.f32.mrb[0].mxu0
        %v5808 = vadd.f32 %v5455, %v5807
        %5809 = vmatprep.mubr.bf16.mxu0 %v3665
        %5810 = vmatmul.mubr.bf16.gmra.mrb[0].mxu0 %v3664
        %v5811 = vpop.f32.mrb[0].mxu0
        %v5812 = vadd.f32 %v5459, %v5811
        %v5813 = vpop.f32.mrb[0].mxu0
        %v5814 = vadd.f32 %v5461, %v5813
        %v5815 = vpop.f32.mrb[0].mxu0
        %v5816 = vadd.f32 %v5463, %v5815
        %v5817 = vpop.f32.mrb[0].mxu0
        %v5818 = vadd.f32 %v5465, %v5817
        %5819 = vmatprep.mubr.bf16.mxu0 %v3673
        %5820 = vmatmul.mubr.bf16.gmra.mrb[0].mxu0 %v3672
        %v5821 = vpop.f32.mrb[0].mxu0
        %v5822 = vadd.f32 %v5469, %v5821
        %v5823 = vpop.f32.mrb[0].mxu0
        %v5824 = vadd.f32 %v5471, %v5823
        %v5825 = vpop.f32.mrb[0].mxu0
        %v5826 = vadd.f32 %v5473, %v5825
        %v5827 = vpop.f32.mrb[0].mxu0
        %v5828 = vadd.f32 %v5475, %v5827
        %5829 = vmatprep.mubr.bf16.mxu0 %v3681
        %5830 = vmatmul.mubr.bf16.gmra.mrb[0].mxu0 %v3680
        %v5831 = vpop.f32.mrb[0].mxu0
        %v5832 = vadd.f32 %v5479, %v5831
        %v5833 = vpop.f32.mrb[0].mxu0
        %v5834 = vadd.f32 %v5481, %v5833
        %v5835 = vpop.f32.mrb[0].mxu0
        %v5836 = vadd.f32 %v5483, %v5835
        %v5837 = vpop.f32.mrb[0].mxu0
        %v5838 = vadd.f32 %v5485, %v5837
        %5839 = vmatprep.mubr.bf16.mxu0 %v3689
        %5840 = vmatmul.mubr.bf16.gmra.mrb[0].mxu0 %v3688
        %v5841 = vpop.f32.mrb[0].mxu0
        %v5842 = vadd.f32 %v5489, %v5841
        %v5843 = vpop.f32.mrb[0].mxu0
        %v5844 = vadd.f32 %v5491, %v5843
        %v5845 = vpop.f32.mrb[0].mxu0
        %v5846 = vadd.f32 %v5493, %v5845
        %v5847 = vpop.f32.mrb[0].mxu0
        %v5848 = vadd.f32 %v5495, %v5847
        %5849 = vmatprep.mubr.bf16.mxu0 %v3697
        %5850 = vmatmul.mubr.bf16.gmra.mrb[0].mxu0 %v3696
        %v5851 = vpop.f32.mrb[0].mxu0
        %v5852 = vadd.f32 %v5499, %v5851
        %v5853 = vpop.f32.mrb[0].mxu0
        %v5854 = vadd.f32 %v5501, %v5853
        %v5855 = vpop.f32.mrb[0].mxu0
        %v5856 = vadd.f32 %v5503, %v5855
        %v5857 = vpop.f32.mrb[0].mxu0
        %v5858 = vadd.f32 %v5505, %v5857
        %5859 = vmatprep.mubr.bf16.mxu0 %v3705
        %5860 = vmatmul.mubr.bf16.gmra.mrb[0].mxu0 %v3704
        %v5861 = vpop.f32.mrb[0].mxu0
        %v5862 = vadd.f32 %v5509, %v5861
        %v5863 = vpop.f32.mrb[0].mxu0
        %v5864 = vadd.f32 %v5511, %v5863
        %v5865 = vpop.f32.mrb[0].mxu0
        %v5866 = vadd.f32 %v5513, %v5865
        %v5867 = vpop.f32.mrb[0].mxu0
        %v5868 = vadd.f32 %v5515, %v5867
        %5869 = vmatprep.mubr.bf16.mxu0 %v3713
        %5870 = vmatmul.mubr.bf16.gmra.mrb[0].mxu0 %v3712
        %v5871 = vpop.f32.mrb[0].mxu0
        %v5872 = vadd.f32 %v5519, %v5871
        %v5873 = vpop.f32.mrb[0].mxu0
        %v5874 = vadd.f32 %v5521, %v5873
        %v5875 = vpop.f32.mrb[0].mxu0
        %v5876 = vadd.f32 %v5523, %v5875
        %v5877 = vpop.f32.mrb[0].mxu0
        %v5878 = vadd.f32 %v5525, %v5877
        %5879 = vmatprep.mubr.bf16.mxu0 %v3721
        %5880 = vmatmul.mubr.bf16.gmra.mrb[0].mxu0 %v3720
        %v5881 = vpop.f32.mrb[0].mxu0
        %v5882 = vadd.f32 %v5529, %v5881
        %v5883 = vpop.f32.mrb[0].mxu0
        %v5884 = vadd.f32 %v5531, %v5883
        %v5885 = vpop.f32.mrb[0].mxu0
        %v5886 = vadd.f32 %v5533, %v5885
        %v5887 = vpop.f32.mrb[0].mxu0
        %v5888 = vadd.f32 %v5535, %v5887
        %5889 = vmatprep.mubr.bf16.mxu0 %v3729
        %5890 = vmatmul.mubr.bf16.gmra.mrb[0].mxu0 %v3728
        %v5891 = vpop.f32.mrb[0].mxu0
        %v5892 = vadd.f32 %v5539, %v5891
        %v5893 = vpop.f32.mrb[0].mxu0
        %v5894 = vadd.f32 %v5541, %v5893
        %v5895 = vpop.f32.mrb[0].mxu0
        %v5896 = vadd.f32 %v5543, %v5895
        %v5897 = vpop.f32.mrb[0].mxu0
        %v5898 = vadd.f32 %v5545, %v5897
        %5899 = vmatprep.mubr.bf16.mxu0 %v3737
        %5900 = vmatmul.mubr.bf16.gmra.mrb[0].mxu0 %v3736
        %v5901 = vpop.f32.mrb[0].mxu0
        %v5902 = vadd.f32 %v5549, %v5901
        %v5903 = vpop.f32.mrb[0].mxu0
        %v5904 = vadd.f32 %v5551, %v5903
        %v5905 = vpop.f32.mrb[0].mxu0
        %v5906 = vadd.f32 %v5553, %v5905
        %v5907 = vpop.f32.mrb[0].mxu0
        %v5908 = vadd.f32 %v5555, %v5907
        %5909 = vmatprep.mubr.bf16.mxu0 %v3745
        %5910 = vmatmul.mubr.bf16.gmra.mrb[0].mxu0 %v3744
        %v5911 = vpop.f32.mrb[0].mxu0
        %v5912 = vadd.f32 %v5559, %v5911
        %v5913 = vpop.f32.mrb[0].mxu0
        %v5914 = vadd.f32 %v5561, %v5913
        %v5915 = vpop.f32.mrb[0].mxu0
        %v5916 = vadd.f32 %v5563, %v5915
        %v5917 = vpop.f32.mrb[0].mxu0
        %v5918 = vadd.f32 %v5565, %v5917
        %5919 = vmatprep.mubr.bf16.mxu0 %v3753
        %5920 = vmatmul.mubr.bf16.gmra.mrb[0].mxu0 %v3752
        %v5921 = vpop.f32.mrb[0].mxu0
        %v5922 = vadd.f32 %v5569, %v5921
        %v5923 = vpop.f32.mrb[0].mxu0
        %v5924 = vadd.f32 %v5571, %v5923
        %v5925 = vpop.f32.mrb[0].mxu0
        %v5926 = vadd.f32 %v5573, %v5925
        %v5927 = vpop.f32.mrb[0].mxu0
        %v5928 = vadd.f32 %v5575, %v5927
        %5929 = vmatprep.mubr.bf16.mxu0 %v3761
        %5930 = vmatmul.mubr.bf16.gmra.mrb[0].mxu0 %v3760
        %v5931 = vpop.f32.mrb[0].mxu0
        %v5932 = vadd.f32 %v5579, %v5931
        %v5933 = vpop.f32.mrb[0].mxu0
        %v5934 = vadd.f32 %v5581, %v5933
        %v5935 = vpop.f32.mrb[0].mxu0
        %v5936 = vadd.f32 %v5583, %v5935
        %v5937 = vpop.f32.mrb[0].mxu0
        %v5938 = vadd.f32 %v5585, %v5937
        %5939 = vmatprep.mubr.bf16.mxu0 %v3769
        %5940 = vmatmul.mubr.bf16.gmra.mrb[0].mxu0 %v3768
        %v5941 = vpop.f32.mrb[0].mxu0
        %v5942 = vadd.f32 %v5589, %v5941
        %v5943 = vpop.f32.mrb[0].mxu0
        %v5944 = vadd.f32 %v5591, %v5943
        %v5945 = vpop.f32.mrb[0].mxu0
        %v5946 = vadd.f32 %v5593, %v5945
        %v5947 = vpop.f32.mrb[0].mxu0
        %v5948 = vadd.f32 %v5595, %v5947
        %5949 = vdwg.mxu0
        %v5950 = vadd.f32 %v3386, %v5632
        %v5951 = vadd.f32 %v3387, %v5634
        %v5952 = vadd.f32 %v3388, %v5636
        %v5953 = vadd.f32 %v3389, %v5638
        %v5954 = vadd.f32 %v3390, %v5642
        %v5955 = vadd.f32 %v3391, %v5644
        %v5956 = vadd.f32 %v3392, %v5646
        %v5957 = vadd.f32 %v3393, %v5648
        %v5958 = vadd.f32 %v3394, %v5652
        %v5959 = vadd.f32 %v3395, %v5654
        %v5960 = vadd.f32 %v3396, %v5656
        %v5961 = vadd.f32 %v3397, %v5658
        %v5962 = vadd.f32 %v3398, %v5662
        %v5963 = vadd.f32 %v3399, %v5664
        %v5964 = vadd.f32 %v3400, %v5666
        %v5965 = vadd.f32 %v3401, %v5668
        %v5966 = vadd.f32 %v3402, %v5672
        %v5967 = vadd.f32 %v3403, %v5674
        %v5968 = vadd.f32 %v3404, %v5676
        %v5969 = vadd.f32 %v3405, %v5678
        %v5970 = vadd.f32 %v3406, %v5682
        %v5971 = vadd.f32 %v3407, %v5684
        %v5972 = vadd.f32 %v3408, %v5686
        %v5973 = vadd.f32 %v3409, %v5688
        %v5974 = vadd.f32 %v3410, %v5692
        %v5975 = vadd.f32 %v3411, %v5694
        %v5976 = vadd.f32 %v3412, %v5696
        %v5977 = vadd.f32 %v3413, %v5698
        %v5978 = vadd.f32 %v3414, %v5702
        %v5979 = vadd.f32 %v3415, %v5704
        %v5980 = vadd.f32 %v3416, %v5706
        %v5981 = vadd.f32 %v3417, %v5708
        %v5982 = vadd.f32 %v3418, %v5712
        %v5983 = vadd.f32 %v3419, %v5714
        %v5984 = vadd.f32 %v3420, %v5716
        %v5985 = vadd.f32 %v3421, %v5718
        %v5986 = vadd.f32 %v3422, %v5722
        %v5987 = vadd.f32 %v3423, %v5724
        %v5988 = vadd.f32 %v3424, %v5726
        %v5989 = vadd.f32 %v3425, %v5728
        %v5990 = vadd.f32 %v3426, %v5732
        %v5991 = vadd.f32 %v3427, %v5734
        %v5992 = vadd.f32 %v3428, %v5736
        %v5993 = vadd.f32 %v3429, %v5738
        %v5994 = vadd.f32 %v3430, %v5742
        %v5995 = vadd.f32 %v3431, %v5744
        %v5996 = vadd.f32 %v3432, %v5746
        %v5997 = vadd.f32 %v3433, %v5748
        %v5998 = vadd.f32 %v3434, %v5752
        %v5999 = vadd.f32 %v3435, %v5754
        %v6000 = vadd.f32 %v3436, %v5756
        %v6001 = vadd.f32 %v3437, %v5758
        %v6002 = vadd.f32 %v3438, %v5762
        %v6003 = vadd.f32 %v3439, %v5764
        %v6004 = vadd.f32 %v3440, %v5766
        %v6005 = vadd.f32 %v3441, %v5768
        %v6006 = vadd.f32 %v3442, %v5772
        %v6007 = vadd.f32 %v3443, %v5774
        %v6008 = vadd.f32 %v3444, %v5776
        %v6009 = vadd.f32 %v3445, %v5778
        %v6010 = vadd.f32 %v3446, %v5782
        %v6011 = vadd.f32 %v3447, %v5784
        %v6012 = vadd.f32 %v3448, %v5786
        %v6013 = vadd.f32 %v3449, %v5788
        %v6014 = vadd.f32 %v3450, %v5792
        %v6015 = vadd.f32 %v3451, %v5794
        %v6016 = vadd.f32 %v3452, %v5796
        %v6017 = vadd.f32 %v3453, %v5798
        %v6018 = vadd.f32 %v3454, %v5802
        %v6019 = vadd.f32 %v3455, %v5804
        %v6020 = vadd.f32 %v3456, %v5806
        %v6021 = vadd.f32 %v3457, %v5808
        %v6022 = vadd.f32 %v3458, %v5812
        %v6023 = vadd.f32 %v3459, %v5814
        %v6024 = vadd.f32 %v3460, %v5816
        %v6025 = vadd.f32 %v3461, %v5818
        %v6026 = vadd.f32 %v3462, %v5822
        %v6027 = vadd.f32 %v3463, %v5824
        %v6028 = vadd.f32 %v3464, %v5826
        %v6029 = vadd.f32 %v3465, %v5828
        %v6030 = vadd.f32 %v3466, %v5832
        %v6031 = vadd.f32 %v3467, %v5834
        %v6032 = vadd.f32 %v3468, %v5836
        %v6033 = vadd.f32 %v3469, %v5838
        %v6034 = vadd.f32 %v3470, %v5842
        %v6035 = vadd.f32 %v3471, %v5844
        %v6036 = vadd.f32 %v3472, %v5846
        %v6037 = vadd.f32 %v3473, %v5848
        %v6038 = vadd.f32 %v3474, %v5852
        %v6039 = vadd.f32 %v3475, %v5854
        %v6040 = vadd.f32 %v3476, %v5856
        %v6041 = vadd.f32 %v3477, %v5858
        %v6042 = vadd.f32 %v3478, %v5862
        %v6043 = vadd.f32 %v3479, %v5864
        %v6044 = vadd.f32 %v3480, %v5866
        %v6045 = vadd.f32 %v3481, %v5868
        %v6046 = vadd.f32 %v3482, %v5872
        %v6047 = vadd.f32 %v3483, %v5874
        %v6048 = vadd.f32 %v3484, %v5876
        %v6049 = vadd.f32 %v3485, %v5878
        %v6050 = vadd.f32 %v3486, %v5882
        %v6051 = vadd.f32 %v3487, %v5884
        %v6052 = vadd.f32 %v3488, %v5886
        %v6053 = vadd.f32 %v3489, %v5888
        %v6054 = vadd.f32 %v3490, %v5892
        %v6055 = vadd.f32 %v3491, %v5894
        %v6056 = vadd.f32 %v3492, %v5896
        %v6057 = vadd.f32 %v3493, %v5898
        %v6058 = vadd.f32 %v3494, %v5902
        %v6059 = vadd.f32 %v3495, %v5904
        %v6060 = vadd.f32 %v3496, %v5906
        %v6061 = vadd.f32 %v3497, %v5908
        %v6062 = vadd.f32 %v3498, %v5912
        %v6063 = vadd.f32 %v3499, %v5914
        %v6064 = vadd.f32 %v3500, %v5916
        %v6065 = vadd.f32 %v3501, %v5918
        %v6066 = vadd.f32 %v3502, %v5922
        %v6067 = vadd.f32 %v3503, %v5924
        %v6068 = vadd.f32 %v3504, %v5926
        %v6069 = vadd.f32 %v3505, %v5928
        %v6070 = vadd.f32 %v3506, %v5932
        %v6071 = vadd.f32 %v3507, %v5934
        %v6072 = vadd.f32 %v3508, %v5936
        %v6073 = vadd.f32 %v3509, %v5938
        %v6074 = vadd.f32 %v3510, %v5942
        %v6075 = vadd.f32 %v3511, %v5944
        %v6076 = vadd.f32 %v3512, %v5946
        %v6077 = vadd.f32 %v3513, %v5948
        %6078 = vst [vmem:[#allocation2] sm:$0xff] %v5950
        %6079 = vst [vmem:[#allocation2 + $0x8] sm:$0xff] %v5951
        %6080 = vst [vmem:[#allocation2 + $0x10] sm:$0xff] %v5952
        %6081 = vst [vmem:[#allocation2 + $0x18] sm:$0xff] %v5953
        %6082 = vst [vmem:[#allocation2 + $0x20] sm:$0xff] %v5954
        %6083 = vst [vmem:[#allocation2 + $0x28] sm:$0xff] %v5955
        %6084 = vst [vmem:[#allocation2 + $0x30] sm:$0xff] %v5956
        %6085 = vst [vmem:[#allocation2 + $0x38] sm:$0xff] %v5957
        %6086 = vst [vmem:[#allocation2 + $0x40] sm:$0xff] %v5958
        %6087 = vst [vmem:[#allocation2 + $0x48] sm:$0xff] %v5959
        %6088 = vst [vmem:[#allocation2 + $0x50] sm:$0xff] %v5960
        %6089 = vst [vmem:[#allocation2 + $0x58] sm:$0xff] %v5961
        %6090 = vst [vmem:[#allocation2 + $0x60] sm:$0xff] %v5962
        %6091 = vst [vmem:[#allocation2 + $0x68] sm:$0xff] %v5963
        %6092 = vst [vmem:[#allocation2 + $0x70] sm:$0xff] %v5964
        %6093 = vst [vmem:[#allocation2 + $0x78] sm:$0xff] %v5965
        %6094 = vst [vmem:[#allocation2 + $0x80] sm:$0xff] %v5966
        %6095 = vst [vmem:[#allocation2 + $0x88] sm:$0xff] %v5967
        %6096 = vst [vmem:[#allocation2 + $0x90] sm:$0xff] %v5968
        %6097 = vst [vmem:[#allocation2 + $0x98] sm:$0xff] %v5969
        %6098 = vst [vmem:[#allocation2 + $0xa0] sm:$0xff] %v5970
        %6099 = vst [vmem:[#allocation2 + $0xa8] sm:$0xff] %v5971
        %6100 = vst [vmem:[#allocation2 + $0xb0] sm:$0xff] %v5972
        %6101 = vst [vmem:[#allocation2 + $0xb8] sm:$0xff] %v5973
        %6102 = vst [vmem:[#allocation2 + $0xc0] sm:$0xff] %v5974
        %6103 = vst [vmem:[#allocation2 + $0xc8] sm:$0xff] %v5975
        %6104 = vst [vmem:[#allocation2 + $0xd0] sm:$0xff] %v5976
        %6105 = vst [vmem:[#allocation2 + $0xd8] sm:$0xff] %v5977
        %6106 = vst [vmem:[#allocation2 + $0xe0] sm:$0xff] %v5978
        %6107 = vst [vmem:[#allocation2 + $0xe8] sm:$0xff] %v5979
        %6108 = vst [vmem:[#allocation2 + $0xf0] sm:$0xff] %v5980
        %6109 = vst [vmem:[#allocation2 + $0xf8] sm:$0xff] %v5981
        %6110 = vst [vmem:[#allocation2 + $0x100] sm:$0xff] %v5982
        %6111 = vst [vmem:[#allocation2 + $0x108] sm:$0xff] %v5983
        %6112 = vst [vmem:[#allocation2 + $0x110] sm:$0xff] %v5984
        %6113 = vst [vmem:[#allocation2 + $0x118] sm:$0xff] %v5985
        %6114 = vst [vmem:[#allocation2 + $0x120] sm:$0xff] %v5986
        %6115 = vst [vmem:[#allocation2 + $0x128] sm:$0xff] %v5987
        %6116 = vst [vmem:[#allocation2 + $0x130] sm:$0xff] %v5988
        %6117 = vst [vmem:[#allocation2 + $0x138] sm:$0xff] %v5989
        %6118 = vst [vmem:[#allocation2 + $0x140] sm:$0xff] %v5990
        %6119 = vst [vmem:[#allocation2 + $0x148] sm:$0xff] %v5991
        %6120 = vst [vmem:[#allocation2 + $0x150] sm:$0xff] %v5992
        %6121 = vst [vmem:[#allocation2 + $0x158] sm:$0xff] %v5993
        %6122 = vst [vmem:[#allocation2 + $0x160] sm:$0xff] %v5994
        %6123 = vst [vmem:[#allocation2 + $0x168] sm:$0xff] %v5995
        %6124 = vst [vmem:[#allocation2 + $0x170] sm:$0xff] %v5996
        %6125 = vst [vmem:[#allocation2 + $0x178] sm:$0xff] %v5997
        %6126 = vst [vmem:[#allocation2 + $0x180] sm:$0xff] %v5998
        %6127 = vst [vmem:[#allocation2 + $0x188] sm:$0xff] %v5999
        %6128 = vst [vmem:[#allocation2 + $0x190] sm:$0xff] %v6000
        %6129 = vst [vmem:[#allocation2 + $0x198] sm:$0xff] %v6001
        %6130 = vst [vmem:[#allocation2 + $0x1a0] sm:$0xff] %v6002
        %6131 = vst [vmem:[#allocation2 + $0x1a8] sm:$0xff] %v6003
        %6132 = vst [vmem:[#allocation2 + $0x1b0] sm:$0xff] %v6004
        %6133 = vst [vmem:[#allocation2 + $0x1b8] sm:$0xff] %v6005
        %6134 = vst [vmem:[#allocation2 + $0x1c0] sm:$0xff] %v6006
        %6135 = vst [vmem:[#allocation2 + $0x1c8] sm:$0xff] %v6007
        %6136 = vst [vmem:[#allocation2 + $0x1d0] sm:$0xff] %v6008
        %6137 = vst [vmem:[#allocation2 + $0x1d8] sm:$0xff] %v6009
        %6138 = vst [vmem:[#allocation2 + $0x1e0] sm:$0xff] %v6010
        %6139 = vst [vmem:[#allocation2 + $0x1e8] sm:$0xff] %v6011
        %6140 = vst [vmem:[#allocation2 + $0x1f0] sm:$0xff] %v6012
        %6141 = vst [vmem:[#allocation2 + $0x1f8] sm:$0xff] %v6013
        %6142 = vst [vmem:[#allocation2 + $0x200] sm:$0xff] %v6014
        %6143 = vst [vmem:[#allocation2 + $0x208] sm:$0xff] %v6015
        %6144 = vst [vmem:[#allocation2 + $0x210] sm:$0xff] %v6016
        %6145 = vst [vmem:[#allocation2 + $0x218] sm:$0xff] %v6017
        %6146 = vst [vmem:[#allocation2 + $0x220] sm:$0xff] %v6018
        %6147 = vst [vmem:[#allocation2 + $0x228] sm:$0xff] %v6019
        %6148 = vst [vmem:[#allocation2 + $0x230] sm:$0xff] %v6020
        %6149 = vst [vmem:[#allocation2 + $0x238] sm:$0xff] %v6021
        %6150 = vst [vmem:[#allocation2 + $0x240] sm:$0xff] %v6022
        %6151 = vst [vmem:[#allocation2 + $0x248] sm:$0xff] %v6023
        %6152 = vst [vmem:[#allocation2 + $0x250] sm:$0xff] %v6024
        %6153 = vst [vmem:[#allocation2 + $0x258] sm:$0xff] %v6025
        %6154 = vst [vmem:[#allocation2 + $0x260] sm:$0xff] %v6026
        %6155 = vst [vmem:[#allocation2 + $0x268] sm:$0xff] %v6027
        %6156 = vst [vmem:[#allocation2 + $0x270] sm:$0xff] %v6028
        %6157 = vst [vmem:[#allocation2 + $0x278] sm:$0xff] %v6029
        %6158 = vst [vmem:[#allocation2 + $0x280] sm:$0xff] %v6030
        %6159 = vst [vmem:[#allocation2 + $0x288] sm:$0xff] %v6031
        %6160 = vst [vmem:[#allocation2 + $0x290] sm:$0xff] %v6032
        %6161 = vst [vmem:[#allocation2 + $0x298] sm:$0xff] %v6033
        %6162 = vst [vmem:[#allocation2 + $0x2a0] sm:$0xff] %v6034
        %6163 = vst [vmem:[#allocation2 + $0x2a8] sm:$0xff] %v6035
        %6164 = vst [vmem:[#allocation2 + $0x2b0] sm:$0xff] %v6036
        %6165 = vst [vmem:[#allocation2 + $0x2b8] sm:$0xff] %v6037
        %6166 = vst [vmem:[#allocation2 + $0x2c0] sm:$0xff] %v6038
        %6167 = vst [vmem:[#allocation2 + $0x2c8] sm:$0xff] %v6039
        %6168 = vst [vmem:[#allocation2 + $0x2d0] sm:$0xff] %v6040
        %6169 = vst [vmem:[#allocation2 + $0x2d8] sm:$0xff] %v6041
        %6170 = vst [vmem:[#allocation2 + $0x2e0] sm:$0xff] %v6042
        %6171 = vst [vmem:[#allocation2 + $0x2e8] sm:$0xff] %v6043
        %6172 = vst [vmem:[#allocation2 + $0x2f0] sm:$0xff] %v6044
        %6173 = vst [vmem:[#allocation2 + $0x2f8] sm:$0xff] %v6045
        %6174 = vst [vmem:[#allocation2 + $0x300] sm:$0xff] %v6046
        %6175 = vst [vmem:[#allocation2 + $0x308] sm:$0xff] %v6047
        %6176 = vst [vmem:[#allocation2 + $0x310] sm:$0xff] %v6048
        %6177 = vst [vmem:[#allocation2 + $0x318] sm:$0xff] %v6049
        %6178 = vst [vmem:[#allocation2 + $0x320] sm:$0xff] %v6050
        %6179 = vst [vmem:[#allocation2 + $0x328] sm:$0xff] %v6051
        %6180 = vst [vmem:[#allocation2 + $0x330] sm:$0xff] %v6052
        %6181 = vst [vmem:[#allocation2 + $0x338] sm:$0xff] %v6053
        %6182 = vst [vmem:[#allocation2 + $0x340] sm:$0xff] %v6054
        %6183 = vst [vmem:[#allocation2 + $0x348] sm:$0xff] %v6055
        %6184 = vst [vmem:[#allocation2 + $0x350] sm:$0xff] %v6056
        %6185 = vst [vmem:[#allocation2 + $0x358] sm:$0xff] %v6057
        %6186 = vst [vmem:[#allocation2 + $0x360] sm:$0xff] %v6058
        %6187 = vst [vmem:[#allocation2 + $0x368] sm:$0xff] %v6059
        %6188 = vst [vmem:[#allocation2 + $0x370] sm:$0xff] %v6060
        %6189 = vst [vmem:[#allocation2 + $0x378] sm:$0xff] %v6061
        %6190 = vst [vmem:[#allocation2 + $0x380] sm:$0xff] %v6062
        %6191 = vst [vmem:[#allocation2 + $0x388] sm:$0xff] %v6063
        %6192 = vst [vmem:[#allocation2 + $0x390] sm:$0xff] %v6064
        %6193 = vst [vmem:[#allocation2 + $0x398] sm:$0xff] %v6065
        %6194 = vst [vmem:[#allocation2 + $0x3a0] sm:$0xff] %v6066
        %6195 = vst [vmem:[#allocation2 + $0x3a8] sm:$0xff] %v6067
        %6196 = vst [vmem:[#allocation2 + $0x3b0] sm:$0xff] %v6068
        %6197 = vst [vmem:[#allocation2 + $0x3b8] sm:$0xff] %v6069
        %6198 = vst [vmem:[#allocation2 + $0x3c0] sm:$0xff] %v6070
        %6199 = vst [vmem:[#allocation2 + $0x3c8] sm:$0xff] %v6071
        %6200 = vst [vmem:[#allocation2 + $0x3d0] sm:$0xff] %v6072
        %6201 = vst [vmem:[#allocation2 + $0x3d8] sm:$0xff] %v6073
        %6202 = vst [vmem:[#allocation2 + $0x3e0] sm:$0xff] %v6074
        %6203 = vst [vmem:[#allocation2 + $0x3e8] sm:$0xff] %v6075
        %6204 = vst [vmem:[#allocation2 + $0x3f0] sm:$0xff] %v6076
        %6205 = vst [vmem:[#allocation2 + $0x3f8] sm:$0xff] %v6077
        // Predicated region
        $region61: #{tpu_custom_call.1} parent=39 // pred_check
          %p6206 = pneg %p328
        $region62: #{tpu_custom_call.1} parent=39 // pred_check_branch
          %6208 = sbr.rel (%p6206) target = $region64
        $region63: #{tpu_custom_call.1} parent=39 // pred_region
          %v6209 = vld [vmem:[#allocation2] sm:$0xff]
          %v6210 = vld [vmem:[#allocation2 + $0x8] sm:$0xff]
          %v6211 = vld [vmem:[#allocation2 + $0x10] sm:$0xff]
          %v6212 = vld [vmem:[#allocation2 + $0x18] sm:$0xff]
          %v6213 = vld [vmem:[#allocation2 + $0x20] sm:$0xff]
          %v6214 = vld [vmem:[#allocation2 + $0x28] sm:$0xff]
          %v6215 = vld [vmem:[#allocation2 + $0x30] sm:$0xff]
          %v6216 = vld [vmem:[#allocation2 + $0x38] sm:$0xff]
          %v6217 = vld [vmem:[#allocation2 + $0x40] sm:$0xff]
          %v6218 = vld [vmem:[#allocation2 + $0x48] sm:$0xff]
          %v6219 = vld [vmem:[#allocation2 + $0x50] sm:$0xff]
          %v6220 = vld [vmem:[#allocation2 + $0x58] sm:$0xff]
          %v6221 = vld [vmem:[#allocation2 + $0x60] sm:$0xff]
          %v6222 = vld [vmem:[#allocation2 + $0x68] sm:$0xff]
          %v6223 = vld [vmem:[#allocation2 + $0x70] sm:$0xff]
          %v6224 = vld [vmem:[#allocation2 + $0x78] sm:$0xff]
          %v6225 = vld [vmem:[#allocation2 + $0x80] sm:$0xff]
          %v6226 = vld [vmem:[#allocation2 + $0x88] sm:$0xff]
          %v6227 = vld [vmem:[#allocation2 + $0x90] sm:$0xff]
          %v6228 = vld [vmem:[#allocation2 + $0x98] sm:$0xff]
          %v6229 = vld [vmem:[#allocation2 + $0xa0] sm:$0xff]
          %v6230 = vld [vmem:[#allocation2 + $0xa8] sm:$0xff]
          %v6231 = vld [vmem:[#allocation2 + $0xb0] sm:$0xff]
          %v6232 = vld [vmem:[#allocation2 + $0xb8] sm:$0xff]
          %v6233 = vld [vmem:[#allocation2 + $0xc0] sm:$0xff]
          %v6234 = vld [vmem:[#allocation2 + $0xc8] sm:$0xff]
          %v6235 = vld [vmem:[#allocation2 + $0xd0] sm:$0xff]
          %v6236 = vld [vmem:[#allocation2 + $0xd8] sm:$0xff]
          %v6237 = vld [vmem:[#allocation2 + $0xe0] sm:$0xff]
          %v6238 = vld [vmem:[#allocation2 + $0xe8] sm:$0xff]
          %v6239 = vld [vmem:[#allocation2 + $0xf0] sm:$0xff]
          %v6240 = vld [vmem:[#allocation2 + $0xf8] sm:$0xff]
          %v6241 = vld [vmem:[#allocation2 + $0x100] sm:$0xff]
          %v6242 = vld [vmem:[#allocation2 + $0x108] sm:$0xff]
          %v6243 = vld [vmem:[#allocation2 + $0x110] sm:$0xff]
          %v6244 = vld [vmem:[#allocation2 + $0x118] sm:$0xff]
          %v6245 = vld [vmem:[#allocation2 + $0x120] sm:$0xff]
          %v6246 = vld [vmem:[#allocation2 + $0x128] sm:$0xff]
          %v6247 = vld [vmem:[#allocation2 + $0x130] sm:$0xff]
          %v6248 = vld [vmem:[#allocation2 + $0x138] sm:$0xff]
          %v6249 = vld [vmem:[#allocation2 + $0x140] sm:$0xff]
          %v6250 = vld [vmem:[#allocation2 + $0x148] sm:$0xff]
          %v6251 = vld [vmem:[#allocation2 + $0x150] sm:$0xff]
          %v6252 = vld [vmem:[#allocation2 + $0x158] sm:$0xff]
          %v6253 = vld [vmem:[#allocation2 + $0x160] sm:$0xff]
          %v6254 = vld [vmem:[#allocation2 + $0x168] sm:$0xff]
          %v6255 = vld [vmem:[#allocation2 + $0x170] sm:$0xff]
          %v6256 = vld [vmem:[#allocation2 + $0x178] sm:$0xff]
          %v6257 = vld [vmem:[#allocation2 + $0x180] sm:$0xff]
          %v6258 = vld [vmem:[#allocation2 + $0x188] sm:$0xff]
          %v6259 = vld [vmem:[#allocation2 + $0x190] sm:$0xff]
          %v6260 = vld [vmem:[#allocation2 + $0x198] sm:$0xff]
          %v6261 = vld [vmem:[#allocation2 + $0x1a0] sm:$0xff]
          %v6262 = vld [vmem:[#allocation2 + $0x1a8] sm:$0xff]
          %v6263 = vld [vmem:[#allocation2 + $0x1b0] sm:$0xff]
          %v6264 = vld [vmem:[#allocation2 + $0x1b8] sm:$0xff]
          %v6265 = vld [vmem:[#allocation2 + $0x1c0] sm:$0xff]
          %v6266 = vld [vmem:[#allocation2 + $0x1c8] sm:$0xff]
          %v6267 = vld [vmem:[#allocation2 + $0x1d0] sm:$0xff]
          %v6268 = vld [vmem:[#allocation2 + $0x1d8] sm:$0xff]
          %v6269 = vld [vmem:[#allocation2 + $0x1e0] sm:$0xff]
          %v6270 = vld [vmem:[#allocation2 + $0x1e8] sm:$0xff]
          %v6271 = vld [vmem:[#allocation2 + $0x1f0] sm:$0xff]
          %v6272 = vld [vmem:[#allocation2 + $0x1f8] sm:$0xff]
          %v6273 = vld [vmem:[#allocation2 + $0x200] sm:$0xff]
          %v6274 = vld [vmem:[#allocation2 + $0x208] sm:$0xff]
          %v6275 = vld [vmem:[#allocation2 + $0x210] sm:$0xff]
          %v6276 = vld [vmem:[#allocation2 + $0x218] sm:$0xff]
          %v6277 = vld [vmem:[#allocation2 + $0x220] sm:$0xff]
          %v6278 = vld [vmem:[#allocation2 + $0x228] sm:$0xff]
          %v6279 = vld [vmem:[#allocation2 + $0x230] sm:$0xff]
          %v6280 = vld [vmem:[#allocation2 + $0x238] sm:$0xff]
          %v6281 = vld [vmem:[#allocation2 + $0x240] sm:$0xff]
          %v6282 = vld [vmem:[#allocation2 + $0x248] sm:$0xff]
          %v6283 = vld [vmem:[#allocation2 + $0x250] sm:$0xff]
          %v6284 = vld [vmem:[#allocation2 + $0x258] sm:$0xff]
          %v6285 = vld [vmem:[#allocation2 + $0x260] sm:$0xff]
          %v6286 = vld [vmem:[#allocation2 + $0x268] sm:$0xff]
          %v6287 = vld [vmem:[#allocation2 + $0x270] sm:$0xff]
          %v6288 = vld [vmem:[#allocation2 + $0x278] sm:$0xff]
          %v6289 = vld [vmem:[#allocation2 + $0x280] sm:$0xff]
          %v6290 = vld [vmem:[#allocation2 + $0x288] sm:$0xff]
          %v6291 = vld [vmem:[#allocation2 + $0x290] sm:$0xff]
          %v6292 = vld [vmem:[#allocation2 + $0x298] sm:$0xff]
          %v6293 = vld [vmem:[#allocation2 + $0x2a0] sm:$0xff]
          %v6294 = vld [vmem:[#allocation2 + $0x2a8] sm:$0xff]
          %v6295 = vld [vmem:[#allocation2 + $0x2b0] sm:$0xff]
          %v6296 = vld [vmem:[#allocation2 + $0x2b8] sm:$0xff]
          %v6297 = vld [vmem:[#allocation2 + $0x2c0] sm:$0xff]
          %v6298 = vld [vmem:[#allocation2 + $0x2c8] sm:$0xff]
          %v6299 = vld [vmem:[#allocation2 + $0x2d0] sm:$0xff]
          %v6300 = vld [vmem:[#allocation2 + $0x2d8] sm:$0xff]
          %v6301 = vld [vmem:[#allocation2 + $0x2e0] sm:$0xff]
          %v6302 = vld [vmem:[#allocation2 + $0x2e8] sm:$0xff]
          %v6303 = vld [vmem:[#allocation2 + $0x2f0] sm:$0xff]
          %v6304 = vld [vmem:[#allocation2 + $0x2f8] sm:$0xff]
          %v6305 = vld [vmem:[#allocation2 + $0x300] sm:$0xff]
          %v6306 = vld [vmem:[#allocation2 + $0x308] sm:$0xff]
          %v6307 = vld [vmem:[#allocation2 + $0x310] sm:$0xff]
          %v6308 = vld [vmem:[#allocation2 + $0x318] sm:$0xff]
          %v6309 = vld [vmem:[#allocation2 + $0x320] sm:$0xff]
          %v6310 = vld [vmem:[#allocation2 + $0x328] sm:$0xff]
          %v6311 = vld [vmem:[#allocation2 + $0x330] sm:$0xff]
          %v6312 = vld [vmem:[#allocation2 + $0x338] sm:$0xff]
          %v6313 = vld [vmem:[#allocation2 + $0x340] sm:$0xff]
          %v6314 = vld [vmem:[#allocation2 + $0x348] sm:$0xff]
          %v6315 = vld [vmem:[#allocation2 + $0x350] sm:$0xff]
          %v6316 = vld [vmem:[#allocation2 + $0x358] sm:$0xff]
          %v6317 = vld [vmem:[#allocation2 + $0x360] sm:$0xff]
          %v6318 = vld [vmem:[#allocation2 + $0x368] sm:$0xff]
          %v6319 = vld [vmem:[#allocation2 + $0x370] sm:$0xff]
          %v6320 = vld [vmem:[#allocation2 + $0x378] sm:$0xff]
          %v6321 = vld [vmem:[#allocation2 + $0x380] sm:$0xff]
          %v6322 = vld [vmem:[#allocation2 + $0x388] sm:$0xff]
          %v6323 = vld [vmem:[#allocation2 + $0x390] sm:$0xff]
          %v6324 = vld [vmem:[#allocation2 + $0x398] sm:$0xff]
          %v6325 = vld [vmem:[#allocation2 + $0x3a0] sm:$0xff]
          %v6326 = vld [vmem:[#allocation2 + $0x3a8] sm:$0xff]
          %v6327 = vld [vmem:[#allocation2 + $0x3b0] sm:$0xff]
          %v6328 = vld [vmem:[#allocation2 + $0x3b8] sm:$0xff]
          %v6329 = vld [vmem:[#allocation2 + $0x3c0] sm:$0xff]
          %v6330 = vld [vmem:[#allocation2 + $0x3c8] sm:$0xff]
          %v6331 = vld [vmem:[#allocation2 + $0x3d0] sm:$0xff]
          %v6332 = vld [vmem:[#allocation2 + $0x3d8] sm:$0xff]
          %v6333 = vld [vmem:[#allocation2 + $0x3e0] sm:$0xff]
          %v6334 = vld [vmem:[#allocation2 + $0x3e8] sm:$0xff]
          %v6335 = vld [vmem:[#allocation2 + $0x3f0] sm:$0xff]
          %v6336 = vld [vmem:[#allocation2 + $0x3f8] sm:$0xff]
          %v6337 = vld [vmem:[%s4] sm:$0x3]
          %v6339 = vlaneseq
          %v6340 = vshrl.u32 %v6339, 7
          %v6341 = vsub.s32 0, %v6340
          %v6342 = vrot.slane %v6337, %v6341
          %v6343 = vlaneseq
          %v6344 = vshrl.u32 %v6343, 7
          %v6345 = vsub.s32 1, %v6344
          %v6346 = vrot.slane %v6337, %v6345
          %v6349 = vadd.f32 %v6209, %v6342
          %v6350 = vadd.f32 %v6210, %v6346
          %v6351 = vadd.f32 %v6211, %v6342
          %v6352 = vadd.f32 %v6212, %v6346
          %v6353 = vadd.f32 %v6213, %v6342
          %v6354 = vadd.f32 %v6214, %v6346
          %v6355 = vadd.f32 %v6215, %v6342
          %v6356 = vadd.f32 %v6216, %v6346
          %v6357 = vadd.f32 %v6217, %v6342
          %v6358 = vadd.f32 %v6218, %v6346
          %v6359 = vadd.f32 %v6219, %v6342
          %v6360 = vadd.f32 %v6220, %v6346
          %v6361 = vadd.f32 %v6221, %v6342
          %v6362 = vadd.f32 %v6222, %v6346
          %v6363 = vadd.f32 %v6223, %v6342
          %v6364 = vadd.f32 %v6224, %v6346
          %v6365 = vadd.f32 %v6225, %v6342
          %v6366 = vadd.f32 %v6226, %v6346
          %v6367 = vadd.f32 %v6227, %v6342
          %v6368 = vadd.f32 %v6228, %v6346
          %v6369 = vadd.f32 %v6229, %v6342
          %v6370 = vadd.f32 %v6230, %v6346
          %v6371 = vadd.f32 %v6231, %v6342
          %v6372 = vadd.f32 %v6232, %v6346
          %v6373 = vadd.f32 %v6233, %v6342
          %v6374 = vadd.f32 %v6234, %v6346
          %v6375 = vadd.f32 %v6235, %v6342
          %v6376 = vadd.f32 %v6236, %v6346
          %v6377 = vadd.f32 %v6237, %v6342
          %v6378 = vadd.f32 %v6238, %v6346
          %v6379 = vadd.f32 %v6239, %v6342
          %v6380 = vadd.f32 %v6240, %v6346
          %v6381 = vadd.f32 %v6241, %v6342
          %v6382 = vadd.f32 %v6242, %v6346
          %v6383 = vadd.f32 %v6243, %v6342
          %v6384 = vadd.f32 %v6244, %v6346
          %v6385 = vadd.f32 %v6245, %v6342
          %v6386 = vadd.f32 %v6246, %v6346
          %v6387 = vadd.f32 %v6247, %v6342
          %v6388 = vadd.f32 %v6248, %v6346
          %v6389 = vadd.f32 %v6249, %v6342
          %v6390 = vadd.f32 %v6250, %v6346
          %v6391 = vadd.f32 %v6251, %v6342
          %v6392 = vadd.f32 %v6252, %v6346
          %v6393 = vadd.f32 %v6253, %v6342
          %v6394 = vadd.f32 %v6254, %v6346
          %v6395 = vadd.f32 %v6255, %v6342
          %v6396 = vadd.f32 %v6256, %v6346
          %v6397 = vadd.f32 %v6257, %v6342
          %v6398 = vadd.f32 %v6258, %v6346
          %v6399 = vadd.f32 %v6259, %v6342
          %v6400 = vadd.f32 %v6260, %v6346
          %v6401 = vadd.f32 %v6261, %v6342
          %v6402 = vadd.f32 %v6262, %v6346
          %v6403 = vadd.f32 %v6263, %v6342
          %v6404 = vadd.f32 %v6264, %v6346
          %v6405 = vadd.f32 %v6265, %v6342
          %v6406 = vadd.f32 %v6266, %v6346
          %v6407 = vadd.f32 %v6267, %v6342
          %v6408 = vadd.f32 %v6268, %v6346
          %v6409 = vadd.f32 %v6269, %v6342
          %v6410 = vadd.f32 %v6270, %v6346
          %v6411 = vadd.f32 %v6271, %v6342
          %v6412 = vadd.f32 %v6272, %v6346
          %v6413 = vadd.f32 %v6273, %v6342
          %v6414 = vadd.f32 %v6274, %v6346
          %v6415 = vadd.f32 %v6275, %v6342
          %v6416 = vadd.f32 %v6276, %v6346
          %v6417 = vadd.f32 %v6277, %v6342
          %v6418 = vadd.f32 %v6278, %v6346
          %v6419 = vadd.f32 %v6279, %v6342
          %v6420 = vadd.f32 %v6280, %v6346
          %v6421 = vadd.f32 %v6281, %v6342
          %v6422 = vadd.f32 %v6282, %v6346
          %v6423 = vadd.f32 %v6283, %v6342
          %v6424 = vadd.f32 %v6284, %v6346
          %v6425 = vadd.f32 %v6285, %v6342
          %v6426 = vadd.f32 %v6286, %v6346
          %v6427 = vadd.f32 %v6287, %v6342
          %v6428 = vadd.f32 %v6288, %v6346
          %v6429 = vadd.f32 %v6289, %v6342
          %v6430 = vadd.f32 %v6290, %v6346
          %v6431 = vadd.f32 %v6291, %v6342
          %v6432 = vadd.f32 %v6292, %v6346
          %v6433 = vadd.f32 %v6293, %v6342
          %v6434 = vadd.f32 %v6294, %v6346
          %v6435 = vadd.f32 %v6295, %v6342
          %v6436 = vadd.f32 %v6296, %v6346
          %v6437 = vadd.f32 %v6297, %v6342
          %v6438 = vadd.f32 %v6298, %v6346
          %v6439 = vadd.f32 %v6299, %v6342
          %v6440 = vadd.f32 %v6300, %v6346
          %v6441 = vadd.f32 %v6301, %v6342
          %v6442 = vadd.f32 %v6302, %v6346
          %v6443 = vadd.f32 %v6303, %v6342
          %v6444 = vadd.f32 %v6304, %v6346
          %v6445 = vadd.f32 %v6305, %v6342
          %v6446 = vadd.f32 %v6306, %v6346
          %v6447 = vadd.f32 %v6307, %v6342
          %v6448 = vadd.f32 %v6308, %v6346
          %v6449 = vadd.f32 %v6309, %v6342
          %v6450 = vadd.f32 %v6310, %v6346
          %v6451 = vadd.f32 %v6311, %v6342
          %v6452 = vadd.f32 %v6312, %v6346
          %v6453 = vadd.f32 %v6313, %v6342
          %v6454 = vadd.f32 %v6314, %v6346
          %v6455 = vadd.f32 %v6315, %v6342
          %v6456 = vadd.f32 %v6316, %v6346
          %v6457 = vadd.f32 %v6317, %v6342
          %v6458 = vadd.f32 %v6318, %v6346
          %v6459 = vadd.f32 %v6319, %v6342
          %v6460 = vadd.f32 %v6320, %v6346
          %v6461 = vadd.f32 %v6321, %v6342
          %v6462 = vadd.f32 %v6322, %v6346
          %v6463 = vadd.f32 %v6323, %v6342
          %v6464 = vadd.f32 %v6324, %v6346
          %v6465 = vadd.f32 %v6325, %v6342
          %v6466 = vadd.f32 %v6326, %v6346
          %v6467 = vadd.f32 %v6327, %v6342
          %v6468 = vadd.f32 %v6328, %v6346
          %v6469 = vadd.f32 %v6329, %v6342
          %v6470 = vadd.f32 %v6330, %v6346
          %v6471 = vadd.f32 %v6331, %v6342
          %v6472 = vadd.f32 %v6332, %v6346
          %v6473 = vadd.f32 %v6333, %v6342
          %v6474 = vadd.f32 %v6334, %v6346
          %v6475 = vadd.f32 %v6335, %v6342
          %v6476 = vadd.f32 %v6336, %v6346
          %6477 = vst [vmem:[%s322] sm:$0xff] %v6349
          %6478 = vst [vmem:[%s322 + $0x8] sm:$0xff] %v6350
          %6479 = vst [vmem:[%s322 + $0x10] sm:$0xff] %v6351
          %6480 = vst [vmem:[%s322 + $0x18] sm:$0xff] %v6352
          %6481 = vst [vmem:[%s322 + $0x20] sm:$0xff] %v6353
          %6482 = vst [vmem:[%s322 + $0x28] sm:$0xff] %v6354
          %6483 = vst [vmem:[%s322 + $0x30] sm:$0xff] %v6355
          %6484 = vst [vmem:[%s322 + $0x38] sm:$0xff] %v6356
          %6485 = vst [vmem:[%s322 + $0x40] sm:$0xff] %v6357
          %6486 = vst [vmem:[%s322 + $0x48] sm:$0xff] %v6358
          %6487 = vst [vmem:[%s322 + $0x50] sm:$0xff] %v6359
          %6488 = vst [vmem:[%s322 + $0x58] sm:$0xff] %v6360
          %6489 = vst [vmem:[%s322 + $0x60] sm:$0xff] %v6361
          %6490 = vst [vmem:[%s322 + $0x68] sm:$0xff] %v6362
          %6491 = vst [vmem:[%s322 + $0x70] sm:$0xff] %v6363
          %6492 = vst [vmem:[%s322 + $0x78] sm:$0xff] %v6364
          %6493 = vst [vmem:[%s322 + $0x80] sm:$0xff] %v6365
          %6494 = vst [vmem:[%s322 + $0x88] sm:$0xff] %v6366
          %6495 = vst [vmem:[%s322 + $0x90] sm:$0xff] %v6367
          %6496 = vst [vmem:[%s322 + $0x98] sm:$0xff] %v6368
          %6497 = vst [vmem:[%s322 + $0xa0] sm:$0xff] %v6369
          %6498 = vst [vmem:[%s322 + $0xa8] sm:$0xff] %v6370
          %6499 = vst [vmem:[%s322 + $0xb0] sm:$0xff] %v6371
          %6500 = vst [vmem:[%s322 + $0xb8] sm:$0xff] %v6372
          %6501 = vst [vmem:[%s322 + $0xc0] sm:$0xff] %v6373
          %6502 = vst [vmem:[%s322 + $0xc8] sm:$0xff] %v6374
          %6503 = vst [vmem:[%s322 + $0xd0] sm:$0xff] %v6375
          %6504 = vst [vmem:[%s322 + $0xd8] sm:$0xff] %v6376
          %6505 = vst [vmem:[%s322 + $0xe0] sm:$0xff] %v6377
          %6506 = vst [vmem:[%s322 + $0xe8] sm:$0xff] %v6378
          %6507 = vst [vmem:[%s322 + $0xf0] sm:$0xff] %v6379
          %6508 = vst [vmem:[%s322 + $0xf8] sm:$0xff] %v6380
          %6509 = vst [vmem:[%s322 + $0x100] sm:$0xff] %v6381
          %6510 = vst [vmem:[%s322 + $0x108] sm:$0xff] %v6382
          %6511 = vst [vmem:[%s322 + $0x110] sm:$0xff] %v6383
          %6512 = vst [vmem:[%s322 + $0x118] sm:$0xff] %v6384
          %6513 = vst [vmem:[%s322 + $0x120] sm:$0xff] %v6385
          %6514 = vst [vmem:[%s322 + $0x128] sm:$0xff] %v6386
          %6515 = vst [vmem:[%s322 + $0x130] sm:$0xff] %v6387
          %6516 = vst [vmem:[%s322 + $0x138] sm:$0xff] %v6388
          %6517 = vst [vmem:[%s322 + $0x140] sm:$0xff] %v6389
          %6518 = vst [vmem:[%s322 + $0x148] sm:$0xff] %v6390
          %6519 = vst [vmem:[%s322 + $0x150] sm:$0xff] %v6391
          %6520 = vst [vmem:[%s322 + $0x158] sm:$0xff] %v6392
          %6521 = vst [vmem:[%s322 + $0x160] sm:$0xff] %v6393
          %6522 = vst [vmem:[%s322 + $0x168] sm:$0xff] %v6394
          %6523 = vst [vmem:[%s322 + $0x170] sm:$0xff] %v6395
          %6524 = vst [vmem:[%s322 + $0x178] sm:$0xff] %v6396
          %6525 = vst [vmem:[%s322 + $0x180] sm:$0xff] %v6397
          %6526 = vst [vmem:[%s322 + $0x188] sm:$0xff] %v6398
          %6527 = vst [vmem:[%s322 + $0x190] sm:$0xff] %v6399
          %6528 = vst [vmem:[%s322 + $0x198] sm:$0xff] %v6400
          %6529 = vst [vmem:[%s322 + $0x1a0] sm:$0xff] %v6401
          %6530 = vst [vmem:[%s322 + $0x1a8] sm:$0xff] %v6402
          %6531 = vst [vmem:[%s322 + $0x1b0] sm:$0xff] %v6403
          %6532 = vst [vmem:[%s322 + $0x1b8] sm:$0xff] %v6404
          %6533 = vst [vmem:[%s322 + $0x1c0] sm:$0xff] %v6405
          %6534 = vst [vmem:[%s322 + $0x1c8] sm:$0xff] %v6406
          %6535 = vst [vmem:[%s322 + $0x1d0] sm:$0xff] %v6407
          %6536 = vst [vmem:[%s322 + $0x1d8] sm:$0xff] %v6408
          %6537 = vst [vmem:[%s322 + $0x1e0] sm:$0xff] %v6409
          %6538 = vst [vmem:[%s322 + $0x1e8] sm:$0xff] %v6410
          %6539 = vst [vmem:[%s322 + $0x1f0] sm:$0xff] %v6411
          %6540 = vst [vmem:[%s322 + $0x1f8] sm:$0xff] %v6412
          %6541 = vst [vmem:[%s322 + $0x200] sm:$0xff] %v6413
          %6542 = vst [vmem:[%s322 + $0x208] sm:$0xff] %v6414
          %6543 = vst [vmem:[%s322 + $0x210] sm:$0xff] %v6415
          %6544 = vst [vmem:[%s322 + $0x218] sm:$0xff] %v6416
          %6545 = vst [vmem:[%s322 + $0x220] sm:$0xff] %v6417
          %6546 = vst [vmem:[%s322 + $0x228] sm:$0xff] %v6418
          %6547 = vst [vmem:[%s322 + $0x230] sm:$0xff] %v6419
          %6548 = vst [vmem:[%s322 + $0x238] sm:$0xff] %v6420
          %6549 = vst [vmem:[%s322 + $0x240] sm:$0xff] %v6421
          %6550 = vst [vmem:[%s322 + $0x248] sm:$0xff] %v6422
          %6551 = vst [vmem:[%s322 + $0x250] sm:$0xff] %v6423
          %6552 = vst [vmem:[%s322 + $0x258] sm:$0xff] %v6424
          %6553 = vst [vmem:[%s322 + $0x260] sm:$0xff] %v6425
          %6554 = vst [vmem:[%s322 + $0x268] sm:$0xff] %v6426
          %6555 = vst [vmem:[%s322 + $0x270] sm:$0xff] %v6427
          %6556 = vst [vmem:[%s322 + $0x278] sm:$0xff] %v6428
          %6557 = vst [vmem:[%s322 + $0x280] sm:$0xff] %v6429
          %6558 = vst [vmem:[%s322 + $0x288] sm:$0xff] %v6430
          %6559 = vst [vmem:[%s322 + $0x290] sm:$0xff] %v6431
          %6560 = vst [vmem:[%s322 + $0x298] sm:$0xff] %v6432
          %6561 = vst [vmem:[%s322 + $0x2a0] sm:$0xff] %v6433
          %6562 = vst [vmem:[%s322 + $0x2a8] sm:$0xff] %v6434
          %6563 = vst [vmem:[%s322 + $0x2b0] sm:$0xff] %v6435
          %6564 = vst [vmem:[%s322 + $0x2b8] sm:$0xff] %v6436
          %6565 = vst [vmem:[%s322 + $0x2c0] sm:$0xff] %v6437
          %6566 = vst [vmem:[%s322 + $0x2c8] sm:$0xff] %v6438
          %6567 = vst [vmem:[%s322 + $0x2d0] sm:$0xff] %v6439
          %6568 = vst [vmem:[%s322 + $0x2d8] sm:$0xff] %v6440
          %6569 = vst [vmem:[%s322 + $0x2e0] sm:$0xff] %v6441
          %6570 = vst [vmem:[%s322 + $0x2e8] sm:$0xff] %v6442
          %6571 = vst [vmem:[%s322 + $0x2f0] sm:$0xff] %v6443
          %6572 = vst [vmem:[%s322 + $0x2f8] sm:$0xff] %v6444
          %6573 = vst [vmem:[%s322 + $0x300] sm:$0xff] %v6445
          %6574 = vst [vmem:[%s322 + $0x308] sm:$0xff] %v6446
          %6575 = vst [vmem:[%s322 + $0x310] sm:$0xff] %v6447
          %6576 = vst [vmem:[%s322 + $0x318] sm:$0xff] %v6448
          %6577 = vst [vmem:[%s322 + $0x320] sm:$0xff] %v6449
          %6578 = vst [vmem:[%s322 + $0x328] sm:$0xff] %v6450
          %6579 = vst [vmem:[%s322 + $0x330] sm:$0xff] %v6451
          %6580 = vst [vmem:[%s322 + $0x338] sm:$0xff] %v6452
          %6581 = vst [vmem:[%s322 + $0x340] sm:$0xff] %v6453
          %6582 = vst [vmem:[%s322 + $0x348] sm:$0xff] %v6454
          %6583 = vst [vmem:[%s322 + $0x350] sm:$0xff] %v6455
          %6584 = vst [vmem:[%s322 + $0x358] sm:$0xff] %v6456
          %6585 = vst [vmem:[%s322 + $0x360] sm:$0xff] %v6457
          %6586 = vst [vmem:[%s322 + $0x368] sm:$0xff] %v6458
          %6587 = vst [vmem:[%s322 + $0x370] sm:$0xff] %v6459
          %6588 = vst [vmem:[%s322 + $0x378] sm:$0xff] %v6460
          %6589 = vst [vmem:[%s322 + $0x380] sm:$0xff] %v6461
          %6590 = vst [vmem:[%s322 + $0x388] sm:$0xff] %v6462
          %6591 = vst [vmem:[%s322 + $0x390] sm:$0xff] %v6463
          %6592 = vst [vmem:[%s322 + $0x398] sm:$0xff] %v6464
          %6593 = vst [vmem:[%s322 + $0x3a0] sm:$0xff] %v6465
          %6594 = vst [vmem:[%s322 + $0x3a8] sm:$0xff] %v6466
          %6595 = vst [vmem:[%s322 + $0x3b0] sm:$0xff] %v6467
          %6596 = vst [vmem:[%s322 + $0x3b8] sm:$0xff] %v6468
          %6597 = vst [vmem:[%s322 + $0x3c0] sm:$0xff] %v6469
          %6598 = vst [vmem:[%s322 + $0x3c8] sm:$0xff] %v6470
          %6599 = vst [vmem:[%s322 + $0x3d0] sm:$0xff] %v6471
          %6600 = vst [vmem:[%s322 + $0x3d8] sm:$0xff] %v6472
          %6601 = vst [vmem:[%s322 + $0x3e0] sm:$0xff] %v6473
          %6602 = vst [vmem:[%s322 + $0x3e8] sm:$0xff] %v6474
          %6603 = vst [vmem:[%s322 + $0x3f0] sm:$0xff] %v6475
          %6604 = vst [vmem:[%s322 + $0x3f8] sm:$0xff] %v6476
        $region64: #{tpu_custom_call.1} parent=39 // pred_fallthru
          _
        %s6605 = sand.u32 %s169, 1
        %s6606 = scalar_lea.sflag [#allocation5], %s6605
        %s6607 = sand.u32 %s169, 1
        %s6608 = smul.addr %s6607, 1024
        %s6609 = scalar_lea.vmem [#allocation11], %s6608
        // Predicated region
        $region65: #{tpu_custom_call.1} parent=39 // pred_check
          %p6610 = pneg %p179
        $region66: #{tpu_custom_call.1} parent=39 // pred_check_branch
          %6612 = sbr.rel (%p6610) target = $region68
        $region67: #{tpu_custom_call.1} parent=39 // pred_region
          %s6613 = smul.u32 64, %s28
          %s6615 = ssub.s32 16384, 16384
          %6616 = vsyncadd %s6606, %s6615
          %s6617 = smul.addr %s6613, 2
          %s6618 = smul.addr %s6617, 128
          %s6619 = scalar_lea.hbm %s5, %s6618
          %s6620 = sshll.u32 %s6609, 4
          %s6621 = int_to_ptr.vmem [resolvable:$true] %s6620
          %6626 = dma.vmem_to_hbm [thread:$0]  %s6621, 16384, %s6619, %s6606, 256, 256, 16
        $region68: #{tpu_custom_call.1} parent=39 // pred_fallthru
          _
      $region40: #{tpu_custom_call.1} parent=5 // pred_fallthru
        _
      %p6627 = scmp.le.s32.totalorder 2, %s19
      // Predicated region
      $region69: #{tpu_custom_call.1} parent=5 // pred_check
        %p6628 = pneg %p6627
      $region70: #{tpu_custom_call.1} parent=5 // pred_check_branch
        %6630 = sbr.rel (%p6628) target = $region72
      $region71: #{tpu_custom_call.1} parent=5 // pred_region
        %s6631 = ssub.s32 %s19, 2
        // Predicated region
        $region73: #{tpu_custom_call.1} parent=71 // pred_check
          %p6632 = pneg %p185
        $region74: #{tpu_custom_call.1} parent=71 // pred_check_branch
          %6634 = sbr.rel (%p6632) target = $region76
        $region75: #{tpu_custom_call.1} parent=71 // pred_region
          %s6635 = sand.u32 %s170, 1
          %s6636 = scalar_lea.sflag [#allocation5], %s6635
          %s6637 = sand.u32 %s170, 1
          %s6638 = smul.addr %s6637, 1024
          %s6639 = scalar_lea.vmem [#allocation11], %s6638
          %6640 = dma.done %s6636, 16384
        $region76: #{tpu_custom_call.1} parent=71 // pred_fallthru
          _
      $region72: #{tpu_custom_call.1} parent=5 // pred_fallthru
        _
    $region6: #{tpu_custom_call.1} parent=1 // loop_footer
      %s23 = sadd.s32 1, %s19
    $region7: #{tpu_custom_call.1} parent=1 // loop_footer_branch
      %18 = sbr.rel target = $region3
    $region8: #{tpu_custom_call.1} parent=1 // loop_exit
      _
    %6641 = vsyncpa [#allocation4], 1
    %s6642 = scalar_lea.sflag [#allocation4], 1
    %6643 = vsyncpa %s6642, 1
    %6644 = vsyncpa [#allocation7], 1
    %6645 = vsyncpa [#allocation10], 1
    %6646 = vsyncpa [#allocation5], 1
    %s6647 = scalar_lea.sflag [#allocation5], 1
    %6648 = vsyncpa %s6647, 1

</llo_original>
